<compile_context>
chip_gen: v7x
topology: tpu7x:2x2x1
jax: 0.10.0
libtpu: 0.0.40
codegen_flags: <defaults>
</compile_context>

<pallas_src>
import jax
import jax.numpy as jnp
from jax import lax
from jax.experimental import pallas as pl
from jax.experimental.pallas import tpu as pltpu

# ------------------------- model dimensions -----------------------------
V = 2           # views (grd, sat)
B = 2           # batch
C = 4           # input image channels
CPAD = 8        # channels zero-padded to one sublane group
H = W = 16      # spatial -> H*W = 256 tokens (must be 256: linear1 in_features)
TOK = H * W     # 256
D = 128         # backbone embedding dim (token feature width)
HID = 1024      # mixer hidden
OUTK = 8        # mixer output tokens -> final feature = OUTK * D
BD = B * D      # 256: batch stacked into the matmul M dimension
NC = 2          # HID chunks
CH = HID // NC  # 512


# ----------------------------- kernel -----------------------------------
def mixer_head_kernel(x_ref, wemb_ref, bemb_ref, w1_ref, b1_ref, w2_hbm,
                      b2_ref, w3_ref, b3_ref, o_ref,
                      y_vmem, w2_vmem, h2_vmem, w2_sem):
    v = pl.program_id(0)

    # Start the W2 (HID, TOK) bf16 weight DMA immediately; it overlaps with the
    # embedding + matmul1(chunk 0) + GELU(chunk 0) below.
    w2_copy = pltpu.make_async_copy(w2_hbm.at[v], w2_vmem, w2_sem)
    w2_copy.start()

    # Per-pixel embedding (== Conv2d(C, D, kernel=1)), batch stacked into the
    # MXU M dimension -> y (BD=256, TOK=256) bf16 in a VMEM scratch.
    for b in range(B):
        yb = jnp.dot(wemb_ref[0], x_ref[0, b],
                     preferred_element_type=jnp.float32) + bemb_ref[0]
        y_vmem[b * D:(b + 1) * D, :] = yb.astype(jnp.bfloat16)
    y = y_vmem[...]                                                # (BD, TOK) bf16

    # Token-mixing MLP over TOK; HID tiled so GELU (VALU/EUP, f32 - v5e safe)
    # overlaps the MXU work and the in-flight W2 DMA.  f32 accumulation.
    for c in range(NC):
        lo = c * CH
        h1c = jnp.dot(y, w1_ref[0, :, lo:lo + CH],
                      preferred_element_type=jnp.float32) \
              + b1_ref[0, :, lo:lo + CH]                           # (BD, CH) f32
        h1c = jax.nn.gelu(h1c, approximate=True).astype(jnp.bfloat16)
        if c == 0:
            w2_copy.wait()                                         # W2 now resident
            h2_vmem[...] = b2_ref[0] + jnp.dot(
                h1c, w2_vmem[lo:lo + CH, :],
                preferred_element_type=jnp.float32)                # (BD, TOK) f32
        else:
            h2_vmem[...] += jnp.dot(
                h1c, w2_vmem[lo:lo + CH, :],
                preferred_element_type=jnp.float32)

    # Third (tiny) projection: bf16 operands -> single MXU pass, f32 accum.
    h3 = jnp.dot(h2_vmem[...].astype(jnp.bfloat16), w3_ref[0],
                 preferred_element_type=jnp.float32) + b3_ref[0]   # (BD, OUTK) f32

    # Per-sample: cheap (128,8) transpose -> lane-dense (OUTK, D); fuse
    # F.normalize(dim=1) over the flattened OUTK*D feature via rsqrt (EUP).
    for b in range(B):
        ob = h3[b * D:(b + 1) * D, :].T                            # (OUTK, D)
        inv = lax.rsqrt(jnp.maximum(jnp.sum(ob * ob), 1e-24))      # == /max(||.||,1e-12)
        o_ref[0, b] = (ob * inv).astype(o_ref.dtype)


def _vspec(shape):
    nd = len(shape)
    return pl.BlockSpec(shape, lambda v, nd=nd: (v,) + (0,) * (nd - 1))


# ----------------------------- wrapper -----------------------------------
@jax.jit
def two_view_forward(x_grd, x_sat, stacked_params):
    """x_*: (B, C, H, W) f32 -> two (B, OUTK*D) L2-normalized feature tensors."""
    wembT, bemb, w1T, b1, w2T, b2, w3T, b3 = stacked_params

    # NCHW -> (V, B, CPAD, TOK); channels zero-padded 4 -> 8 (one sublane group).
    x = jnp.stack([x_grd, x_sat], axis=0).reshape(V, B, C, TOK)
    x = jnp.pad(x, ((0, 0), (0, 0), (0, CPAD - C), (0, 0)))

    flops = 2 * V * BD * (TOK * HID + HID * TOK + TOK * OUTK + CPAD * TOK)
    bytes_accessed = (x.size * 4 + (wembT.size + bemb.size) * 4
                      + (w1T.size + w2T.size + w3T.size) * 2
                      + (b1.size + b2.size + b3.size) * 4
                      + V * B * OUTK * D * 4)

    out = pl.pallas_call(
        mixer_head_kernel,
        out_shape=jax.ShapeDtypeStruct((V, B, OUTK, D), jnp.float32),
        grid_spec=pltpu.PrefetchScalarGridSpec(
            num_scalar_prefetch=0,
            grid=(V,),
            in_specs=[
                _vspec((1, B, CPAD, TOK)),            # x       (f32)
                _vspec((1, D, CPAD)),                 # Wemb.T  (f32)
                _vspec((1, D, 1)),                    # bemb    (f32)
                _vspec((1, TOK, HID)),                # W1.T    (bf16)
                _vspec((1, 1, HID)),                  # b1      (f32)
                pl.BlockSpec(memory_space=pl.ANY),    # W2.T    (bf16, manual DMA)
                _vspec((1, 1, TOK)),                  # b2      (f32)
                _vspec((1, TOK, OUTK)),               # W3.T    (bf16)
                _vspec((1, 1, OUTK)),                 # b3      (f32)
            ],
            out_specs=pl.BlockSpec((1, B, OUTK, D), lambda v: (v, 0, 0, 0)),
            scratch_shapes=[
                pltpu.VMEM((BD, TOK), jnp.bfloat16),   # y (embedded tokens)
                pltpu.VMEM((HID, TOK), jnp.bfloat16),  # W2 landing buffer
                pltpu.VMEM((BD, TOK), jnp.float32),    # h2 accumulator
                pltpu.SemaphoreType.DMA(()),           # W2 DMA semaphore
            ]),
        compiler_params=pltpu.CompilerParams(
            dimension_semantics=("parallel",)),        # v7x: one view per TensorCore
        cost_estimate=pl.CostEstimate(
            flops=flops,
            transcendentals=V * BD * HID,              # tanh in approx GELU
            bytes_accessed=bytes_accessed),
    )(x, wembT, bemb, w1T, b1, w2T, b2, w3T, b3)

    out = out.reshape(V, B, OUTK * D)   # == transpose(-1,-2).flatten(-2,-1), normalized
    return out[0], out[1]


# ----------------------------- params ------------------------------------
def make_params(key):
    """Deterministic synthetic params for one branch (backbone + mixer head)."""
    # TODO(synk): the real PyTorch backbone is injected by the caller; it is
    # synthesized here as a per-pixel linear embedding (Conv2d(C, D, kernel=1))
    # producing (B, H*W=256, D) tokens for the mixer head.
    ks = jax.random.split(key, 8)
    s = 0.05
    wembT = jax.random.normal(ks[0], (D, C), jnp.float32) * s      # Conv2d(C,D,1).weight.T
    bemb  = jax.random.normal(ks[1], (D, 1), jnp.float32) * s
    w1T   = jax.random.normal(ks[2], (TOK, HID), jnp.float32) * s  # Linear(256,1024).weight.T
    b1    = jax.random.normal(ks[3], (1, HID), jnp.float32) * s
    w2T   = jax.random.normal(ks[4], (HID, TOK), jnp.float32) * s  # Linear(1024,256).weight.T
    b2    = jax.random.normal(ks[5], (1, TOK), jnp.float32) * s
    w3T   = jax.random.normal(ks[6], (TOK, OUTK), jnp.float32) * s # Linear(256,8).weight.T
    b3    = jax.random.normal(ks[7], (1, OUTK), jnp.float32) * s
    return (wembT, bemb, w1T, b1, w2T, b2, w3T, b3)


def stack_view_params(p_grd, p_sat):
    """Stack per-view params on a leading axis; ship matmul weights as bf16."""
    wembT, bemb, w1T, b1, w2T, b2, w3T, b3 = (
        jnp.stack([g, s], axis=0) for g, s in zip(p_grd, p_sat))
    wembT = jnp.pad(wembT, ((0, 0), (0, 0), (0, CPAD - C)))   # channels 4 -> 8
    return (wembT, bemb,
            w1T.astype(jnp.bfloat16), b1,
            w2T.astype(jnp.bfloat16), b2,
            w3T.astype(jnp.bfloat16), b3)


# -------------------------- pure-JAX reference ---------------------------
def _ref_branch(x_nchw, params):
    wembT, bemb, w1T, b1, w2T, b2, w3T, b3 = params
    x = x_nchw.reshape(B, C, TOK)
    y = jnp.einsum('dc,bct->bdt', wembT, x) + bemb[None]               # (B, D, TOK)
    h1 = jax.nn.gelu(jnp.einsum('bdt,th->bdh', y, w1T) + b1[None],
                     approximate=False)                                # exact erf GELU
    h2 = jnp.einsum('bdh,ht->bdt', h1, w2T) + b2[None]
    h3 = jnp.einsum('bdt,tk->bdk', h2, w3T) + b3[None]                 # (B, D, OUTK)
    out = jnp.swapaxes(h3, -1, -2).reshape(B, OUTK * D)
    nrm = jnp.sqrt(jnp.sum(out * out, axis=1, keepdims=True))
    return out / jnp.maximum(nrm, 1e-12)


if __name__ == "__main__":
    key = jax.random.PRNGKey(0)
    k_xg, k_xs, k_pg, k_ps = jax.random.split(key, 4)

    x_grd = jax.random.normal(k_xg, (B, C, H, W), jnp.float32)
    x_sat = jax.random.normal(k_xs, (B, C, H, W), jnp.float32)
    params_grd = make_params(k_pg)
    params_sat = make_params(k_ps)
    stacked = stack_view_params(params_grd, params_sat)

    f_grd, f_sat = two_view_forward(x_grd, x_sat, stacked)
    f_grd = jax.block_until_ready(f_grd)
    f_sat = jax.block_until_ready(f_sat)

    # correctness check vs the f32 exact-GELU pure-JAX reference (kernel uses
    # bf16 matmul operands + tanh-GELU -> relaxed tolerance; outputs are
    # L2-normalized, |x| ~ 0.03)
    r_grd = _ref_branch(x_grd, params_grd)
    r_sat = _ref_branch(x_sat, params_sat)
    assert f_grd.shape == (B, OUTK * D) and f_sat.shape == (B, OUTK * D)
    assert jnp.allclose(f_grd, r_grd, atol=1e-2, rtol=1e-2)
    assert jnp.allclose(f_sat, r_sat, atol=1e-2, rtol=1e-2)

    print("KERNEL_OK")
</pallas_src>

<mosaic_0001>
module attributes {stable_mosaic.version = 11 : i64} {
  func.func @mixer_head_kernel(%arg0: i32, %arg1: memref<1x2x8x256xf32, #tpu.memory_space<vmem>>, %arg2: memref<1x128x8xf32, #tpu.memory_space<vmem>>, %arg3: memref<1x128x1xf32, #tpu.memory_space<vmem>>, %arg4: memref<1x256x1024xbf16, #tpu.memory_space<vmem>>, %arg5: memref<1x1x1024xf32, #tpu.memory_space<vmem>>, %arg6: memref<2x1024x256xbf16, #tpu.memory_space<any>>, %arg7: memref<1x1x256xf32, #tpu.memory_space<vmem>>, %arg8: memref<1x256x8xbf16, #tpu.memory_space<vmem>>, %arg9: memref<1x1x8xf32, #tpu.memory_space<vmem>>, %arg10: memref<1x2x8x128xf32, #tpu.memory_space<vmem>>, %arg11: memref<256x256xbf16, #tpu.memory_space<vmem>>, %arg12: memref<1024x256xbf16, #tpu.memory_space<vmem>>, %arg13: memref<256x256xf32, #tpu.memory_space<vmem>>, %arg14: memref<!tpu.dma_semaphore, #tpu.memory_space<semaphore_mem>>) attributes {dimension_semantics = [#tpu.dimension_semantics<parallel>], iteration_bounds = array<i64: 2>, scalar_prefetch = 0 : i64, scratch_operands = 4 : i64, tpu.core_type = #tpu.core_type<tc>, window_params = [{transform_indices = @transform_0, window_bounds = array<i64: 1, 2, 8, 256>}, {transform_indices = @transform_1, window_bounds = array<i64: 1, 128, 8>}, {transform_indices = @transform_2, window_bounds = array<i64: 1, 128, 1>}, {transform_indices = @transform_3, window_bounds = array<i64: 1, 256, 1024>}, {transform_indices = @transform_4, window_bounds = array<i64: 1, 1, 1024>}, {}, {transform_indices = @transform_6, window_bounds = array<i64: 1, 1, 256>}, {transform_indices = @transform_7, window_bounds = array<i64: 1, 256, 8>}, {transform_indices = @transform_8, window_bounds = array<i64: 1, 1, 8>}, {transform_indices = @transform_9, window_bounds = array<i64: 1, 2, 8, 128>}]} {
    %c0_i32 = arith.constant 0 : i32
    %c0_i32_0 = arith.constant 0 : i32
    %0 = tpu.memref_slice %arg6[%arg0, %c0_i32, %c0_i32_0] : memref<2x1024x256xbf16, #tpu.memory_space<any>> -> memref<1x1024x256xbf16, #tpu.memory_space<any>>
    %1 = tpu.memref_squeeze %0 : memref<1x1024x256xbf16, #tpu.memory_space<any>> -> memref<1024x256xbf16, #tpu.memory_space<any>>
    tpu.enqueue_dma source(%1 : memref<1024x256xbf16, #tpu.memory_space<any>>) target(%arg12 : memref<1024x256xbf16, #tpu.memory_space<vmem>>) target_semaphore(%arg14 : memref<!tpu.dma_semaphore, #tpu.memory_space<semaphore_mem>>)
    %c0 = arith.constant 0 : index
    %c0_1 = arith.constant 0 : index
    %c0_2 = arith.constant 0 : index
    %2 = vector.load %arg2[%c0, %c0_1, %c0_2] : memref<1x128x8xf32, #tpu.memory_space<vmem>>, vector<1x128x8xf32>
    %3 = vector.shape_cast %2 : vector<1x128x8xf32> to vector<128x8xf32>
    %c0_3 = arith.constant 0 : index
    %c0_4 = arith.constant 0 : index
    %c0_5 = arith.constant 0 : index
    %c0_6 = arith.constant 0 : index
    %4 = vector.load %arg1[%c0_3, %c0_4, %c0_5, %c0_6] : memref<1x2x8x256xf32, #tpu.memory_space<vmem>>, vector<1x1x8x256xf32>
    %5 = vector.shape_cast %4 : vector<1x1x8x256xf32> to vector<8x256xf32>
    %cst = arith.constant dense<0.000000e+00> : vector<128x256xf32>
    %6 = tpu.matmul %3, %5, %cst {dimension_numbers = #tpu.dot_dimension_numbers<[1], [0], [0], [1], [0, 0, 1, 1], [], []>} : vector<128x8xf32>, vector<8x256xf32>, vector<128x256xf32> -> vector<128x256xf32>
    %c0_7 = arith.constant 0 : index
    %c0_8 = arith.constant 0 : index
    %c0_9 = arith.constant 0 : index
    %7 = vector.load %arg3[%c0_7, %c0_8, %c0_9] : memref<1x128x1xf32, #tpu.memory_space<vmem>>, vector<1x128x1xf32>
    %8 = vector.shape_cast %7 : vector<1x128x1xf32> to vector<128x1xf32>
    %9 = vector.broadcast %8 : vector<128x1xf32> to vector<128x256xf32>
    %10 = arith.addf %6, %9 : vector<128x256xf32>
    %11 = arith.truncf %10 : vector<128x256xf32> to vector<128x256xbf16>
    %c0_10 = arith.constant 0 : index
    %c0_11 = arith.constant 0 : index
    %12 = vector.load %arg11[%c0_10, %c0_11] : memref<256x256xbf16, #tpu.memory_space<vmem>>, vector<128x256xbf16>
    tpu.vector_store %arg11[%c0_10, %c0_11], %11 {strides = array<i32>} : memref<256x256xbf16, #tpu.memory_space<vmem>>, vector<128x256xbf16>,
    %c0_12 = arith.constant 0 : index
    %c0_13 = arith.constant 0 : index
    %c0_14 = arith.constant 0 : index
    %13 = vector.load %arg2[%c0_12, %c0_13, %c0_14] : memref<1x128x8xf32, #tpu.memory_space<vmem>>, vector<1x128x8xf32>
    %14 = vector.shape_cast %13 : vector<1x128x8xf32> to vector<128x8xf32>
    %c0_15 = arith.constant 0 : index
    %c1 = arith.constant 1 : index
    %c0_16 = arith.constant 0 : index
    %c0_17 = arith.constant 0 : index
    %15 = vector.load %arg1[%c0_15, %c1, %c0_16, %c0_17] : memref<1x2x8x256xf32, #tpu.memory_space<vmem>>, vector<1x1x8x256xf32>
    %16 = vector.shape_cast %15 : vector<1x1x8x256xf32> to vector<8x256xf32>
    %cst_18 = arith.constant dense<0.000000e+00> : vector<128x256xf32>
    %17 = tpu.matmul %14, %16, %cst_18 {dimension_numbers = #tpu.dot_dimension_numbers<[1], [0], [0], [1], [0, 0, 1, 1], [], []>} : vector<128x8xf32>, vector<8x256xf32>, vector<128x256xf32> -> vector<128x256xf32>
    %c0_19 = arith.constant 0 : index
    %c0_20 = arith.constant 0 : index
    %c0_21 = arith.constant 0 : index
    %18 = vector.load %arg3[%c0_19, %c0_20, %c0_21] : memref<1x128x1xf32, #tpu.memory_space<vmem>>, vector<1x128x1xf32>
    %19 = vector.shape_cast %18 : vector<1x128x1xf32> to vector<128x1xf32>
    %20 = vector.broadcast %19 : vector<128x1xf32> to vector<128x256xf32>
    %21 = arith.addf %17, %20 : vector<128x256xf32>
    %22 = arith.truncf %21 : vector<128x256xf32> to vector<128x256xbf16>
    %c128 = arith.constant 128 : index
    %c0_22 = arith.constant 0 : index
    %23 = vector.load %arg11[%c128, %c0_22] : memref<256x256xbf16, #tpu.memory_space<vmem>>, vector<128x256xbf16>
    tpu.vector_store %arg11[%c128, %c0_22], %22 {strides = array<i32>} : memref<256x256xbf16, #tpu.memory_space<vmem>>, vector<128x256xbf16>,
    %c0_23 = arith.constant 0 : index
    %c0_24 = arith.constant 0 : index
    %24 = vector.load %arg11[%c0_23, %c0_24] : memref<256x256xbf16, #tpu.memory_space<vmem>>, vector<256x256xbf16>
    %c0_25 = arith.constant 0 : index
    %c0_26 = arith.constant 0 : index
    %c0_27 = arith.constant 0 : index
    %25 = vector.load %arg4[%c0_25, %c0_26, %c0_27] : memref<1x256x1024xbf16, #tpu.memory_space<vmem>>, vector<1x256x512xbf16>
    %26 = vector.shape_cast %25 : vector<1x256x512xbf16> to vector<256x512xbf16>
    %cst_28 = arith.constant dense<0.000000e+00> : vector<256x512xf32>
    %27 = tpu.matmul %24, %26, %cst_28 {dimension_numbers = #tpu.dot_dimension_numbers<[1], [0], [0], [1], [0, 0, 1, 1], [], []>} : vector<256x256xbf16>, vector<256x512xbf16>, vector<256x512xf32> -> vector<256x512xf32>
    %c0_29 = arith.constant 0 : index
    %c0_30 = arith.constant 0 : index
    %c0_31 = arith.constant 0 : index
    %28 = vector.load %arg5[%c0_29, %c0_30, %c0_31] : memref<1x1x1024xf32, #tpu.memory_space<vmem>>, vector<1x1x512xf32>
    %29 = vector.shape_cast %28 : vector<1x1x512xf32> to vector<1x512xf32>
    %30 = vector.broadcast %29 : vector<1x512xf32> to vector<256x512xf32>
    %31 = arith.addf %27, %30 : vector<256x512xf32>
    %32 = arith.mulf %31, %31 : vector<256x512xf32>
    %33 = arith.mulf %31, %32 : vector<256x512xf32>
    %cst_32 = arith.constant 4.471500e-02 : f32
    %34 = vector.broadcast %cst_32 : f32 to vector<256x512xf32>
    %35 = arith.mulf %34, %33 : vector<256x512xf32>
    %36 = arith.addf %31, %35 : vector<256x512xf32>
    %cst_33 = arith.constant 0.797884583 : f32
    %37 = vector.broadcast %cst_33 : f32 to vector<256x512xf32>
    %38 = arith.mulf %37, %36 : vector<256x512xf32>
    %39 = math.tanh %38 : vector<256x512xf32>
    %cst_34 = arith.constant 1.000000e+00 : f32
    %40 = vector.broadcast %cst_34 : f32 to vector<256x512xf32>
    %41 = arith.addf %40, %39 : vector<256x512xf32>
    %cst_35 = arith.constant 5.000000e-01 : f32
    %42 = vector.broadcast %cst_35 : f32 to vector<256x512xf32>
    %43 = arith.mulf %42, %41 : vector<256x512xf32>
    %44 = arith.mulf %31, %43 : vector<256x512xf32>
    %45 = arith.truncf %44 : vector<256x512xf32> to vector<256x512xbf16>
    %c0_i32_36 = arith.constant 0 : i32
    %c0_i32_37 = arith.constant 0 : i32
    %46 = tpu.memref_slice %arg6[%arg0, %c0_i32_36, %c0_i32_37] : memref<2x1024x256xbf16, #tpu.memory_space<any>> -> memref<1x1024x256xbf16, #tpu.memory_space<any>>
    %47 = tpu.memref_squeeze %46 : memref<1x1024x256xbf16, #tpu.memory_space<any>> -> memref<1024x256xbf16, #tpu.memory_space<any>>
    tpu.wait_dma2 semaphore(%arg14 : memref<!tpu.dma_semaphore, #tpu.memory_space<semaphore_mem>>) src(%47 : memref<1024x256xbf16, #tpu.memory_space<any>>) dst(%arg12 : memref<1024x256xbf16, #tpu.memory_space<vmem>>)
    %c0_38 = arith.constant 0 : index
    %c0_39 = arith.constant 0 : index
    %c0_40 = arith.constant 0 : index
    %48 = vector.load %arg7[%c0_38, %c0_39, %c0_40] : memref<1x1x256xf32, #tpu.memory_space<vmem>>, vector<1x1x256xf32>
    %49 = vector.shape_cast %48 : vector<1x1x256xf32> to vector<1x256xf32>
    %c0_41 = arith.constant 0 : index
    %c0_42 = arith.constant 0 : index
    %50 = vector.load %arg12[%c0_41, %c0_42] : memref<1024x256xbf16, #tpu.memory_space<vmem>>, vector<512x256xbf16>
    %cst_43 = arith.constant dense<0.000000e+00> : vector<256x256xf32>
    %51 = tpu.matmul %45, %50, %cst_43 {dimension_numbers = #tpu.dot_dimension_numbers<[1], [0], [0], [1], [0, 0, 1, 1], [], []>} : vector<256x512xbf16>, vector<512x256xbf16>, vector<256x256xf32> -> vector<256x256xf32>
    %52 = vector.broadcast %49 : vector<1x256xf32> to vector<256x256xf32>
    %53 = arith.addf %52, %51 : vector<256x256xf32>
    %c0_44 = arith.constant 0 : index
    %c0_45 = arith.constant 0 : index
    %54 = vector.load %arg13[%c0_44, %c0_45] : memref<256x256xf32, #tpu.memory_space<vmem>>, vector<256x256xf32>
    tpu.vector_store %arg13[%c0_44, %c0_45], %53 {strides = array<i32>} : memref<256x256xf32, #tpu.memory_space<vmem>>, vector<256x256xf32>,
    %c0_46 = arith.constant 0 : index
    %c0_47 = arith.constant 0 : index
    %c512 = arith.constant 512 : index
    %55 = vector.load %arg4[%c0_46, %c0_47, %c512] : memref<1x256x1024xbf16, #tpu.memory_space<vmem>>, vector<1x256x512xbf16>
    %56 = vector.shape_cast %55 : vector<1x256x512xbf16> to vector<256x512xbf16>
    %cst_48 = arith.constant dense<0.000000e+00> : vector<256x512xf32>
    %57 = tpu.matmul %24, %56, %cst_48 {dimension_numbers = #tpu.dot_dimension_numbers<[1], [0], [0], [1], [0, 0, 1, 1], [], []>} : vector<256x256xbf16>, vector<256x512xbf16>, vector<256x512xf32> -> vector<256x512xf32>
    %c0_49 = arith.constant 0 : index
    %c0_50 = arith.constant 0 : index
    %c512_51 = arith.constant 512 : index
    %58 = vector.load %arg5[%c0_49, %c0_50, %c512_51] : memref<1x1x1024xf32, #tpu.memory_space<vmem>>, vector<1x1x512xf32>
    %59 = vector.shape_cast %58 : vector<1x1x512xf32> to vector<1x512xf32>
    %60 = vector.broadcast %59 : vector<1x512xf32> to vector<256x512xf32>
    %61 = arith.addf %57, %60 : vector<256x512xf32>
    %62 = arith.mulf %61, %61 : vector<256x512xf32>
    %63 = arith.mulf %61, %62 : vector<256x512xf32>
    %cst_52 = arith.constant 4.471500e-02 : f32
    %64 = vector.broadcast %cst_52 : f32 to vector<256x512xf32>
    %65 = arith.mulf %64, %63 : vector<256x512xf32>
    %66 = arith.addf %61, %65 : vector<256x512xf32>
    %cst_53 = arith.constant 0.797884583 : f32
    %67 = vector.broadcast %cst_53 : f32 to vector<256x512xf32>
    %68 = arith.mulf %67, %66 : vector<256x512xf32>
    %69 = math.tanh %68 : vector<256x512xf32>
    %cst_54 = arith.constant 1.000000e+00 : f32
    %70 = vector.broadcast %cst_54 : f32 to vector<256x512xf32>
    %71 = arith.addf %70, %69 : vector<256x512xf32>
    %cst_55 = arith.constant 5.000000e-01 : f32
    %72 = vector.broadcast %cst_55 : f32 to vector<256x512xf32>
    %73 = arith.mulf %72, %71 : vector<256x512xf32>
    %74 = arith.mulf %61, %73 : vector<256x512xf32>
    %75 = arith.truncf %74 : vector<256x512xf32> to vector<256x512xbf16>
    %c0_56 = arith.constant 0 : index
    %c0_57 = arith.constant 0 : index
    %76 = vector.load %arg13[%c0_56, %c0_57] : memref<256x256xf32, #tpu.memory_space<vmem>>, vector<256x256xf32>
    %c512_58 = arith.constant 512 : index
    %c0_59 = arith.constant 0 : index
    %77 = vector.load %arg12[%c512_58, %c0_59] : memref<1024x256xbf16, #tpu.memory_space<vmem>>, vector<512x256xbf16>
    %cst_60 = arith.constant dense<0.000000e+00> : vector<256x256xf32>
    %78 = tpu.matmul %75, %77, %cst_60 {dimension_numbers = #tpu.dot_dimension_numbers<[1], [0], [0], [1], [0, 0, 1, 1], [], []>} : vector<256x512xbf16>, vector<512x256xbf16>, vector<256x256xf32> -> vector<256x256xf32>
    %79 = arith.addf %76, %78 : vector<256x256xf32>
    %c0_61 = arith.constant 0 : index
    %c0_62 = arith.constant 0 : index
    %80 = vector.load %arg13[%c0_61, %c0_62] : memref<256x256xf32, #tpu.memory_space<vmem>>, vector<256x256xf32>
    tpu.vector_store %arg13[%c0_61, %c0_62], %79 {strides = array<i32>} : memref<256x256xf32, #tpu.memory_space<vmem>>, vector<256x256xf32>,
    %c0_63 = arith.constant 0 : index
    %c0_64 = arith.constant 0 : index
    %81 = vector.load %arg13[%c0_63, %c0_64] : memref<256x256xf32, #tpu.memory_space<vmem>>, vector<256x256xf32>
    %82 = arith.truncf %81 : vector<256x256xf32> to vector<256x256xbf16>
    %c0_65 = arith.constant 0 : index
    %c0_66 = arith.constant 0 : index
    %c0_67 = arith.constant 0 : index
    %83 = vector.load %arg8[%c0_65, %c0_66, %c0_67] : memref<1x256x8xbf16, #tpu.memory_space<vmem>>, vector<1x256x8xbf16>
    %84 = vector.shape_cast %83 : vector<1x256x8xbf16> to vector<256x8xbf16>
    %cst_68 = arith.constant dense<0.000000e+00> : vector<256x8xf32>
    %85 = tpu.matmul %82, %84, %cst_68 {dimension_numbers = #tpu.dot_dimension_numbers<[1], [0], [0], [1], [0, 0, 1, 1], [], []>} : vector<256x256xbf16>, vector<256x8xbf16>, vector<256x8xf32> -> vector<256x8xf32>
    %c0_69 = arith.constant 0 : index
    %c0_70 = arith.constant 0 : index
    %c0_71 = arith.constant 0 : index
    %86 = vector.load %arg9[%c0_69, %c0_70, %c0_71] : memref<1x1x8xf32, #tpu.memory_space<vmem>>, vector<1x1x8xf32>
    %87 = vector.shape_cast %86 : vector<1x1x8xf32> to vector<1x8xf32>
    %88 = vector.broadcast %87 : vector<1x8xf32> to vector<256x8xf32>
    %89 = arith.addf %85, %88 : vector<256x8xf32>
    %90 = vector.extract_strided_slice %89 {offsets = [0, 0], sizes = [128, 8], strides = [1, 1]} : vector<256x8xf32> to vector<128x8xf32>
    %91 = tpu.transpose %90, [1, 0] : vector<128x8xf32> -> vector<8x128xf32>
    %92 = arith.mulf %91, %91 : vector<8x128xf32>
    %93 = vector.shape_cast %92 : vector<8x128xf32> to vector<1x8x128xf32>
    %cst_72 = arith.constant dense<0.000000e+00> : vector<1xf32>
    %94 = vector.multi_reduction <add>, %93, %cst_72 [1, 2] : vector<1x8x128xf32> to vector<1xf32>
    %95 = vector.shape_cast %94 : vector<1xf32> to vector<1x1x1xf32>
    %96 = vector.extract %95[0, 0, 0] : f32 from vector<1x1x1xf32>
    %cst_73 = arith.constant 1.000000e-24 : f32
    %97 = arith.maximumf %96, %cst_73 : f32
    %98 = math.rsqrt %97 : f32
    %99 = vector.broadcast %98 : f32 to vector<8x128xf32>
    %100 = arith.mulf %91, %99 : vector<8x128xf32>
    %c0_74 = arith.constant 0 : index
    %c0_75 = arith.constant 0 : index
    %c0_76 = arith.constant 0 : index
    %c0_77 = arith.constant 0 : index
    %101 = vector.load %arg10[%c0_74, %c0_75, %c0_76, %c0_77] : memref<1x2x8x128xf32, #tpu.memory_space<vmem>>, vector<1x1x8x128xf32>
    %102 = vector.shape_cast %101 : vector<1x1x8x128xf32> to vector<8x128xf32>
    %103 = vector.shape_cast %100 : vector<8x128xf32> to vector<1x1x8x128xf32>
    tpu.vector_store %arg10[%c0_74, %c0_75, %c0_76, %c0_77], %103 {strides = array<i32>} : memref<1x2x8x128xf32, #tpu.memory_space<vmem>>, vector<1x1x8x128xf32>,
    %104 = vector.extract_strided_slice %89 {offsets = [128, 0], sizes = [128, 8], strides = [1, 1]} : vector<256x8xf32> to vector<128x8xf32>
    %105 = tpu.transpose %104, [1, 0] : vector<128x8xf32> -> vector<8x128xf32>
    %106 = arith.mulf %105, %105 : vector<8x128xf32>
    %107 = vector.shape_cast %106 : vector<8x128xf32> to vector<1x8x128xf32>
    %cst_78 = arith.constant dense<0.000000e+00> : vector<1xf32>
    %108 = vector.multi_reduction <add>, %107, %cst_78 [1, 2] : vector<1x8x128xf32> to vector<1xf32>
    %109 = vector.shape_cast %108 : vector<1xf32> to vector<1x1x1xf32>
    %110 = vector.extract %109[0, 0, 0] : f32 from vector<1x1x1xf32>
    %cst_79 = arith.constant 1.000000e-24 : f32
    %111 = arith.maximumf %110, %cst_79 : f32
    %112 = math.rsqrt %111 : f32
    %113 = vector.broadcast %112 : f32 to vector<8x128xf32>
    %114 = arith.mulf %105, %113 : vector<8x128xf32>
    %c0_80 = arith.constant 0 : index
    %c1_81 = arith.constant 1 : index
    %c0_82 = arith.constant 0 : index
    %c0_83 = arith.constant 0 : index
    %115 = vector.load %arg10[%c0_80, %c1_81, %c0_82, %c0_83] : memref<1x2x8x128xf32, #tpu.memory_space<vmem>>, vector<1x1x8x128xf32>
    %116 = vector.shape_cast %115 : vector<1x1x8x128xf32> to vector<8x128xf32>
    %117 = vector.shape_cast %114 : vector<8x128xf32> to vector<1x1x8x128xf32>
    tpu.vector_store %arg10[%c0_80, %c1_81, %c0_82, %c0_83], %117 {strides = array<i32>} : memref<1x2x8x128xf32, #tpu.memory_space<vmem>>, vector<1x1x8x128xf32>,
    return
  }
  func.func @transform_0(%arg0: i32) -> (i32, i32, i32, i32) {
    %c0_i32 = arith.constant 0 : i32
    %c0_i32_0 = arith.constant 0 : i32
    %c0_i32_1 = arith.constant 0 : i32
    %c0_i32_2 = arith.constant 0 : i32
    return %arg0, %c0_i32, %c0_i32_0, %c0_i32_1 : i32, i32, i32, i32
  }
  func.func @transform_1(%arg0: i32) -> (i32, i32, i32) {
    %c0_i32 = arith.constant 0 : i32
    %c0_i32_0 = arith.constant 0 : i32
    %c0_i32_1 = arith.constant 0 : i32
    return %arg0, %c0_i32, %c0_i32_0 : i32, i32, i32
  }
  func.func @transform_2(%arg0: i32) -> (i32, i32, i32) {
    %c0_i32 = arith.constant 0 : i32
    %c0_i32_0 = arith.constant 0 : i32
    %c0_i32_1 = arith.constant 0 : i32
    return %arg0, %c0_i32, %c0_i32_0 : i32, i32, i32
  }
  func.func @transform_3(%arg0: i32) -> (i32, i32, i32) {
    %c0_i32 = arith.constant 0 : i32
    %c0_i32_0 = arith.constant 0 : i32
    %c0_i32_1 = arith.constant 0 : i32
    return %arg0, %c0_i32, %c0_i32_0 : i32, i32, i32
  }
  func.func @transform_4(%arg0: i32) -> (i32, i32, i32) {
    %c0_i32 = arith.constant 0 : i32
    %c0_i32_0 = arith.constant 0 : i32
    %c0_i32_1 = arith.constant 0 : i32
    return %arg0, %c0_i32, %c0_i32_0 : i32, i32, i32
  }
  func.func @transform_6(%arg0: i32) -> (i32, i32, i32) {
    %c0_i32 = arith.constant 0 : i32
    %c0_i32_0 = arith.constant 0 : i32
    %c0_i32_1 = arith.constant 0 : i32
    return %arg0, %c0_i32, %c0_i32_0 : i32, i32, i32
  }
  func.func @transform_7(%arg0: i32) -> (i32, i32, i32) {
    %c0_i32 = arith.constant 0 : i32
    %c0_i32_0 = arith.constant 0 : i32
    %c0_i32_1 = arith.constant 0 : i32
    return %arg0, %c0_i32, %c0_i32_0 : i32, i32, i32
  }
  func.func @transform_8(%arg0: i32) -> (i32, i32, i32) {
    %c0_i32 = arith.constant 0 : i32
    %c0_i32_0 = arith.constant 0 : i32
    %c0_i32_1 = arith.constant 0 : i32
    return %arg0, %c0_i32, %c0_i32_0 : i32, i32, i32
  }
  func.func @transform_9(%arg0: i32) -> (i32, i32, i32, i32) {
    %c0_i32 = arith.constant 0 : i32
    %c0_i32_0 = arith.constant 0 : i32
    %c0_i32_1 = arith.constant 0 : i32
    %c0_i32_2 = arith.constant 0 : i32
    return %arg0, %c0_i32, %c0_i32_0, %c0_i32_1 : i32, i32, i32, i32
  }
}

</mosaic_0001>

<llo_original>
// kernel: two_view_forward.1
$region0: #{two_view_forward.1}
  #allocation0 [shape = 'u32[]', space=smem, size = 0x4, offset = 0x4, fixed_abs, tag = 'smem constant byte address 0x4 - core index']
  #allocation1 [shape = 'u32[144,128]{1,0:T(1,128)}', space=vmem, size = 0x12000, scoped, tag = 'internal scratch']
  #allocation2 [shape = 'bf16[256,256]{1,0:T(16,128)(2,1)}', space=vmem, size = 0x20000, scoped, tag = 'scratch operand']
  #allocation3 [shape = 'bf16[1024,256]{1,0:T(16,128)(2,1)}', space=vmem, size = 0x80000, scoped, tag = 'scratch operand']
  #allocation4 [shape = 'f32[256,256]{1,0:T(8,128)}', space=vmem, size = 0x40000, scoped, tag = 'scratch operand']
  #allocation5 [shape = 's32[1]{0}', space=sflag, size = 0x4, scoped, tag = 'scratch operand']
  #allocation8 [shape = 's32[]', space=sflag, size = 0x4, offset = 0, fixed_abs, tag = 'sflag constant byte address 0x0 - dummy sync flag']
  %s0 = inlined_call_operand.vmem [shape: f32[2,2,8,256], index: 0, kind: input, shape index: {}]
  %s1 = inlined_call_operand.vmem [shape: f32[2,128,8], index: 1, kind: input, shape index: {}]
  %s2 = inlined_call_operand.vmem [shape: f32[2,128,1], index: 2, kind: input, shape index: {}]
  %s3 = inlined_call_operand.hbm [shape: bf16[2,256,1024], index: 3, kind: input, shape index: {}]
  %s4 = inlined_call_operand.vmem [shape: f32[2,1,1024], index: 4, kind: input, shape index: {}]
  %s5 = inlined_call_operand.hbm [shape: bf16[2,1024,256], index: 5, kind: input, shape index: {}]
  %s6 = inlined_call_operand.vmem [shape: f32[2,1,256], index: 6, kind: input, shape index: {}]
  %s7 = inlined_call_operand.vmem [shape: bf16[2,256,8], index: 7, kind: input, shape index: {}]
  %s8 = inlined_call_operand.vmem [shape: f32[2,1,8], index: 8, kind: input, shape index: {}]
  %s9 = inlined_call_operand.vmem [shape: f32[2,2,8,128], index: 9, kind: output, shape index: {}]
  %s10 = sld [smem:[#allocation0]]
  $region69: #{two_view_forward.1} parent=0
    _
  %s12 = ssub.s32 1, %s10
  %s13 = scalar_select 0, %s12, %s10
  $region1: #{two_view_forward.1} parent=0
    #allocation6 [shape = 'u8[1048576]{0}', space=vmem, size = 0x100000, scoped, tag = 'input window, operand 3']
    #allocation7 [shape = 's32[2]{0}', space=sflag, size = 0x8, scoped, tag = 'scoped memory for two_view_forward.1']
    %14 = vsyncpa [#allocation7], 0
    %s15 = scalar_lea.sflag [#allocation7], 1
    %16 = vsyncpa %s15, 0
    loop: start=0, step=1, limit=4
    $region2: #{two_view_forward.1} parent=1 // loop_pre_header
      _
    $region3: #{two_view_forward.1} parent=1 // loop_header
      %s18 = sphi 0, %s22
      %p19 = scmp.ge.s32.totalorder %s18, 4
      %s28 = sphi 0, %s30
      %s31 = sphi 0, %s28
      %s32 = sphi 0, %s31
      %s48 = sphi 0, %s32
      %s54 = sphi 0, %s56
      %s57 = sphi 0, %s54
      %s58 = sphi 0, %s57
      %s74 = sphi 0, %s58
      %s80 = sphi 0, %s82
      %s83 = sphi 0, %s80
      %s84 = sphi 0, %s83
      %s100 = sphi 0, %s84
      %s106 = sphi 0, %s108
      %s109 = sphi 0, %s106
      %s110 = sphi 0, %s109
      %s126 = sphi 0, %s110
      %s132 = sphi 0, %s134
      %s135 = sphi 0, %s132
      %s136 = sphi 0, %s135
      %s152 = sphi 0, %s136
      %s158 = sphi 0, %s160
      %s161 = sphi 0, %s158
      %s162 = sphi 0, %s161
      %s178 = sphi 0, %s162
      %s184 = sphi 0, %s186
      %s187 = sphi 0, %s184
      %s188 = sphi 0, %s187
      %s204 = sphi 0, %s188
      %s210 = sphi 0, %s212
      %s213 = sphi 0, %s210
      %s214 = sphi 0, %s213
      %s230 = sphi 0, %s214
      %s236 = sphi 0, %s238
      %s239 = sphi 0, %s236
      %s240 = sphi 0, %s239
      %s256 = sphi 0, %s240
    $region4: #{two_view_forward.1} parent=1 // loop_header_branch
      %21 = sbr.rel (%p19) target = $region8
    $region5: #{two_view_forward.1} parent=1 // loop_body
      %s23 = ssub.s32 %s18, 1
      %s24 = ssub.s32 %s18, 2
      %s25 = sadd.s32 %s18, 1
      %s26 = ssub.s32 %s18, %s25
      %p27 = scmp.eq.s32.totalorder %s26, 0
      %s29 = sadd.s32 %s28, 1
      %s30 = scalar_select %p27, %s28, %s29
      %p33 = pneg %p27
      %p34 = scmp.eq.s32.totalorder %s18, 1
      %p35 = por %p33, %p34
      %p36 = scmp.ne.s32.totalorder %s28, %s31
      %p37 = scmp.eq.s32.totalorder %s18, 0
      %p38 = por %p36, %p37
      %p39 = scmp.ne.s32.totalorder %s28, %s31
      %p40 = scmp.eq.s32.totalorder %s23, 1
      %p41 = por %p39, %p40
      %p42 = scmp.ne.s32.totalorder %s31, %s32
      %p43 = scmp.eq.s32.totalorder %s23, 0
      %p44 = por %p42, %p43
      %p45 = scmp.ne.s32.totalorder %s31, %s32
      %p46 = scmp.eq.s32.totalorder %s24, 1
      %p47 = por %p45, %p46
      %p49 = scmp.ne.s32.totalorder %s32, %s48
      %p50 = scmp.eq.s32.totalorder %s24, 0
      %p51 = por %p49, %p50
      %s52 = ssub.s32 %s18, %s25
      %p53 = scmp.eq.s32.totalorder %s52, 0
      %s55 = sadd.s32 %s54, 1
      %s56 = scalar_select %p53, %s54, %s55
      %p59 = pneg %p53
      %p60 = scmp.eq.s32.totalorder %s18, 1
      %p61 = por %p59, %p60
      %p62 = scmp.ne.s32.totalorder %s54, %s57
      %p63 = scmp.eq.s32.totalorder %s18, 0
      %p64 = por %p62, %p63
      %p65 = scmp.ne.s32.totalorder %s54, %s57
      %p66 = scmp.eq.s32.totalorder %s23, 1
      %p67 = por %p65, %p66
      %p68 = scmp.ne.s32.totalorder %s57, %s58
      %p69 = scmp.eq.s32.totalorder %s23, 0
      %p70 = por %p68, %p69
      %p71 = scmp.ne.s32.totalorder %s57, %s58
      %p72 = scmp.eq.s32.totalorder %s24, 1
      %p73 = por %p71, %p72
      %p75 = scmp.ne.s32.totalorder %s58, %s74
      %p76 = scmp.eq.s32.totalorder %s24, 0
      %p77 = por %p75, %p76
      %s78 = ssub.s32 %s18, %s25
      %p79 = scmp.eq.s32.totalorder %s78, 0
      %s81 = sadd.s32 %s80, 1
      %s82 = scalar_select %p79, %s80, %s81
      %p85 = pneg %p79
      %p86 = scmp.eq.s32.totalorder %s18, 1
      %p87 = por %p85, %p86
      %p88 = scmp.ne.s32.totalorder %s80, %s83
      %p89 = scmp.eq.s32.totalorder %s18, 0
      %p90 = por %p88, %p89
      %p91 = scmp.ne.s32.totalorder %s80, %s83
      %p92 = scmp.eq.s32.totalorder %s23, 1
      %p93 = por %p91, %p92
      %p94 = scmp.ne.s32.totalorder %s83, %s84
      %p95 = scmp.eq.s32.totalorder %s23, 0
      %p96 = por %p94, %p95
      %p97 = scmp.ne.s32.totalorder %s83, %s84
      %p98 = scmp.eq.s32.totalorder %s24, 1
      %p99 = por %p97, %p98
      %p101 = scmp.ne.s32.totalorder %s84, %s100
      %p102 = scmp.eq.s32.totalorder %s24, 0
      %p103 = por %p101, %p102
      %s104 = ssub.s32 %s18, %s25
      %p105 = scmp.eq.s32.totalorder %s104, 0
      %s107 = sadd.s32 %s106, 1
      %s108 = scalar_select %p105, %s106, %s107
      %p111 = pneg %p105
      %p112 = scmp.eq.s32.totalorder %s18, 1
      %p113 = por %p111, %p112
      %p114 = scmp.ne.s32.totalorder %s106, %s109
      %p115 = scmp.eq.s32.totalorder %s18, 0
      %p116 = por %p114, %p115
      %p117 = scmp.ne.s32.totalorder %s106, %s109
      %p118 = scmp.eq.s32.totalorder %s23, 1
      %p119 = por %p117, %p118
      %p120 = scmp.ne.s32.totalorder %s109, %s110
      %p121 = scmp.eq.s32.totalorder %s23, 0
      %p122 = por %p120, %p121
      %p123 = scmp.ne.s32.totalorder %s109, %s110
      %p124 = scmp.eq.s32.totalorder %s24, 1
      %p125 = por %p123, %p124
      %p127 = scmp.ne.s32.totalorder %s110, %s126
      %p128 = scmp.eq.s32.totalorder %s24, 0
      %p129 = por %p127, %p128
      %s130 = ssub.s32 %s18, %s25
      %p131 = scmp.eq.s32.totalorder %s130, 0
      %s133 = sadd.s32 %s132, 1
      %s134 = scalar_select %p131, %s132, %s133
      %p137 = pneg %p131
      %p138 = scmp.eq.s32.totalorder %s18, 1
      %p139 = por %p137, %p138
      %p140 = scmp.ne.s32.totalorder %s132, %s135
      %p141 = scmp.eq.s32.totalorder %s18, 0
      %p142 = por %p140, %p141
      %p143 = scmp.ne.s32.totalorder %s132, %s135
      %p144 = scmp.eq.s32.totalorder %s23, 1
      %p145 = por %p143, %p144
      %p146 = scmp.ne.s32.totalorder %s135, %s136
      %p147 = scmp.eq.s32.totalorder %s23, 0
      %p148 = por %p146, %p147
      %p149 = scmp.ne.s32.totalorder %s135, %s136
      %p150 = scmp.eq.s32.totalorder %s24, 1
      %p151 = por %p149, %p150
      %p153 = scmp.ne.s32.totalorder %s136, %s152
      %p154 = scmp.eq.s32.totalorder %s24, 0
      %p155 = por %p153, %p154
      %s156 = ssub.s32 %s18, %s25
      %p157 = scmp.eq.s32.totalorder %s156, 0
      %s159 = sadd.s32 %s158, 1
      %s160 = scalar_select %p157, %s158, %s159
      %p163 = pneg %p157
      %p164 = scmp.eq.s32.totalorder %s18, 1
      %p165 = por %p163, %p164
      %p166 = scmp.ne.s32.totalorder %s158, %s161
      %p167 = scmp.eq.s32.totalorder %s18, 0
      %p168 = por %p166, %p167
      %p169 = scmp.ne.s32.totalorder %s158, %s161
      %p170 = scmp.eq.s32.totalorder %s23, 1
      %p171 = por %p169, %p170
      %p172 = scmp.ne.s32.totalorder %s161, %s162
      %p173 = scmp.eq.s32.totalorder %s23, 0
      %p174 = por %p172, %p173
      %p175 = scmp.ne.s32.totalorder %s161, %s162
      %p176 = scmp.eq.s32.totalorder %s24, 1
      %p177 = por %p175, %p176
      %p179 = scmp.ne.s32.totalorder %s162, %s178
      %p180 = scmp.eq.s32.totalorder %s24, 0
      %p181 = por %p179, %p180
      %s182 = ssub.s32 %s18, %s25
      %p183 = scmp.eq.s32.totalorder %s182, 0
      %s185 = sadd.s32 %s184, 1
      %s186 = scalar_select %p183, %s184, %s185
      %p189 = pneg %p183
      %p190 = scmp.eq.s32.totalorder %s18, 1
      %p191 = por %p189, %p190
      %p192 = scmp.ne.s32.totalorder %s184, %s187
      %p193 = scmp.eq.s32.totalorder %s18, 0
      %p194 = por %p192, %p193
      %p195 = scmp.ne.s32.totalorder %s184, %s187
      %p196 = scmp.eq.s32.totalorder %s23, 1
      %p197 = por %p195, %p196
      %p198 = scmp.ne.s32.totalorder %s187, %s188
      %p199 = scmp.eq.s32.totalorder %s23, 0
      %p200 = por %p198, %p199
      %p201 = scmp.ne.s32.totalorder %s187, %s188
      %p202 = scmp.eq.s32.totalorder %s24, 1
      %p203 = por %p201, %p202
      %p205 = scmp.ne.s32.totalorder %s188, %s204
      %p206 = scmp.eq.s32.totalorder %s24, 0
      %p207 = por %p205, %p206
      %s208 = ssub.s32 %s18, %s25
      %p209 = scmp.eq.s32.totalorder %s208, 0
      %s211 = sadd.s32 %s210, 1
      %s212 = scalar_select %p209, %s210, %s211
      %p215 = pneg %p209
      %p216 = scmp.eq.s32.totalorder %s18, 1
      %p217 = por %p215, %p216
      %p218 = scmp.ne.s32.totalorder %s210, %s213
      %p219 = scmp.eq.s32.totalorder %s18, 0
      %p220 = por %p218, %p219
      %p221 = scmp.ne.s32.totalorder %s210, %s213
      %p222 = scmp.eq.s32.totalorder %s23, 1
      %p223 = por %p221, %p222
      %p224 = scmp.ne.s32.totalorder %s213, %s214
      %p225 = scmp.eq.s32.totalorder %s23, 0
      %p226 = por %p224, %p225
      %p227 = scmp.ne.s32.totalorder %s213, %s214
      %p228 = scmp.eq.s32.totalorder %s24, 1
      %p229 = por %p227, %p228
      %p231 = scmp.ne.s32.totalorder %s214, %s230
      %p232 = scmp.eq.s32.totalorder %s24, 0
      %p233 = por %p231, %p232
      %s234 = ssub.s32 %s18, %s25
      %p235 = scmp.eq.s32.totalorder %s234, 0
      %s237 = sadd.s32 %s236, 1
      %s238 = scalar_select %p235, %s236, %s237
      %p241 = pneg %p235
      %p242 = scmp.eq.s32.totalorder %s18, 1
      %p243 = por %p241, %p242
      %p244 = scmp.ne.s32.totalorder %s236, %s239
      %p245 = scmp.eq.s32.totalorder %s18, 0
      %p246 = por %p244, %p245
      %p247 = scmp.ne.s32.totalorder %s236, %s239
      %p248 = scmp.eq.s32.totalorder %s23, 1
      %p249 = por %p247, %p248
      %p250 = scmp.ne.s32.totalorder %s239, %s240
      %p251 = scmp.eq.s32.totalorder %s23, 0
      %p252 = por %p250, %p251
      %p253 = scmp.ne.s32.totalorder %s239, %s240
      %p254 = scmp.eq.s32.totalorder %s24, 1
      %p255 = por %p253, %p254
      %p257 = scmp.ne.s32.totalorder %s240, %s256
      %p258 = scmp.eq.s32.totalorder %s24, 0
      %p259 = por %p257, %p258
      %p260 = scmp.le.s32.totalorder 1, %s18
      %p261 = scmp.lt.s32.totalorder %s18, 3
      %p262 = pnand %p260, %p261
      %p263 = pneg %p262
      // Predicated region
      $region9: #{two_view_forward.1} parent=5 // pred_check
        _
      $region10: #{two_view_forward.1} parent=5 // pred_check_branch
        %265 = sbr.rel (%p262) target = $region12
      $region11: #{two_view_forward.1} parent=5 // pred_region
        %s266 = ssub.s32 %s18, 1
      $region12: #{two_view_forward.1} parent=5 // pred_fallthru
        _
      %p267 = scmp.lt.s32.totalorder %s18, 2
      // Predicated region
      $region13: #{two_view_forward.1} parent=5 // pred_check
        %p268 = pneg %p267
      $region14: #{two_view_forward.1} parent=5 // pred_check_branch
        %270 = sbr.rel (%p268) target = $region16
      $region15: #{two_view_forward.1} parent=5 // pred_region
        // Predicated region
        $region17: #{two_view_forward.1} parent=15 // pred_check
          %p271 = pneg %p38
        $region18: #{two_view_forward.1} parent=15 // pred_check_branch
          %273 = sbr.rel (%p271) target = $region20
        $region19: #{two_view_forward.1} parent=15 // pred_region
          %p274 = scmp.lt.s32.totalorder %s18, 1
          %s275 = scalar_select %p274, %s18, 1
          %s276 = smul.addr %s275, 4
          %s277 = smul.addr %s276, 8
          %s278 = scalar_lea.vmem %s0, %s277
        $region20: #{two_view_forward.1} parent=15 // pred_fallthru
          _
        // Predicated region
        $region21: #{two_view_forward.1} parent=15 // pred_check
          %p279 = pneg %p64
        $region22: #{two_view_forward.1} parent=15 // pred_check_branch
          %281 = sbr.rel (%p279) target = $region24
        $region23: #{two_view_forward.1} parent=15 // pred_region
          %p282 = scmp.lt.s32.totalorder %s18, 1
          %s283 = scalar_select %p282, %s18, 1
          %s284 = smul.addr %s283, 16
          %s285 = smul.addr %s284, 8
          %s286 = scalar_lea.vmem %s1, %s285
        $region24: #{two_view_forward.1} parent=15 // pred_fallthru
          _
        // Predicated region
        $region25: #{two_view_forward.1} parent=15 // pred_check
          %p287 = pneg %p90
        $region26: #{two_view_forward.1} parent=15 // pred_check_branch
          %289 = sbr.rel (%p287) target = $region28
        $region27: #{two_view_forward.1} parent=15 // pred_region
          %p290 = scmp.lt.s32.totalorder %s18, 1
          %s291 = scalar_select %p290, %s18, 1
          %s292 = smul.addr %s291, 16
          %s293 = smul.addr %s292, 8
          %s294 = scalar_lea.vmem %s2, %s293
        $region28: #{two_view_forward.1} parent=15 // pred_fallthru
          _
        // Predicated region
        $region29: #{two_view_forward.1} parent=15 // pred_check
          %p295 = pneg %p116
        $region30: #{two_view_forward.1} parent=15 // pred_check_branch
          %297 = sbr.rel (%p295) target = $region32
        $region31: #{two_view_forward.1} parent=15 // pred_region
          %s298 = sand.u32 %s106, 1
          %s299 = scalar_lea.sflag [#allocation7], %s298
          %s300 = sand.u32 %s106, 1
          %s301 = smul.addr %s300, 1024
          %s302 = scalar_lea.vmem [#allocation6], %s301
          %s304 = ssub.s32 16384, 16384
          %305 = vsyncadd %s299, %s304
          %s306 = smul.addr %s18, 256
          %s307 = smul.addr %s306, 64
          %s308 = scalar_lea.hbm %s3, %s307
          %s309 = sshll.u32 %s302, 4
          %s310 = int_to_ptr.vmem [resolvable:$true] %s309
          %315 = dma.hbm_to_vmem [thread:$0]  %s308, 16384, %s310, %s299, 512, 512, 32
        $region32: #{two_view_forward.1} parent=15 // pred_fallthru
          _
        // Predicated region
        $region33: #{two_view_forward.1} parent=15 // pred_check
          %p316 = pneg %p142
        $region34: #{two_view_forward.1} parent=15 // pred_check_branch
          %318 = sbr.rel (%p316) target = $region36
        $region35: #{two_view_forward.1} parent=15 // pred_region
          %p319 = scmp.lt.s32.totalorder %s18, 1
          %s320 = scalar_select %p319, %s18, 1
          %s321 = smul.addr %s320, 8
          %s322 = scalar_lea.vmem %s4, %s321
        $region36: #{two_view_forward.1} parent=15 // pred_fallthru
          _
        // Predicated region
        $region37: #{two_view_forward.1} parent=15 // pred_check
          %p323 = pneg %p168
        $region38: #{two_view_forward.1} parent=15 // pred_check_branch
          %325 = sbr.rel (%p323) target = $region40
        $region39: #{two_view_forward.1} parent=15 // pred_region
          %p326 = scmp.lt.s32.totalorder %s18, 1
          %s327 = scalar_select %p326, %s18, 1
          %s328 = smul.addr %s327, 2
          %s329 = scalar_lea.vmem %s6, %s328
        $region40: #{two_view_forward.1} parent=15 // pred_fallthru
          _
        // Predicated region
        $region41: #{two_view_forward.1} parent=15 // pred_check
          %p330 = pneg %p194
        $region42: #{two_view_forward.1} parent=15 // pred_check_branch
          %332 = sbr.rel (%p330) target = $region44
        $region43: #{two_view_forward.1} parent=15 // pred_region
          %p333 = scmp.lt.s32.totalorder %s18, 1
          %s334 = scalar_select %p333, %s18, 1
          %s335 = smul.addr %s334, 32
          %s336 = smul.addr %s335, 4
          %s337 = scalar_lea.vmem %s7, %s336
        $region44: #{two_view_forward.1} parent=15 // pred_fallthru
          _
        // Predicated region
        $region45: #{two_view_forward.1} parent=15 // pred_check
          %p338 = pneg %p220
        $region46: #{two_view_forward.1} parent=15 // pred_check_branch
          %340 = sbr.rel (%p338) target = $region48
        $region47: #{two_view_forward.1} parent=15 // pred_region
          %p341 = scmp.lt.s32.totalorder %s18, 1
          %s342 = scalar_select %p341, %s18, 1
          %s343 = scalar_lea.vmem %s8, %s342
        $region48: #{two_view_forward.1} parent=15 // pred_fallthru
          _
      $region16: #{two_view_forward.1} parent=5 // pred_fallthru
        _
      %p344 = scmp.le.s32.totalorder 1, %s18
      %p345 = scmp.lt.s32.totalorder %s18, 3
      %p346 = pnand %p344, %p345
      %p347 = pneg %p346
      // Predicated region
      $region49: #{two_view_forward.1} parent=5 // pred_check
        _
      $region50: #{two_view_forward.1} parent=5 // pred_check_branch
        %349 = sbr.rel (%p346) target = $region52
      $region51: #{two_view_forward.1} parent=5 // pred_region
        #allocation9 [shape = 'u32[9]{0}', space=smem, size = 0x24, scoped, tag = 'DMA stride descriptor']
        %s350 = ssub.s32 %s18, 1
        %s351 = sand.u32 %s109, 1
        %s352 = scalar_lea.sflag [#allocation7], %s351
        %s353 = sand.u32 %s109, 1
        %s354 = smul.addr %s353, 1024
        %s355 = scalar_lea.vmem [#allocation6], %s354
        // Predicated region
        $region53: #{two_view_forward.1} parent=51 // pred_check
          %p356 = pneg %p122
        $region54: #{two_view_forward.1} parent=51 // pred_check_branch
          %358 = sbr.rel (%p356) target = $region56
        $region55: #{two_view_forward.1} parent=51 // pred_region
          %359 = dma.done %s352, 16384
        $region56: #{two_view_forward.1} parent=51 // pred_fallthru
          _
        %p360 = scmp.lt.s32.totalorder %s23, 1
        %s361 = scalar_select %p360, %s23, 1
        %s362 = smul.addr %s361, 4
        %s363 = smul.addr %s362, 8
        %s364 = scalar_lea.vmem %s0, %s363
        %p365 = pneg %p44
        %p366 = pneg %p41
        %p367 = scmp.lt.s32.totalorder %s23, 1
        %s368 = scalar_select %p367, %s23, 1
        %s369 = smul.addr %s368, 16
        %s370 = smul.addr %s369, 8
        %s371 = scalar_lea.vmem %s1, %s370
        %p372 = pneg %p70
        %p373 = pneg %p67
        %p374 = scmp.lt.s32.totalorder %s23, 1
        %s375 = scalar_select %p374, %s23, 1
        %s376 = smul.addr %s375, 16
        %s377 = smul.addr %s376, 8
        %s378 = scalar_lea.vmem %s2, %s377
        %p379 = pneg %p96
        %p380 = pneg %p93
        %s381 = sand.u32 %s109, 1
        %s382 = scalar_lea.sflag [#allocation7], %s381
        %s383 = sand.u32 %s109, 1
        %s384 = smul.addr %s383, 1024
        %s385 = scalar_lea.vmem [#allocation6], %s384
        %p386 = pneg %p122
        %p387 = pneg %p119
        %p388 = scmp.lt.s32.totalorder %s23, 1
        %s389 = scalar_select %p388, %s23, 1
        %s390 = smul.addr %s389, 8
        %s391 = scalar_lea.vmem %s4, %s390
        %p392 = pneg %p148
        %p393 = pneg %p145
        %p394 = scmp.lt.s32.totalorder %s23, 1
        %s395 = scalar_select %p394, %s23, 1
        %s396 = smul.addr %s395, 2
        %s397 = scalar_lea.vmem %s6, %s396
        %p398 = pneg %p174
        %p399 = pneg %p171
        %p400 = scmp.lt.s32.totalorder %s23, 1
        %s401 = scalar_select %p400, %s23, 1
        %s402 = smul.addr %s401, 32
        %s403 = smul.addr %s402, 4
        %s404 = scalar_lea.vmem %s7, %s403
        %p405 = pneg %p200
        %p406 = pneg %p197
        %p407 = scmp.lt.s32.totalorder %s23, 1
        %s408 = scalar_select %p407, %s23, 1
        %s409 = scalar_lea.vmem %s8, %s408
        %p410 = pneg %p226
        %p411 = pneg %p223
        %p412 = pneg %p252
        %p413 = pneg %p249
        %p414 = scmp.lt.s32.totalorder %s23, 1
        %s415 = scalar_select %p414, %s23, 1
        %s416 = smul.addr %s415, 2
        %s417 = smul.addr %s416, 8
        %s418 = scalar_lea.vmem %s9, %s417
        %p419 = scmp.lt.s32.totalorder %s23, 1
        %s420 = scalar_select %p419, %s23, 1
        %s421 = smul.addr %s420, 4
        %s422 = smul.addr %s421, 8
        %s423 = scalar_lea.vmem %s0, %s422
        %p424 = scmp.lt.s32.totalorder %s23, 1
        %s425 = scalar_select %p424, %s23, 1
        %s426 = smul.addr %s425, 16
        %s427 = smul.addr %s426, 8
        %s428 = scalar_lea.vmem %s1, %s427
        %p429 = scmp.lt.s32.totalorder %s23, 1
        %s430 = scalar_select %p429, %s23, 1
        %s431 = smul.addr %s430, 16
        %s432 = smul.addr %s431, 8
        %s433 = scalar_lea.vmem %s2, %s432
        %p434 = scmp.lt.s32.totalorder %s23, 1
        %s435 = scalar_select %p434, %s23, 1
        %s436 = smul.addr %s435, 8
        %s437 = scalar_lea.vmem %s4, %s436
        %p438 = scmp.lt.s32.totalorder %s23, 1
        %s439 = scalar_select %p438, %s23, 1
        %s440 = smul.addr %s439, 2
        %s441 = scalar_lea.vmem %s6, %s440
        %p442 = scmp.lt.s32.totalorder %s23, 1
        %s443 = scalar_select %p442, %s23, 1
        %s444 = smul.addr %s443, 32
        %s445 = smul.addr %s444, 4
        %s446 = scalar_lea.vmem %s7, %s445
        %p447 = scmp.lt.s32.totalorder %s23, 1
        %s448 = scalar_select %p447, %s23, 1
        %s449 = scalar_lea.vmem %s8, %s448
        %p450 = scmp.lt.s32.totalorder %s23, 1
        %s451 = scalar_select %p450, %s23, 1
        %s452 = smul.addr %s451, 2
        %s453 = smul.addr %s452, 8
        %s454 = scalar_lea.vmem %s9, %s453
        %s456 = smul.u32 %s23, 256
        %s457 = smul.addr %s456, 64
        %s458 = scalar_lea.hbm %s5, %s457
        %s460 = sshll.u32 1, 14
        %s461 = sxor.u32 4294967295, %s460
        %s463 = sld [smem:[#allocation0]]
        %s464 = sadd.s32 2, %s463
        %s466 = sshll.u32 7, 26
        %s467 = sxor.u32 4294967295, %s466
        %s468 = sand.u32 0, %s467
        %s469 = sshll.u32 %s464, 26
        %s470 = sor.u32 %s468, %s469
        %s471 = sshll.u32 [#allocation3], 4
        %s472 = int_to_ptr.vmem [resolvable:$true] %s471
        %475 = sst [smem:[#allocation9]] 256
        %s476 = scalar_lea.smem [#allocation9], 1
        %477 = sst [smem:[%s476]] 256
        %s478 = scalar_lea.smem [#allocation9], 2
        %479 = sst [smem:[%s478]] 2
        %s480 = scalar_lea.smem [#allocation9], 3
        %481 = sst [smem:[%s480]] 64
        %s482 = scalar_lea.smem [#allocation9], 4
        %483 = sst [smem:[%s482]] 128
        %s484 = scalar_lea.smem [#allocation9], 5
        %485 = sst [smem:[%s484]] 2
        %s486 = scalar_lea.smem [#allocation9], 6
        %487 = sst [smem:[%s486]] 128
        %s488 = scalar_lea.smem [#allocation9], 7
        %489 = sst [smem:[%s488]] 64
        %s490 = scalar_lea.smem [#allocation9], 8
        %491 = sst [smem:[%s490]] 4
        %493 = dma.general %s458, 16384, %s472, [#allocation5], [#allocation8], [#allocation9], %s470, 0
        %v494 = vld [vmem:[%s428] sm:$0xff]
        %v495 = vld [vmem:[%s428 + $0x8] sm:$0xff]
        %v496 = vld [vmem:[%s428 + $0x10] sm:$0xff]
        %v497 = vld [vmem:[%s428 + $0x18] sm:$0xff]
        %v498 = vld [vmem:[%s428 + $0x20] sm:$0xff]
        %v499 = vld [vmem:[%s428 + $0x28] sm:$0xff]
        %v500 = vld [vmem:[%s428 + $0x30] sm:$0xff]
        %v501 = vld [vmem:[%s428 + $0x38] sm:$0xff]
        %v502 = vld [vmem:[%s428 + $0x40] sm:$0xff]
        %v503 = vld [vmem:[%s428 + $0x48] sm:$0xff]
        %v504 = vld [vmem:[%s428 + $0x50] sm:$0xff]
        %v505 = vld [vmem:[%s428 + $0x58] sm:$0xff]
        %v506 = vld [vmem:[%s428 + $0x60] sm:$0xff]
        %v507 = vld [vmem:[%s428 + $0x68] sm:$0xff]
        %v508 = vld [vmem:[%s428 + $0x70] sm:$0xff]
        %v509 = vld [vmem:[%s428 + $0x78] sm:$0xff]
        %v510 = vld [vmem:[%s423] sm:$0xff]
        %v511 = vld [vmem:[%s423 + $0x8] sm:$0xff]
        %v512 = vld [vmem:[%s433] sm:$0xff]
        %v513 = vld [vmem:[%s433 + $0x8] sm:$0xff]
        %v514 = vld [vmem:[%s433 + $0x10] sm:$0xff]
        %v515 = vld [vmem:[%s433 + $0x18] sm:$0xff]
        %v516 = vld [vmem:[%s433 + $0x20] sm:$0xff]
        %v517 = vld [vmem:[%s433 + $0x28] sm:$0xff]
        %v518 = vld [vmem:[%s433 + $0x30] sm:$0xff]
        %v519 = vld [vmem:[%s433 + $0x38] sm:$0xff]
        %v520 = vld [vmem:[%s433 + $0x40] sm:$0xff]
        %v521 = vld [vmem:[%s433 + $0x48] sm:$0xff]
        %v522 = vld [vmem:[%s433 + $0x50] sm:$0xff]
        %v523 = vld [vmem:[%s433 + $0x58] sm:$0xff]
        %v524 = vld [vmem:[%s433 + $0x60] sm:$0xff]
        %v525 = vld [vmem:[%s433 + $0x68] sm:$0xff]
        %v526 = vld [vmem:[%s433 + $0x70] sm:$0xff]
        %v527 = vld [vmem:[%s433 + $0x78] sm:$0xff]
        %529 = vset.pattern.permute.xlu0 0
        %530 = vperm.xlu0 %529, %v512
        %v531 = vpop.permute.xlu0 %530
        %534 = vset.pattern.permute.xlu0 0
        %535 = vperm.xlu0 %534, %v513
        %v536 = vpop.permute.xlu0 %535
        %539 = vset.pattern.permute.xlu0 0
        %540 = vperm.xlu0 %539, %v514
        %v541 = vpop.permute.xlu0 %540
        %544 = vset.pattern.permute.xlu0 0
        %545 = vperm.xlu0 %544, %v515
        %v546 = vpop.permute.xlu0 %545
        %549 = vset.pattern.permute.xlu0 0
        %550 = vperm.xlu0 %549, %v516
        %v551 = vpop.permute.xlu0 %550
        %554 = vset.pattern.permute.xlu0 0
        %555 = vperm.xlu0 %554, %v517
        %v556 = vpop.permute.xlu0 %555
        %559 = vset.pattern.permute.xlu0 0
        %560 = vperm.xlu0 %559, %v518
        %v561 = vpop.permute.xlu0 %560
        %564 = vset.pattern.permute.xlu0 0
        %565 = vperm.xlu0 %564, %v519
        %v566 = vpop.permute.xlu0 %565
        %569 = vset.pattern.permute.xlu0 0
        %570 = vperm.xlu0 %569, %v520
        %v571 = vpop.permute.xlu0 %570
        %574 = vset.pattern.permute.xlu0 0
        %575 = vperm.xlu0 %574, %v521
        %v576 = vpop.permute.xlu0 %575
        %579 = vset.pattern.permute.xlu0 0
        %580 = vperm.xlu0 %579, %v522
        %v581 = vpop.permute.xlu0 %580
        %584 = vset.pattern.permute.xlu0 0
        %585 = vperm.xlu0 %584, %v523
        %v586 = vpop.permute.xlu0 %585
        %589 = vset.pattern.permute.xlu0 0
        %590 = vperm.xlu0 %589, %v524
        %v591 = vpop.permute.xlu0 %590
        %594 = vset.pattern.permute.xlu0 0
        %595 = vperm.xlu0 %594, %v525
        %v596 = vpop.permute.xlu0 %595
        %599 = vset.pattern.permute.xlu0 0
        %600 = vperm.xlu0 %599, %v526
        %v601 = vpop.permute.xlu0 %600
        %604 = vset.pattern.permute.xlu0 0
        %605 = vperm.xlu0 %604, %v527
        %v606 = vpop.permute.xlu0 %605
        %vm608 = vcmask 64512
        %v610 = vsel %vm608, %v494, 0
        %v613 = vsel %vm608, %v495, 0
        %v616 = vsel %vm608, %v496, 0
        %v619 = vsel %vm608, %v497, 0
        %v622 = vsel %vm608, %v498, 0
        %v625 = vsel %vm608, %v499, 0
        %v628 = vsel %vm608, %v500, 0
        %v631 = vsel %vm608, %v501, 0
        %v634 = vsel %vm608, %v502, 0
        %v637 = vsel %vm608, %v503, 0
        %v640 = vsel %vm608, %v504, 0
        %v643 = vsel %vm608, %v505, 0
        %v646 = vsel %vm608, %v506, 0
        %v649 = vsel %vm608, %v507, 0
        %v652 = vsel %vm608, %v508, 0
        %v655 = vsel %vm608, %v509, 0
        %657 = vmatprep.subr.mxu0 %v511
        %658 = vmatpush1.msra.mxu0 %v510
        %659 = vmatprep.subr.mxu0 0.0
        %660 = vmatpush1.msra.mxu0 0.0
        %661 = vmatprep.subr.mxu0 0.0
        %662 = vmatpush1.msra.mxu0 0.0
        %663 = vmatprep.subr.mxu0 0.0
        %664 = vmatpush1.msra.mxu0 0.0
        %665 = vmatprep.subr.mxu0 0.0
        %666 = vmatpush1.msra.mxu0 0.0
        %667 = vmatprep.subr.mxu0 0.0
        %668 = vmatpush1.msra.mxu0 0.0
        %669 = vmatprep.subr.mxu0 0.0
        %670 = vmatpush1.msra.mxu0 0.0
        %671 = vmatprep.subr.mxu0 0.0
        %672 = vmatpush1.msra.mxu0 0.0
        %673 = vmatprep.subr.mxu0 0.0
        %674 = vmatpush1.msra.mxu0 0.0
        %675 = vmatprep.subr.mxu0 0.0
        %676 = vmatpush1.msra.mxu0 0.0
        %677 = vmatprep.subr.mxu0 0.0
        %678 = vmatpush1.msra.mxu0 0.0
        %679 = vmatprep.subr.mxu0 0.0
        %680 = vmatpush1.msra.mxu0 0.0
        %681 = vmatprep.subr.mxu0 0.0
        %682 = vmatpush1.msra.mxu0 0.0
        %683 = vmatprep.subr.mxu0 0.0
        %684 = vmatpush1.msra.mxu0 0.0
        %685 = vmatprep.subr.mxu0 0.0
        %686 = vmatpush1.msra.mxu0 0.0
        %687 = vmatprep.subr.mxu0 0.0
        %688 = vmatpush1.msra.mxu0 0.0
        %689 = vmatprep.subr.mxu0 0.0
        %690 = vmatpush1.msra.mxu0 0.0
        %691 = vmatprep.subr.mxu0 0.0
        %692 = vmatpush1.msra.mxu0 0.0
        %693 = vmatprep.subr.mxu0 0.0
        %694 = vmatpush1.msra.mxu0 0.0
        %695 = vmatprep.subr.mxu0 0.0
        %696 = vmatpush1.msra.mxu0 0.0
        %697 = vmatprep.subr.mxu0 0.0
        %698 = vmatpush1.msra.mxu0 0.0
        %699 = vmatprep.subr.mxu0 0.0
        %700 = vmatpush1.msra.mxu0 0.0
        %701 = vmatprep.subr.mxu0 0.0
        %702 = vmatpush1.msra.mxu0 0.0
        %703 = vmatprep.subr.mxu0 0.0
        %704 = vmatpush1.msra.mxu0 0.0
        %705 = vmatprep.subr.mxu0 0.0
        %706 = vmatpush1.msra.mxu0 0.0
        %707 = vmatprep.subr.mxu0 0.0
        %708 = vmatpush1.msra.mxu0 0.0
        %709 = vmatprep.subr.mxu0 0.0
        %710 = vmatpush1.msra.mxu0 0.0
        %711 = vmatprep.subr.mxu0 0.0
        %712 = vmatpush1.msra.mxu0 0.0
        %713 = vmatprep.subr.mxu0 0.0
        %714 = vmatpush1.msra.mxu0 0.0
        %715 = vmatprep.subr.mxu0 0.0
        %716 = vmatpush1.msra.mxu0 0.0
        %717 = vmatprep.subr.mxu0 0.0
        %718 = vmatpush1.msra.mxu0 0.0
        %719 = vmatprep.subr.mxu0 0.0
        %720 = vmatpush1.msra.mxu0 0.0
        %721 = vmatprep.mubr.f32.mxu0 0.0
        %722 = vmatmul.mubr.f32.gmra.mrb[0].mxu0 %v610
        %v723 = vpop.f32.mrb[0].mxu0
        %v724 = vadd.f32 %v531, %v723
        %v725 = vpop.f32.mrb[0].mxu0
        %v726 = vadd.f32 %v531, %v725
        %727 = vmatprep.mubr.f32.mxu0 0.0
        %728 = vmatmul.mubr.f32.gmra.mrb[0].mxu0 %v613
        %v729 = vpop.f32.mrb[0].mxu0
        %v730 = vadd.f32 %v536, %v729
        %v731 = vpop.f32.mrb[0].mxu0
        %v732 = vadd.f32 %v536, %v731
        %733 = vmatprep.mubr.f32.mxu0 0.0
        %734 = vmatmul.mubr.f32.gmra.mrb[0].mxu0 %v616
        %v735 = vpop.f32.mrb[0].mxu0
        %v736 = vadd.f32 %v541, %v735
        %v737 = vpop.f32.mrb[0].mxu0
        %v738 = vadd.f32 %v541, %v737
        %739 = vmatprep.mubr.f32.mxu0 0.0
        %740 = vmatmul.mubr.f32.gmra.mrb[0].mxu0 %v619
        %v741 = vpop.f32.mrb[0].mxu0
        %v742 = vadd.f32 %v546, %v741
        %v743 = vpop.f32.mrb[0].mxu0
        %v744 = vadd.f32 %v546, %v743
        %745 = vmatprep.mubr.f32.mxu0 0.0
        %746 = vmatmul.mubr.f32.gmra.mrb[0].mxu0 %v622
        %v747 = vpop.f32.mrb[0].mxu0
        %v748 = vadd.f32 %v551, %v747
        %v749 = vpop.f32.mrb[0].mxu0
        %v750 = vadd.f32 %v551, %v749
        %751 = vmatprep.mubr.f32.mxu0 0.0
        %752 = vmatmul.mubr.f32.gmra.mrb[0].mxu0 %v625
        %v753 = vpop.f32.mrb[0].mxu0
        %v754 = vadd.f32 %v556, %v753
        %v755 = vpop.f32.mrb[0].mxu0
        %v756 = vadd.f32 %v556, %v755
        %757 = vmatprep.mubr.f32.mxu0 0.0
        %758 = vmatmul.mubr.f32.gmra.mrb[0].mxu0 %v628
        %v759 = vpop.f32.mrb[0].mxu0
        %v760 = vadd.f32 %v561, %v759
        %v761 = vpop.f32.mrb[0].mxu0
        %v762 = vadd.f32 %v561, %v761
        %763 = vmatprep.mubr.f32.mxu0 0.0
        %764 = vmatmul.mubr.f32.gmra.mrb[0].mxu0 %v631
        %v765 = vpop.f32.mrb[0].mxu0
        %v766 = vadd.f32 %v566, %v765
        %v767 = vpop.f32.mrb[0].mxu0
        %v768 = vadd.f32 %v566, %v767
        %769 = vmatprep.mubr.f32.mxu0 0.0
        %770 = vmatmul.mubr.f32.gmra.mrb[0].mxu0 %v634
        %v771 = vpop.f32.mrb[0].mxu0
        %v772 = vadd.f32 %v571, %v771
        %v773 = vpop.f32.mrb[0].mxu0
        %v774 = vadd.f32 %v571, %v773
        %775 = vmatprep.mubr.f32.mxu0 0.0
        %776 = vmatmul.mubr.f32.gmra.mrb[0].mxu0 %v637
        %v777 = vpop.f32.mrb[0].mxu0
        %v778 = vadd.f32 %v576, %v777
        %v779 = vpop.f32.mrb[0].mxu0
        %v780 = vadd.f32 %v576, %v779
        %781 = vmatprep.mubr.f32.mxu0 0.0
        %782 = vmatmul.mubr.f32.gmra.mrb[0].mxu0 %v640
        %v783 = vpop.f32.mrb[0].mxu0
        %v784 = vadd.f32 %v581, %v783
        %v785 = vpop.f32.mrb[0].mxu0
        %v786 = vadd.f32 %v581, %v785
        %787 = vmatprep.mubr.f32.mxu0 0.0
        %788 = vmatmul.mubr.f32.gmra.mrb[0].mxu0 %v643
        %v789 = vpop.f32.mrb[0].mxu0
        %v790 = vadd.f32 %v586, %v789
        %v791 = vpop.f32.mrb[0].mxu0
        %v792 = vadd.f32 %v586, %v791
        %793 = vmatprep.mubr.f32.mxu0 0.0
        %794 = vmatmul.mubr.f32.gmra.mrb[0].mxu0 %v646
        %v795 = vpop.f32.mrb[0].mxu0
        %v796 = vadd.f32 %v591, %v795
        %v797 = vpop.f32.mrb[0].mxu0
        %v798 = vadd.f32 %v591, %v797
        %799 = vmatprep.mubr.f32.mxu0 0.0
        %800 = vmatmul.mubr.f32.gmra.mrb[0].mxu0 %v649
        %v801 = vpop.f32.mrb[0].mxu0
        %v802 = vadd.f32 %v596, %v801
        %v803 = vpop.f32.mrb[0].mxu0
        %v804 = vadd.f32 %v596, %v803
        %805 = vmatprep.mubr.f32.mxu0 0.0
        %806 = vmatmul.mubr.f32.gmra.mrb[0].mxu0 %v652
        %v807 = vpop.f32.mrb[0].mxu0
        %v808 = vadd.f32 %v601, %v807
        %v809 = vpop.f32.mrb[0].mxu0
        %v810 = vadd.f32 %v601, %v809
        %811 = vmatprep.mubr.f32.mxu0 0.0
        %812 = vmatmul.mubr.f32.gmra.mrb[0].mxu0 %v655
        %v813 = vpop.f32.mrb[0].mxu0
        %v814 = vadd.f32 %v606, %v813
        %v815 = vpop.f32.mrb[0].mxu0
        %v816 = vadd.f32 %v606, %v815
        %817 = vdwg.mxu0
        %v818 = vpack.c.bf16 %v730, %v724
        %v819 = vpack.c.bf16 %v732, %v726
        %v820 = vpack.c.bf16 %v742, %v736
        %v821 = vpack.c.bf16 %v744, %v738
        %v822 = vpack.c.bf16 %v754, %v748
        %v823 = vpack.c.bf16 %v756, %v750
        %v824 = vpack.c.bf16 %v766, %v760
        %v825 = vpack.c.bf16 %v768, %v762
        %v826 = vpack.c.bf16 %v778, %v772
        %v827 = vpack.c.bf16 %v780, %v774
        %v828 = vpack.c.bf16 %v790, %v784
        %v829 = vpack.c.bf16 %v792, %v786
        %v830 = vpack.c.bf16 %v802, %v796
        %v831 = vpack.c.bf16 %v804, %v798
        %v832 = vpack.c.bf16 %v814, %v808
        %v833 = vpack.c.bf16 %v816, %v810
        %834 = vst [vmem:[#allocation2] sm:$0xff] %v818
        %835 = vst [vmem:[#allocation2 + $0x8] sm:$0xff] %v819
        %836 = vst [vmem:[#allocation2 + $0x10] sm:$0xff] %v820
        %837 = vst [vmem:[#allocation2 + $0x18] sm:$0xff] %v821
        %838 = vst [vmem:[#allocation2 + $0x20] sm:$0xff] %v822
        %839 = vst [vmem:[#allocation2 + $0x28] sm:$0xff] %v823
        %840 = vst [vmem:[#allocation2 + $0x30] sm:$0xff] %v824
        %841 = vst [vmem:[#allocation2 + $0x38] sm:$0xff] %v825
        %842 = vst [vmem:[#allocation2 + $0x40] sm:$0xff] %v826
        %843 = vst [vmem:[#allocation2 + $0x48] sm:$0xff] %v827
        %844 = vst [vmem:[#allocation2 + $0x50] sm:$0xff] %v828
        %845 = vst [vmem:[#allocation2 + $0x58] sm:$0xff] %v829
        %846 = vst [vmem:[#allocation2 + $0x60] sm:$0xff] %v830
        %847 = vst [vmem:[#allocation2 + $0x68] sm:$0xff] %v831
        %848 = vst [vmem:[#allocation2 + $0x70] sm:$0xff] %v832
        %849 = vst [vmem:[#allocation2 + $0x78] sm:$0xff] %v833
        %v850 = vld [vmem:[%s428] sm:$0xff]
        %v851 = vld [vmem:[%s428 + $0x8] sm:$0xff]
        %v852 = vld [vmem:[%s428 + $0x10] sm:$0xff]
        %v853 = vld [vmem:[%s428 + $0x18] sm:$0xff]
        %v854 = vld [vmem:[%s428 + $0x20] sm:$0xff]
        %v855 = vld [vmem:[%s428 + $0x28] sm:$0xff]
        %v856 = vld [vmem:[%s428 + $0x30] sm:$0xff]
        %v857 = vld [vmem:[%s428 + $0x38] sm:$0xff]
        %v858 = vld [vmem:[%s428 + $0x40] sm:$0xff]
        %v859 = vld [vmem:[%s428 + $0x48] sm:$0xff]
        %v860 = vld [vmem:[%s428 + $0x50] sm:$0xff]
        %v861 = vld [vmem:[%s428 + $0x58] sm:$0xff]
        %v862 = vld [vmem:[%s428 + $0x60] sm:$0xff]
        %v863 = vld [vmem:[%s428 + $0x68] sm:$0xff]
        %v864 = vld [vmem:[%s428 + $0x70] sm:$0xff]
        %v865 = vld [vmem:[%s428 + $0x78] sm:$0xff]
        %s866 = scalar_lea.vmem %s423, 16
        %v867 = vld [vmem:[%s866] sm:$0xff]
        %v868 = vld [vmem:[%s866 + $0x8] sm:$0xff]
        %v869 = vld [vmem:[%s433] sm:$0xff]
        %v870 = vld [vmem:[%s433 + $0x8] sm:$0xff]
        %v871 = vld [vmem:[%s433 + $0x10] sm:$0xff]
        %v872 = vld [vmem:[%s433 + $0x18] sm:$0xff]
        %v873 = vld [vmem:[%s433 + $0x20] sm:$0xff]
        %v874 = vld [vmem:[%s433 + $0x28] sm:$0xff]
        %v875 = vld [vmem:[%s433 + $0x30] sm:$0xff]
        %v876 = vld [vmem:[%s433 + $0x38] sm:$0xff]
        %v877 = vld [vmem:[%s433 + $0x40] sm:$0xff]
        %v878 = vld [vmem:[%s433 + $0x48] sm:$0xff]
        %v879 = vld [vmem:[%s433 + $0x50] sm:$0xff]
        %v880 = vld [vmem:[%s433 + $0x58] sm:$0xff]
        %v881 = vld [vmem:[%s433 + $0x60] sm:$0xff]
        %v882 = vld [vmem:[%s433 + $0x68] sm:$0xff]
        %v883 = vld [vmem:[%s433 + $0x70] sm:$0xff]
        %v884 = vld [vmem:[%s433 + $0x78] sm:$0xff]
        %886 = vset.pattern.permute.xlu0 0
        %887 = vperm.xlu0 %886, %v869
        %v888 = vpop.permute.xlu0 %887
        %891 = vset.pattern.permute.xlu0 0
        %892 = vperm.xlu0 %891, %v870
        %v893 = vpop.permute.xlu0 %892
        %896 = vset.pattern.permute.xlu0 0
        %897 = vperm.xlu0 %896, %v871
        %v898 = vpop.permute.xlu0 %897
        %901 = vset.pattern.permute.xlu0 0
        %902 = vperm.xlu0 %901, %v872
        %v903 = vpop.permute.xlu0 %902
        %906 = vset.pattern.permute.xlu0 0
        %907 = vperm.xlu0 %906, %v873
        %v908 = vpop.permute.xlu0 %907
        %911 = vset.pattern.permute.xlu0 0
        %912 = vperm.xlu0 %911, %v874
        %v913 = vpop.permute.xlu0 %912
        %916 = vset.pattern.permute.xlu0 0
        %917 = vperm.xlu0 %916, %v875
        %v918 = vpop.permute.xlu0 %917
        %921 = vset.pattern.permute.xlu0 0
        %922 = vperm.xlu0 %921, %v876
        %v923 = vpop.permute.xlu0 %922
        %926 = vset.pattern.permute.xlu0 0
        %927 = vperm.xlu0 %926, %v877
        %v928 = vpop.permute.xlu0 %927
        %931 = vset.pattern.permute.xlu0 0
        %932 = vperm.xlu0 %931, %v878
        %v933 = vpop.permute.xlu0 %932
        %936 = vset.pattern.permute.xlu0 0
        %937 = vperm.xlu0 %936, %v879
        %v938 = vpop.permute.xlu0 %937
        %941 = vset.pattern.permute.xlu0 0
        %942 = vperm.xlu0 %941, %v880
        %v943 = vpop.permute.xlu0 %942
        %946 = vset.pattern.permute.xlu0 0
        %947 = vperm.xlu0 %946, %v881
        %v948 = vpop.permute.xlu0 %947
        %951 = vset.pattern.permute.xlu0 0
        %952 = vperm.xlu0 %951, %v882
        %v953 = vpop.permute.xlu0 %952
        %956 = vset.pattern.permute.xlu0 0
        %957 = vperm.xlu0 %956, %v883
        %v958 = vpop.permute.xlu0 %957
        %961 = vset.pattern.permute.xlu0 0
        %962 = vperm.xlu0 %961, %v884
        %v963 = vpop.permute.xlu0 %962
        %v966 = vsel %vm608, %v850, 0
        %v969 = vsel %vm608, %v851, 0
        %v972 = vsel %vm608, %v852, 0
        %v975 = vsel %vm608, %v853, 0
        %v978 = vsel %vm608, %v854, 0
        %v981 = vsel %vm608, %v855, 0
        %v984 = vsel %vm608, %v856, 0
        %v987 = vsel %vm608, %v857, 0
        %v990 = vsel %vm608, %v858, 0
        %v993 = vsel %vm608, %v859, 0
        %v996 = vsel %vm608, %v860, 0
        %v999 = vsel %vm608, %v861, 0
        %v1002 = vsel %vm608, %v862, 0
        %v1005 = vsel %vm608, %v863, 0
        %v1008 = vsel %vm608, %v864, 0
        %v1011 = vsel %vm608, %v865, 0
        %1013 = vmatprep.subr.mxu0 %v868
        %1014 = vmatpush1.msra.mxu0 %v867
        %1015 = vmatprep.subr.mxu0 0.0
        %1016 = vmatpush1.msra.mxu0 0.0
        %1017 = vmatprep.subr.mxu0 0.0
        %1018 = vmatpush1.msra.mxu0 0.0
        %1019 = vmatprep.subr.mxu0 0.0
        %1020 = vmatpush1.msra.mxu0 0.0
        %1021 = vmatprep.subr.mxu0 0.0
        %1022 = vmatpush1.msra.mxu0 0.0
        %1023 = vmatprep.subr.mxu0 0.0
        %1024 = vmatpush1.msra.mxu0 0.0
        %1025 = vmatprep.subr.mxu0 0.0
        %1026 = vmatpush1.msra.mxu0 0.0
        %1027 = vmatprep.subr.mxu0 0.0
        %1028 = vmatpush1.msra.mxu0 0.0
        %1029 = vmatprep.subr.mxu0 0.0
        %1030 = vmatpush1.msra.mxu0 0.0
        %1031 = vmatprep.subr.mxu0 0.0
        %1032 = vmatpush1.msra.mxu0 0.0
        %1033 = vmatprep.subr.mxu0 0.0
        %1034 = vmatpush1.msra.mxu0 0.0
        %1035 = vmatprep.subr.mxu0 0.0
        %1036 = vmatpush1.msra.mxu0 0.0
        %1037 = vmatprep.subr.mxu0 0.0
        %1038 = vmatpush1.msra.mxu0 0.0
        %1039 = vmatprep.subr.mxu0 0.0
        %1040 = vmatpush1.msra.mxu0 0.0
        %1041 = vmatprep.subr.mxu0 0.0
        %1042 = vmatpush1.msra.mxu0 0.0
        %1043 = vmatprep.subr.mxu0 0.0
        %1044 = vmatpush1.msra.mxu0 0.0
        %1045 = vmatprep.subr.mxu0 0.0
        %1046 = vmatpush1.msra.mxu0 0.0
        %1047 = vmatprep.subr.mxu0 0.0
        %1048 = vmatpush1.msra.mxu0 0.0
        %1049 = vmatprep.subr.mxu0 0.0
        %1050 = vmatpush1.msra.mxu0 0.0
        %1051 = vmatprep.subr.mxu0 0.0
        %1052 = vmatpush1.msra.mxu0 0.0
        %1053 = vmatprep.subr.mxu0 0.0
        %1054 = vmatpush1.msra.mxu0 0.0
        %1055 = vmatprep.subr.mxu0 0.0
        %1056 = vmatpush1.msra.mxu0 0.0
        %1057 = vmatprep.subr.mxu0 0.0
        %1058 = vmatpush1.msra.mxu0 0.0
        %1059 = vmatprep.subr.mxu0 0.0
        %1060 = vmatpush1.msra.mxu0 0.0
        %1061 = vmatprep.subr.mxu0 0.0
        %1062 = vmatpush1.msra.mxu0 0.0
        %1063 = vmatprep.subr.mxu0 0.0
        %1064 = vmatpush1.msra.mxu0 0.0
        %1065 = vmatprep.subr.mxu0 0.0
        %1066 = vmatpush1.msra.mxu0 0.0
        %1067 = vmatprep.subr.mxu0 0.0
        %1068 = vmatpush1.msra.mxu0 0.0
        %1069 = vmatprep.subr.mxu0 0.0
        %1070 = vmatpush1.msra.mxu0 0.0
        %1071 = vmatprep.subr.mxu0 0.0
        %1072 = vmatpush1.msra.mxu0 0.0
        %1073 = vmatprep.subr.mxu0 0.0
        %1074 = vmatpush1.msra.mxu0 0.0
        %1075 = vmatprep.subr.mxu0 0.0
        %1076 = vmatpush1.msra.mxu0 0.0
        %1077 = vmatprep.mubr.f32.mxu0 0.0
        %1078 = vmatmul.mubr.f32.gmra.mrb[0].mxu0 %v966
        %v1079 = vpop.f32.mrb[0].mxu0
        %v1080 = vadd.f32 %v888, %v1079
        %v1081 = vpop.f32.mrb[0].mxu0
        %v1082 = vadd.f32 %v888, %v1081
        %1083 = vmatprep.mubr.f32.mxu0 0.0
        %1084 = vmatmul.mubr.f32.gmra.mrb[0].mxu0 %v969
        %v1085 = vpop.f32.mrb[0].mxu0
        %v1086 = vadd.f32 %v893, %v1085
        %v1087 = vpop.f32.mrb[0].mxu0
        %v1088 = vadd.f32 %v893, %v1087
        %1089 = vmatprep.mubr.f32.mxu0 0.0
        %1090 = vmatmul.mubr.f32.gmra.mrb[0].mxu0 %v972
        %v1091 = vpop.f32.mrb[0].mxu0
        %v1092 = vadd.f32 %v898, %v1091
        %v1093 = vpop.f32.mrb[0].mxu0
        %v1094 = vadd.f32 %v898, %v1093
        %1095 = vmatprep.mubr.f32.mxu0 0.0
        %1096 = vmatmul.mubr.f32.gmra.mrb[0].mxu0 %v975
        %v1097 = vpop.f32.mrb[0].mxu0
        %v1098 = vadd.f32 %v903, %v1097
        %v1099 = vpop.f32.mrb[0].mxu0
        %v1100 = vadd.f32 %v903, %v1099
        %1101 = vmatprep.mubr.f32.mxu0 0.0
        %1102 = vmatmul.mubr.f32.gmra.mrb[0].mxu0 %v978
        %v1103 = vpop.f32.mrb[0].mxu0
        %v1104 = vadd.f32 %v908, %v1103
        %v1105 = vpop.f32.mrb[0].mxu0
        %v1106 = vadd.f32 %v908, %v1105
        %1107 = vmatprep.mubr.f32.mxu0 0.0
        %1108 = vmatmul.mubr.f32.gmra.mrb[0].mxu0 %v981
        %v1109 = vpop.f32.mrb[0].mxu0
        %v1110 = vadd.f32 %v913, %v1109
        %v1111 = vpop.f32.mrb[0].mxu0
        %v1112 = vadd.f32 %v913, %v1111
        %1113 = vmatprep.mubr.f32.mxu0 0.0
        %1114 = vmatmul.mubr.f32.gmra.mrb[0].mxu0 %v984
        %v1115 = vpop.f32.mrb[0].mxu0
        %v1116 = vadd.f32 %v918, %v1115
        %v1117 = vpop.f32.mrb[0].mxu0
        %v1118 = vadd.f32 %v918, %v1117
        %1119 = vmatprep.mubr.f32.mxu0 0.0
        %1120 = vmatmul.mubr.f32.gmra.mrb[0].mxu0 %v987
        %v1121 = vpop.f32.mrb[0].mxu0
        %v1122 = vadd.f32 %v923, %v1121
        %v1123 = vpop.f32.mrb[0].mxu0
        %v1124 = vadd.f32 %v923, %v1123
        %1125 = vmatprep.mubr.f32.mxu0 0.0
        %1126 = vmatmul.mubr.f32.gmra.mrb[0].mxu0 %v990
        %v1127 = vpop.f32.mrb[0].mxu0
        %v1128 = vadd.f32 %v928, %v1127
        %v1129 = vpop.f32.mrb[0].mxu0
        %v1130 = vadd.f32 %v928, %v1129
        %1131 = vmatprep.mubr.f32.mxu0 0.0
        %1132 = vmatmul.mubr.f32.gmra.mrb[0].mxu0 %v993
        %v1133 = vpop.f32.mrb[0].mxu0
        %v1134 = vadd.f32 %v933, %v1133
        %v1135 = vpop.f32.mrb[0].mxu0
        %v1136 = vadd.f32 %v933, %v1135
        %1137 = vmatprep.mubr.f32.mxu0 0.0
        %1138 = vmatmul.mubr.f32.gmra.mrb[0].mxu0 %v996
        %v1139 = vpop.f32.mrb[0].mxu0
        %v1140 = vadd.f32 %v938, %v1139
        %v1141 = vpop.f32.mrb[0].mxu0
        %v1142 = vadd.f32 %v938, %v1141
        %1143 = vmatprep.mubr.f32.mxu0 0.0
        %1144 = vmatmul.mubr.f32.gmra.mrb[0].mxu0 %v999
        %v1145 = vpop.f32.mrb[0].mxu0
        %v1146 = vadd.f32 %v943, %v1145
        %v1147 = vpop.f32.mrb[0].mxu0
        %v1148 = vadd.f32 %v943, %v1147
        %1149 = vmatprep.mubr.f32.mxu0 0.0
        %1150 = vmatmul.mubr.f32.gmra.mrb[0].mxu0 %v1002
        %v1151 = vpop.f32.mrb[0].mxu0
        %v1152 = vadd.f32 %v948, %v1151
        %v1153 = vpop.f32.mrb[0].mxu0
        %v1154 = vadd.f32 %v948, %v1153
        %1155 = vmatprep.mubr.f32.mxu0 0.0
        %1156 = vmatmul.mubr.f32.gmra.mrb[0].mxu0 %v1005
        %v1157 = vpop.f32.mrb[0].mxu0
        %v1158 = vadd.f32 %v953, %v1157
        %v1159 = vpop.f32.mrb[0].mxu0
        %v1160 = vadd.f32 %v953, %v1159
        %1161 = vmatprep.mubr.f32.mxu0 0.0
        %1162 = vmatmul.mubr.f32.gmra.mrb[0].mxu0 %v1008
        %v1163 = vpop.f32.mrb[0].mxu0
        %v1164 = vadd.f32 %v958, %v1163
        %v1165 = vpop.f32.mrb[0].mxu0
        %v1166 = vadd.f32 %v958, %v1165
        %1167 = vmatprep.mubr.f32.mxu0 0.0
        %1168 = vmatmul.mubr.f32.gmra.mrb[0].mxu0 %v1011
        %v1169 = vpop.f32.mrb[0].mxu0
        %v1170 = vadd.f32 %v963, %v1169
        %v1171 = vpop.f32.mrb[0].mxu0
        %v1172 = vadd.f32 %v963, %v1171
        %1173 = vdwg.mxu0
        %v1174 = vpack.c.bf16 %v1086, %v1080
        %v1175 = vpack.c.bf16 %v1088, %v1082
        %v1176 = vpack.c.bf16 %v1098, %v1092
        %v1177 = vpack.c.bf16 %v1100, %v1094
        %v1178 = vpack.c.bf16 %v1110, %v1104
        %v1179 = vpack.c.bf16 %v1112, %v1106
        %v1180 = vpack.c.bf16 %v1122, %v1116
        %v1181 = vpack.c.bf16 %v1124, %v1118
        %v1182 = vpack.c.bf16 %v1134, %v1128
        %v1183 = vpack.c.bf16 %v1136, %v1130
        %v1184 = vpack.c.bf16 %v1146, %v1140
        %v1185 = vpack.c.bf16 %v1148, %v1142
        %v1186 = vpack.c.bf16 %v1158, %v1152
        %v1187 = vpack.c.bf16 %v1160, %v1154
        %v1188 = vpack.c.bf16 %v1170, %v1164
        %v1189 = vpack.c.bf16 %v1172, %v1166
        %1190 = vst [vmem:[#allocation2 + $0x80] sm:$0xff] %v1174
        %1191 = vst [vmem:[#allocation2 + $0x88] sm:$0xff] %v1175
        %1192 = vst [vmem:[#allocation2 + $0x90] sm:$0xff] %v1176
        %1193 = vst [vmem:[#allocation2 + $0x98] sm:$0xff] %v1177
        %1194 = vst [vmem:[#allocation2 + $0xa0] sm:$0xff] %v1178
        %1195 = vst [vmem:[#allocation2 + $0xa8] sm:$0xff] %v1179
        %1196 = vst [vmem:[#allocation2 + $0xb0] sm:$0xff] %v1180
        %1197 = vst [vmem:[#allocation2 + $0xb8] sm:$0xff] %v1181
        %1198 = vst [vmem:[#allocation2 + $0xc0] sm:$0xff] %v1182
        %1199 = vst [vmem:[#allocation2 + $0xc8] sm:$0xff] %v1183
        %1200 = vst [vmem:[#allocation2 + $0xd0] sm:$0xff] %v1184
        %1201 = vst [vmem:[#allocation2 + $0xd8] sm:$0xff] %v1185
        %1202 = vst [vmem:[#allocation2 + $0xe0] sm:$0xff] %v1186
        %1203 = vst [vmem:[#allocation2 + $0xe8] sm:$0xff] %v1187
        %1204 = vst [vmem:[#allocation2 + $0xf0] sm:$0xff] %v1188
        %1205 = vst [vmem:[#allocation2 + $0xf8] sm:$0xff] %v1189
        %v1206 = vld [vmem:[#allocation2] sm:$0xff]
        %v1207 = vld [vmem:[#allocation2 + $0x8] sm:$0xff]
        %v1208 = vld [vmem:[#allocation2 + $0x10] sm:$0xff]
        %v1209 = vld [vmem:[#allocation2 + $0x18] sm:$0xff]
        %v1210 = vld [vmem:[#allocation2 + $0x20] sm:$0xff]
        %v1211 = vld [vmem:[#allocation2 + $0x28] sm:$0xff]
        %v1212 = vld [vmem:[#allocation2 + $0x30] sm:$0xff]
        %v1213 = vld [vmem:[#allocation2 + $0x38] sm:$0xff]
        %v1214 = vld [vmem:[#allocation2 + $0x40] sm:$0xff]
        %v1215 = vld [vmem:[#allocation2 + $0x48] sm:$0xff]
        %v1216 = vld [vmem:[#allocation2 + $0x50] sm:$0xff]
        %v1217 = vld [vmem:[#allocation2 + $0x58] sm:$0xff]
        %v1218 = vld [vmem:[#allocation2 + $0x60] sm:$0xff]
        %v1219 = vld [vmem:[#allocation2 + $0x68] sm:$0xff]
        %v1220 = vld [vmem:[#allocation2 + $0x70] sm:$0xff]
        %v1221 = vld [vmem:[#allocation2 + $0x78] sm:$0xff]
        %v1222 = vld [vmem:[#allocation2 + $0x80] sm:$0xff]
        %v1223 = vld [vmem:[#allocation2 + $0x88] sm:$0xff]
        %v1224 = vld [vmem:[#allocation2 + $0x90] sm:$0xff]
        %v1225 = vld [vmem:[#allocation2 + $0x98] sm:$0xff]
        %v1226 = vld [vmem:[#allocation2 + $0xa0] sm:$0xff]
        %v1227 = vld [vmem:[#allocation2 + $0xa8] sm:$0xff]
        %v1228 = vld [vmem:[#allocation2 + $0xb0] sm:$0xff]
        %v1229 = vld [vmem:[#allocation2 + $0xb8] sm:$0xff]
        %v1230 = vld [vmem:[#allocation2 + $0xc0] sm:$0xff]
        %v1231 = vld [vmem:[#allocation2 + $0xc8] sm:$0xff]
        %v1232 = vld [vmem:[#allocation2 + $0xd0] sm:$0xff]
        %v1233 = vld [vmem:[#allocation2 + $0xd8] sm:$0xff]
        %v1234 = vld [vmem:[#allocation2 + $0xe0] sm:$0xff]
        %v1235 = vld [vmem:[#allocation2 + $0xe8] sm:$0xff]
        %v1236 = vld [vmem:[#allocation2 + $0xf0] sm:$0xff]
        %v1237 = vld [vmem:[#allocation2 + $0xf8] sm:$0xff]
        %v1238 = vld [vmem:[%s355] sm:$0xff]
        %v1239 = vld [vmem:[%s355 + $0x8] sm:$0xff]
        %v1240 = vld [vmem:[%s355 + $0x20] sm:$0xff]
        %v1241 = vld [vmem:[%s355 + $0x28] sm:$0xff]
        %v1242 = vld [vmem:[%s355 + $0x40] sm:$0xff]
        %v1243 = vld [vmem:[%s355 + $0x48] sm:$0xff]
        %v1244 = vld [vmem:[%s355 + $0x60] sm:$0xff]
        %v1245 = vld [vmem:[%s355 + $0x68] sm:$0xff]
        %v1246 = vld [vmem:[%s355 + $0x80] sm:$0xff]
        %v1247 = vld [vmem:[%s355 + $0x88] sm:$0xff]
        %v1248 = vld [vmem:[%s355 + $0xa0] sm:$0xff]
        %v1249 = vld [vmem:[%s355 + $0xa8] sm:$0xff]
        %v1250 = vld [vmem:[%s355 + $0xc0] sm:$0xff]
        %v1251 = vld [vmem:[%s355 + $0xc8] sm:$0xff]
        %v1252 = vld [vmem:[%s355 + $0xe0] sm:$0xff]
        %v1253 = vld [vmem:[%s355 + $0xe8] sm:$0xff]
        %v1254 = vld [vmem:[%s355 + $0x100] sm:$0xff]
        %v1255 = vld [vmem:[%s355 + $0x108] sm:$0xff]
        %v1256 = vld [vmem:[%s355 + $0x120] sm:$0xff]
        %v1257 = vld [vmem:[%s355 + $0x128] sm:$0xff]
        %v1258 = vld [vmem:[%s355 + $0x140] sm:$0xff]
        %v1259 = vld [vmem:[%s355 + $0x148] sm:$0xff]
        %v1260 = vld [vmem:[%s355 + $0x160] sm:$0xff]
        %v1261 = vld [vmem:[%s355 + $0x168] sm:$0xff]
        %v1262 = vld [vmem:[%s355 + $0x180] sm:$0xff]
        %v1263 = vld [vmem:[%s355 + $0x188] sm:$0xff]
        %v1264 = vld [vmem:[%s355 + $0x1a0] sm:$0xff]
        %v1265 = vld [vmem:[%s355 + $0x1a8] sm:$0xff]
        %v1266 = vld [vmem:[%s355 + $0x1c0] sm:$0xff]
        %v1267 = vld [vmem:[%s355 + $0x1c8] sm:$0xff]
        %v1268 = vld [vmem:[%s355 + $0x1e0] sm:$0xff]
        %v1269 = vld [vmem:[%s355 + $0x1e8] sm:$0xff]
        %v1270 = vld [vmem:[%s355 + $0x200] sm:$0xff]
        %v1271 = vld [vmem:[%s355 + $0x208] sm:$0xff]
        %v1272 = vld [vmem:[%s355 + $0x220] sm:$0xff]
        %v1273 = vld [vmem:[%s355 + $0x228] sm:$0xff]
        %v1274 = vld [vmem:[%s355 + $0x240] sm:$0xff]
        %v1275 = vld [vmem:[%s355 + $0x248] sm:$0xff]
        %v1276 = vld [vmem:[%s355 + $0x260] sm:$0xff]
        %v1277 = vld [vmem:[%s355 + $0x268] sm:$0xff]
        %v1278 = vld [vmem:[%s355 + $0x280] sm:$0xff]
        %v1279 = vld [vmem:[%s355 + $0x288] sm:$0xff]
        %v1280 = vld [vmem:[%s355 + $0x2a0] sm:$0xff]
        %v1281 = vld [vmem:[%s355 + $0x2a8] sm:$0xff]
        %v1282 = vld [vmem:[%s355 + $0x2c0] sm:$0xff]
        %v1283 = vld [vmem:[%s355 + $0x2c8] sm:$0xff]
        %v1284 = vld [vmem:[%s355 + $0x2e0] sm:$0xff]
        %v1285 = vld [vmem:[%s355 + $0x2e8] sm:$0xff]
        %v1286 = vld [vmem:[%s355 + $0x300] sm:$0xff]
        %v1287 = vld [vmem:[%s355 + $0x308] sm:$0xff]
        %v1288 = vld [vmem:[%s355 + $0x320] sm:$0xff]
        %v1289 = vld [vmem:[%s355 + $0x328] sm:$0xff]
        %v1290 = vld [vmem:[%s355 + $0x340] sm:$0xff]
        %v1291 = vld [vmem:[%s355 + $0x348] sm:$0xff]
        %v1292 = vld [vmem:[%s355 + $0x360] sm:$0xff]
        %v1293 = vld [vmem:[%s355 + $0x368] sm:$0xff]
        %v1294 = vld [vmem:[%s355 + $0x380] sm:$0xff]
        %v1295 = vld [vmem:[%s355 + $0x388] sm:$0xff]
        %v1296 = vld [vmem:[%s355 + $0x3a0] sm:$0xff]
        %v1297 = vld [vmem:[%s355 + $0x3a8] sm:$0xff]
        %v1298 = vld [vmem:[%s355 + $0x3c0] sm:$0xff]
        %v1299 = vld [vmem:[%s355 + $0x3c8] sm:$0xff]
        %v1300 = vld [vmem:[%s355 + $0x3e0] sm:$0xff]
        %v1301 = vld [vmem:[%s355 + $0x3e8] sm:$0xff]
        %v1302 = vld [vmem:[%s437] sm:$0xf]
        %v1304 = vlaneseq
        %v1305 = vshrl.u32 %v1304, 7
        %v1306 = vsub.s32 0, %v1305
        %v1307 = vrot.slane %v1302, %v1306
        %v1308 = vlaneseq
        %v1309 = vshrl.u32 %v1308, 7
        %v1310 = vsub.s32 1, %v1309
        %v1311 = vrot.slane %v1302, %v1310
        %v1312 = vlaneseq
        %v1313 = vshrl.u32 %v1312, 7
        %v1314 = vsub.s32 2, %v1313
        %v1315 = vrot.slane %v1302, %v1314
        %v1316 = vlaneseq
        %v1317 = vshrl.u32 %v1316, 7
        %v1318 = vsub.s32 3, %v1317
        %v1319 = vrot.slane %v1302, %v1318
        %v1388 = vunpack.c.l.b16 %v1238
        %v1389 = vunpack.c.h.b16 %v1238
        %v1390 = vunpack.c.l.b16 %v1239
        %v1391 = vunpack.c.h.b16 %v1239
        %v1392 = vunpack.c.l.b16 %v1240
        %v1393 = vunpack.c.h.b16 %v1240
        %v1394 = vunpack.c.l.b16 %v1241
        %v1395 = vunpack.c.h.b16 %v1241
        %v1396 = vunpack.c.l.b16 %v1242
        %v1397 = vunpack.c.h.b16 %v1242
        %v1398 = vunpack.c.l.b16 %v1243
        %v1399 = vunpack.c.h.b16 %v1243
        %v1400 = vunpack.c.l.b16 %v1244
        %v1401 = vunpack.c.h.b16 %v1244
        %v1402 = vunpack.c.l.b16 %v1245
        %v1403 = vunpack.c.h.b16 %v1245
        %v1404 = vunpack.c.l.b16 %v1246
        %v1405 = vunpack.c.h.b16 %v1246
        %v1406 = vunpack.c.l.b16 %v1247
        %v1407 = vunpack.c.h.b16 %v1247
        %v1408 = vunpack.c.l.b16 %v1248
        %v1409 = vunpack.c.h.b16 %v1248
        %v1410 = vunpack.c.l.b16 %v1249
        %v1411 = vunpack.c.h.b16 %v1249
        %v1412 = vunpack.c.l.b16 %v1250
        %v1413 = vunpack.c.h.b16 %v1250
        %v1414 = vunpack.c.l.b16 %v1251
        %v1415 = vunpack.c.h.b16 %v1251
        %v1416 = vunpack.c.l.b16 %v1252
        %v1417 = vunpack.c.h.b16 %v1252
        %v1418 = vunpack.c.l.b16 %v1253
        %v1419 = vunpack.c.h.b16 %v1253
        %v1420 = vunpack.c.l.b16 %v1254
        %v1421 = vunpack.c.h.b16 %v1254
        %v1422 = vunpack.c.l.b16 %v1255
        %v1423 = vunpack.c.h.b16 %v1255
        %v1424 = vunpack.c.l.b16 %v1256
        %v1425 = vunpack.c.h.b16 %v1256
        %v1426 = vunpack.c.l.b16 %v1257
        %v1427 = vunpack.c.h.b16 %v1257
        %v1428 = vunpack.c.l.b16 %v1258
        %v1429 = vunpack.c.h.b16 %v1258
        %v1430 = vunpack.c.l.b16 %v1259
        %v1431 = vunpack.c.h.b16 %v1259
        %v1432 = vunpack.c.l.b16 %v1260
        %v1433 = vunpack.c.h.b16 %v1260
        %v1434 = vunpack.c.l.b16 %v1261
        %v1435 = vunpack.c.h.b16 %v1261
        %v1436 = vunpack.c.l.b16 %v1262
        %v1437 = vunpack.c.h.b16 %v1262
        %v1438 = vunpack.c.l.b16 %v1263
        %v1439 = vunpack.c.h.b16 %v1263
        %v1440 = vunpack.c.l.b16 %v1264
        %v1441 = vunpack.c.h.b16 %v1264
        %v1442 = vunpack.c.l.b16 %v1265
        %v1443 = vunpack.c.h.b16 %v1265
        %v1444 = vunpack.c.l.b16 %v1266
        %v1445 = vunpack.c.h.b16 %v1266
        %v1446 = vunpack.c.l.b16 %v1267
        %v1447 = vunpack.c.h.b16 %v1267
        %v1448 = vunpack.c.l.b16 %v1268
        %v1449 = vunpack.c.h.b16 %v1268
        %v1450 = vunpack.c.l.b16 %v1269
        %v1451 = vunpack.c.h.b16 %v1269
        %v1452 = vunpack.c.l.b16 %v1270
        %v1453 = vunpack.c.h.b16 %v1270
        %v1454 = vunpack.c.l.b16 %v1271
        %v1455 = vunpack.c.h.b16 %v1271
        %v1456 = vunpack.c.l.b16 %v1272
        %v1457 = vunpack.c.h.b16 %v1272
        %v1458 = vunpack.c.l.b16 %v1273
        %v1459 = vunpack.c.h.b16 %v1273
        %v1460 = vunpack.c.l.b16 %v1274
        %v1461 = vunpack.c.h.b16 %v1274
        %v1462 = vunpack.c.l.b16 %v1275
        %v1463 = vunpack.c.h.b16 %v1275
        %v1464 = vunpack.c.l.b16 %v1276
        %v1465 = vunpack.c.h.b16 %v1276
        %v1466 = vunpack.c.l.b16 %v1277
        %v1467 = vunpack.c.h.b16 %v1277
        %v1468 = vunpack.c.l.b16 %v1278
        %v1469 = vunpack.c.h.b16 %v1278
        %v1470 = vunpack.c.l.b16 %v1279
        %v1471 = vunpack.c.h.b16 %v1279
        %v1472 = vunpack.c.l.b16 %v1280
        %v1473 = vunpack.c.h.b16 %v1280
        %v1474 = vunpack.c.l.b16 %v1281
        %v1475 = vunpack.c.h.b16 %v1281
        %v1476 = vunpack.c.l.b16 %v1282
        %v1477 = vunpack.c.h.b16 %v1282
        %v1478 = vunpack.c.l.b16 %v1283
        %v1479 = vunpack.c.h.b16 %v1283
        %v1480 = vunpack.c.l.b16 %v1284
        %v1481 = vunpack.c.h.b16 %v1284
        %v1482 = vunpack.c.l.b16 %v1285
        %v1483 = vunpack.c.h.b16 %v1285
        %v1484 = vunpack.c.l.b16 %v1286
        %v1485 = vunpack.c.h.b16 %v1286
        %v1486 = vunpack.c.l.b16 %v1287
        %v1487 = vunpack.c.h.b16 %v1287
        %v1488 = vunpack.c.l.b16 %v1288
        %v1489 = vunpack.c.h.b16 %v1288
        %v1490 = vunpack.c.l.b16 %v1289
        %v1491 = vunpack.c.h.b16 %v1289
        %v1492 = vunpack.c.l.b16 %v1290
        %v1493 = vunpack.c.h.b16 %v1290
        %v1494 = vunpack.c.l.b16 %v1291
        %v1495 = vunpack.c.h.b16 %v1291
        %v1496 = vunpack.c.l.b16 %v1292
        %v1497 = vunpack.c.h.b16 %v1292
        %v1498 = vunpack.c.l.b16 %v1293
        %v1499 = vunpack.c.h.b16 %v1293
        %v1500 = vunpack.c.l.b16 %v1294
        %v1501 = vunpack.c.h.b16 %v1294
        %v1502 = vunpack.c.l.b16 %v1295
        %v1503 = vunpack.c.h.b16 %v1295
        %v1504 = vunpack.c.l.b16 %v1296
        %v1505 = vunpack.c.h.b16 %v1296
        %v1506 = vunpack.c.l.b16 %v1297
        %v1507 = vunpack.c.h.b16 %v1297
        %v1508 = vunpack.c.l.b16 %v1298
        %v1509 = vunpack.c.h.b16 %v1298
        %v1510 = vunpack.c.l.b16 %v1299
        %v1511 = vunpack.c.h.b16 %v1299
        %v1512 = vunpack.c.l.b16 %v1300
        %v1513 = vunpack.c.h.b16 %v1300
        %v1514 = vunpack.c.l.b16 %v1301
        %v1515 = vunpack.c.h.b16 %v1301
        %v1516 = vpack.c.b16 %v1392, %v1388
        %v1517 = vpack.c.b16 %v1393, %v1389
        %v1518 = vpack.c.b16 %v1394, %v1390
        %v1519 = vpack.c.b16 %v1395, %v1391
        %v1520 = vpack.c.b16 %v1400, %v1396
        %v1521 = vpack.c.b16 %v1401, %v1397
        %v1522 = vpack.c.b16 %v1402, %v1398
        %v1523 = vpack.c.b16 %v1403, %v1399
        %v1524 = vpack.c.b16 %v1408, %v1404
        %v1525 = vpack.c.b16 %v1409, %v1405
        %v1526 = vpack.c.b16 %v1410, %v1406
        %v1527 = vpack.c.b16 %v1411, %v1407
        %v1528 = vpack.c.b16 %v1416, %v1412
        %v1529 = vpack.c.b16 %v1417, %v1413
        %v1530 = vpack.c.b16 %v1418, %v1414
        %v1531 = vpack.c.b16 %v1419, %v1415
        %v1532 = vpack.c.b16 %v1424, %v1420
        %v1533 = vpack.c.b16 %v1425, %v1421
        %v1534 = vpack.c.b16 %v1426, %v1422
        %v1535 = vpack.c.b16 %v1427, %v1423
        %v1536 = vpack.c.b16 %v1432, %v1428
        %v1537 = vpack.c.b16 %v1433, %v1429
        %v1538 = vpack.c.b16 %v1434, %v1430
        %v1539 = vpack.c.b16 %v1435, %v1431
        %v1540 = vpack.c.b16 %v1440, %v1436
        %v1541 = vpack.c.b16 %v1441, %v1437
        %v1542 = vpack.c.b16 %v1442, %v1438
        %v1543 = vpack.c.b16 %v1443, %v1439
        %v1544 = vpack.c.b16 %v1448, %v1444
        %v1545 = vpack.c.b16 %v1449, %v1445
        %v1546 = vpack.c.b16 %v1450, %v1446
        %v1547 = vpack.c.b16 %v1451, %v1447
        %v1548 = vpack.c.b16 %v1456, %v1452
        %v1549 = vpack.c.b16 %v1457, %v1453
        %v1550 = vpack.c.b16 %v1458, %v1454
        %v1551 = vpack.c.b16 %v1459, %v1455
        %v1552 = vpack.c.b16 %v1464, %v1460
        %v1553 = vpack.c.b16 %v1465, %v1461
        %v1554 = vpack.c.b16 %v1466, %v1462
        %v1555 = vpack.c.b16 %v1467, %v1463
        %v1556 = vpack.c.b16 %v1472, %v1468
        %v1557 = vpack.c.b16 %v1473, %v1469
        %v1558 = vpack.c.b16 %v1474, %v1470
        %v1559 = vpack.c.b16 %v1475, %v1471
        %v1560 = vpack.c.b16 %v1480, %v1476
        %v1561 = vpack.c.b16 %v1481, %v1477
        %v1562 = vpack.c.b16 %v1482, %v1478
        %v1563 = vpack.c.b16 %v1483, %v1479
        %v1564 = vpack.c.b16 %v1488, %v1484
        %v1565 = vpack.c.b16 %v1489, %v1485
        %v1566 = vpack.c.b16 %v1490, %v1486
        %v1567 = vpack.c.b16 %v1491, %v1487
        %v1568 = vpack.c.b16 %v1496, %v1492
        %v1569 = vpack.c.b16 %v1497, %v1493
        %v1570 = vpack.c.b16 %v1498, %v1494
        %v1571 = vpack.c.b16 %v1499, %v1495
        %v1572 = vpack.c.b16 %v1504, %v1500
        %v1573 = vpack.c.b16 %v1505, %v1501
        %v1574 = vpack.c.b16 %v1506, %v1502
        %v1575 = vpack.c.b16 %v1507, %v1503
        %v1576 = vpack.c.b16 %v1512, %v1508
        %v1577 = vpack.c.b16 %v1513, %v1509
        %v1578 = vpack.c.b16 %v1514, %v1510
        %v1579 = vpack.c.b16 %v1515, %v1511
        %1644 = vmatprep.subr.bf16.mxu0 %v1517
        %1645 = vmatpush1.bf16.msra.mxu0 %v1516
        %1646 = vmatprep.subr.bf16.mxu0 %v1521
        %1647 = vmatpush1.bf16.msra.mxu0 %v1520
        %1648 = vmatprep.subr.bf16.mxu0 %v1525
        %1649 = vmatpush1.bf16.msra.mxu0 %v1524
        %1650 = vmatprep.subr.bf16.mxu0 %v1529
        %1651 = vmatpush1.bf16.msra.mxu0 %v1528
        %1652 = vmatprep.subr.bf16.mxu0 %v1533
        %1653 = vmatpush1.bf16.msra.mxu0 %v1532
        %1654 = vmatprep.subr.bf16.mxu0 %v1537
        %1655 = vmatpush1.bf16.msra.mxu0 %v1536
        %1656 = vmatprep.subr.bf16.mxu0 %v1541
        %1657 = vmatpush1.bf16.msra.mxu0 %v1540
        %1658 = vmatprep.subr.bf16.mxu0 %v1545
        %1659 = vmatpush1.bf16.msra.mxu0 %v1544
        %1660 = vmatprep.subr.bf16.mxu0 %v1549
        %1661 = vmatpush1.bf16.msra.mxu0 %v1548
        %1662 = vmatprep.subr.bf16.mxu0 %v1553
        %1663 = vmatpush1.bf16.msra.mxu0 %v1552
        %1664 = vmatprep.subr.bf16.mxu0 %v1557
        %1665 = vmatpush1.bf16.msra.mxu0 %v1556
        %1666 = vmatprep.subr.bf16.mxu0 %v1561
        %1667 = vmatpush1.bf16.msra.mxu0 %v1560
        %1668 = vmatprep.subr.bf16.mxu0 %v1565
        %1669 = vmatpush1.bf16.msra.mxu0 %v1564
        %1670 = vmatprep.subr.bf16.mxu0 %v1569
        %1671 = vmatpush1.bf16.msra.mxu0 %v1568
        %1672 = vmatprep.subr.bf16.mxu0 %v1573
        %1673 = vmatpush1.bf16.msra.mxu0 %v1572
        %1674 = vmatprep.subr.bf16.mxu0 %v1577
        %1675 = vmatpush1.bf16.msra.mxu0 %v1576
        %1676 = vmatprep.mubr.bf16.mxu0 %v1207
        %1677 = vmatmul.mubr.bf16.gmra.mrb[0].mxu0 %v1206
        %v1678 = vpop.f32.mrb[0].mxu0
        %v1679 = vadd.f32 %v1307, %v1678
        %v1680 = vpop.f32.mrb[0].mxu0
        %v1681 = vadd.f32 %v1311, %v1680
        %v1682 = vpop.f32.mrb[0].mxu0
        %v1683 = vadd.f32 %v1307, %v1682
        %v1684 = vpop.f32.mrb[0].mxu0
        %v1685 = vadd.f32 %v1311, %v1684
        %1686 = vmatprep.mubr.bf16.mxu0 %v1209
        %1687 = vmatmul.mubr.bf16.gmra.mrb[0].mxu0 %v1208
        %v1688 = vpop.f32.mrb[0].mxu0
        %v1689 = vadd.f32 %v1307, %v1688
        %v1690 = vpop.f32.mrb[0].mxu0
        %v1691 = vadd.f32 %v1311, %v1690
        %v1692 = vpop.f32.mrb[0].mxu0
        %v1693 = vadd.f32 %v1307, %v1692
        %v1694 = vpop.f32.mrb[0].mxu0
        %v1695 = vadd.f32 %v1311, %v1694
        %1696 = vmatprep.mubr.bf16.mxu0 %v1211
        %1697 = vmatmul.mubr.bf16.gmra.mrb[0].mxu0 %v1210
        %v1698 = vpop.f32.mrb[0].mxu0
        %v1699 = vadd.f32 %v1307, %v1698
        %v1700 = vpop.f32.mrb[0].mxu0
        %v1701 = vadd.f32 %v1311, %v1700
        %v1702 = vpop.f32.mrb[0].mxu0
        %v1703 = vadd.f32 %v1307, %v1702
        %v1704 = vpop.f32.mrb[0].mxu0
        %v1705 = vadd.f32 %v1311, %v1704
        %1706 = vmatprep.mubr.bf16.mxu0 %v1213
        %1707 = vmatmul.mubr.bf16.gmra.mrb[0].mxu0 %v1212
        %v1708 = vpop.f32.mrb[0].mxu0
        %v1709 = vadd.f32 %v1307, %v1708
        %v1710 = vpop.f32.mrb[0].mxu0
        %v1711 = vadd.f32 %v1311, %v1710
        %v1712 = vpop.f32.mrb[0].mxu0
        %v1713 = vadd.f32 %v1307, %v1712
        %v1714 = vpop.f32.mrb[0].mxu0
        %v1715 = vadd.f32 %v1311, %v1714
        %1716 = vmatprep.mubr.bf16.mxu0 %v1215
        %1717 = vmatmul.mubr.bf16.gmra.mrb[0].mxu0 %v1214
        %v1718 = vpop.f32.mrb[0].mxu0
        %v1719 = vadd.f32 %v1307, %v1718
        %v1720 = vpop.f32.mrb[0].mxu0
        %v1721 = vadd.f32 %v1311, %v1720
        %v1722 = vpop.f32.mrb[0].mxu0
        %v1723 = vadd.f32 %v1307, %v1722
        %v1724 = vpop.f32.mrb[0].mxu0
        %v1725 = vadd.f32 %v1311, %v1724
        %1726 = vmatprep.mubr.bf16.mxu0 %v1217
        %1727 = vmatmul.mubr.bf16.gmra.mrb[0].mxu0 %v1216
        %v1728 = vpop.f32.mrb[0].mxu0
        %v1729 = vadd.f32 %v1307, %v1728
        %v1730 = vpop.f32.mrb[0].mxu0
        %v1731 = vadd.f32 %v1311, %v1730
        %v1732 = vpop.f32.mrb[0].mxu0
        %v1733 = vadd.f32 %v1307, %v1732
        %v1734 = vpop.f32.mrb[0].mxu0
        %v1735 = vadd.f32 %v1311, %v1734
        %1736 = vmatprep.mubr.bf16.mxu0 %v1219
        %1737 = vmatmul.mubr.bf16.gmra.mrb[0].mxu0 %v1218
        %v1738 = vpop.f32.mrb[0].mxu0
        %v1739 = vadd.f32 %v1307, %v1738
        %v1740 = vpop.f32.mrb[0].mxu0
        %v1741 = vadd.f32 %v1311, %v1740
        %v1742 = vpop.f32.mrb[0].mxu0
        %v1743 = vadd.f32 %v1307, %v1742
        %v1744 = vpop.f32.mrb[0].mxu0
        %v1745 = vadd.f32 %v1311, %v1744
        %1746 = vmatprep.mubr.bf16.mxu0 %v1221
        %1747 = vmatmul.mubr.bf16.gmra.mrb[0].mxu0 %v1220
        %v1748 = vpop.f32.mrb[0].mxu0
        %v1749 = vadd.f32 %v1307, %v1748
        %v1750 = vpop.f32.mrb[0].mxu0
        %v1751 = vadd.f32 %v1311, %v1750
        %v1752 = vpop.f32.mrb[0].mxu0
        %v1753 = vadd.f32 %v1307, %v1752
        %v1754 = vpop.f32.mrb[0].mxu0
        %v1755 = vadd.f32 %v1311, %v1754
        %1756 = vmatprep.mubr.bf16.mxu0 %v1223
        %1757 = vmatmul.mubr.bf16.gmra.mrb[0].mxu0 %v1222
        %v1758 = vpop.f32.mrb[0].mxu0
        %v1759 = vadd.f32 %v1307, %v1758
        %v1760 = vpop.f32.mrb[0].mxu0
        %v1761 = vadd.f32 %v1311, %v1760
        %v1762 = vpop.f32.mrb[0].mxu0
        %v1763 = vadd.f32 %v1307, %v1762
        %v1764 = vpop.f32.mrb[0].mxu0
        %v1765 = vadd.f32 %v1311, %v1764
        %1766 = vmatprep.mubr.bf16.mxu0 %v1225
        %1767 = vmatmul.mubr.bf16.gmra.mrb[0].mxu0 %v1224
        %v1768 = vpop.f32.mrb[0].mxu0
        %v1769 = vadd.f32 %v1307, %v1768
        %v1770 = vpop.f32.mrb[0].mxu0
        %v1771 = vadd.f32 %v1311, %v1770
        %v1772 = vpop.f32.mrb[0].mxu0
        %v1773 = vadd.f32 %v1307, %v1772
        %v1774 = vpop.f32.mrb[0].mxu0
        %v1775 = vadd.f32 %v1311, %v1774
        %1776 = vmatprep.mubr.bf16.mxu0 %v1227
        %1777 = vmatmul.mubr.bf16.gmra.mrb[0].mxu0 %v1226
        %v1778 = vpop.f32.mrb[0].mxu0
        %v1779 = vadd.f32 %v1307, %v1778
        %v1780 = vpop.f32.mrb[0].mxu0
        %v1781 = vadd.f32 %v1311, %v1780
        %v1782 = vpop.f32.mrb[0].mxu0
        %v1783 = vadd.f32 %v1307, %v1782
        %v1784 = vpop.f32.mrb[0].mxu0
        %v1785 = vadd.f32 %v1311, %v1784
        %1786 = vmatprep.mubr.bf16.mxu0 %v1229
        %1787 = vmatmul.mubr.bf16.gmra.mrb[0].mxu0 %v1228
        %v1788 = vpop.f32.mrb[0].mxu0
        %v1789 = vadd.f32 %v1307, %v1788
        %v1790 = vpop.f32.mrb[0].mxu0
        %v1791 = vadd.f32 %v1311, %v1790
        %v1792 = vpop.f32.mrb[0].mxu0
        %v1793 = vadd.f32 %v1307, %v1792
        %v1794 = vpop.f32.mrb[0].mxu0
        %v1795 = vadd.f32 %v1311, %v1794
        %1796 = vmatprep.mubr.bf16.mxu0 %v1231
        %1797 = vmatmul.mubr.bf16.gmra.mrb[0].mxu0 %v1230
        %v1798 = vpop.f32.mrb[0].mxu0
        %v1799 = vadd.f32 %v1307, %v1798
        %v1800 = vpop.f32.mrb[0].mxu0
        %v1801 = vadd.f32 %v1311, %v1800
        %v1802 = vpop.f32.mrb[0].mxu0
        %v1803 = vadd.f32 %v1307, %v1802
        %v1804 = vpop.f32.mrb[0].mxu0
        %v1805 = vadd.f32 %v1311, %v1804
        %1806 = vmatprep.mubr.bf16.mxu0 %v1233
        %1807 = vmatmul.mubr.bf16.gmra.mrb[0].mxu0 %v1232
        %v1808 = vpop.f32.mrb[0].mxu0
        %v1809 = vadd.f32 %v1307, %v1808
        %v1810 = vpop.f32.mrb[0].mxu0
        %v1811 = vadd.f32 %v1311, %v1810
        %v1812 = vpop.f32.mrb[0].mxu0
        %v1813 = vadd.f32 %v1307, %v1812
        %v1814 = vpop.f32.mrb[0].mxu0
        %v1815 = vadd.f32 %v1311, %v1814
        %1816 = vmatprep.mubr.bf16.mxu0 %v1235
        %1817 = vmatmul.mubr.bf16.gmra.mrb[0].mxu0 %v1234
        %v1818 = vpop.f32.mrb[0].mxu0
        %v1819 = vadd.f32 %v1307, %v1818
        %v1820 = vpop.f32.mrb[0].mxu0
        %v1821 = vadd.f32 %v1311, %v1820
        %v1822 = vpop.f32.mrb[0].mxu0
        %v1823 = vadd.f32 %v1307, %v1822
        %v1824 = vpop.f32.mrb[0].mxu0
        %v1825 = vadd.f32 %v1311, %v1824
        %1826 = vmatprep.mubr.bf16.mxu0 %v1237
        %1827 = vmatmul.mubr.bf16.gmra.mrb[0].mxu0 %v1236
        %v1828 = vpop.f32.mrb[0].mxu0
        %v1829 = vadd.f32 %v1307, %v1828
        %v1830 = vpop.f32.mrb[0].mxu0
        %v1831 = vadd.f32 %v1311, %v1830
        %v1832 = vpop.f32.mrb[0].mxu0
        %v1833 = vadd.f32 %v1307, %v1832
        %v1834 = vpop.f32.mrb[0].mxu0
        %v1835 = vadd.f32 %v1311, %v1834
        %1836 = vdwg.mxu0
        %1837 = vmatprep.subr.bf16.mxu0 %v1519
        %1838 = vmatpush1.bf16.msra.mxu0 %v1518
        %1839 = vmatprep.subr.bf16.mxu0 %v1523
        %1840 = vmatpush1.bf16.msra.mxu0 %v1522
        %1841 = vmatprep.subr.bf16.mxu0 %v1527
        %1842 = vmatpush1.bf16.msra.mxu0 %v1526
        %1843 = vmatprep.subr.bf16.mxu0 %v1531
        %1844 = vmatpush1.bf16.msra.mxu0 %v1530
        %1845 = vmatprep.subr.bf16.mxu0 %v1535
        %1846 = vmatpush1.bf16.msra.mxu0 %v1534
        %1847 = vmatprep.subr.bf16.mxu0 %v1539
        %1848 = vmatpush1.bf16.msra.mxu0 %v1538
        %1849 = vmatprep.subr.bf16.mxu0 %v1543
        %1850 = vmatpush1.bf16.msra.mxu0 %v1542
        %1851 = vmatprep.subr.bf16.mxu0 %v1547
        %1852 = vmatpush1.bf16.msra.mxu0 %v1546
        %1853 = vmatprep.subr.bf16.mxu0 %v1551
        %1854 = vmatpush1.bf16.msra.mxu0 %v1550
        %1855 = vmatprep.subr.bf16.mxu0 %v1555
        %1856 = vmatpush1.bf16.msra.mxu0 %v1554
        %1857 = vmatprep.subr.bf16.mxu0 %v1559
        %1858 = vmatpush1.bf16.msra.mxu0 %v1558
        %1859 = vmatprep.subr.bf16.mxu0 %v1563
        %1860 = vmatpush1.bf16.msra.mxu0 %v1562
        %1861 = vmatprep.subr.bf16.mxu0 %v1567
        %1862 = vmatpush1.bf16.msra.mxu0 %v1566
        %1863 = vmatprep.subr.bf16.mxu0 %v1571
        %1864 = vmatpush1.bf16.msra.mxu0 %v1570
        %1865 = vmatprep.subr.bf16.mxu0 %v1575
        %1866 = vmatpush1.bf16.msra.mxu0 %v1574
        %1867 = vmatprep.subr.bf16.mxu0 %v1579
        %1868 = vmatpush1.bf16.msra.mxu0 %v1578
        %1869 = vmatprep.mubr.bf16.mxu0 %v1207
        %1870 = vmatmul.mubr.bf16.gmra.mrb[0].mxu0 %v1206
        %v1871 = vpop.f32.mrb[0].mxu0
        %v1872 = vadd.f32 %v1315, %v1871
        %v1873 = vpop.f32.mrb[0].mxu0
        %v1874 = vadd.f32 %v1319, %v1873
        %v1875 = vpop.f32.mrb[0].mxu0
        %v1876 = vadd.f32 %v1315, %v1875
        %v1877 = vpop.f32.mrb[0].mxu0
        %v1878 = vadd.f32 %v1319, %v1877
        %1879 = vmatprep.mubr.bf16.mxu0 %v1209
        %1880 = vmatmul.mubr.bf16.gmra.mrb[0].mxu0 %v1208
        %v1881 = vpop.f32.mrb[0].mxu0
        %v1882 = vadd.f32 %v1315, %v1881
        %v1883 = vpop.f32.mrb[0].mxu0
        %v1884 = vadd.f32 %v1319, %v1883
        %v1885 = vpop.f32.mrb[0].mxu0
        %v1886 = vadd.f32 %v1315, %v1885
        %v1887 = vpop.f32.mrb[0].mxu0
        %v1888 = vadd.f32 %v1319, %v1887
        %1889 = vmatprep.mubr.bf16.mxu0 %v1211
        %1890 = vmatmul.mubr.bf16.gmra.mrb[0].mxu0 %v1210
        %v1891 = vpop.f32.mrb[0].mxu0
        %v1892 = vadd.f32 %v1315, %v1891
        %v1893 = vpop.f32.mrb[0].mxu0
        %v1894 = vadd.f32 %v1319, %v1893
        %v1895 = vpop.f32.mrb[0].mxu0
        %v1896 = vadd.f32 %v1315, %v1895
        %v1897 = vpop.f32.mrb[0].mxu0
        %v1898 = vadd.f32 %v1319, %v1897
        %1899 = vmatprep.mubr.bf16.mxu0 %v1213
        %1900 = vmatmul.mubr.bf16.gmra.mrb[0].mxu0 %v1212
        %v1901 = vpop.f32.mrb[0].mxu0
        %v1902 = vadd.f32 %v1315, %v1901
        %v1903 = vpop.f32.mrb[0].mxu0
        %v1904 = vadd.f32 %v1319, %v1903
        %v1905 = vpop.f32.mrb[0].mxu0
        %v1906 = vadd.f32 %v1315, %v1905
        %v1907 = vpop.f32.mrb[0].mxu0
        %v1908 = vadd.f32 %v1319, %v1907
        %1909 = vmatprep.mubr.bf16.mxu0 %v1215
        %1910 = vmatmul.mubr.bf16.gmra.mrb[0].mxu0 %v1214
        %v1911 = vpop.f32.mrb[0].mxu0
        %v1912 = vadd.f32 %v1315, %v1911
        %v1913 = vpop.f32.mrb[0].mxu0
        %v1914 = vadd.f32 %v1319, %v1913
        %v1915 = vpop.f32.mrb[0].mxu0
        %v1916 = vadd.f32 %v1315, %v1915
        %v1917 = vpop.f32.mrb[0].mxu0
        %v1918 = vadd.f32 %v1319, %v1917
        %1919 = vmatprep.mubr.bf16.mxu0 %v1217
        %1920 = vmatmul.mubr.bf16.gmra.mrb[0].mxu0 %v1216
        %v1921 = vpop.f32.mrb[0].mxu0
        %v1922 = vadd.f32 %v1315, %v1921
        %v1923 = vpop.f32.mrb[0].mxu0
        %v1924 = vadd.f32 %v1319, %v1923
        %v1925 = vpop.f32.mrb[0].mxu0
        %v1926 = vadd.f32 %v1315, %v1925
        %v1927 = vpop.f32.mrb[0].mxu0
        %v1928 = vadd.f32 %v1319, %v1927
        %1929 = vmatprep.mubr.bf16.mxu0 %v1219
        %1930 = vmatmul.mubr.bf16.gmra.mrb[0].mxu0 %v1218
        %v1931 = vpop.f32.mrb[0].mxu0
        %v1932 = vadd.f32 %v1315, %v1931
        %v1933 = vpop.f32.mrb[0].mxu0
        %v1934 = vadd.f32 %v1319, %v1933
        %v1935 = vpop.f32.mrb[0].mxu0
        %v1936 = vadd.f32 %v1315, %v1935
        %v1937 = vpop.f32.mrb[0].mxu0
        %v1938 = vadd.f32 %v1319, %v1937
        %1939 = vmatprep.mubr.bf16.mxu0 %v1221
        %1940 = vmatmul.mubr.bf16.gmra.mrb[0].mxu0 %v1220
        %v1941 = vpop.f32.mrb[0].mxu0
        %v1942 = vadd.f32 %v1315, %v1941
        %v1943 = vpop.f32.mrb[0].mxu0
        %v1944 = vadd.f32 %v1319, %v1943
        %v1945 = vpop.f32.mrb[0].mxu0
        %v1946 = vadd.f32 %v1315, %v1945
        %v1947 = vpop.f32.mrb[0].mxu0
        %v1948 = vadd.f32 %v1319, %v1947
        %1949 = vmatprep.mubr.bf16.mxu0 %v1223
        %1950 = vmatmul.mubr.bf16.gmra.mrb[0].mxu0 %v1222
        %v1951 = vpop.f32.mrb[0].mxu0
        %v1952 = vadd.f32 %v1315, %v1951
        %v1953 = vpop.f32.mrb[0].mxu0
        %v1954 = vadd.f32 %v1319, %v1953
        %v1955 = vpop.f32.mrb[0].mxu0
        %v1956 = vadd.f32 %v1315, %v1955
        %v1957 = vpop.f32.mrb[0].mxu0
        %v1958 = vadd.f32 %v1319, %v1957
        %1959 = vmatprep.mubr.bf16.mxu0 %v1225
        %1960 = vmatmul.mubr.bf16.gmra.mrb[0].mxu0 %v1224
        %v1961 = vpop.f32.mrb[0].mxu0
        %v1962 = vadd.f32 %v1315, %v1961
        %v1963 = vpop.f32.mrb[0].mxu0
        %v1964 = vadd.f32 %v1319, %v1963
        %v1965 = vpop.f32.mrb[0].mxu0
        %v1966 = vadd.f32 %v1315, %v1965
        %v1967 = vpop.f32.mrb[0].mxu0
        %v1968 = vadd.f32 %v1319, %v1967
        %1969 = vmatprep.mubr.bf16.mxu0 %v1227
        %1970 = vmatmul.mubr.bf16.gmra.mrb[0].mxu0 %v1226
        %v1971 = vpop.f32.mrb[0].mxu0
        %v1972 = vadd.f32 %v1315, %v1971
        %v1973 = vpop.f32.mrb[0].mxu0
        %v1974 = vadd.f32 %v1319, %v1973
        %v1975 = vpop.f32.mrb[0].mxu0
        %v1976 = vadd.f32 %v1315, %v1975
        %v1977 = vpop.f32.mrb[0].mxu0
        %v1978 = vadd.f32 %v1319, %v1977
        %1979 = vmatprep.mubr.bf16.mxu0 %v1229
        %1980 = vmatmul.mubr.bf16.gmra.mrb[0].mxu0 %v1228
        %v1981 = vpop.f32.mrb[0].mxu0
        %v1982 = vadd.f32 %v1315, %v1981
        %v1983 = vpop.f32.mrb[0].mxu0
        %v1984 = vadd.f32 %v1319, %v1983
        %v1985 = vpop.f32.mrb[0].mxu0
        %v1986 = vadd.f32 %v1315, %v1985
        %v1987 = vpop.f32.mrb[0].mxu0
        %v1988 = vadd.f32 %v1319, %v1987
        %1989 = vmatprep.mubr.bf16.mxu0 %v1231
        %1990 = vmatmul.mubr.bf16.gmra.mrb[0].mxu0 %v1230
        %v1991 = vpop.f32.mrb[0].mxu0
        %v1992 = vadd.f32 %v1315, %v1991
        %v1993 = vpop.f32.mrb[0].mxu0
        %v1994 = vadd.f32 %v1319, %v1993
        %v1995 = vpop.f32.mrb[0].mxu0
        %v1996 = vadd.f32 %v1315, %v1995
        %v1997 = vpop.f32.mrb[0].mxu0
        %v1998 = vadd.f32 %v1319, %v1997
        %1999 = vmatprep.mubr.bf16.mxu0 %v1233
        %2000 = vmatmul.mubr.bf16.gmra.mrb[0].mxu0 %v1232
        %v2001 = vpop.f32.mrb[0].mxu0
        %v2002 = vadd.f32 %v1315, %v2001
        %v2003 = vpop.f32.mrb[0].mxu0
        %v2004 = vadd.f32 %v1319, %v2003
        %v2005 = vpop.f32.mrb[0].mxu0
        %v2006 = vadd.f32 %v1315, %v2005
        %v2007 = vpop.f32.mrb[0].mxu0
        %v2008 = vadd.f32 %v1319, %v2007
        %2009 = vmatprep.mubr.bf16.mxu0 %v1235
        %2010 = vmatmul.mubr.bf16.gmra.mrb[0].mxu0 %v1234
        %v2011 = vpop.f32.mrb[0].mxu0
        %v2012 = vadd.f32 %v1315, %v2011
        %v2013 = vpop.f32.mrb[0].mxu0
        %v2014 = vadd.f32 %v1319, %v2013
        %v2015 = vpop.f32.mrb[0].mxu0
        %v2016 = vadd.f32 %v1315, %v2015
        %v2017 = vpop.f32.mrb[0].mxu0
        %v2018 = vadd.f32 %v1319, %v2017
        %2019 = vmatprep.mubr.bf16.mxu0 %v1237
        %2020 = vmatmul.mubr.bf16.gmra.mrb[0].mxu0 %v1236
        %v2021 = vpop.f32.mrb[0].mxu0
        %v2022 = vadd.f32 %v1315, %v2021
        %v2023 = vpop.f32.mrb[0].mxu0
        %v2024 = vadd.f32 %v1319, %v2023
        %v2025 = vpop.f32.mrb[0].mxu0
        %v2026 = vadd.f32 %v1315, %v2025
        %v2027 = vpop.f32.mrb[0].mxu0
        %v2028 = vadd.f32 %v1319, %v2027
        %2029 = vdwg.mxu0
        %v2030 = vmul.f32 %v1679, %v1679
        %v2031 = vmul.f32 %v1681, %v1681
        %v2032 = vmul.f32 %v1872, %v1872
        %v2033 = vmul.f32 %v1874, %v1874
        %v2034 = vmul.f32 %v1683, %v1683
        %v2035 = vmul.f32 %v1685, %v1685
        %v2036 = vmul.f32 %v1876, %v1876
        %v2037 = vmul.f32 %v1878, %v1878
        %v2038 = vmul.f32 %v1689, %v1689
        %v2039 = vmul.f32 %v1691, %v1691
        %v2040 = vmul.f32 %v1882, %v1882
        %v2041 = vmul.f32 %v1884, %v1884
        %v2042 = vmul.f32 %v1693, %v1693
        %v2043 = vmul.f32 %v1695, %v1695
        %v2044 = vmul.f32 %v1886, %v1886
        %v2045 = vmul.f32 %v1888, %v1888
        %v2046 = vmul.f32 %v1699, %v1699
        %v2047 = vmul.f32 %v1701, %v1701
        %v2048 = vmul.f32 %v1892, %v1892
        %v2049 = vmul.f32 %v1894, %v1894
        %v2050 = vmul.f32 %v1703, %v1703
        %v2051 = vmul.f32 %v1705, %v1705
        %v2052 = vmul.f32 %v1896, %v1896
        %v2053 = vmul.f32 %v1898, %v1898
        %v2054 = vmul.f32 %v1709, %v1709
        %v2055 = vmul.f32 %v1711, %v1711
        %v2056 = vmul.f32 %v1902, %v1902
        %v2057 = vmul.f32 %v1904, %v1904
        %v2058 = vmul.f32 %v1713, %v1713
        %v2059 = vmul.f32 %v1715, %v1715
        %v2060 = vmul.f32 %v1906, %v1906
        %v2061 = vmul.f32 %v1908, %v1908
        %v2062 = vmul.f32 %v1719, %v1719
        %v2063 = vmul.f32 %v1721, %v1721
        %v2064 = vmul.f32 %v1912, %v1912
        %v2065 = vmul.f32 %v1914, %v1914
        %v2066 = vmul.f32 %v1723, %v1723
        %v2067 = vmul.f32 %v1725, %v1725
        %v2068 = vmul.f32 %v1916, %v1916
        %v2069 = vmul.f32 %v1918, %v1918
        %v2070 = vmul.f32 %v1729, %v1729
        %v2071 = vmul.f32 %v1731, %v1731
        %v2072 = vmul.f32 %v1922, %v1922
        %v2073 = vmul.f32 %v1924, %v1924
        %v2074 = vmul.f32 %v1733, %v1733
        %v2075 = vmul.f32 %v1735, %v1735
        %v2076 = vmul.f32 %v1926, %v1926
        %v2077 = vmul.f32 %v1928, %v1928
        %v2078 = vmul.f32 %v1739, %v1739
        %v2079 = vmul.f32 %v1741, %v1741
        %v2080 = vmul.f32 %v1932, %v1932
        %v2081 = vmul.f32 %v1934, %v1934
        %v2082 = vmul.f32 %v1743, %v1743
        %v2083 = vmul.f32 %v1745, %v1745
        %v2084 = vmul.f32 %v1936, %v1936
        %v2085 = vmul.f32 %v1938, %v1938
        %v2086 = vmul.f32 %v1749, %v1749
        %v2087 = vmul.f32 %v1751, %v1751
        %v2088 = vmul.f32 %v1942, %v1942
        %v2089 = vmul.f32 %v1944, %v1944
        %v2090 = vmul.f32 %v1753, %v1753
        %v2091 = vmul.f32 %v1755, %v1755
        %v2092 = vmul.f32 %v1946, %v1946
        %v2093 = vmul.f32 %v1948, %v1948
        %v2094 = vmul.f32 %v1759, %v1759
        %v2095 = vmul.f32 %v1761, %v1761
        %v2096 = vmul.f32 %v1952, %v1952
        %v2097 = vmul.f32 %v1954, %v1954
        %v2098 = vmul.f32 %v1763, %v1763
        %v2099 = vmul.f32 %v1765, %v1765
        %v2100 = vmul.f32 %v1956, %v1956
        %v2101 = vmul.f32 %v1958, %v1958
        %v2102 = vmul.f32 %v1769, %v1769
        %v2103 = vmul.f32 %v1771, %v1771
        %v2104 = vmul.f32 %v1962, %v1962
        %v2105 = vmul.f32 %v1964, %v1964
        %v2106 = vmul.f32 %v1773, %v1773
        %v2107 = vmul.f32 %v1775, %v1775
        %v2108 = vmul.f32 %v1966, %v1966
        %v2109 = vmul.f32 %v1968, %v1968
        %v2110 = vmul.f32 %v1779, %v1779
        %v2111 = vmul.f32 %v1781, %v1781
        %v2112 = vmul.f32 %v1972, %v1972
        %v2113 = vmul.f32 %v1974, %v1974
        %v2114 = vmul.f32 %v1783, %v1783
        %v2115 = vmul.f32 %v1785, %v1785
        %v2116 = vmul.f32 %v1976, %v1976
        %v2117 = vmul.f32 %v1978, %v1978
        %v2118 = vmul.f32 %v1789, %v1789
        %v2119 = vmul.f32 %v1791, %v1791
        %v2120 = vmul.f32 %v1982, %v1982
        %v2121 = vmul.f32 %v1984, %v1984
        %v2122 = vmul.f32 %v1793, %v1793
        %v2123 = vmul.f32 %v1795, %v1795
        %v2124 = vmul.f32 %v1986, %v1986
        %v2125 = vmul.f32 %v1988, %v1988
        %v2126 = vmul.f32 %v1799, %v1799
        %v2127 = vmul.f32 %v1801, %v1801
        %v2128 = vmul.f32 %v1992, %v1992
        %v2129 = vmul.f32 %v1994, %v1994
        %v2130 = vmul.f32 %v1803, %v1803
        %v2131 = vmul.f32 %v1805, %v1805
        %v2132 = vmul.f32 %v1996, %v1996
        %v2133 = vmul.f32 %v1998, %v1998
        %v2134 = vmul.f32 %v1809, %v1809
        %v2135 = vmul.f32 %v1811, %v1811
        %v2136 = vmul.f32 %v2002, %v2002
        %v2137 = vmul.f32 %v2004, %v2004
        %v2138 = vmul.f32 %v1813, %v1813
        %v2139 = vmul.f32 %v1815, %v1815
        %v2140 = vmul.f32 %v2006, %v2006
        %v2141 = vmul.f32 %v2008, %v2008
        %v2142 = vmul.f32 %v1819, %v1819
        %v2143 = vmul.f32 %v1821, %v1821
        %v2144 = vmul.f32 %v2012, %v2012
        %v2145 = vmul.f32 %v2014, %v2014
        %v2146 = vmul.f32 %v1823, %v1823
        %v2147 = vmul.f32 %v1825, %v1825
        %v2148 = vmul.f32 %v2016, %v2016
        %v2149 = vmul.f32 %v2018, %v2018
        %v2150 = vmul.f32 %v1829, %v1829
        %v2151 = vmul.f32 %v1831, %v1831
        %v2152 = vmul.f32 %v2022, %v2022
        %v2153 = vmul.f32 %v2024, %v2024
        %v2154 = vmul.f32 %v1833, %v1833
        %v2155 = vmul.f32 %v1835, %v1835
        %v2156 = vmul.f32 %v2026, %v2026
        %v2157 = vmul.f32 %v2028, %v2028
        %v2158 = vmul.f32 %v1679, %v2030
        %v2159 = vmul.f32 %v1681, %v2031
        %v2160 = vmul.f32 %v1872, %v2032
        %v2161 = vmul.f32 %v1874, %v2033
        %v2162 = vmul.f32 %v1683, %v2034
        %v2163 = vmul.f32 %v1685, %v2035
        %v2164 = vmul.f32 %v1876, %v2036
        %v2165 = vmul.f32 %v1878, %v2037
        %v2166 = vmul.f32 %v1689, %v2038
        %v2167 = vmul.f32 %v1691, %v2039
        %v2168 = vmul.f32 %v1882, %v2040
        %v2169 = vmul.f32 %v1884, %v2041
        %v2170 = vmul.f32 %v1693, %v2042
        %v2171 = vmul.f32 %v1695, %v2043
        %v2172 = vmul.f32 %v1886, %v2044
        %v2173 = vmul.f32 %v1888, %v2045
        %v2174 = vmul.f32 %v1699, %v2046
        %v2175 = vmul.f32 %v1701, %v2047
        %v2176 = vmul.f32 %v1892, %v2048
        %v2177 = vmul.f32 %v1894, %v2049
        %v2178 = vmul.f32 %v1703, %v2050
        %v2179 = vmul.f32 %v1705, %v2051
        %v2180 = vmul.f32 %v1896, %v2052
        %v2181 = vmul.f32 %v1898, %v2053
        %v2182 = vmul.f32 %v1709, %v2054
        %v2183 = vmul.f32 %v1711, %v2055
        %v2184 = vmul.f32 %v1902, %v2056
        %v2185 = vmul.f32 %v1904, %v2057
        %v2186 = vmul.f32 %v1713, %v2058
        %v2187 = vmul.f32 %v1715, %v2059
        %v2188 = vmul.f32 %v1906, %v2060
        %v2189 = vmul.f32 %v1908, %v2061
        %v2190 = vmul.f32 %v1719, %v2062
        %v2191 = vmul.f32 %v1721, %v2063
        %v2192 = vmul.f32 %v1912, %v2064
        %v2193 = vmul.f32 %v1914, %v2065
        %v2194 = vmul.f32 %v1723, %v2066
        %v2195 = vmul.f32 %v1725, %v2067
        %v2196 = vmul.f32 %v1916, %v2068
        %v2197 = vmul.f32 %v1918, %v2069
        %v2198 = vmul.f32 %v1729, %v2070
        %v2199 = vmul.f32 %v1731, %v2071
        %v2200 = vmul.f32 %v1922, %v2072
        %v2201 = vmul.f32 %v1924, %v2073
        %v2202 = vmul.f32 %v1733, %v2074
        %v2203 = vmul.f32 %v1735, %v2075
        %v2204 = vmul.f32 %v1926, %v2076
        %v2205 = vmul.f32 %v1928, %v2077
        %v2206 = vmul.f32 %v1739, %v2078
        %v2207 = vmul.f32 %v1741, %v2079
        %v2208 = vmul.f32 %v1932, %v2080
        %v2209 = vmul.f32 %v1934, %v2081
        %v2210 = vmul.f32 %v1743, %v2082
        %v2211 = vmul.f32 %v1745, %v2083
        %v2212 = vmul.f32 %v1936, %v2084
        %v2213 = vmul.f32 %v1938, %v2085
        %v2214 = vmul.f32 %v1749, %v2086
        %v2215 = vmul.f32 %v1751, %v2087
        %v2216 = vmul.f32 %v1942, %v2088
        %v2217 = vmul.f32 %v1944, %v2089
        %v2218 = vmul.f32 %v1753, %v2090
        %v2219 = vmul.f32 %v1755, %v2091
        %v2220 = vmul.f32 %v1946, %v2092
        %v2221 = vmul.f32 %v1948, %v2093
        %v2222 = vmul.f32 %v1759, %v2094
        %v2223 = vmul.f32 %v1761, %v2095
        %v2224 = vmul.f32 %v1952, %v2096
        %v2225 = vmul.f32 %v1954, %v2097
        %v2226 = vmul.f32 %v1763, %v2098
        %v2227 = vmul.f32 %v1765, %v2099
        %v2228 = vmul.f32 %v1956, %v2100
        %v2229 = vmul.f32 %v1958, %v2101
        %v2230 = vmul.f32 %v1769, %v2102
        %v2231 = vmul.f32 %v1771, %v2103
        %v2232 = vmul.f32 %v1962, %v2104
        %v2233 = vmul.f32 %v1964, %v2105
        %v2234 = vmul.f32 %v1773, %v2106
        %v2235 = vmul.f32 %v1775, %v2107
        %v2236 = vmul.f32 %v1966, %v2108
        %v2237 = vmul.f32 %v1968, %v2109
        %v2238 = vmul.f32 %v1779, %v2110
        %v2239 = vmul.f32 %v1781, %v2111
        %v2240 = vmul.f32 %v1972, %v2112
        %v2241 = vmul.f32 %v1974, %v2113
        %v2242 = vmul.f32 %v1783, %v2114
        %v2243 = vmul.f32 %v1785, %v2115
        %v2244 = vmul.f32 %v1976, %v2116
        %v2245 = vmul.f32 %v1978, %v2117
        %v2246 = vmul.f32 %v1789, %v2118
        %v2247 = vmul.f32 %v1791, %v2119
        %v2248 = vmul.f32 %v1982, %v2120
        %v2249 = vmul.f32 %v1984, %v2121
        %v2250 = vmul.f32 %v1793, %v2122
        %v2251 = vmul.f32 %v1795, %v2123
        %v2252 = vmul.f32 %v1986, %v2124
        %v2253 = vmul.f32 %v1988, %v2125
        %v2254 = vmul.f32 %v1799, %v2126
        %v2255 = vmul.f32 %v1801, %v2127
        %v2256 = vmul.f32 %v1992, %v2128
        %v2257 = vmul.f32 %v1994, %v2129
        %v2258 = vmul.f32 %v1803, %v2130
        %v2259 = vmul.f32 %v1805, %v2131
        %v2260 = vmul.f32 %v1996, %v2132
        %v2261 = vmul.f32 %v1998, %v2133
        %v2262 = vmul.f32 %v1809, %v2134
        %v2263 = vmul.f32 %v1811, %v2135
        %v2264 = vmul.f32 %v2002, %v2136
        %v2265 = vmul.f32 %v2004, %v2137
        %v2266 = vmul.f32 %v1813, %v2138
        %v2267 = vmul.f32 %v1815, %v2139
        %v2268 = vmul.f32 %v2006, %v2140
        %v2269 = vmul.f32 %v2008, %v2141
        %v2270 = vmul.f32 %v1819, %v2142
        %v2271 = vmul.f32 %v1821, %v2143
        %v2272 = vmul.f32 %v2012, %v2144
        %v2273 = vmul.f32 %v2014, %v2145
        %v2274 = vmul.f32 %v1823, %v2146
        %v2275 = vmul.f32 %v1825, %v2147
        %v2276 = vmul.f32 %v2016, %v2148
        %v2277 = vmul.f32 %v2018, %v2149
        %v2278 = vmul.f32 %v1829, %v2150
        %v2279 = vmul.f32 %v1831, %v2151
        %v2280 = vmul.f32 %v2022, %v2152
        %v2281 = vmul.f32 %v2024, %v2153
        %v2282 = vmul.f32 %v1833, %v2154
        %v2283 = vmul.f32 %v1835, %v2155
        %v2284 = vmul.f32 %v2026, %v2156
        %v2285 = vmul.f32 %v2028, %v2157
        %v2286 = vmul.f32 %v2158, 0.044715
        %v2287 = vmul.f32 %v2159, 0.044715
        %v2288 = vmul.f32 %v2160, 0.044715
        %v2289 = vmul.f32 %v2161, 0.044715
        %v2290 = vmul.f32 %v2162, 0.044715
        %v2291 = vmul.f32 %v2163, 0.044715
        %v2292 = vmul.f32 %v2164, 0.044715
        %v2293 = vmul.f32 %v2165, 0.044715
        %v2294 = vmul.f32 %v2166, 0.044715
        %v2295 = vmul.f32 %v2167, 0.044715
        %v2296 = vmul.f32 %v2168, 0.044715
        %v2297 = vmul.f32 %v2169, 0.044715
        %v2298 = vmul.f32 %v2170, 0.044715
        %v2299 = vmul.f32 %v2171, 0.044715
        %v2300 = vmul.f32 %v2172, 0.044715
        %v2301 = vmul.f32 %v2173, 0.044715
        %v2302 = vmul.f32 %v2174, 0.044715
        %v2303 = vmul.f32 %v2175, 0.044715
        %v2304 = vmul.f32 %v2176, 0.044715
        %v2305 = vmul.f32 %v2177, 0.044715
        %v2306 = vmul.f32 %v2178, 0.044715
        %v2307 = vmul.f32 %v2179, 0.044715
        %v2308 = vmul.f32 %v2180, 0.044715
        %v2309 = vmul.f32 %v2181, 0.044715
        %v2310 = vmul.f32 %v2182, 0.044715
        %v2311 = vmul.f32 %v2183, 0.044715
        %v2312 = vmul.f32 %v2184, 0.044715
        %v2313 = vmul.f32 %v2185, 0.044715
        %v2314 = vmul.f32 %v2186, 0.044715
        %v2315 = vmul.f32 %v2187, 0.044715
        %v2316 = vmul.f32 %v2188, 0.044715
        %v2317 = vmul.f32 %v2189, 0.044715
        %v2318 = vmul.f32 %v2190, 0.044715
        %v2319 = vmul.f32 %v2191, 0.044715
        %v2320 = vmul.f32 %v2192, 0.044715
        %v2321 = vmul.f32 %v2193, 0.044715
        %v2322 = vmul.f32 %v2194, 0.044715
        %v2323 = vmul.f32 %v2195, 0.044715
        %v2324 = vmul.f32 %v2196, 0.044715
        %v2325 = vmul.f32 %v2197, 0.044715
        %v2326 = vmul.f32 %v2198, 0.044715
        %v2327 = vmul.f32 %v2199, 0.044715
        %v2328 = vmul.f32 %v2200, 0.044715
        %v2329 = vmul.f32 %v2201, 0.044715
        %v2330 = vmul.f32 %v2202, 0.044715
        %v2331 = vmul.f32 %v2203, 0.044715
        %v2332 = vmul.f32 %v2204, 0.044715
        %v2333 = vmul.f32 %v2205, 0.044715
        %v2334 = vmul.f32 %v2206, 0.044715
        %v2335 = vmul.f32 %v2207, 0.044715
        %v2336 = vmul.f32 %v2208, 0.044715
        %v2337 = vmul.f32 %v2209, 0.044715
        %v2338 = vmul.f32 %v2210, 0.044715
        %v2339 = vmul.f32 %v2211, 0.044715
        %v2340 = vmul.f32 %v2212, 0.044715
        %v2341 = vmul.f32 %v2213, 0.044715
        %v2342 = vmul.f32 %v2214, 0.044715
        %v2343 = vmul.f32 %v2215, 0.044715
        %v2344 = vmul.f32 %v2216, 0.044715
        %v2345 = vmul.f32 %v2217, 0.044715
        %v2346 = vmul.f32 %v2218, 0.044715
        %v2347 = vmul.f32 %v2219, 0.044715
        %v2348 = vmul.f32 %v2220, 0.044715
        %v2349 = vmul.f32 %v2221, 0.044715
        %v2350 = vmul.f32 %v2222, 0.044715
        %v2351 = vmul.f32 %v2223, 0.044715
        %v2352 = vmul.f32 %v2224, 0.044715
        %v2353 = vmul.f32 %v2225, 0.044715
        %v2354 = vmul.f32 %v2226, 0.044715
        %v2355 = vmul.f32 %v2227, 0.044715
        %v2356 = vmul.f32 %v2228, 0.044715
        %v2357 = vmul.f32 %v2229, 0.044715
        %v2358 = vmul.f32 %v2230, 0.044715
        %v2359 = vmul.f32 %v2231, 0.044715
        %v2360 = vmul.f32 %v2232, 0.044715
        %v2361 = vmul.f32 %v2233, 0.044715
        %v2362 = vmul.f32 %v2234, 0.044715
        %v2363 = vmul.f32 %v2235, 0.044715
        %v2364 = vmul.f32 %v2236, 0.044715
        %v2365 = vmul.f32 %v2237, 0.044715
        %v2366 = vmul.f32 %v2238, 0.044715
        %v2367 = vmul.f32 %v2239, 0.044715
        %v2368 = vmul.f32 %v2240, 0.044715
        %v2369 = vmul.f32 %v2241, 0.044715
        %v2370 = vmul.f32 %v2242, 0.044715
        %v2371 = vmul.f32 %v2243, 0.044715
        %v2372 = vmul.f32 %v2244, 0.044715
        %v2373 = vmul.f32 %v2245, 0.044715
        %v2374 = vmul.f32 %v2246, 0.044715
        %v2375 = vmul.f32 %v2247, 0.044715
        %v2376 = vmul.f32 %v2248, 0.044715
        %v2377 = vmul.f32 %v2249, 0.044715
        %v2378 = vmul.f32 %v2250, 0.044715
        %v2379 = vmul.f32 %v2251, 0.044715
        %v2380 = vmul.f32 %v2252, 0.044715
        %v2381 = vmul.f32 %v2253, 0.044715
        %v2382 = vmul.f32 %v2254, 0.044715
        %v2383 = vmul.f32 %v2255, 0.044715
        %v2384 = vmul.f32 %v2256, 0.044715
        %v2385 = vmul.f32 %v2257, 0.044715
        %v2386 = vmul.f32 %v2258, 0.044715
        %v2387 = vmul.f32 %v2259, 0.044715
        %v2388 = vmul.f32 %v2260, 0.044715
        %v2389 = vmul.f32 %v2261, 0.044715
        %v2390 = vmul.f32 %v2262, 0.044715
        %v2391 = vmul.f32 %v2263, 0.044715
        %v2392 = vmul.f32 %v2264, 0.044715
        %v2393 = vmul.f32 %v2265, 0.044715
        %v2394 = vmul.f32 %v2266, 0.044715
        %v2395 = vmul.f32 %v2267, 0.044715
        %v2396 = vmul.f32 %v2268, 0.044715
        %v2397 = vmul.f32 %v2269, 0.044715
        %v2398 = vmul.f32 %v2270, 0.044715
        %v2399 = vmul.f32 %v2271, 0.044715
        %v2400 = vmul.f32 %v2272, 0.044715
        %v2401 = vmul.f32 %v2273, 0.044715
        %v2402 = vmul.f32 %v2274, 0.044715
        %v2403 = vmul.f32 %v2275, 0.044715
        %v2404 = vmul.f32 %v2276, 0.044715
        %v2405 = vmul.f32 %v2277, 0.044715
        %v2406 = vmul.f32 %v2278, 0.044715
        %v2407 = vmul.f32 %v2279, 0.044715
        %v2408 = vmul.f32 %v2280, 0.044715
        %v2409 = vmul.f32 %v2281, 0.044715
        %v2410 = vmul.f32 %v2282, 0.044715
        %v2411 = vmul.f32 %v2283, 0.044715
        %v2412 = vmul.f32 %v2284, 0.044715
        %v2413 = vmul.f32 %v2285, 0.044715
        %v2414 = vadd.f32 %v1679, %v2286
        %v2415 = vadd.f32 %v1681, %v2287
        %v2416 = vadd.f32 %v1872, %v2288
        %v2417 = vadd.f32 %v1874, %v2289
        %v2418 = vadd.f32 %v1683, %v2290
        %v2419 = vadd.f32 %v1685, %v2291
        %v2420 = vadd.f32 %v1876, %v2292
        %v2421 = vadd.f32 %v1878, %v2293
        %v2422 = vadd.f32 %v1689, %v2294
        %v2423 = vadd.f32 %v1691, %v2295
        %v2424 = vadd.f32 %v1882, %v2296
        %v2425 = vadd.f32 %v1884, %v2297
        %v2426 = vadd.f32 %v1693, %v2298
        %v2427 = vadd.f32 %v1695, %v2299
        %v2428 = vadd.f32 %v1886, %v2300
        %v2429 = vadd.f32 %v1888, %v2301
        %v2430 = vadd.f32 %v1699, %v2302
        %v2431 = vadd.f32 %v1701, %v2303
        %v2432 = vadd.f32 %v1892, %v2304
        %v2433 = vadd.f32 %v1894, %v2305
        %v2434 = vadd.f32 %v1703, %v2306
        %v2435 = vadd.f32 %v1705, %v2307
        %v2436 = vadd.f32 %v1896, %v2308
        %v2437 = vadd.f32 %v1898, %v2309
        %v2438 = vadd.f32 %v1709, %v2310
        %v2439 = vadd.f32 %v1711, %v2311
        %v2440 = vadd.f32 %v1902, %v2312
        %v2441 = vadd.f32 %v1904, %v2313
        %v2442 = vadd.f32 %v1713, %v2314
        %v2443 = vadd.f32 %v1715, %v2315
        %v2444 = vadd.f32 %v1906, %v2316
        %v2445 = vadd.f32 %v1908, %v2317
        %v2446 = vadd.f32 %v1719, %v2318
        %v2447 = vadd.f32 %v1721, %v2319
        %v2448 = vadd.f32 %v1912, %v2320
        %v2449 = vadd.f32 %v1914, %v2321
        %v2450 = vadd.f32 %v1723, %v2322
        %v2451 = vadd.f32 %v1725, %v2323
        %v2452 = vadd.f32 %v1916, %v2324
        %v2453 = vadd.f32 %v1918, %v2325
        %v2454 = vadd.f32 %v1729, %v2326
        %v2455 = vadd.f32 %v1731, %v2327
        %v2456 = vadd.f32 %v1922, %v2328
        %v2457 = vadd.f32 %v1924, %v2329
        %v2458 = vadd.f32 %v1733, %v2330
        %v2459 = vadd.f32 %v1735, %v2331
        %v2460 = vadd.f32 %v1926, %v2332
        %v2461 = vadd.f32 %v1928, %v2333
        %v2462 = vadd.f32 %v1739, %v2334
        %v2463 = vadd.f32 %v1741, %v2335
        %v2464 = vadd.f32 %v1932, %v2336
        %v2465 = vadd.f32 %v1934, %v2337
        %v2466 = vadd.f32 %v1743, %v2338
        %v2467 = vadd.f32 %v1745, %v2339
        %v2468 = vadd.f32 %v1936, %v2340
        %v2469 = vadd.f32 %v1938, %v2341
        %v2470 = vadd.f32 %v1749, %v2342
        %v2471 = vadd.f32 %v1751, %v2343
        %v2472 = vadd.f32 %v1942, %v2344
        %v2473 = vadd.f32 %v1944, %v2345
        %v2474 = vadd.f32 %v1753, %v2346
        %v2475 = vadd.f32 %v1755, %v2347
        %v2476 = vadd.f32 %v1946, %v2348
        %v2477 = vadd.f32 %v1948, %v2349
        %v2478 = vadd.f32 %v1759, %v2350
        %v2479 = vadd.f32 %v1761, %v2351
        %v2480 = vadd.f32 %v1952, %v2352
        %v2481 = vadd.f32 %v1954, %v2353
        %v2482 = vadd.f32 %v1763, %v2354
        %v2483 = vadd.f32 %v1765, %v2355
        %v2484 = vadd.f32 %v1956, %v2356
        %v2485 = vadd.f32 %v1958, %v2357
        %v2486 = vadd.f32 %v1769, %v2358
        %v2487 = vadd.f32 %v1771, %v2359
        %v2488 = vadd.f32 %v1962, %v2360
        %v2489 = vadd.f32 %v1964, %v2361
        %v2490 = vadd.f32 %v1773, %v2362
        %v2491 = vadd.f32 %v1775, %v2363
        %v2492 = vadd.f32 %v1966, %v2364
        %v2493 = vadd.f32 %v1968, %v2365
        %v2494 = vadd.f32 %v1779, %v2366
        %v2495 = vadd.f32 %v1781, %v2367
        %v2496 = vadd.f32 %v1972, %v2368
        %v2497 = vadd.f32 %v1974, %v2369
        %v2498 = vadd.f32 %v1783, %v2370
        %v2499 = vadd.f32 %v1785, %v2371
        %v2500 = vadd.f32 %v1976, %v2372
        %v2501 = vadd.f32 %v1978, %v2373
        %v2502 = vadd.f32 %v1789, %v2374
        %v2503 = vadd.f32 %v1791, %v2375
        %v2504 = vadd.f32 %v1982, %v2376
        %v2505 = vadd.f32 %v1984, %v2377
        %v2506 = vadd.f32 %v1793, %v2378
        %v2507 = vadd.f32 %v1795, %v2379
        %v2508 = vadd.f32 %v1986, %v2380
        %v2509 = vadd.f32 %v1988, %v2381
        %v2510 = vadd.f32 %v1799, %v2382
        %v2511 = vadd.f32 %v1801, %v2383
        %v2512 = vadd.f32 %v1992, %v2384
        %v2513 = vadd.f32 %v1994, %v2385
        %v2514 = vadd.f32 %v1803, %v2386
        %v2515 = vadd.f32 %v1805, %v2387
        %v2516 = vadd.f32 %v1996, %v2388
        %v2517 = vadd.f32 %v1998, %v2389
        %v2518 = vadd.f32 %v1809, %v2390
        %v2519 = vadd.f32 %v1811, %v2391
        %v2520 = vadd.f32 %v2002, %v2392
        %v2521 = vadd.f32 %v2004, %v2393
        %v2522 = vadd.f32 %v1813, %v2394
        %v2523 = vadd.f32 %v1815, %v2395
        %v2524 = vadd.f32 %v2006, %v2396
        %v2525 = vadd.f32 %v2008, %v2397
        %v2526 = vadd.f32 %v1819, %v2398
        %v2527 = vadd.f32 %v1821, %v2399
        %v2528 = vadd.f32 %v2012, %v2400
        %v2529 = vadd.f32 %v2014, %v2401
        %v2530 = vadd.f32 %v1823, %v2402
        %v2531 = vadd.f32 %v1825, %v2403
        %v2532 = vadd.f32 %v2016, %v2404
        %v2533 = vadd.f32 %v2018, %v2405
        %v2534 = vadd.f32 %v1829, %v2406
        %v2535 = vadd.f32 %v1831, %v2407
        %v2536 = vadd.f32 %v2022, %v2408
        %v2537 = vadd.f32 %v2024, %v2409
        %v2538 = vadd.f32 %v1833, %v2410
        %v2539 = vadd.f32 %v1835, %v2411
        %v2540 = vadd.f32 %v2026, %v2412
        %v2541 = vadd.f32 %v2028, %v2413
        %v2542 = vmul.f32 %v2414, 0.7978846
        %v2543 = vmul.f32 %v2415, 0.7978846
        %v2544 = vmul.f32 %v2416, 0.7978846
        %v2545 = vmul.f32 %v2417, 0.7978846
        %v2546 = vmul.f32 %v2418, 0.7978846
        %v2547 = vmul.f32 %v2419, 0.7978846
        %v2548 = vmul.f32 %v2420, 0.7978846
        %v2549 = vmul.f32 %v2421, 0.7978846
        %v2550 = vmul.f32 %v2422, 0.7978846
        %v2551 = vmul.f32 %v2423, 0.7978846
        %v2552 = vmul.f32 %v2424, 0.7978846
        %v2553 = vmul.f32 %v2425, 0.7978846
        %v2554 = vmul.f32 %v2426, 0.7978846
        %v2555 = vmul.f32 %v2427, 0.7978846
        %v2556 = vmul.f32 %v2428, 0.7978846
        %v2557 = vmul.f32 %v2429, 0.7978846
        %v2558 = vmul.f32 %v2430, 0.7978846
        %v2559 = vmul.f32 %v2431, 0.7978846
        %v2560 = vmul.f32 %v2432, 0.7978846
        %v2561 = vmul.f32 %v2433, 0.7978846
        %v2562 = vmul.f32 %v2434, 0.7978846
        %v2563 = vmul.f32 %v2435, 0.7978846
        %v2564 = vmul.f32 %v2436, 0.7978846
        %v2565 = vmul.f32 %v2437, 0.7978846
        %v2566 = vmul.f32 %v2438, 0.7978846
        %v2567 = vmul.f32 %v2439, 0.7978846
        %v2568 = vmul.f32 %v2440, 0.7978846
        %v2569 = vmul.f32 %v2441, 0.7978846
        %v2570 = vmul.f32 %v2442, 0.7978846
        %v2571 = vmul.f32 %v2443, 0.7978846
        %v2572 = vmul.f32 %v2444, 0.7978846
        %v2573 = vmul.f32 %v2445, 0.7978846
        %v2574 = vmul.f32 %v2446, 0.7978846
        %v2575 = vmul.f32 %v2447, 0.7978846
        %v2576 = vmul.f32 %v2448, 0.7978846
        %v2577 = vmul.f32 %v2449, 0.7978846
        %v2578 = vmul.f32 %v2450, 0.7978846
        %v2579 = vmul.f32 %v2451, 0.7978846
        %v2580 = vmul.f32 %v2452, 0.7978846
        %v2581 = vmul.f32 %v2453, 0.7978846
        %v2582 = vmul.f32 %v2454, 0.7978846
        %v2583 = vmul.f32 %v2455, 0.7978846
        %v2584 = vmul.f32 %v2456, 0.7978846
        %v2585 = vmul.f32 %v2457, 0.7978846
        %v2586 = vmul.f32 %v2458, 0.7978846
        %v2587 = vmul.f32 %v2459, 0.7978846
        %v2588 = vmul.f32 %v2460, 0.7978846
        %v2589 = vmul.f32 %v2461, 0.7978846
        %v2590 = vmul.f32 %v2462, 0.7978846
        %v2591 = vmul.f32 %v2463, 0.7978846
        %v2592 = vmul.f32 %v2464, 0.7978846
        %v2593 = vmul.f32 %v2465, 0.7978846
        %v2594 = vmul.f32 %v2466, 0.7978846
        %v2595 = vmul.f32 %v2467, 0.7978846
        %v2596 = vmul.f32 %v2468, 0.7978846
        %v2597 = vmul.f32 %v2469, 0.7978846
        %v2598 = vmul.f32 %v2470, 0.7978846
        %v2599 = vmul.f32 %v2471, 0.7978846
        %v2600 = vmul.f32 %v2472, 0.7978846
        %v2601 = vmul.f32 %v2473, 0.7978846
        %v2602 = vmul.f32 %v2474, 0.7978846
        %v2603 = vmul.f32 %v2475, 0.7978846
        %v2604 = vmul.f32 %v2476, 0.7978846
        %v2605 = vmul.f32 %v2477, 0.7978846
        %v2606 = vmul.f32 %v2478, 0.7978846
        %v2607 = vmul.f32 %v2479, 0.7978846
        %v2608 = vmul.f32 %v2480, 0.7978846
        %v2609 = vmul.f32 %v2481, 0.7978846
        %v2610 = vmul.f32 %v2482, 0.7978846
        %v2611 = vmul.f32 %v2483, 0.7978846
        %v2612 = vmul.f32 %v2484, 0.7978846
        %v2613 = vmul.f32 %v2485, 0.7978846
        %v2614 = vmul.f32 %v2486, 0.7978846
        %v2615 = vmul.f32 %v2487, 0.7978846
        %v2616 = vmul.f32 %v2488, 0.7978846
        %v2617 = vmul.f32 %v2489, 0.7978846
        %v2618 = vmul.f32 %v2490, 0.7978846
        %v2619 = vmul.f32 %v2491, 0.7978846
        %v2620 = vmul.f32 %v2492, 0.7978846
        %v2621 = vmul.f32 %v2493, 0.7978846
        %v2622 = vmul.f32 %v2494, 0.7978846
        %v2623 = vmul.f32 %v2495, 0.7978846
        %v2624 = vmul.f32 %v2496, 0.7978846
        %v2625 = vmul.f32 %v2497, 0.7978846
        %v2626 = vmul.f32 %v2498, 0.7978846
        %v2627 = vmul.f32 %v2499, 0.7978846
        %v2628 = vmul.f32 %v2500, 0.7978846
        %v2629 = vmul.f32 %v2501, 0.7978846
        %v2630 = vmul.f32 %v2502, 0.7978846
        %v2631 = vmul.f32 %v2503, 0.7978846
        %v2632 = vmul.f32 %v2504, 0.7978846
        %v2633 = vmul.f32 %v2505, 0.7978846
        %v2634 = vmul.f32 %v2506, 0.7978846
        %v2635 = vmul.f32 %v2507, 0.7978846
        %v2636 = vmul.f32 %v2508, 0.7978846
        %v2637 = vmul.f32 %v2509, 0.7978846
        %v2638 = vmul.f32 %v2510, 0.7978846
        %v2639 = vmul.f32 %v2511, 0.7978846
        %v2640 = vmul.f32 %v2512, 0.7978846
        %v2641 = vmul.f32 %v2513, 0.7978846
        %v2642 = vmul.f32 %v2514, 0.7978846
        %v2643 = vmul.f32 %v2515, 0.7978846
        %v2644 = vmul.f32 %v2516, 0.7978846
        %v2645 = vmul.f32 %v2517, 0.7978846
        %v2646 = vmul.f32 %v2518, 0.7978846
        %v2647 = vmul.f32 %v2519, 0.7978846
        %v2648 = vmul.f32 %v2520, 0.7978846
        %v2649 = vmul.f32 %v2521, 0.7978846
        %v2650 = vmul.f32 %v2522, 0.7978846
        %v2651 = vmul.f32 %v2523, 0.7978846
        %v2652 = vmul.f32 %v2524, 0.7978846
        %v2653 = vmul.f32 %v2525, 0.7978846
        %v2654 = vmul.f32 %v2526, 0.7978846
        %v2655 = vmul.f32 %v2527, 0.7978846
        %v2656 = vmul.f32 %v2528, 0.7978846
        %v2657 = vmul.f32 %v2529, 0.7978846
        %v2658 = vmul.f32 %v2530, 0.7978846
        %v2659 = vmul.f32 %v2531, 0.7978846
        %v2660 = vmul.f32 %v2532, 0.7978846
        %v2661 = vmul.f32 %v2533, 0.7978846
        %v2662 = vmul.f32 %v2534, 0.7978846
        %v2663 = vmul.f32 %v2535, 0.7978846
        %v2664 = vmul.f32 %v2536, 0.7978846
        %v2665 = vmul.f32 %v2537, 0.7978846
        %v2666 = vmul.f32 %v2538, 0.7978846
        %v2667 = vmul.f32 %v2539, 0.7978846
        %v2668 = vmul.f32 %v2540, 0.7978846
        %v2669 = vmul.f32 %v2541, 0.7978846
        %v2670 = vtanh.pop %v2542
        %v2671 = vtanh.pop %v2543
        %v2672 = vtanh.pop %v2544
        %v2673 = vtanh.pop %v2545
        %v2674 = vtanh.pop %v2546
        %v2675 = vtanh.pop %v2547
        %v2676 = vtanh.pop %v2548
        %v2677 = vtanh.pop %v2549
        %v2678 = vtanh.pop %v2550
        %v2679 = vtanh.pop %v2551
        %v2680 = vtanh.pop %v2552
        %v2681 = vtanh.pop %v2553
        %v2682 = vtanh.pop %v2554
        %v2683 = vtanh.pop %v2555
        %v2684 = vtanh.pop %v2556
        %v2685 = vtanh.pop %v2557
        %v2686 = vtanh.pop %v2558
        %v2687 = vtanh.pop %v2559
        %v2688 = vtanh.pop %v2560
        %v2689 = vtanh.pop %v2561
        %v2690 = vtanh.pop %v2562
        %v2691 = vtanh.pop %v2563
        %v2692 = vtanh.pop %v2564
        %v2693 = vtanh.pop %v2565
        %v2694 = vtanh.pop %v2566
        %v2695 = vtanh.pop %v2567
        %v2696 = vtanh.pop %v2568
        %v2697 = vtanh.pop %v2569
        %v2698 = vtanh.pop %v2570
        %v2699 = vtanh.pop %v2571
        %v2700 = vtanh.pop %v2572
        %v2701 = vtanh.pop %v2573
        %v2702 = vtanh.pop %v2574
        %v2703 = vtanh.pop %v2575
        %v2704 = vtanh.pop %v2576
        %v2705 = vtanh.pop %v2577
        %v2706 = vtanh.pop %v2578
        %v2707 = vtanh.pop %v2579
        %v2708 = vtanh.pop %v2580
        %v2709 = vtanh.pop %v2581
        %v2710 = vtanh.pop %v2582
        %v2711 = vtanh.pop %v2583
        %v2712 = vtanh.pop %v2584
        %v2713 = vtanh.pop %v2585
        %v2714 = vtanh.pop %v2586
        %v2715 = vtanh.pop %v2587
        %v2716 = vtanh.pop %v2588
        %v2717 = vtanh.pop %v2589
        %v2718 = vtanh.pop %v2590
        %v2719 = vtanh.pop %v2591
        %v2720 = vtanh.pop %v2592
        %v2721 = vtanh.pop %v2593
        %v2722 = vtanh.pop %v2594
        %v2723 = vtanh.pop %v2595
        %v2724 = vtanh.pop %v2596
        %v2725 = vtanh.pop %v2597
        %v2726 = vtanh.pop %v2598
        %v2727 = vtanh.pop %v2599
        %v2728 = vtanh.pop %v2600
        %v2729 = vtanh.pop %v2601
        %v2730 = vtanh.pop %v2602
        %v2731 = vtanh.pop %v2603
        %v2732 = vtanh.pop %v2604
        %v2733 = vtanh.pop %v2605
        %v2734 = vtanh.pop %v2606
        %v2735 = vtanh.pop %v2607
        %v2736 = vtanh.pop %v2608
        %v2737 = vtanh.pop %v2609
        %v2738 = vtanh.pop %v2610
        %v2739 = vtanh.pop %v2611
        %v2740 = vtanh.pop %v2612
        %v2741 = vtanh.pop %v2613
        %v2742 = vtanh.pop %v2614
        %v2743 = vtanh.pop %v2615
        %v2744 = vtanh.pop %v2616
        %v2745 = vtanh.pop %v2617
        %v2746 = vtanh.pop %v2618
        %v2747 = vtanh.pop %v2619
        %v2748 = vtanh.pop %v2620
        %v2749 = vtanh.pop %v2621
        %v2750 = vtanh.pop %v2622
        %v2751 = vtanh.pop %v2623
        %v2752 = vtanh.pop %v2624
        %v2753 = vtanh.pop %v2625
        %v2754 = vtanh.pop %v2626
        %v2755 = vtanh.pop %v2627
        %v2756 = vtanh.pop %v2628
        %v2757 = vtanh.pop %v2629
        %v2758 = vtanh.pop %v2630
        %v2759 = vtanh.pop %v2631
        %v2760 = vtanh.pop %v2632
        %v2761 = vtanh.pop %v2633
        %v2762 = vtanh.pop %v2634
        %v2763 = vtanh.pop %v2635
        %v2764 = vtanh.pop %v2636
        %v2765 = vtanh.pop %v2637
        %v2766 = vtanh.pop %v2638
        %v2767 = vtanh.pop %v2639
        %v2768 = vtanh.pop %v2640
        %v2769 = vtanh.pop %v2641
        %v2770 = vtanh.pop %v2642
        %v2771 = vtanh.pop %v2643
        %v2772 = vtanh.pop %v2644
        %v2773 = vtanh.pop %v2645
        %v2774 = vtanh.pop %v2646
        %v2775 = vtanh.pop %v2647
        %v2776 = vtanh.pop %v2648
        %v2777 = vtanh.pop %v2649
        %v2778 = vtanh.pop %v2650
        %v2779 = vtanh.pop %v2651
        %v2780 = vtanh.pop %v2652
        %v2781 = vtanh.pop %v2653
        %v2782 = vtanh.pop %v2654
        %v2783 = vtanh.pop %v2655
        %v2784 = vtanh.pop %v2656
        %v2785 = vtanh.pop %v2657
        %v2786 = vtanh.pop %v2658
        %v2787 = vtanh.pop %v2659
        %v2788 = vtanh.pop %v2660
        %v2789 = vtanh.pop %v2661
        %v2790 = vtanh.pop %v2662
        %v2791 = vtanh.pop %v2663
        %v2792 = vtanh.pop %v2664
        %v2793 = vtanh.pop %v2665
        %v2794 = vtanh.pop %v2666
        %v2795 = vtanh.pop %v2667
        %v2796 = vtanh.pop %v2668
        %v2797 = vtanh.pop %v2669
        %v2798 = vadd.f32 %v2670, 1.0
        %v2799 = vadd.f32 %v2671, 1.0
        %v2800 = vadd.f32 %v2672, 1.0
        %v2801 = vadd.f32 %v2673, 1.0
        %v2802 = vadd.f32 %v2674, 1.0
        %v2803 = vadd.f32 %v2675, 1.0
        %v2804 = vadd.f32 %v2676, 1.0
        %v2805 = vadd.f32 %v2677, 1.0
        %v2806 = vadd.f32 %v2678, 1.0
        %v2807 = vadd.f32 %v2679, 1.0
        %v2808 = vadd.f32 %v2680, 1.0
        %v2809 = vadd.f32 %v2681, 1.0
        %v2810 = vadd.f32 %v2682, 1.0
        %v2811 = vadd.f32 %v2683, 1.0
        %v2812 = vadd.f32 %v2684, 1.0
        %v2813 = vadd.f32 %v2685, 1.0
        %v2814 = vadd.f32 %v2686, 1.0
        %v2815 = vadd.f32 %v2687, 1.0
        %v2816 = vadd.f32 %v2688, 1.0
        %v2817 = vadd.f32 %v2689, 1.0
        %v2818 = vadd.f32 %v2690, 1.0
        %v2819 = vadd.f32 %v2691, 1.0
        %v2820 = vadd.f32 %v2692, 1.0
        %v2821 = vadd.f32 %v2693, 1.0
        %v2822 = vadd.f32 %v2694, 1.0
        %v2823 = vadd.f32 %v2695, 1.0
        %v2824 = vadd.f32 %v2696, 1.0
        %v2825 = vadd.f32 %v2697, 1.0
        %v2826 = vadd.f32 %v2698, 1.0
        %v2827 = vadd.f32 %v2699, 1.0
        %v2828 = vadd.f32 %v2700, 1.0
        %v2829 = vadd.f32 %v2701, 1.0
        %v2830 = vadd.f32 %v2702, 1.0
        %v2831 = vadd.f32 %v2703, 1.0
        %v2832 = vadd.f32 %v2704, 1.0
        %v2833 = vadd.f32 %v2705, 1.0
        %v2834 = vadd.f32 %v2706, 1.0
        %v2835 = vadd.f32 %v2707, 1.0
        %v2836 = vadd.f32 %v2708, 1.0
        %v2837 = vadd.f32 %v2709, 1.0
        %v2838 = vadd.f32 %v2710, 1.0
        %v2839 = vadd.f32 %v2711, 1.0
        %v2840 = vadd.f32 %v2712, 1.0
        %v2841 = vadd.f32 %v2713, 1.0
        %v2842 = vadd.f32 %v2714, 1.0
        %v2843 = vadd.f32 %v2715, 1.0
        %v2844 = vadd.f32 %v2716, 1.0
        %v2845 = vadd.f32 %v2717, 1.0
        %v2846 = vadd.f32 %v2718, 1.0
        %v2847 = vadd.f32 %v2719, 1.0
        %v2848 = vadd.f32 %v2720, 1.0
        %v2849 = vadd.f32 %v2721, 1.0
        %v2850 = vadd.f32 %v2722, 1.0
        %v2851 = vadd.f32 %v2723, 1.0
        %v2852 = vadd.f32 %v2724, 1.0
        %v2853 = vadd.f32 %v2725, 1.0
        %v2854 = vadd.f32 %v2726, 1.0
        %v2855 = vadd.f32 %v2727, 1.0
        %v2856 = vadd.f32 %v2728, 1.0
        %v2857 = vadd.f32 %v2729, 1.0
        %v2858 = vadd.f32 %v2730, 1.0
        %v2859 = vadd.f32 %v2731, 1.0
        %v2860 = vadd.f32 %v2732, 1.0
        %v2861 = vadd.f32 %v2733, 1.0
        %v2862 = vadd.f32 %v2734, 1.0
        %v2863 = vadd.f32 %v2735, 1.0
        %v2864 = vadd.f32 %v2736, 1.0
        %v2865 = vadd.f32 %v2737, 1.0
        %v2866 = vadd.f32 %v2738, 1.0
        %v2867 = vadd.f32 %v2739, 1.0
        %v2868 = vadd.f32 %v2740, 1.0
        %v2869 = vadd.f32 %v2741, 1.0
        %v2870 = vadd.f32 %v2742, 1.0
        %v2871 = vadd.f32 %v2743, 1.0
        %v2872 = vadd.f32 %v2744, 1.0
        %v2873 = vadd.f32 %v2745, 1.0
        %v2874 = vadd.f32 %v2746, 1.0
        %v2875 = vadd.f32 %v2747, 1.0
        %v2876 = vadd.f32 %v2748, 1.0
        %v2877 = vadd.f32 %v2749, 1.0
        %v2878 = vadd.f32 %v2750, 1.0
        %v2879 = vadd.f32 %v2751, 1.0
        %v2880 = vadd.f32 %v2752, 1.0
        %v2881 = vadd.f32 %v2753, 1.0
        %v2882 = vadd.f32 %v2754, 1.0
        %v2883 = vadd.f32 %v2755, 1.0
        %v2884 = vadd.f32 %v2756, 1.0
        %v2885 = vadd.f32 %v2757, 1.0
        %v2886 = vadd.f32 %v2758, 1.0
        %v2887 = vadd.f32 %v2759, 1.0
        %v2888 = vadd.f32 %v2760, 1.0
        %v2889 = vadd.f32 %v2761, 1.0
        %v2890 = vadd.f32 %v2762, 1.0
        %v2891 = vadd.f32 %v2763, 1.0
        %v2892 = vadd.f32 %v2764, 1.0
        %v2893 = vadd.f32 %v2765, 1.0
        %v2894 = vadd.f32 %v2766, 1.0
        %v2895 = vadd.f32 %v2767, 1.0
        %v2896 = vadd.f32 %v2768, 1.0
        %v2897 = vadd.f32 %v2769, 1.0
        %v2898 = vadd.f32 %v2770, 1.0
        %v2899 = vadd.f32 %v2771, 1.0
        %v2900 = vadd.f32 %v2772, 1.0
        %v2901 = vadd.f32 %v2773, 1.0
        %v2902 = vadd.f32 %v2774, 1.0
        %v2903 = vadd.f32 %v2775, 1.0
        %v2904 = vadd.f32 %v2776, 1.0
        %v2905 = vadd.f32 %v2777, 1.0
        %v2906 = vadd.f32 %v2778, 1.0
        %v2907 = vadd.f32 %v2779, 1.0
        %v2908 = vadd.f32 %v2780, 1.0
        %v2909 = vadd.f32 %v2781, 1.0
        %v2910 = vadd.f32 %v2782, 1.0
        %v2911 = vadd.f32 %v2783, 1.0
        %v2912 = vadd.f32 %v2784, 1.0
        %v2913 = vadd.f32 %v2785, 1.0
        %v2914 = vadd.f32 %v2786, 1.0
        %v2915 = vadd.f32 %v2787, 1.0
        %v2916 = vadd.f32 %v2788, 1.0
        %v2917 = vadd.f32 %v2789, 1.0
        %v2918 = vadd.f32 %v2790, 1.0
        %v2919 = vadd.f32 %v2791, 1.0
        %v2920 = vadd.f32 %v2792, 1.0
        %v2921 = vadd.f32 %v2793, 1.0
        %v2922 = vadd.f32 %v2794, 1.0
        %v2923 = vadd.f32 %v2795, 1.0
        %v2924 = vadd.f32 %v2796, 1.0
        %v2925 = vadd.f32 %v2797, 1.0
        %v2926 = vmul.f32 %v2798, 0.5
        %v2927 = vmul.f32 %v2799, 0.5
        %v2928 = vmul.f32 %v2800, 0.5
        %v2929 = vmul.f32 %v2801, 0.5
        %v2930 = vmul.f32 %v2802, 0.5
        %v2931 = vmul.f32 %v2803, 0.5
        %v2932 = vmul.f32 %v2804, 0.5
        %v2933 = vmul.f32 %v2805, 0.5
        %v2934 = vmul.f32 %v2806, 0.5
        %v2935 = vmul.f32 %v2807, 0.5
        %v2936 = vmul.f32 %v2808, 0.5
        %v2937 = vmul.f32 %v2809, 0.5
        %v2938 = vmul.f32 %v2810, 0.5
        %v2939 = vmul.f32 %v2811, 0.5
        %v2940 = vmul.f32 %v2812, 0.5
        %v2941 = vmul.f32 %v2813, 0.5
        %v2942 = vmul.f32 %v2814, 0.5
        %v2943 = vmul.f32 %v2815, 0.5
        %v2944 = vmul.f32 %v2816, 0.5
        %v2945 = vmul.f32 %v2817, 0.5
        %v2946 = vmul.f32 %v2818, 0.5
        %v2947 = vmul.f32 %v2819, 0.5
        %v2948 = vmul.f32 %v2820, 0.5
        %v2949 = vmul.f32 %v2821, 0.5
        %v2950 = vmul.f32 %v2822, 0.5
        %v2951 = vmul.f32 %v2823, 0.5
        %v2952 = vmul.f32 %v2824, 0.5
        %v2953 = vmul.f32 %v2825, 0.5
        %v2954 = vmul.f32 %v2826, 0.5
        %v2955 = vmul.f32 %v2827, 0.5
        %v2956 = vmul.f32 %v2828, 0.5
        %v2957 = vmul.f32 %v2829, 0.5
        %v2958 = vmul.f32 %v2830, 0.5
        %v2959 = vmul.f32 %v2831, 0.5
        %v2960 = vmul.f32 %v2832, 0.5
        %v2961 = vmul.f32 %v2833, 0.5
        %v2962 = vmul.f32 %v2834, 0.5
        %v2963 = vmul.f32 %v2835, 0.5
        %v2964 = vmul.f32 %v2836, 0.5
        %v2965 = vmul.f32 %v2837, 0.5
        %v2966 = vmul.f32 %v2838, 0.5
        %v2967 = vmul.f32 %v2839, 0.5
        %v2968 = vmul.f32 %v2840, 0.5
        %v2969 = vmul.f32 %v2841, 0.5
        %v2970 = vmul.f32 %v2842, 0.5
        %v2971 = vmul.f32 %v2843, 0.5
        %v2972 = vmul.f32 %v2844, 0.5
        %v2973 = vmul.f32 %v2845, 0.5
        %v2974 = vmul.f32 %v2846, 0.5
        %v2975 = vmul.f32 %v2847, 0.5
        %v2976 = vmul.f32 %v2848, 0.5
        %v2977 = vmul.f32 %v2849, 0.5
        %v2978 = vmul.f32 %v2850, 0.5
        %v2979 = vmul.f32 %v2851, 0.5
        %v2980 = vmul.f32 %v2852, 0.5
        %v2981 = vmul.f32 %v2853, 0.5
        %v2982 = vmul.f32 %v2854, 0.5
        %v2983 = vmul.f32 %v2855, 0.5
        %v2984 = vmul.f32 %v2856, 0.5
        %v2985 = vmul.f32 %v2857, 0.5
        %v2986 = vmul.f32 %v2858, 0.5
        %v2987 = vmul.f32 %v2859, 0.5
        %v2988 = vmul.f32 %v2860, 0.5
        %v2989 = vmul.f32 %v2861, 0.5
        %v2990 = vmul.f32 %v2862, 0.5
        %v2991 = vmul.f32 %v2863, 0.5
        %v2992 = vmul.f32 %v2864, 0.5
        %v2993 = vmul.f32 %v2865, 0.5
        %v2994 = vmul.f32 %v2866, 0.5
        %v2995 = vmul.f32 %v2867, 0.5
        %v2996 = vmul.f32 %v2868, 0.5
        %v2997 = vmul.f32 %v2869, 0.5
        %v2998 = vmul.f32 %v2870, 0.5
        %v2999 = vmul.f32 %v2871, 0.5
        %v3000 = vmul.f32 %v2872, 0.5
        %v3001 = vmul.f32 %v2873, 0.5
        %v3002 = vmul.f32 %v2874, 0.5
        %v3003 = vmul.f32 %v2875, 0.5
        %v3004 = vmul.f32 %v2876, 0.5
        %v3005 = vmul.f32 %v2877, 0.5
        %v3006 = vmul.f32 %v2878, 0.5
        %v3007 = vmul.f32 %v2879, 0.5
        %v3008 = vmul.f32 %v2880, 0.5
        %v3009 = vmul.f32 %v2881, 0.5
        %v3010 = vmul.f32 %v2882, 0.5
        %v3011 = vmul.f32 %v2883, 0.5
        %v3012 = vmul.f32 %v2884, 0.5
        %v3013 = vmul.f32 %v2885, 0.5
        %v3014 = vmul.f32 %v2886, 0.5
        %v3015 = vmul.f32 %v2887, 0.5
        %v3016 = vmul.f32 %v2888, 0.5
        %v3017 = vmul.f32 %v2889, 0.5
        %v3018 = vmul.f32 %v2890, 0.5
        %v3019 = vmul.f32 %v2891, 0.5
        %v3020 = vmul.f32 %v2892, 0.5
        %v3021 = vmul.f32 %v2893, 0.5
        %v3022 = vmul.f32 %v2894, 0.5
        %v3023 = vmul.f32 %v2895, 0.5
        %v3024 = vmul.f32 %v2896, 0.5
        %v3025 = vmul.f32 %v2897, 0.5
        %v3026 = vmul.f32 %v2898, 0.5
        %v3027 = vmul.f32 %v2899, 0.5
        %v3028 = vmul.f32 %v2900, 0.5
        %v3029 = vmul.f32 %v2901, 0.5
        %v3030 = vmul.f32 %v2902, 0.5
        %v3031 = vmul.f32 %v2903, 0.5
        %v3032 = vmul.f32 %v2904, 0.5
        %v3033 = vmul.f32 %v2905, 0.5
        %v3034 = vmul.f32 %v2906, 0.5
        %v3035 = vmul.f32 %v2907, 0.5
        %v3036 = vmul.f32 %v2908, 0.5
        %v3037 = vmul.f32 %v2909, 0.5
        %v3038 = vmul.f32 %v2910, 0.5
        %v3039 = vmul.f32 %v2911, 0.5
        %v3040 = vmul.f32 %v2912, 0.5
        %v3041 = vmul.f32 %v2913, 0.5
        %v3042 = vmul.f32 %v2914, 0.5
        %v3043 = vmul.f32 %v2915, 0.5
        %v3044 = vmul.f32 %v2916, 0.5
        %v3045 = vmul.f32 %v2917, 0.5
        %v3046 = vmul.f32 %v2918, 0.5
        %v3047 = vmul.f32 %v2919, 0.5
        %v3048 = vmul.f32 %v2920, 0.5
        %v3049 = vmul.f32 %v2921, 0.5
        %v3050 = vmul.f32 %v2922, 0.5
        %v3051 = vmul.f32 %v2923, 0.5
        %v3052 = vmul.f32 %v2924, 0.5
        %v3053 = vmul.f32 %v2925, 0.5
        %v3054 = vmul.f32 %v1679, %v2926
        %v3055 = vmul.f32 %v1681, %v2927
        %v3056 = vmul.f32 %v1872, %v2928
        %v3057 = vmul.f32 %v1874, %v2929
        %v3058 = vmul.f32 %v1683, %v2930
        %v3059 = vmul.f32 %v1685, %v2931
        %v3060 = vmul.f32 %v1876, %v2932
        %v3061 = vmul.f32 %v1878, %v2933
        %v3062 = vmul.f32 %v1689, %v2934
        %v3063 = vmul.f32 %v1691, %v2935
        %v3064 = vmul.f32 %v1882, %v2936
        %v3065 = vmul.f32 %v1884, %v2937
        %v3066 = vmul.f32 %v1693, %v2938
        %v3067 = vmul.f32 %v1695, %v2939
        %v3068 = vmul.f32 %v1886, %v2940
        %v3069 = vmul.f32 %v1888, %v2941
        %v3070 = vmul.f32 %v1699, %v2942
        %v3071 = vmul.f32 %v1701, %v2943
        %v3072 = vmul.f32 %v1892, %v2944
        %v3073 = vmul.f32 %v1894, %v2945
        %v3074 = vmul.f32 %v1703, %v2946
        %v3075 = vmul.f32 %v1705, %v2947
        %v3076 = vmul.f32 %v1896, %v2948
        %v3077 = vmul.f32 %v1898, %v2949
        %v3078 = vmul.f32 %v1709, %v2950
        %v3079 = vmul.f32 %v1711, %v2951
        %v3080 = vmul.f32 %v1902, %v2952
        %v3081 = vmul.f32 %v1904, %v2953
        %v3082 = vmul.f32 %v1713, %v2954
        %v3083 = vmul.f32 %v1715, %v2955
        %v3084 = vmul.f32 %v1906, %v2956
        %v3085 = vmul.f32 %v1908, %v2957
        %v3086 = vmul.f32 %v1719, %v2958
        %v3087 = vmul.f32 %v1721, %v2959
        %v3088 = vmul.f32 %v1912, %v2960
        %v3089 = vmul.f32 %v1914, %v2961
        %v3090 = vmul.f32 %v1723, %v2962
        %v3091 = vmul.f32 %v1725, %v2963
        %v3092 = vmul.f32 %v1916, %v2964
        %v3093 = vmul.f32 %v1918, %v2965
        %v3094 = vmul.f32 %v1729, %v2966
        %v3095 = vmul.f32 %v1731, %v2967
        %v3096 = vmul.f32 %v1922, %v2968
        %v3097 = vmul.f32 %v1924, %v2969
        %v3098 = vmul.f32 %v1733, %v2970
        %v3099 = vmul.f32 %v1735, %v2971
        %v3100 = vmul.f32 %v1926, %v2972
        %v3101 = vmul.f32 %v1928, %v2973
        %v3102 = vmul.f32 %v1739, %v2974
        %v3103 = vmul.f32 %v1741, %v2975
        %v3104 = vmul.f32 %v1932, %v2976
        %v3105 = vmul.f32 %v1934, %v2977
        %v3106 = vmul.f32 %v1743, %v2978
        %v3107 = vmul.f32 %v1745, %v2979
        %v3108 = vmul.f32 %v1936, %v2980
        %v3109 = vmul.f32 %v1938, %v2981
        %v3110 = vmul.f32 %v1749, %v2982
        %v3111 = vmul.f32 %v1751, %v2983
        %v3112 = vmul.f32 %v1942, %v2984
        %v3113 = vmul.f32 %v1944, %v2985
        %v3114 = vmul.f32 %v1753, %v2986
        %v3115 = vmul.f32 %v1755, %v2987
        %v3116 = vmul.f32 %v1946, %v2988
        %v3117 = vmul.f32 %v1948, %v2989
        %v3118 = vmul.f32 %v1759, %v2990
        %v3119 = vmul.f32 %v1761, %v2991
        %v3120 = vmul.f32 %v1952, %v2992
        %v3121 = vmul.f32 %v1954, %v2993
        %v3122 = vmul.f32 %v1763, %v2994
        %v3123 = vmul.f32 %v1765, %v2995
        %v3124 = vmul.f32 %v1956, %v2996
        %v3125 = vmul.f32 %v1958, %v2997
        %v3126 = vmul.f32 %v1769, %v2998
        %v3127 = vmul.f32 %v1771, %v2999
        %v3128 = vmul.f32 %v1962, %v3000
        %v3129 = vmul.f32 %v1964, %v3001
        %v3130 = vmul.f32 %v1773, %v3002
        %v3131 = vmul.f32 %v1775, %v3003
        %v3132 = vmul.f32 %v1966, %v3004
        %v3133 = vmul.f32 %v1968, %v3005
        %v3134 = vmul.f32 %v1779, %v3006
        %v3135 = vmul.f32 %v1781, %v3007
        %v3136 = vmul.f32 %v1972, %v3008
        %v3137 = vmul.f32 %v1974, %v3009
        %v3138 = vmul.f32 %v1783, %v3010
        %v3139 = vmul.f32 %v1785, %v3011
        %v3140 = vmul.f32 %v1976, %v3012
        %v3141 = vmul.f32 %v1978, %v3013
        %v3142 = vmul.f32 %v1789, %v3014
        %v3143 = vmul.f32 %v1791, %v3015
        %v3144 = vmul.f32 %v1982, %v3016
        %v3145 = vmul.f32 %v1984, %v3017
        %v3146 = vmul.f32 %v1793, %v3018
        %v3147 = vmul.f32 %v1795, %v3019
        %v3148 = vmul.f32 %v1986, %v3020
        %v3149 = vmul.f32 %v1988, %v3021
        %v3150 = vmul.f32 %v1799, %v3022
        %v3151 = vmul.f32 %v1801, %v3023
        %v3152 = vmul.f32 %v1992, %v3024
        %v3153 = vmul.f32 %v1994, %v3025
        %v3154 = vmul.f32 %v1803, %v3026
        %v3155 = vmul.f32 %v1805, %v3027
        %v3156 = vmul.f32 %v1996, %v3028
        %v3157 = vmul.f32 %v1998, %v3029
        %v3158 = vmul.f32 %v1809, %v3030
        %v3159 = vmul.f32 %v1811, %v3031
        %v3160 = vmul.f32 %v2002, %v3032
        %v3161 = vmul.f32 %v2004, %v3033
        %v3162 = vmul.f32 %v1813, %v3034
        %v3163 = vmul.f32 %v1815, %v3035
        %v3164 = vmul.f32 %v2006, %v3036
        %v3165 = vmul.f32 %v2008, %v3037
        %v3166 = vmul.f32 %v1819, %v3038
        %v3167 = vmul.f32 %v1821, %v3039
        %v3168 = vmul.f32 %v2012, %v3040
        %v3169 = vmul.f32 %v2014, %v3041
        %v3170 = vmul.f32 %v1823, %v3042
        %v3171 = vmul.f32 %v1825, %v3043
        %v3172 = vmul.f32 %v2016, %v3044
        %v3173 = vmul.f32 %v2018, %v3045
        %v3174 = vmul.f32 %v1829, %v3046
        %v3175 = vmul.f32 %v1831, %v3047
        %v3176 = vmul.f32 %v2022, %v3048
        %v3177 = vmul.f32 %v2024, %v3049
        %v3178 = vmul.f32 %v1833, %v3050
        %v3179 = vmul.f32 %v1835, %v3051
        %v3180 = vmul.f32 %v2026, %v3052
        %v3181 = vmul.f32 %v2028, %v3053
        %v3182 = vpack.c.bf16 %v3058, %v3054
        %v3183 = vpack.c.bf16 %v3059, %v3055
        %v3184 = vpack.c.bf16 %v3060, %v3056
        %v3185 = vpack.c.bf16 %v3061, %v3057
        %v3186 = vpack.c.bf16 %v3066, %v3062
        %v3187 = vpack.c.bf16 %v3067, %v3063
        %v3188 = vpack.c.bf16 %v3068, %v3064
        %v3189 = vpack.c.bf16 %v3069, %v3065
        %v3190 = vpack.c.bf16 %v3074, %v3070
        %v3191 = vpack.c.bf16 %v3075, %v3071
        %v3192 = vpack.c.bf16 %v3076, %v3072
        %v3193 = vpack.c.bf16 %v3077, %v3073
        %v3194 = vpack.c.bf16 %v3082, %v3078
        %v3195 = vpack.c.bf16 %v3083, %v3079
        %v3196 = vpack.c.bf16 %v3084, %v3080
        %v3197 = vpack.c.bf16 %v3085, %v3081
        %v3198 = vpack.c.bf16 %v3090, %v3086
        %v3199 = vpack.c.bf16 %v3091, %v3087
        %v3200 = vpack.c.bf16 %v3092, %v3088
        %v3201 = vpack.c.bf16 %v3093, %v3089
        %v3202 = vpack.c.bf16 %v3098, %v3094
        %v3203 = vpack.c.bf16 %v3099, %v3095
        %v3204 = vpack.c.bf16 %v3100, %v3096
        %v3205 = vpack.c.bf16 %v3101, %v3097
        %v3206 = vpack.c.bf16 %v3106, %v3102
        %v3207 = vpack.c.bf16 %v3107, %v3103
        %v3208 = vpack.c.bf16 %v3108, %v3104
        %v3209 = vpack.c.bf16 %v3109, %v3105
        %v3210 = vpack.c.bf16 %v3114, %v3110
        %v3211 = vpack.c.bf16 %v3115, %v3111
        %v3212 = vpack.c.bf16 %v3116, %v3112
        %v3213 = vpack.c.bf16 %v3117, %v3113
        %v3214 = vpack.c.bf16 %v3122, %v3118
        %v3215 = vpack.c.bf16 %v3123, %v3119
        %v3216 = vpack.c.bf16 %v3124, %v3120
        %v3217 = vpack.c.bf16 %v3125, %v3121
        %v3218 = vpack.c.bf16 %v3130, %v3126
        %v3219 = vpack.c.bf16 %v3131, %v3127
        %v3220 = vpack.c.bf16 %v3132, %v3128
        %v3221 = vpack.c.bf16 %v3133, %v3129
        %v3222 = vpack.c.bf16 %v3138, %v3134
        %v3223 = vpack.c.bf16 %v3139, %v3135
        %v3224 = vpack.c.bf16 %v3140, %v3136
        %v3225 = vpack.c.bf16 %v3141, %v3137
        %v3226 = vpack.c.bf16 %v3146, %v3142
        %v3227 = vpack.c.bf16 %v3147, %v3143
        %v3228 = vpack.c.bf16 %v3148, %v3144
        %v3229 = vpack.c.bf16 %v3149, %v3145
        %v3230 = vpack.c.bf16 %v3154, %v3150
        %v3231 = vpack.c.bf16 %v3155, %v3151
        %v3232 = vpack.c.bf16 %v3156, %v3152
        %v3233 = vpack.c.bf16 %v3157, %v3153
        %v3234 = vpack.c.bf16 %v3162, %v3158
        %v3235 = vpack.c.bf16 %v3163, %v3159
        %v3236 = vpack.c.bf16 %v3164, %v3160
        %v3237 = vpack.c.bf16 %v3165, %v3161
        %v3238 = vpack.c.bf16 %v3170, %v3166
        %v3239 = vpack.c.bf16 %v3171, %v3167
        %v3240 = vpack.c.bf16 %v3172, %v3168
        %v3241 = vpack.c.bf16 %v3173, %v3169
        %v3242 = vpack.c.bf16 %v3178, %v3174
        %v3243 = vpack.c.bf16 %v3179, %v3175
        %v3244 = vpack.c.bf16 %v3180, %v3176
        %v3245 = vpack.c.bf16 %v3181, %v3177
        %s3246 = smul.u32 4, 128
        %s3247 = smul.u32 %s3246, 2
        %s3248 = sshll.u32 %s3247, 4
        %3249 = dma.done [#allocation5], %s3248
        %v3250 = vld [vmem:[%s441] sm:$0x3]
        %v3251 = vld [vmem:[#allocation3] sm:$0xff]
        %v3252 = vld [vmem:[#allocation3 + $0x8] sm:$0xff]
        %v3253 = vld [vmem:[#allocation3 + $0x10] sm:$0xff]
        %v3254 = vld [vmem:[#allocation3 + $0x18] sm:$0xff]
        %v3255 = vld [vmem:[#allocation3 + $0x20] sm:$0xff]
        %v3256 = vld [vmem:[#allocation3 + $0x28] sm:$0xff]
        %v3257 = vld [vmem:[#allocation3 + $0x30] sm:$0xff]
        %v3258 = vld [vmem:[#allocation3 + $0x38] sm:$0xff]
        %v3259 = vld [vmem:[#allocation3 + $0x40] sm:$0xff]
        %v3260 = vld [vmem:[#allocation3 + $0x48] sm:$0xff]
        %v3261 = vld [vmem:[#allocation3 + $0x50] sm:$0xff]
        %v3262 = vld [vmem:[#allocation3 + $0x58] sm:$0xff]
        %v3263 = vld [vmem:[#allocation3 + $0x60] sm:$0xff]
        %v3264 = vld [vmem:[#allocation3 + $0x68] sm:$0xff]
        %v3265 = vld [vmem:[#allocation3 + $0x70] sm:$0xff]
        %v3266 = vld [vmem:[#allocation3 + $0x78] sm:$0xff]
        %v3267 = vld [vmem:[#allocation3 + $0x80] sm:$0xff]
        %v3268 = vld [vmem:[#allocation3 + $0x88] sm:$0xff]
        %v3269 = vld [vmem:[#allocation3 + $0x90] sm:$0xff]
        %v3270 = vld [vmem:[#allocation3 + $0x98] sm:$0xff]
        %v3271 = vld [vmem:[#allocation3 + $0xa0] sm:$0xff]
        %v3272 = vld [vmem:[#allocation3 + $0xa8] sm:$0xff]
        %v3273 = vld [vmem:[#allocation3 + $0xb0] sm:$0xff]
        %v3274 = vld [vmem:[#allocation3 + $0xb8] sm:$0xff]
        %v3275 = vld [vmem:[#allocation3 + $0xc0] sm:$0xff]
        %v3276 = vld [vmem:[#allocation3 + $0xc8] sm:$0xff]
        %v3277 = vld [vmem:[#allocation3 + $0xd0] sm:$0xff]
        %v3278 = vld [vmem:[#allocation3 + $0xd8] sm:$0xff]
        %v3279 = vld [vmem:[#allocation3 + $0xe0] sm:$0xff]
        %v3280 = vld [vmem:[#allocation3 + $0xe8] sm:$0xff]
        %v3281 = vld [vmem:[#allocation3 + $0xf0] sm:$0xff]
        %v3282 = vld [vmem:[#allocation3 + $0xf8] sm:$0xff]
        %v3283 = vld [vmem:[#allocation3 + $0x100] sm:$0xff]
        %v3284 = vld [vmem:[#allocation3 + $0x108] sm:$0xff]
        %v3285 = vld [vmem:[#allocation3 + $0x110] sm:$0xff]
        %v3286 = vld [vmem:[#allocation3 + $0x118] sm:$0xff]
        %v3287 = vld [vmem:[#allocation3 + $0x120] sm:$0xff]
        %v3288 = vld [vmem:[#allocation3 + $0x128] sm:$0xff]
        %v3289 = vld [vmem:[#allocation3 + $0x130] sm:$0xff]
        %v3290 = vld [vmem:[#allocation3 + $0x138] sm:$0xff]
        %v3291 = vld [vmem:[#allocation3 + $0x140] sm:$0xff]
        %v3292 = vld [vmem:[#allocation3 + $0x148] sm:$0xff]
        %v3293 = vld [vmem:[#allocation3 + $0x150] sm:$0xff]
        %v3294 = vld [vmem:[#allocation3 + $0x158] sm:$0xff]
        %v3295 = vld [vmem:[#allocation3 + $0x160] sm:$0xff]
        %v3296 = vld [vmem:[#allocation3 + $0x168] sm:$0xff]
        %v3297 = vld [vmem:[#allocation3 + $0x170] sm:$0xff]
        %v3298 = vld [vmem:[#allocation3 + $0x178] sm:$0xff]
        %v3299 = vld [vmem:[#allocation3 + $0x180] sm:$0xff]
        %v3300 = vld [vmem:[#allocation3 + $0x188] sm:$0xff]
        %v3301 = vld [vmem:[#allocation3 + $0x190] sm:$0xff]
        %v3302 = vld [vmem:[#allocation3 + $0x198] sm:$0xff]
        %v3303 = vld [vmem:[#allocation3 + $0x1a0] sm:$0xff]
        %v3304 = vld [vmem:[#allocation3 + $0x1a8] sm:$0xff]
        %v3305 = vld [vmem:[#allocation3 + $0x1b0] sm:$0xff]
        %v3306 = vld [vmem:[#allocation3 + $0x1b8] sm:$0xff]
        %v3307 = vld [vmem:[#allocation3 + $0x1c0] sm:$0xff]
        %v3308 = vld [vmem:[#allocation3 + $0x1c8] sm:$0xff]
        %v3309 = vld [vmem:[#allocation3 + $0x1d0] sm:$0xff]
        %v3310 = vld [vmem:[#allocation3 + $0x1d8] sm:$0xff]
        %v3311 = vld [vmem:[#allocation3 + $0x1e0] sm:$0xff]
        %v3312 = vld [vmem:[#allocation3 + $0x1e8] sm:$0xff]
        %v3313 = vld [vmem:[#allocation3 + $0x1f0] sm:$0xff]
        %v3314 = vld [vmem:[#allocation3 + $0x1f8] sm:$0xff]
        %3315 = vmatprep.subr.bf16.mxu0 %v3252
        %3316 = vmatpush1.bf16.msra.mxu0 %v3251
        %3317 = vmatprep.subr.bf16.mxu0 %v3254
        %3318 = vmatpush1.bf16.msra.mxu0 %v3253
        %3319 = vmatprep.subr.bf16.mxu0 %v3256
        %3320 = vmatpush1.bf16.msra.mxu0 %v3255
        %3321 = vmatprep.subr.bf16.mxu0 %v3258
        %3322 = vmatpush1.bf16.msra.mxu0 %v3257
        %3323 = vmatprep.subr.bf16.mxu0 %v3260
        %3324 = vmatpush1.bf16.msra.mxu0 %v3259
        %3325 = vmatprep.subr.bf16.mxu0 %v3262
        %3326 = vmatpush1.bf16.msra.mxu0 %v3261
        %3327 = vmatprep.subr.bf16.mxu0 %v3264
        %3328 = vmatpush1.bf16.msra.mxu0 %v3263
        %3329 = vmatprep.subr.bf16.mxu0 %v3266
        %3330 = vmatpush1.bf16.msra.mxu0 %v3265
        %3331 = vmatprep.subr.bf16.mxu0 %v3268
        %3332 = vmatpush1.bf16.msra.mxu0 %v3267
        %3333 = vmatprep.subr.bf16.mxu0 %v3270
        %3334 = vmatpush1.bf16.msra.mxu0 %v3269
        %3335 = vmatprep.subr.bf16.mxu0 %v3272
        %3336 = vmatpush1.bf16.msra.mxu0 %v3271
        %3337 = vmatprep.subr.bf16.mxu0 %v3274
        %3338 = vmatpush1.bf16.msra.mxu0 %v3273
        %3339 = vmatprep.subr.bf16.mxu0 %v3276
        %3340 = vmatpush1.bf16.msra.mxu0 %v3275
        %3341 = vmatprep.subr.bf16.mxu0 %v3278
        %3342 = vmatpush1.bf16.msra.mxu0 %v3277
        %3343 = vmatprep.subr.bf16.mxu0 %v3280
        %3344 = vmatpush1.bf16.msra.mxu0 %v3279
        %3345 = vmatprep.subr.bf16.mxu0 %v3282
        %3346 = vmatpush1.bf16.msra.mxu0 %v3281
        %3347 = vmatprep.mubr.bf16.mxu0 %v3183
        %3348 = vmatmul.mubr.bf16.gmra.mrb[0].mxu0 %v3182
        %v3349 = vpop.f32.mrb[0].mxu0
        %v3350 = vadd.f32 0.0, %v3349
        %v3351 = vpop.f32.mrb[0].mxu0
        %v3352 = vadd.f32 0.0, %v3351
        %v3353 = vpop.f32.mrb[0].mxu0
        %v3354 = vadd.f32 0.0, %v3353
        %v3355 = vpop.f32.mrb[0].mxu0
        %v3356 = vadd.f32 0.0, %v3355
        %3357 = vmatprep.mubr.bf16.mxu0 %v3187
        %3358 = vmatmul.mubr.bf16.gmra.mrb[0].mxu0 %v3186
        %v3359 = vpop.f32.mrb[0].mxu0
        %v3360 = vadd.f32 0.0, %v3359
        %v3361 = vpop.f32.mrb[0].mxu0
        %v3362 = vadd.f32 0.0, %v3361
        %v3363 = vpop.f32.mrb[0].mxu0
        %v3364 = vadd.f32 0.0, %v3363
        %v3365 = vpop.f32.mrb[0].mxu0
        %v3366 = vadd.f32 0.0, %v3365
        %3367 = vmatprep.mubr.bf16.mxu0 %v3191
        %3368 = vmatmul.mubr.bf16.gmra.mrb[0].mxu0 %v3190
        %v3369 = vpop.f32.mrb[0].mxu0
        %v3370 = vadd.f32 0.0, %v3369
        %v3371 = vpop.f32.mrb[0].mxu0
        %v3372 = vadd.f32 0.0, %v3371
        %v3373 = vpop.f32.mrb[0].mxu0
        %v3374 = vadd.f32 0.0, %v3373
        %v3375 = vpop.f32.mrb[0].mxu0
        %v3376 = vadd.f32 0.0, %v3375
        %3377 = vmatprep.mubr.bf16.mxu0 %v3195
        %3378 = vmatmul.mubr.bf16.gmra.mrb[0].mxu0 %v3194
        %v3379 = vpop.f32.mrb[0].mxu0
        %v3380 = vadd.f32 0.0, %v3379
        %v3381 = vpop.f32.mrb[0].mxu0
        %v3382 = vadd.f32 0.0, %v3381
        %v3383 = vpop.f32.mrb[0].mxu0
        %v3384 = vadd.f32 0.0, %v3383
        %v3385 = vpop.f32.mrb[0].mxu0
        %v3386 = vadd.f32 0.0, %v3385
        %3387 = vmatprep.mubr.bf16.mxu0 %v3199
        %3388 = vmatmul.mubr.bf16.gmra.mrb[0].mxu0 %v3198
        %v3389 = vpop.f32.mrb[0].mxu0
        %v3390 = vadd.f32 0.0, %v3389
        %v3391 = vpop.f32.mrb[0].mxu0
        %v3392 = vadd.f32 0.0, %v3391
        %v3393 = vpop.f32.mrb[0].mxu0
        %v3394 = vadd.f32 0.0, %v3393
        %v3395 = vpop.f32.mrb[0].mxu0
        %v3396 = vadd.f32 0.0, %v3395
        %3397 = vmatprep.mubr.bf16.mxu0 %v3203
        %3398 = vmatmul.mubr.bf16.gmra.mrb[0].mxu0 %v3202
        %v3399 = vpop.f32.mrb[0].mxu0
        %v3400 = vadd.f32 0.0, %v3399
        %v3401 = vpop.f32.mrb[0].mxu0
        %v3402 = vadd.f32 0.0, %v3401
        %v3403 = vpop.f32.mrb[0].mxu0
        %v3404 = vadd.f32 0.0, %v3403
        %v3405 = vpop.f32.mrb[0].mxu0
        %v3406 = vadd.f32 0.0, %v3405
        %3407 = vmatprep.mubr.bf16.mxu0 %v3207
        %3408 = vmatmul.mubr.bf16.gmra.mrb[0].mxu0 %v3206
        %v3409 = vpop.f32.mrb[0].mxu0
        %v3410 = vadd.f32 0.0, %v3409
        %v3411 = vpop.f32.mrb[0].mxu0
        %v3412 = vadd.f32 0.0, %v3411
        %v3413 = vpop.f32.mrb[0].mxu0
        %v3414 = vadd.f32 0.0, %v3413
        %v3415 = vpop.f32.mrb[0].mxu0
        %v3416 = vadd.f32 0.0, %v3415
        %3417 = vmatprep.mubr.bf16.mxu0 %v3211
        %3418 = vmatmul.mubr.bf16.gmra.mrb[0].mxu0 %v3210
        %v3419 = vpop.f32.mrb[0].mxu0
        %v3420 = vadd.f32 0.0, %v3419
        %v3421 = vpop.f32.mrb[0].mxu0
        %v3422 = vadd.f32 0.0, %v3421
        %v3423 = vpop.f32.mrb[0].mxu0
        %v3424 = vadd.f32 0.0, %v3423
        %v3425 = vpop.f32.mrb[0].mxu0
        %v3426 = vadd.f32 0.0, %v3425
        %3427 = vmatprep.mubr.bf16.mxu0 %v3215
        %3428 = vmatmul.mubr.bf16.gmra.mrb[0].mxu0 %v3214
        %v3429 = vpop.f32.mrb[0].mxu0
        %v3430 = vadd.f32 0.0, %v3429
        %v3431 = vpop.f32.mrb[0].mxu0
        %v3432 = vadd.f32 0.0, %v3431
        %v3433 = vpop.f32.mrb[0].mxu0
        %v3434 = vadd.f32 0.0, %v3433
        %v3435 = vpop.f32.mrb[0].mxu0
        %v3436 = vadd.f32 0.0, %v3435
        %3437 = vmatprep.mubr.bf16.mxu0 %v3219
        %3438 = vmatmul.mubr.bf16.gmra.mrb[0].mxu0 %v3218
        %v3439 = vpop.f32.mrb[0].mxu0
        %v3440 = vadd.f32 0.0, %v3439
        %v3441 = vpop.f32.mrb[0].mxu0
        %v3442 = vadd.f32 0.0, %v3441
        %v3443 = vpop.f32.mrb[0].mxu0
        %v3444 = vadd.f32 0.0, %v3443
        %v3445 = vpop.f32.mrb[0].mxu0
        %v3446 = vadd.f32 0.0, %v3445
        %3447 = vmatprep.mubr.bf16.mxu0 %v3223
        %3448 = vmatmul.mubr.bf16.gmra.mrb[0].mxu0 %v3222
        %v3449 = vpop.f32.mrb[0].mxu0
        %v3450 = vadd.f32 0.0, %v3449
        %v3451 = vpop.f32.mrb[0].mxu0
        %v3452 = vadd.f32 0.0, %v3451
        %v3453 = vpop.f32.mrb[0].mxu0
        %v3454 = vadd.f32 0.0, %v3453
        %v3455 = vpop.f32.mrb[0].mxu0
        %v3456 = vadd.f32 0.0, %v3455
        %3457 = vmatprep.mubr.bf16.mxu0 %v3227
        %3458 = vmatmul.mubr.bf16.gmra.mrb[0].mxu0 %v3226
        %v3459 = vpop.f32.mrb[0].mxu0
        %v3460 = vadd.f32 0.0, %v3459
        %v3461 = vpop.f32.mrb[0].mxu0
        %v3462 = vadd.f32 0.0, %v3461
        %v3463 = vpop.f32.mrb[0].mxu0
        %v3464 = vadd.f32 0.0, %v3463
        %v3465 = vpop.f32.mrb[0].mxu0
        %v3466 = vadd.f32 0.0, %v3465
        %3467 = vmatprep.mubr.bf16.mxu0 %v3231
        %3468 = vmatmul.mubr.bf16.gmra.mrb[0].mxu0 %v3230
        %v3469 = vpop.f32.mrb[0].mxu0
        %v3470 = vadd.f32 0.0, %v3469
        %v3471 = vpop.f32.mrb[0].mxu0
        %v3472 = vadd.f32 0.0, %v3471
        %v3473 = vpop.f32.mrb[0].mxu0
        %v3474 = vadd.f32 0.0, %v3473
        %v3475 = vpop.f32.mrb[0].mxu0
        %v3476 = vadd.f32 0.0, %v3475
        %3477 = vmatprep.mubr.bf16.mxu0 %v3235
        %3478 = vmatmul.mubr.bf16.gmra.mrb[0].mxu0 %v3234
        %v3479 = vpop.f32.mrb[0].mxu0
        %v3480 = vadd.f32 0.0, %v3479
        %v3481 = vpop.f32.mrb[0].mxu0
        %v3482 = vadd.f32 0.0, %v3481
        %v3483 = vpop.f32.mrb[0].mxu0
        %v3484 = vadd.f32 0.0, %v3483
        %v3485 = vpop.f32.mrb[0].mxu0
        %v3486 = vadd.f32 0.0, %v3485
        %3487 = vmatprep.mubr.bf16.mxu0 %v3239
        %3488 = vmatmul.mubr.bf16.gmra.mrb[0].mxu0 %v3238
        %v3489 = vpop.f32.mrb[0].mxu0
        %v3490 = vadd.f32 0.0, %v3489
        %v3491 = vpop.f32.mrb[0].mxu0
        %v3492 = vadd.f32 0.0, %v3491
        %v3493 = vpop.f32.mrb[0].mxu0
        %v3494 = vadd.f32 0.0, %v3493
        %v3495 = vpop.f32.mrb[0].mxu0
        %v3496 = vadd.f32 0.0, %v3495
        %3497 = vmatprep.mubr.bf16.mxu0 %v3243
        %3498 = vmatmul.mubr.bf16.gmra.mrb[0].mxu0 %v3242
        %v3499 = vpop.f32.mrb[0].mxu0
        %v3500 = vadd.f32 0.0, %v3499
        %v3501 = vpop.f32.mrb[0].mxu0
        %v3502 = vadd.f32 0.0, %v3501
        %v3503 = vpop.f32.mrb[0].mxu0
        %v3504 = vadd.f32 0.0, %v3503
        %v3505 = vpop.f32.mrb[0].mxu0
        %v3506 = vadd.f32 0.0, %v3505
        %3507 = vdwg.mxu0
        %3508 = vmatprep.subr.bf16.mxu0 %v3284
        %3509 = vmatpush1.bf16.msra.mxu0 %v3283
        %3510 = vmatprep.subr.bf16.mxu0 %v3286
        %3511 = vmatpush1.bf16.msra.mxu0 %v3285
        %3512 = vmatprep.subr.bf16.mxu0 %v3288
        %3513 = vmatpush1.bf16.msra.mxu0 %v3287
        %3514 = vmatprep.subr.bf16.mxu0 %v3290
        %3515 = vmatpush1.bf16.msra.mxu0 %v3289
        %3516 = vmatprep.subr.bf16.mxu0 %v3292
        %3517 = vmatpush1.bf16.msra.mxu0 %v3291
        %3518 = vmatprep.subr.bf16.mxu0 %v3294
        %3519 = vmatpush1.bf16.msra.mxu0 %v3293
        %3520 = vmatprep.subr.bf16.mxu0 %v3296
        %3521 = vmatpush1.bf16.msra.mxu0 %v3295
        %3522 = vmatprep.subr.bf16.mxu0 %v3298
        %3523 = vmatpush1.bf16.msra.mxu0 %v3297
        %3524 = vmatprep.subr.bf16.mxu0 %v3300
        %3525 = vmatpush1.bf16.msra.mxu0 %v3299
        %3526 = vmatprep.subr.bf16.mxu0 %v3302
        %3527 = vmatpush1.bf16.msra.mxu0 %v3301
        %3528 = vmatprep.subr.bf16.mxu0 %v3304
        %3529 = vmatpush1.bf16.msra.mxu0 %v3303
        %3530 = vmatprep.subr.bf16.mxu0 %v3306
        %3531 = vmatpush1.bf16.msra.mxu0 %v3305
        %3532 = vmatprep.subr.bf16.mxu0 %v3308
        %3533 = vmatpush1.bf16.msra.mxu0 %v3307
        %3534 = vmatprep.subr.bf16.mxu0 %v3310
        %3535 = vmatpush1.bf16.msra.mxu0 %v3309
        %3536 = vmatprep.subr.bf16.mxu0 %v3312
        %3537 = vmatpush1.bf16.msra.mxu0 %v3311
        %3538 = vmatprep.subr.bf16.mxu0 %v3314
        %3539 = vmatpush1.bf16.msra.mxu0 %v3313
        %3540 = vmatprep.mubr.bf16.mxu0 %v3185
        %3541 = vmatmul.mubr.bf16.gmra.mrb[0].mxu0 %v3184
        %v3542 = vpop.f32.mrb[0].mxu0
        %v3543 = vadd.f32 %v3350, %v3542
        %v3544 = vpop.f32.mrb[0].mxu0
        %v3545 = vadd.f32 %v3352, %v3544
        %v3546 = vpop.f32.mrb[0].mxu0
        %v3547 = vadd.f32 %v3354, %v3546
        %v3548 = vpop.f32.mrb[0].mxu0
        %v3549 = vadd.f32 %v3356, %v3548
        %3550 = vmatprep.mubr.bf16.mxu0 %v3189
        %3551 = vmatmul.mubr.bf16.gmra.mrb[0].mxu0 %v3188
        %v3552 = vpop.f32.mrb[0].mxu0
        %v3553 = vadd.f32 %v3360, %v3552
        %v3554 = vpop.f32.mrb[0].mxu0
        %v3555 = vadd.f32 %v3362, %v3554
        %v3556 = vpop.f32.mrb[0].mxu0
        %v3557 = vadd.f32 %v3364, %v3556
        %v3558 = vpop.f32.mrb[0].mxu0
        %v3559 = vadd.f32 %v3366, %v3558
        %3560 = vmatprep.mubr.bf16.mxu0 %v3193
        %3561 = vmatmul.mubr.bf16.gmra.mrb[0].mxu0 %v3192
        %v3562 = vpop.f32.mrb[0].mxu0
        %v3563 = vadd.f32 %v3370, %v3562
        %v3564 = vpop.f32.mrb[0].mxu0
        %v3565 = vadd.f32 %v3372, %v3564
        %v3566 = vpop.f32.mrb[0].mxu0
        %v3567 = vadd.f32 %v3374, %v3566
        %v3568 = vpop.f32.mrb[0].mxu0
        %v3569 = vadd.f32 %v3376, %v3568
        %3570 = vmatprep.mubr.bf16.mxu0 %v3197
        %3571 = vmatmul.mubr.bf16.gmra.mrb[0].mxu0 %v3196
        %v3572 = vpop.f32.mrb[0].mxu0
        %v3573 = vadd.f32 %v3380, %v3572
        %v3574 = vpop.f32.mrb[0].mxu0
        %v3575 = vadd.f32 %v3382, %v3574
        %v3576 = vpop.f32.mrb[0].mxu0
        %v3577 = vadd.f32 %v3384, %v3576
        %v3578 = vpop.f32.mrb[0].mxu0
        %v3579 = vadd.f32 %v3386, %v3578
        %3580 = vmatprep.mubr.bf16.mxu0 %v3201
        %3581 = vmatmul.mubr.bf16.gmra.mrb[0].mxu0 %v3200
        %v3582 = vpop.f32.mrb[0].mxu0
        %v3583 = vadd.f32 %v3390, %v3582
        %v3584 = vpop.f32.mrb[0].mxu0
        %v3585 = vadd.f32 %v3392, %v3584
        %v3586 = vpop.f32.mrb[0].mxu0
        %v3587 = vadd.f32 %v3394, %v3586
        %v3588 = vpop.f32.mrb[0].mxu0
        %v3589 = vadd.f32 %v3396, %v3588
        %3590 = vmatprep.mubr.bf16.mxu0 %v3205
        %3591 = vmatmul.mubr.bf16.gmra.mrb[0].mxu0 %v3204
        %v3592 = vpop.f32.mrb[0].mxu0
        %v3593 = vadd.f32 %v3400, %v3592
        %v3594 = vpop.f32.mrb[0].mxu0
        %v3595 = vadd.f32 %v3402, %v3594
        %v3596 = vpop.f32.mrb[0].mxu0
        %v3597 = vadd.f32 %v3404, %v3596
        %v3598 = vpop.f32.mrb[0].mxu0
        %v3599 = vadd.f32 %v3406, %v3598
        %3600 = vmatprep.mubr.bf16.mxu0 %v3209
        %3601 = vmatmul.mubr.bf16.gmra.mrb[0].mxu0 %v3208
        %v3602 = vpop.f32.mrb[0].mxu0
        %v3603 = vadd.f32 %v3410, %v3602
        %v3604 = vpop.f32.mrb[0].mxu0
        %v3605 = vadd.f32 %v3412, %v3604
        %v3606 = vpop.f32.mrb[0].mxu0
        %v3607 = vadd.f32 %v3414, %v3606
        %v3608 = vpop.f32.mrb[0].mxu0
        %v3609 = vadd.f32 %v3416, %v3608
        %3610 = vmatprep.mubr.bf16.mxu0 %v3213
        %3611 = vmatmul.mubr.bf16.gmra.mrb[0].mxu0 %v3212
        %v3612 = vpop.f32.mrb[0].mxu0
        %v3613 = vadd.f32 %v3420, %v3612
        %v3614 = vpop.f32.mrb[0].mxu0
        %v3615 = vadd.f32 %v3422, %v3614
        %v3616 = vpop.f32.mrb[0].mxu0
        %v3617 = vadd.f32 %v3424, %v3616
        %v3618 = vpop.f32.mrb[0].mxu0
        %v3619 = vadd.f32 %v3426, %v3618
        %3620 = vmatprep.mubr.bf16.mxu0 %v3217
        %3621 = vmatmul.mubr.bf16.gmra.mrb[0].mxu0 %v3216
        %v3622 = vpop.f32.mrb[0].mxu0
        %v3623 = vadd.f32 %v3430, %v3622
        %v3624 = vpop.f32.mrb[0].mxu0
        %v3625 = vadd.f32 %v3432, %v3624
        %v3626 = vpop.f32.mrb[0].mxu0
        %v3627 = vadd.f32 %v3434, %v3626
        %v3628 = vpop.f32.mrb[0].mxu0
        %v3629 = vadd.f32 %v3436, %v3628
        %3630 = vmatprep.mubr.bf16.mxu0 %v3221
        %3631 = vmatmul.mubr.bf16.gmra.mrb[0].mxu0 %v3220
        %v3632 = vpop.f32.mrb[0].mxu0
        %v3633 = vadd.f32 %v3440, %v3632
        %v3634 = vpop.f32.mrb[0].mxu0
        %v3635 = vadd.f32 %v3442, %v3634
        %v3636 = vpop.f32.mrb[0].mxu0
        %v3637 = vadd.f32 %v3444, %v3636
        %v3638 = vpop.f32.mrb[0].mxu0
        %v3639 = vadd.f32 %v3446, %v3638
        %3640 = vmatprep.mubr.bf16.mxu0 %v3225
        %3641 = vmatmul.mubr.bf16.gmra.mrb[0].mxu0 %v3224
        %v3642 = vpop.f32.mrb[0].mxu0
        %v3643 = vadd.f32 %v3450, %v3642
        %v3644 = vpop.f32.mrb[0].mxu0
        %v3645 = vadd.f32 %v3452, %v3644
        %v3646 = vpop.f32.mrb[0].mxu0
        %v3647 = vadd.f32 %v3454, %v3646
        %v3648 = vpop.f32.mrb[0].mxu0
        %v3649 = vadd.f32 %v3456, %v3648
        %3650 = vmatprep.mubr.bf16.mxu0 %v3229
        %3651 = vmatmul.mubr.bf16.gmra.mrb[0].mxu0 %v3228
        %v3652 = vpop.f32.mrb[0].mxu0
        %v3653 = vadd.f32 %v3460, %v3652
        %v3654 = vpop.f32.mrb[0].mxu0
        %v3655 = vadd.f32 %v3462, %v3654
        %v3656 = vpop.f32.mrb[0].mxu0
        %v3657 = vadd.f32 %v3464, %v3656
        %v3658 = vpop.f32.mrb[0].mxu0
        %v3659 = vadd.f32 %v3466, %v3658
        %3660 = vmatprep.mubr.bf16.mxu0 %v3233
        %3661 = vmatmul.mubr.bf16.gmra.mrb[0].mxu0 %v3232
        %v3662 = vpop.f32.mrb[0].mxu0
        %v3663 = vadd.f32 %v3470, %v3662
        %v3664 = vpop.f32.mrb[0].mxu0
        %v3665 = vadd.f32 %v3472, %v3664
        %v3666 = vpop.f32.mrb[0].mxu0
        %v3667 = vadd.f32 %v3474, %v3666
        %v3668 = vpop.f32.mrb[0].mxu0
        %v3669 = vadd.f32 %v3476, %v3668
        %3670 = vmatprep.mubr.bf16.mxu0 %v3237
        %3671 = vmatmul.mubr.bf16.gmra.mrb[0].mxu0 %v3236
        %v3672 = vpop.f32.mrb[0].mxu0
        %v3673 = vadd.f32 %v3480, %v3672
        %v3674 = vpop.f32.mrb[0].mxu0
        %v3675 = vadd.f32 %v3482, %v3674
        %v3676 = vpop.f32.mrb[0].mxu0
        %v3677 = vadd.f32 %v3484, %v3676
        %v3678 = vpop.f32.mrb[0].mxu0
        %v3679 = vadd.f32 %v3486, %v3678
        %3680 = vmatprep.mubr.bf16.mxu0 %v3241
        %3681 = vmatmul.mubr.bf16.gmra.mrb[0].mxu0 %v3240
        %v3682 = vpop.f32.mrb[0].mxu0
        %v3683 = vadd.f32 %v3490, %v3682
        %v3684 = vpop.f32.mrb[0].mxu0
        %v3685 = vadd.f32 %v3492, %v3684
        %v3686 = vpop.f32.mrb[0].mxu0
        %v3687 = vadd.f32 %v3494, %v3686
        %v3688 = vpop.f32.mrb[0].mxu0
        %v3689 = vadd.f32 %v3496, %v3688
        %3690 = vmatprep.mubr.bf16.mxu0 %v3245
        %3691 = vmatmul.mubr.bf16.gmra.mrb[0].mxu0 %v3244
        %v3692 = vpop.f32.mrb[0].mxu0
        %v3693 = vadd.f32 %v3500, %v3692
        %v3694 = vpop.f32.mrb[0].mxu0
        %v3695 = vadd.f32 %v3502, %v3694
        %v3696 = vpop.f32.mrb[0].mxu0
        %v3697 = vadd.f32 %v3504, %v3696
        %v3698 = vpop.f32.mrb[0].mxu0
        %v3699 = vadd.f32 %v3506, %v3698
        %3700 = vdwg.mxu0
        %v3702 = vlaneseq
        %v3703 = vshrl.u32 %v3702, 7
        %v3704 = vsub.s32 0, %v3703
        %v3705 = vrot.slane %v3250, %v3704
        %v3706 = vlaneseq
        %v3707 = vshrl.u32 %v3706, 7
        %v3708 = vsub.s32 1, %v3707
        %v3709 = vrot.slane %v3250, %v3708
        %v3712 = vadd.f32 %v3705, %v3543
        %v3713 = vadd.f32 %v3709, %v3545
        %v3714 = vadd.f32 %v3705, %v3547
        %v3715 = vadd.f32 %v3709, %v3549
        %v3716 = vadd.f32 %v3705, %v3553
        %v3717 = vadd.f32 %v3709, %v3555
        %v3718 = vadd.f32 %v3705, %v3557
        %v3719 = vadd.f32 %v3709, %v3559
        %v3720 = vadd.f32 %v3705, %v3563
        %v3721 = vadd.f32 %v3709, %v3565
        %v3722 = vadd.f32 %v3705, %v3567
        %v3723 = vadd.f32 %v3709, %v3569
        %v3724 = vadd.f32 %v3705, %v3573
        %v3725 = vadd.f32 %v3709, %v3575
        %v3726 = vadd.f32 %v3705, %v3577
        %v3727 = vadd.f32 %v3709, %v3579
        %v3728 = vadd.f32 %v3705, %v3583
        %v3729 = vadd.f32 %v3709, %v3585
        %v3730 = vadd.f32 %v3705, %v3587
        %v3731 = vadd.f32 %v3709, %v3589
        %v3732 = vadd.f32 %v3705, %v3593
        %v3733 = vadd.f32 %v3709, %v3595
        %v3734 = vadd.f32 %v3705, %v3597
        %v3735 = vadd.f32 %v3709, %v3599
        %v3736 = vadd.f32 %v3705, %v3603
        %v3737 = vadd.f32 %v3709, %v3605
        %v3738 = vadd.f32 %v3705, %v3607
        %v3739 = vadd.f32 %v3709, %v3609
        %v3740 = vadd.f32 %v3705, %v3613
        %v3741 = vadd.f32 %v3709, %v3615
        %v3742 = vadd.f32 %v3705, %v3617
        %v3743 = vadd.f32 %v3709, %v3619
        %v3744 = vadd.f32 %v3705, %v3623
        %v3745 = vadd.f32 %v3709, %v3625
        %v3746 = vadd.f32 %v3705, %v3627
        %v3747 = vadd.f32 %v3709, %v3629
        %v3748 = vadd.f32 %v3705, %v3633
        %v3749 = vadd.f32 %v3709, %v3635
        %v3750 = vadd.f32 %v3705, %v3637
        %v3751 = vadd.f32 %v3709, %v3639
        %v3752 = vadd.f32 %v3705, %v3643
        %v3753 = vadd.f32 %v3709, %v3645
        %v3754 = vadd.f32 %v3705, %v3647
        %v3755 = vadd.f32 %v3709, %v3649
        %v3756 = vadd.f32 %v3705, %v3653
        %v3757 = vadd.f32 %v3709, %v3655
        %v3758 = vadd.f32 %v3705, %v3657
        %v3759 = vadd.f32 %v3709, %v3659
        %v3760 = vadd.f32 %v3705, %v3663
        %v3761 = vadd.f32 %v3709, %v3665
        %v3762 = vadd.f32 %v3705, %v3667
        %v3763 = vadd.f32 %v3709, %v3669
        %v3764 = vadd.f32 %v3705, %v3673
        %v3765 = vadd.f32 %v3709, %v3675
        %v3766 = vadd.f32 %v3705, %v3677
        %v3767 = vadd.f32 %v3709, %v3679
        %v3768 = vadd.f32 %v3705, %v3683
        %v3769 = vadd.f32 %v3709, %v3685
        %v3770 = vadd.f32 %v3705, %v3687
        %v3771 = vadd.f32 %v3709, %v3689
        %v3772 = vadd.f32 %v3705, %v3693
        %v3773 = vadd.f32 %v3709, %v3695
        %v3774 = vadd.f32 %v3705, %v3697
        %v3775 = vadd.f32 %v3709, %v3699
        %3776 = vst [vmem:[#allocation4] sm:$0xff] %v3712
        %3777 = vst [vmem:[#allocation4 + $0x8] sm:$0xff] %v3713
        %3778 = vst [vmem:[#allocation4 + $0x10] sm:$0xff] %v3714
        %3779 = vst [vmem:[#allocation4 + $0x18] sm:$0xff] %v3715
        %3780 = vst [vmem:[#allocation4 + $0x20] sm:$0xff] %v3716
        %3781 = vst [vmem:[#allocation4 + $0x28] sm:$0xff] %v3717
        %3782 = vst [vmem:[#allocation4 + $0x30] sm:$0xff] %v3718
        %3783 = vst [vmem:[#allocation4 + $0x38] sm:$0xff] %v3719
        %3784 = vst [vmem:[#allocation4 + $0x40] sm:$0xff] %v3720
        %3785 = vst [vmem:[#allocation4 + $0x48] sm:$0xff] %v3721
        %3786 = vst [vmem:[#allocation4 + $0x50] sm:$0xff] %v3722
        %3787 = vst [vmem:[#allocation4 + $0x58] sm:$0xff] %v3723
        %3788 = vst [vmem:[#allocation4 + $0x60] sm:$0xff] %v3724
        %3789 = vst [vmem:[#allocation4 + $0x68] sm:$0xff] %v3725
        %3790 = vst [vmem:[#allocation4 + $0x70] sm:$0xff] %v3726
        %3791 = vst [vmem:[#allocation4 + $0x78] sm:$0xff] %v3727
        %3792 = vst [vmem:[#allocation4 + $0x80] sm:$0xff] %v3728
        %3793 = vst [vmem:[#allocation4 + $0x88] sm:$0xff] %v3729
        %3794 = vst [vmem:[#allocation4 + $0x90] sm:$0xff] %v3730
        %3795 = vst [vmem:[#allocation4 + $0x98] sm:$0xff] %v3731
        %3796 = vst [vmem:[#allocation4 + $0xa0] sm:$0xff] %v3732
        %3797 = vst [vmem:[#allocation4 + $0xa8] sm:$0xff] %v3733
        %3798 = vst [vmem:[#allocation4 + $0xb0] sm:$0xff] %v3734
        %3799 = vst [vmem:[#allocation4 + $0xb8] sm:$0xff] %v3735
        %3800 = vst [vmem:[#allocation4 + $0xc0] sm:$0xff] %v3736
        %3801 = vst [vmem:[#allocation4 + $0xc8] sm:$0xff] %v3737
        %3802 = vst [vmem:[#allocation4 + $0xd0] sm:$0xff] %v3738
        %3803 = vst [vmem:[#allocation4 + $0xd8] sm:$0xff] %v3739
        %3804 = vst [vmem:[#allocation4 + $0xe0] sm:$0xff] %v3740
        %3805 = vst [vmem:[#allocation4 + $0xe8] sm:$0xff] %v3741
        %3806 = vst [vmem:[#allocation4 + $0xf0] sm:$0xff] %v3742
        %3807 = vst [vmem:[#allocation4 + $0xf8] sm:$0xff] %v3743
        %3808 = vst [vmem:[#allocation4 + $0x100] sm:$0xff] %v3744
        %3809 = vst [vmem:[#allocation4 + $0x108] sm:$0xff] %v3745
        %3810 = vst [vmem:[#allocation4 + $0x110] sm:$0xff] %v3746
        %3811 = vst [vmem:[#allocation4 + $0x118] sm:$0xff] %v3747
        %3812 = vst [vmem:[#allocation4 + $0x120] sm:$0xff] %v3748
        %3813 = vst [vmem:[#allocation4 + $0x128] sm:$0xff] %v3749
        %3814 = vst [vmem:[#allocation4 + $0x130] sm:$0xff] %v3750
        %3815 = vst [vmem:[#allocation4 + $0x138] sm:$0xff] %v3751
        %3816 = vst [vmem:[#allocation4 + $0x140] sm:$0xff] %v3752
        %3817 = vst [vmem:[#allocation4 + $0x148] sm:$0xff] %v3753
        %3818 = vst [vmem:[#allocation4 + $0x150] sm:$0xff] %v3754
        %3819 = vst [vmem:[#allocation4 + $0x158] sm:$0xff] %v3755
        %3820 = vst [vmem:[#allocation4 + $0x160] sm:$0xff] %v3756
        %3821 = vst [vmem:[#allocation4 + $0x168] sm:$0xff] %v3757
        %3822 = vst [vmem:[#allocation4 + $0x170] sm:$0xff] %v3758
        %3823 = vst [vmem:[#allocation4 + $0x178] sm:$0xff] %v3759
        %3824 = vst [vmem:[#allocation4 + $0x180] sm:$0xff] %v3760
        %3825 = vst [vmem:[#allocation4 + $0x188] sm:$0xff] %v3761
        %3826 = vst [vmem:[#allocation4 + $0x190] sm:$0xff] %v3762
        %3827 = vst [vmem:[#allocation4 + $0x198] sm:$0xff] %v3763
        %3828 = vst [vmem:[#allocation4 + $0x1a0] sm:$0xff] %v3764
        %3829 = vst [vmem:[#allocation4 + $0x1a8] sm:$0xff] %v3765
        %3830 = vst [vmem:[#allocation4 + $0x1b0] sm:$0xff] %v3766
        %3831 = vst [vmem:[#allocation4 + $0x1b8] sm:$0xff] %v3767
        %3832 = vst [vmem:[#allocation4 + $0x1c0] sm:$0xff] %v3768
        %3833 = vst [vmem:[#allocation4 + $0x1c8] sm:$0xff] %v3769
        %3834 = vst [vmem:[#allocation4 + $0x1d0] sm:$0xff] %v3770
        %3835 = vst [vmem:[#allocation4 + $0x1d8] sm:$0xff] %v3771
        %3836 = vst [vmem:[#allocation4 + $0x1e0] sm:$0xff] %v3772
        %3837 = vst [vmem:[#allocation4 + $0x1e8] sm:$0xff] %v3773
        %3838 = vst [vmem:[#allocation4 + $0x1f0] sm:$0xff] %v3774
        %3839 = vst [vmem:[#allocation4 + $0x1f8] sm:$0xff] %v3775
        %v3840 = vld [vmem:[%s355 + $0x10] sm:$0xff]
        %v3841 = vld [vmem:[%s355 + $0x18] sm:$0xff]
        %v3842 = vld [vmem:[%s355 + $0x30] sm:$0xff]
        %v3843 = vld [vmem:[%s355 + $0x38] sm:$0xff]
        %v3844 = vld [vmem:[%s355 + $0x50] sm:$0xff]
        %v3845 = vld [vmem:[%s355 + $0x58] sm:$0xff]
        %v3846 = vld [vmem:[%s355 + $0x70] sm:$0xff]
        %v3847 = vld [vmem:[%s355 + $0x78] sm:$0xff]
        %v3848 = vld [vmem:[%s355 + $0x90] sm:$0xff]
        %v3849 = vld [vmem:[%s355 + $0x98] sm:$0xff]
        %v3850 = vld [vmem:[%s355 + $0xb0] sm:$0xff]
        %v3851 = vld [vmem:[%s355 + $0xb8] sm:$0xff]
        %v3852 = vld [vmem:[%s355 + $0xd0] sm:$0xff]
        %v3853 = vld [vmem:[%s355 + $0xd8] sm:$0xff]
        %v3854 = vld [vmem:[%s355 + $0xf0] sm:$0xff]
        %v3855 = vld [vmem:[%s355 + $0xf8] sm:$0xff]
        %v3856 = vld [vmem:[%s355 + $0x110] sm:$0xff]
        %v3857 = vld [vmem:[%s355 + $0x118] sm:$0xff]
        %v3858 = vld [vmem:[%s355 + $0x130] sm:$0xff]
        %v3859 = vld [vmem:[%s355 + $0x138] sm:$0xff]
        %v3860 = vld [vmem:[%s355 + $0x150] sm:$0xff]
        %v3861 = vld [vmem:[%s355 + $0x158] sm:$0xff]
        %v3862 = vld [vmem:[%s355 + $0x170] sm:$0xff]
        %v3863 = vld [vmem:[%s355 + $0x178] sm:$0xff]
        %v3864 = vld [vmem:[%s355 + $0x190] sm:$0xff]
        %v3865 = vld [vmem:[%s355 + $0x198] sm:$0xff]
        %v3866 = vld [vmem:[%s355 + $0x1b0] sm:$0xff]
        %v3867 = vld [vmem:[%s355 + $0x1b8] sm:$0xff]
        %v3868 = vld [vmem:[%s355 + $0x1d0] sm:$0xff]
        %v3869 = vld [vmem:[%s355 + $0x1d8] sm:$0xff]
        %v3870 = vld [vmem:[%s355 + $0x1f0] sm:$0xff]
        %v3871 = vld [vmem:[%s355 + $0x1f8] sm:$0xff]
        %v3872 = vld [vmem:[%s355 + $0x210] sm:$0xff]
        %v3873 = vld [vmem:[%s355 + $0x218] sm:$0xff]
        %v3874 = vld [vmem:[%s355 + $0x230] sm:$0xff]
        %v3875 = vld [vmem:[%s355 + $0x238] sm:$0xff]
        %v3876 = vld [vmem:[%s355 + $0x250] sm:$0xff]
        %v3877 = vld [vmem:[%s355 + $0x258] sm:$0xff]
        %v3878 = vld [vmem:[%s355 + $0x270] sm:$0xff]
        %v3879 = vld [vmem:[%s355 + $0x278] sm:$0xff]
        %v3880 = vld [vmem:[%s355 + $0x290] sm:$0xff]
        %v3881 = vld [vmem:[%s355 + $0x298] sm:$0xff]
        %v3882 = vld [vmem:[%s355 + $0x2b0] sm:$0xff]
        %v3883 = vld [vmem:[%s355 + $0x2b8] sm:$0xff]
        %v3884 = vld [vmem:[%s355 + $0x2d0] sm:$0xff]
        %v3885 = vld [vmem:[%s355 + $0x2d8] sm:$0xff]
        %v3886 = vld [vmem:[%s355 + $0x2f0] sm:$0xff]
        %v3887 = vld [vmem:[%s355 + $0x2f8] sm:$0xff]
        %v3888 = vld [vmem:[%s355 + $0x310] sm:$0xff]
        %v3889 = vld [vmem:[%s355 + $0x318] sm:$0xff]
        %v3890 = vld [vmem:[%s355 + $0x330] sm:$0xff]
        %v3891 = vld [vmem:[%s355 + $0x338] sm:$0xff]
        %v3892 = vld [vmem:[%s355 + $0x350] sm:$0xff]
        %v3893 = vld [vmem:[%s355 + $0x358] sm:$0xff]
        %v3894 = vld [vmem:[%s355 + $0x370] sm:$0xff]
        %v3895 = vld [vmem:[%s355 + $0x378] sm:$0xff]
        %v3896 = vld [vmem:[%s355 + $0x390] sm:$0xff]
        %v3897 = vld [vmem:[%s355 + $0x398] sm:$0xff]
        %v3898 = vld [vmem:[%s355 + $0x3b0] sm:$0xff]
        %v3899 = vld [vmem:[%s355 + $0x3b8] sm:$0xff]
        %v3900 = vld [vmem:[%s355 + $0x3d0] sm:$0xff]
        %v3901 = vld [vmem:[%s355 + $0x3d8] sm:$0xff]
        %v3902 = vld [vmem:[%s355 + $0x3f0] sm:$0xff]
        %v3903 = vld [vmem:[%s355 + $0x3f8] sm:$0xff]
        %v3904 = vld [vmem:[%s437 + $0x4] sm:$0xf]
        %v3906 = vlaneseq
        %v3907 = vshrl.u32 %v3906, 7
        %v3908 = vsub.s32 0, %v3907
        %v3909 = vrot.slane %v3904, %v3908
        %v3910 = vlaneseq
        %v3911 = vshrl.u32 %v3910, 7
        %v3912 = vsub.s32 1, %v3911
        %v3913 = vrot.slane %v3904, %v3912
        %v3914 = vlaneseq
        %v3915 = vshrl.u32 %v3914, 7
        %v3916 = vsub.s32 2, %v3915
        %v3917 = vrot.slane %v3904, %v3916
        %v3918 = vlaneseq
        %v3919 = vshrl.u32 %v3918, 7
        %v3920 = vsub.s32 3, %v3919
        %v3921 = vrot.slane %v3904, %v3920
        %v3990 = vunpack.c.l.b16 %v3840
        %v3991 = vunpack.c.h.b16 %v3840
        %v3992 = vunpack.c.l.b16 %v3841
        %v3993 = vunpack.c.h.b16 %v3841
        %v3994 = vunpack.c.l.b16 %v3842
        %v3995 = vunpack.c.h.b16 %v3842
        %v3996 = vunpack.c.l.b16 %v3843
        %v3997 = vunpack.c.h.b16 %v3843
        %v3998 = vunpack.c.l.b16 %v3844
        %v3999 = vunpack.c.h.b16 %v3844
        %v4000 = vunpack.c.l.b16 %v3845
        %v4001 = vunpack.c.h.b16 %v3845
        %v4002 = vunpack.c.l.b16 %v3846
        %v4003 = vunpack.c.h.b16 %v3846
        %v4004 = vunpack.c.l.b16 %v3847
        %v4005 = vunpack.c.h.b16 %v3847
        %v4006 = vunpack.c.l.b16 %v3848
        %v4007 = vunpack.c.h.b16 %v3848
        %v4008 = vunpack.c.l.b16 %v3849
        %v4009 = vunpack.c.h.b16 %v3849
        %v4010 = vunpack.c.l.b16 %v3850
        %v4011 = vunpack.c.h.b16 %v3850
        %v4012 = vunpack.c.l.b16 %v3851
        %v4013 = vunpack.c.h.b16 %v3851
        %v4014 = vunpack.c.l.b16 %v3852
        %v4015 = vunpack.c.h.b16 %v3852
        %v4016 = vunpack.c.l.b16 %v3853
        %v4017 = vunpack.c.h.b16 %v3853
        %v4018 = vunpack.c.l.b16 %v3854
        %v4019 = vunpack.c.h.b16 %v3854
        %v4020 = vunpack.c.l.b16 %v3855
        %v4021 = vunpack.c.h.b16 %v3855
        %v4022 = vunpack.c.l.b16 %v3856
        %v4023 = vunpack.c.h.b16 %v3856
        %v4024 = vunpack.c.l.b16 %v3857
        %v4025 = vunpack.c.h.b16 %v3857
        %v4026 = vunpack.c.l.b16 %v3858
        %v4027 = vunpack.c.h.b16 %v3858
        %v4028 = vunpack.c.l.b16 %v3859
        %v4029 = vunpack.c.h.b16 %v3859
        %v4030 = vunpack.c.l.b16 %v3860
        %v4031 = vunpack.c.h.b16 %v3860
        %v4032 = vunpack.c.l.b16 %v3861
        %v4033 = vunpack.c.h.b16 %v3861
        %v4034 = vunpack.c.l.b16 %v3862
        %v4035 = vunpack.c.h.b16 %v3862
        %v4036 = vunpack.c.l.b16 %v3863
        %v4037 = vunpack.c.h.b16 %v3863
        %v4038 = vunpack.c.l.b16 %v3864
        %v4039 = vunpack.c.h.b16 %v3864
        %v4040 = vunpack.c.l.b16 %v3865
        %v4041 = vunpack.c.h.b16 %v3865
        %v4042 = vunpack.c.l.b16 %v3866
        %v4043 = vunpack.c.h.b16 %v3866
        %v4044 = vunpack.c.l.b16 %v3867
        %v4045 = vunpack.c.h.b16 %v3867
        %v4046 = vunpack.c.l.b16 %v3868
        %v4047 = vunpack.c.h.b16 %v3868
        %v4048 = vunpack.c.l.b16 %v3869
        %v4049 = vunpack.c.h.b16 %v3869
        %v4050 = vunpack.c.l.b16 %v3870
        %v4051 = vunpack.c.h.b16 %v3870
        %v4052 = vunpack.c.l.b16 %v3871
        %v4053 = vunpack.c.h.b16 %v3871
        %v4054 = vunpack.c.l.b16 %v3872
        %v4055 = vunpack.c.h.b16 %v3872
        %v4056 = vunpack.c.l.b16 %v3873
        %v4057 = vunpack.c.h.b16 %v3873
        %v4058 = vunpack.c.l.b16 %v3874
        %v4059 = vunpack.c.h.b16 %v3874
        %v4060 = vunpack.c.l.b16 %v3875
        %v4061 = vunpack.c.h.b16 %v3875
        %v4062 = vunpack.c.l.b16 %v3876
        %v4063 = vunpack.c.h.b16 %v3876
        %v4064 = vunpack.c.l.b16 %v3877
        %v4065 = vunpack.c.h.b16 %v3877
        %v4066 = vunpack.c.l.b16 %v3878
        %v4067 = vunpack.c.h.b16 %v3878
        %v4068 = vunpack.c.l.b16 %v3879
        %v4069 = vunpack.c.h.b16 %v3879
        %v4070 = vunpack.c.l.b16 %v3880
        %v4071 = vunpack.c.h.b16 %v3880
        %v4072 = vunpack.c.l.b16 %v3881
        %v4073 = vunpack.c.h.b16 %v3881
        %v4074 = vunpack.c.l.b16 %v3882
        %v4075 = vunpack.c.h.b16 %v3882
        %v4076 = vunpack.c.l.b16 %v3883
        %v4077 = vunpack.c.h.b16 %v3883
        %v4078 = vunpack.c.l.b16 %v3884
        %v4079 = vunpack.c.h.b16 %v3884
        %v4080 = vunpack.c.l.b16 %v3885
        %v4081 = vunpack.c.h.b16 %v3885
        %v4082 = vunpack.c.l.b16 %v3886
        %v4083 = vunpack.c.h.b16 %v3886
        %v4084 = vunpack.c.l.b16 %v3887
        %v4085 = vunpack.c.h.b16 %v3887
        %v4086 = vunpack.c.l.b16 %v3888
        %v4087 = vunpack.c.h.b16 %v3888
        %v4088 = vunpack.c.l.b16 %v3889
        %v4089 = vunpack.c.h.b16 %v3889
        %v4090 = vunpack.c.l.b16 %v3890
        %v4091 = vunpack.c.h.b16 %v3890
        %v4092 = vunpack.c.l.b16 %v3891
        %v4093 = vunpack.c.h.b16 %v3891
        %v4094 = vunpack.c.l.b16 %v3892
        %v4095 = vunpack.c.h.b16 %v3892
        %v4096 = vunpack.c.l.b16 %v3893
        %v4097 = vunpack.c.h.b16 %v3893
        %v4098 = vunpack.c.l.b16 %v3894
        %v4099 = vunpack.c.h.b16 %v3894
        %v4100 = vunpack.c.l.b16 %v3895
        %v4101 = vunpack.c.h.b16 %v3895
        %v4102 = vunpack.c.l.b16 %v3896
        %v4103 = vunpack.c.h.b16 %v3896
        %v4104 = vunpack.c.l.b16 %v3897
        %v4105 = vunpack.c.h.b16 %v3897
        %v4106 = vunpack.c.l.b16 %v3898
        %v4107 = vunpack.c.h.b16 %v3898
        %v4108 = vunpack.c.l.b16 %v3899
        %v4109 = vunpack.c.h.b16 %v3899
        %v4110 = vunpack.c.l.b16 %v3900
        %v4111 = vunpack.c.h.b16 %v3900
        %v4112 = vunpack.c.l.b16 %v3901
        %v4113 = vunpack.c.h.b16 %v3901
        %v4114 = vunpack.c.l.b16 %v3902
        %v4115 = vunpack.c.h.b16 %v3902
        %v4116 = vunpack.c.l.b16 %v3903
        %v4117 = vunpack.c.h.b16 %v3903
        %v4118 = vpack.c.b16 %v3994, %v3990
        %v4119 = vpack.c.b16 %v3995, %v3991
        %v4120 = vpack.c.b16 %v3996, %v3992
        %v4121 = vpack.c.b16 %v3997, %v3993
        %v4122 = vpack.c.b16 %v4002, %v3998
        %v4123 = vpack.c.b16 %v4003, %v3999
        %v4124 = vpack.c.b16 %v4004, %v4000
        %v4125 = vpack.c.b16 %v4005, %v4001
        %v4126 = vpack.c.b16 %v4010, %v4006
        %v4127 = vpack.c.b16 %v4011, %v4007
        %v4128 = vpack.c.b16 %v4012, %v4008
        %v4129 = vpack.c.b16 %v4013, %v4009
        %v4130 = vpack.c.b16 %v4018, %v4014
        %v4131 = vpack.c.b16 %v4019, %v4015
        %v4132 = vpack.c.b16 %v4020, %v4016
        %v4133 = vpack.c.b16 %v4021, %v4017
        %v4134 = vpack.c.b16 %v4026, %v4022
        %v4135 = vpack.c.b16 %v4027, %v4023
        %v4136 = vpack.c.b16 %v4028, %v4024
        %v4137 = vpack.c.b16 %v4029, %v4025
        %v4138 = vpack.c.b16 %v4034, %v4030
        %v4139 = vpack.c.b16 %v4035, %v4031
        %v4140 = vpack.c.b16 %v4036, %v4032
        %v4141 = vpack.c.b16 %v4037, %v4033
        %v4142 = vpack.c.b16 %v4042, %v4038
        %v4143 = vpack.c.b16 %v4043, %v4039
        %v4144 = vpack.c.b16 %v4044, %v4040
        %v4145 = vpack.c.b16 %v4045, %v4041
        %v4146 = vpack.c.b16 %v4050, %v4046
        %v4147 = vpack.c.b16 %v4051, %v4047
        %v4148 = vpack.c.b16 %v4052, %v4048
        %v4149 = vpack.c.b16 %v4053, %v4049
        %v4150 = vpack.c.b16 %v4058, %v4054
        %v4151 = vpack.c.b16 %v4059, %v4055
        %v4152 = vpack.c.b16 %v4060, %v4056
        %v4153 = vpack.c.b16 %v4061, %v4057
        %v4154 = vpack.c.b16 %v4066, %v4062
        %v4155 = vpack.c.b16 %v4067, %v4063
        %v4156 = vpack.c.b16 %v4068, %v4064
        %v4157 = vpack.c.b16 %v4069, %v4065
        %v4158 = vpack.c.b16 %v4074, %v4070
        %v4159 = vpack.c.b16 %v4075, %v4071
        %v4160 = vpack.c.b16 %v4076, %v4072
        %v4161 = vpack.c.b16 %v4077, %v4073
        %v4162 = vpack.c.b16 %v4082, %v4078
        %v4163 = vpack.c.b16 %v4083, %v4079
        %v4164 = vpack.c.b16 %v4084, %v4080
        %v4165 = vpack.c.b16 %v4085, %v4081
        %v4166 = vpack.c.b16 %v4090, %v4086
        %v4167 = vpack.c.b16 %v4091, %v4087
        %v4168 = vpack.c.b16 %v4092, %v4088
        %v4169 = vpack.c.b16 %v4093, %v4089
        %v4170 = vpack.c.b16 %v4098, %v4094
        %v4171 = vpack.c.b16 %v4099, %v4095
        %v4172 = vpack.c.b16 %v4100, %v4096
        %v4173 = vpack.c.b16 %v4101, %v4097
        %v4174 = vpack.c.b16 %v4106, %v4102
        %v4175 = vpack.c.b16 %v4107, %v4103
        %v4176 = vpack.c.b16 %v4108, %v4104
        %v4177 = vpack.c.b16 %v4109, %v4105
        %v4178 = vpack.c.b16 %v4114, %v4110
        %v4179 = vpack.c.b16 %v4115, %v4111
        %v4180 = vpack.c.b16 %v4116, %v4112
        %v4181 = vpack.c.b16 %v4117, %v4113
        %4246 = vmatprep.subr.bf16.mxu0 %v4119
        %4247 = vmatpush1.bf16.msra.mxu0 %v4118
        %4248 = vmatprep.subr.bf16.mxu0 %v4123
        %4249 = vmatpush1.bf16.msra.mxu0 %v4122
        %4250 = vmatprep.subr.bf16.mxu0 %v4127
        %4251 = vmatpush1.bf16.msra.mxu0 %v4126
        %4252 = vmatprep.subr.bf16.mxu0 %v4131
        %4253 = vmatpush1.bf16.msra.mxu0 %v4130
        %4254 = vmatprep.subr.bf16.mxu0 %v4135
        %4255 = vmatpush1.bf16.msra.mxu0 %v4134
        %4256 = vmatprep.subr.bf16.mxu0 %v4139
        %4257 = vmatpush1.bf16.msra.mxu0 %v4138
        %4258 = vmatprep.subr.bf16.mxu0 %v4143
        %4259 = vmatpush1.bf16.msra.mxu0 %v4142
        %4260 = vmatprep.subr.bf16.mxu0 %v4147
        %4261 = vmatpush1.bf16.msra.mxu0 %v4146
        %4262 = vmatprep.subr.bf16.mxu0 %v4151
        %4263 = vmatpush1.bf16.msra.mxu0 %v4150
        %4264 = vmatprep.subr.bf16.mxu0 %v4155
        %4265 = vmatpush1.bf16.msra.mxu0 %v4154
        %4266 = vmatprep.subr.bf16.mxu0 %v4159
        %4267 = vmatpush1.bf16.msra.mxu0 %v4158
        %4268 = vmatprep.subr.bf16.mxu0 %v4163
        %4269 = vmatpush1.bf16.msra.mxu0 %v4162
        %4270 = vmatprep.subr.bf16.mxu0 %v4167
        %4271 = vmatpush1.bf16.msra.mxu0 %v4166
        %4272 = vmatprep.subr.bf16.mxu0 %v4171
        %4273 = vmatpush1.bf16.msra.mxu0 %v4170
        %4274 = vmatprep.subr.bf16.mxu0 %v4175
        %4275 = vmatpush1.bf16.msra.mxu0 %v4174
        %4276 = vmatprep.subr.bf16.mxu0 %v4179
        %4277 = vmatpush1.bf16.msra.mxu0 %v4178
        %4278 = vmatprep.mubr.bf16.mxu0 %v1207
        %4279 = vmatmul.mubr.bf16.gmra.mrb[0].mxu0 %v1206
        %v4280 = vpop.f32.mrb[0].mxu0
        %v4281 = vadd.f32 %v3909, %v4280
        %v4282 = vpop.f32.mrb[0].mxu0
        %v4283 = vadd.f32 %v3913, %v4282
        %v4284 = vpop.f32.mrb[0].mxu0
        %v4285 = vadd.f32 %v3909, %v4284
        %v4286 = vpop.f32.mrb[0].mxu0
        %v4287 = vadd.f32 %v3913, %v4286
        %4288 = vmatprep.mubr.bf16.mxu0 %v1209
        %4289 = vmatmul.mubr.bf16.gmra.mrb[0].mxu0 %v1208
        %v4290 = vpop.f32.mrb[0].mxu0
        %v4291 = vadd.f32 %v3909, %v4290
        %v4292 = vpop.f32.mrb[0].mxu0
        %v4293 = vadd.f32 %v3913, %v4292
        %v4294 = vpop.f32.mrb[0].mxu0
        %v4295 = vadd.f32 %v3909, %v4294
        %v4296 = vpop.f32.mrb[0].mxu0
        %v4297 = vadd.f32 %v3913, %v4296
        %4298 = vmatprep.mubr.bf16.mxu0 %v1211
        %4299 = vmatmul.mubr.bf16.gmra.mrb[0].mxu0 %v1210
        %v4300 = vpop.f32.mrb[0].mxu0
        %v4301 = vadd.f32 %v3909, %v4300
        %v4302 = vpop.f32.mrb[0].mxu0
        %v4303 = vadd.f32 %v3913, %v4302
        %v4304 = vpop.f32.mrb[0].mxu0
        %v4305 = vadd.f32 %v3909, %v4304
        %v4306 = vpop.f32.mrb[0].mxu0
        %v4307 = vadd.f32 %v3913, %v4306
        %4308 = vmatprep.mubr.bf16.mxu0 %v1213
        %4309 = vmatmul.mubr.bf16.gmra.mrb[0].mxu0 %v1212
        %v4310 = vpop.f32.mrb[0].mxu0
        %v4311 = vadd.f32 %v3909, %v4310
        %v4312 = vpop.f32.mrb[0].mxu0
        %v4313 = vadd.f32 %v3913, %v4312
        %v4314 = vpop.f32.mrb[0].mxu0
        %v4315 = vadd.f32 %v3909, %v4314
        %v4316 = vpop.f32.mrb[0].mxu0
        %v4317 = vadd.f32 %v3913, %v4316
        %4318 = vmatprep.mubr.bf16.mxu0 %v1215
        %4319 = vmatmul.mubr.bf16.gmra.mrb[0].mxu0 %v1214
        %v4320 = vpop.f32.mrb[0].mxu0
        %v4321 = vadd.f32 %v3909, %v4320
        %v4322 = vpop.f32.mrb[0].mxu0
        %v4323 = vadd.f32 %v3913, %v4322
        %v4324 = vpop.f32.mrb[0].mxu0
        %v4325 = vadd.f32 %v3909, %v4324
        %v4326 = vpop.f32.mrb[0].mxu0
        %v4327 = vadd.f32 %v3913, %v4326
        %4328 = vmatprep.mubr.bf16.mxu0 %v1217
        %4329 = vmatmul.mubr.bf16.gmra.mrb[0].mxu0 %v1216
        %v4330 = vpop.f32.mrb[0].mxu0
        %v4331 = vadd.f32 %v3909, %v4330
        %v4332 = vpop.f32.mrb[0].mxu0
        %v4333 = vadd.f32 %v3913, %v4332
        %v4334 = vpop.f32.mrb[0].mxu0
        %v4335 = vadd.f32 %v3909, %v4334
        %v4336 = vpop.f32.mrb[0].mxu0
        %v4337 = vadd.f32 %v3913, %v4336
        %4338 = vmatprep.mubr.bf16.mxu0 %v1219
        %4339 = vmatmul.mubr.bf16.gmra.mrb[0].mxu0 %v1218
        %v4340 = vpop.f32.mrb[0].mxu0
        %v4341 = vadd.f32 %v3909, %v4340
        %v4342 = vpop.f32.mrb[0].mxu0
        %v4343 = vadd.f32 %v3913, %v4342
        %v4344 = vpop.f32.mrb[0].mxu0
        %v4345 = vadd.f32 %v3909, %v4344
        %v4346 = vpop.f32.mrb[0].mxu0
        %v4347 = vadd.f32 %v3913, %v4346
        %4348 = vmatprep.mubr.bf16.mxu0 %v1221
        %4349 = vmatmul.mubr.bf16.gmra.mrb[0].mxu0 %v1220
        %v4350 = vpop.f32.mrb[0].mxu0
        %v4351 = vadd.f32 %v3909, %v4350
        %v4352 = vpop.f32.mrb[0].mxu0
        %v4353 = vadd.f32 %v3913, %v4352
        %v4354 = vpop.f32.mrb[0].mxu0
        %v4355 = vadd.f32 %v3909, %v4354
        %v4356 = vpop.f32.mrb[0].mxu0
        %v4357 = vadd.f32 %v3913, %v4356
        %4358 = vmatprep.mubr.bf16.mxu0 %v1223
        %4359 = vmatmul.mubr.bf16.gmra.mrb[0].mxu0 %v1222
        %v4360 = vpop.f32.mrb[0].mxu0
        %v4361 = vadd.f32 %v3909, %v4360
        %v4362 = vpop.f32.mrb[0].mxu0
        %v4363 = vadd.f32 %v3913, %v4362
        %v4364 = vpop.f32.mrb[0].mxu0
        %v4365 = vadd.f32 %v3909, %v4364
        %v4366 = vpop.f32.mrb[0].mxu0
        %v4367 = vadd.f32 %v3913, %v4366
        %4368 = vmatprep.mubr.bf16.mxu0 %v1225
        %4369 = vmatmul.mubr.bf16.gmra.mrb[0].mxu0 %v1224
        %v4370 = vpop.f32.mrb[0].mxu0
        %v4371 = vadd.f32 %v3909, %v4370
        %v4372 = vpop.f32.mrb[0].mxu0
        %v4373 = vadd.f32 %v3913, %v4372
        %v4374 = vpop.f32.mrb[0].mxu0
        %v4375 = vadd.f32 %v3909, %v4374
        %v4376 = vpop.f32.mrb[0].mxu0
        %v4377 = vadd.f32 %v3913, %v4376
        %4378 = vmatprep.mubr.bf16.mxu0 %v1227
        %4379 = vmatmul.mubr.bf16.gmra.mrb[0].mxu0 %v1226
        %v4380 = vpop.f32.mrb[0].mxu0
        %v4381 = vadd.f32 %v3909, %v4380
        %v4382 = vpop.f32.mrb[0].mxu0
        %v4383 = vadd.f32 %v3913, %v4382
        %v4384 = vpop.f32.mrb[0].mxu0
        %v4385 = vadd.f32 %v3909, %v4384
        %v4386 = vpop.f32.mrb[0].mxu0
        %v4387 = vadd.f32 %v3913, %v4386
        %4388 = vmatprep.mubr.bf16.mxu0 %v1229
        %4389 = vmatmul.mubr.bf16.gmra.mrb[0].mxu0 %v1228
        %v4390 = vpop.f32.mrb[0].mxu0
        %v4391 = vadd.f32 %v3909, %v4390
        %v4392 = vpop.f32.mrb[0].mxu0
        %v4393 = vadd.f32 %v3913, %v4392
        %v4394 = vpop.f32.mrb[0].mxu0
        %v4395 = vadd.f32 %v3909, %v4394
        %v4396 = vpop.f32.mrb[0].mxu0
        %v4397 = vadd.f32 %v3913, %v4396
        %4398 = vmatprep.mubr.bf16.mxu0 %v1231
        %4399 = vmatmul.mubr.bf16.gmra.mrb[0].mxu0 %v1230
        %v4400 = vpop.f32.mrb[0].mxu0
        %v4401 = vadd.f32 %v3909, %v4400
        %v4402 = vpop.f32.mrb[0].mxu0
        %v4403 = vadd.f32 %v3913, %v4402
        %v4404 = vpop.f32.mrb[0].mxu0
        %v4405 = vadd.f32 %v3909, %v4404
        %v4406 = vpop.f32.mrb[0].mxu0
        %v4407 = vadd.f32 %v3913, %v4406
        %4408 = vmatprep.mubr.bf16.mxu0 %v1233
        %4409 = vmatmul.mubr.bf16.gmra.mrb[0].mxu0 %v1232
        %v4410 = vpop.f32.mrb[0].mxu0
        %v4411 = vadd.f32 %v3909, %v4410
        %v4412 = vpop.f32.mrb[0].mxu0
        %v4413 = vadd.f32 %v3913, %v4412
        %v4414 = vpop.f32.mrb[0].mxu0
        %v4415 = vadd.f32 %v3909, %v4414
        %v4416 = vpop.f32.mrb[0].mxu0
        %v4417 = vadd.f32 %v3913, %v4416
        %4418 = vmatprep.mubr.bf16.mxu0 %v1235
        %4419 = vmatmul.mubr.bf16.gmra.mrb[0].mxu0 %v1234
        %v4420 = vpop.f32.mrb[0].mxu0
        %v4421 = vadd.f32 %v3909, %v4420
        %v4422 = vpop.f32.mrb[0].mxu0
        %v4423 = vadd.f32 %v3913, %v4422
        %v4424 = vpop.f32.mrb[0].mxu0
        %v4425 = vadd.f32 %v3909, %v4424
        %v4426 = vpop.f32.mrb[0].mxu0
        %v4427 = vadd.f32 %v3913, %v4426
        %4428 = vmatprep.mubr.bf16.mxu0 %v1237
        %4429 = vmatmul.mubr.bf16.gmra.mrb[0].mxu0 %v1236
        %v4430 = vpop.f32.mrb[0].mxu0
        %v4431 = vadd.f32 %v3909, %v4430
        %v4432 = vpop.f32.mrb[0].mxu0
        %v4433 = vadd.f32 %v3913, %v4432
        %v4434 = vpop.f32.mrb[0].mxu0
        %v4435 = vadd.f32 %v3909, %v4434
        %v4436 = vpop.f32.mrb[0].mxu0
        %v4437 = vadd.f32 %v3913, %v4436
        %4438 = vdwg.mxu0
        %4439 = vmatprep.subr.bf16.mxu0 %v4121
        %4440 = vmatpush1.bf16.msra.mxu0 %v4120
        %4441 = vmatprep.subr.bf16.mxu0 %v4125
        %4442 = vmatpush1.bf16.msra.mxu0 %v4124
        %4443 = vmatprep.subr.bf16.mxu0 %v4129
        %4444 = vmatpush1.bf16.msra.mxu0 %v4128
        %4445 = vmatprep.subr.bf16.mxu0 %v4133
        %4446 = vmatpush1.bf16.msra.mxu0 %v4132
        %4447 = vmatprep.subr.bf16.mxu0 %v4137
        %4448 = vmatpush1.bf16.msra.mxu0 %v4136
        %4449 = vmatprep.subr.bf16.mxu0 %v4141
        %4450 = vmatpush1.bf16.msra.mxu0 %v4140
        %4451 = vmatprep.subr.bf16.mxu0 %v4145
        %4452 = vmatpush1.bf16.msra.mxu0 %v4144
        %4453 = vmatprep.subr.bf16.mxu0 %v4149
        %4454 = vmatpush1.bf16.msra.mxu0 %v4148
        %4455 = vmatprep.subr.bf16.mxu0 %v4153
        %4456 = vmatpush1.bf16.msra.mxu0 %v4152
        %4457 = vmatprep.subr.bf16.mxu0 %v4157
        %4458 = vmatpush1.bf16.msra.mxu0 %v4156
        %4459 = vmatprep.subr.bf16.mxu0 %v4161
        %4460 = vmatpush1.bf16.msra.mxu0 %v4160
        %4461 = vmatprep.subr.bf16.mxu0 %v4165
        %4462 = vmatpush1.bf16.msra.mxu0 %v4164
        %4463 = vmatprep.subr.bf16.mxu0 %v4169
        %4464 = vmatpush1.bf16.msra.mxu0 %v4168
        %4465 = vmatprep.subr.bf16.mxu0 %v4173
        %4466 = vmatpush1.bf16.msra.mxu0 %v4172
        %4467 = vmatprep.subr.bf16.mxu0 %v4177
        %4468 = vmatpush1.bf16.msra.mxu0 %v4176
        %4469 = vmatprep.subr.bf16.mxu0 %v4181
        %4470 = vmatpush1.bf16.msra.mxu0 %v4180
        %4471 = vmatprep.mubr.bf16.mxu0 %v1207
        %4472 = vmatmul.mubr.bf16.gmra.mrb[0].mxu0 %v1206
        %v4473 = vpop.f32.mrb[0].mxu0
        %v4474 = vadd.f32 %v3917, %v4473
        %v4475 = vpop.f32.mrb[0].mxu0
        %v4476 = vadd.f32 %v3921, %v4475
        %v4477 = vpop.f32.mrb[0].mxu0
        %v4478 = vadd.f32 %v3917, %v4477
        %v4479 = vpop.f32.mrb[0].mxu0
        %v4480 = vadd.f32 %v3921, %v4479
        %4481 = vmatprep.mubr.bf16.mxu0 %v1209
        %4482 = vmatmul.mubr.bf16.gmra.mrb[0].mxu0 %v1208
        %v4483 = vpop.f32.mrb[0].mxu0
        %v4484 = vadd.f32 %v3917, %v4483
        %v4485 = vpop.f32.mrb[0].mxu0
        %v4486 = vadd.f32 %v3921, %v4485
        %v4487 = vpop.f32.mrb[0].mxu0
        %v4488 = vadd.f32 %v3917, %v4487
        %v4489 = vpop.f32.mrb[0].mxu0
        %v4490 = vadd.f32 %v3921, %v4489
        %4491 = vmatprep.mubr.bf16.mxu0 %v1211
        %4492 = vmatmul.mubr.bf16.gmra.mrb[0].mxu0 %v1210
        %v4493 = vpop.f32.mrb[0].mxu0
        %v4494 = vadd.f32 %v3917, %v4493
        %v4495 = vpop.f32.mrb[0].mxu0
        %v4496 = vadd.f32 %v3921, %v4495
        %v4497 = vpop.f32.mrb[0].mxu0
        %v4498 = vadd.f32 %v3917, %v4497
        %v4499 = vpop.f32.mrb[0].mxu0
        %v4500 = vadd.f32 %v3921, %v4499
        %4501 = vmatprep.mubr.bf16.mxu0 %v1213
        %4502 = vmatmul.mubr.bf16.gmra.mrb[0].mxu0 %v1212
        %v4503 = vpop.f32.mrb[0].mxu0
        %v4504 = vadd.f32 %v3917, %v4503
        %v4505 = vpop.f32.mrb[0].mxu0
        %v4506 = vadd.f32 %v3921, %v4505
        %v4507 = vpop.f32.mrb[0].mxu0
        %v4508 = vadd.f32 %v3917, %v4507
        %v4509 = vpop.f32.mrb[0].mxu0
        %v4510 = vadd.f32 %v3921, %v4509
        %4511 = vmatprep.mubr.bf16.mxu0 %v1215
        %4512 = vmatmul.mubr.bf16.gmra.mrb[0].mxu0 %v1214
        %v4513 = vpop.f32.mrb[0].mxu0
        %v4514 = vadd.f32 %v3917, %v4513
        %v4515 = vpop.f32.mrb[0].mxu0
        %v4516 = vadd.f32 %v3921, %v4515
        %v4517 = vpop.f32.mrb[0].mxu0
        %v4518 = vadd.f32 %v3917, %v4517
        %v4519 = vpop.f32.mrb[0].mxu0
        %v4520 = vadd.f32 %v3921, %v4519
        %4521 = vmatprep.mubr.bf16.mxu0 %v1217
        %4522 = vmatmul.mubr.bf16.gmra.mrb[0].mxu0 %v1216
        %v4523 = vpop.f32.mrb[0].mxu0
        %v4524 = vadd.f32 %v3917, %v4523
        %v4525 = vpop.f32.mrb[0].mxu0
        %v4526 = vadd.f32 %v3921, %v4525
        %v4527 = vpop.f32.mrb[0].mxu0
        %v4528 = vadd.f32 %v3917, %v4527
        %v4529 = vpop.f32.mrb[0].mxu0
        %v4530 = vadd.f32 %v3921, %v4529
        %4531 = vmatprep.mubr.bf16.mxu0 %v1219
        %4532 = vmatmul.mubr.bf16.gmra.mrb[0].mxu0 %v1218
        %v4533 = vpop.f32.mrb[0].mxu0
        %v4534 = vadd.f32 %v3917, %v4533
        %v4535 = vpop.f32.mrb[0].mxu0
        %v4536 = vadd.f32 %v3921, %v4535
        %v4537 = vpop.f32.mrb[0].mxu0
        %v4538 = vadd.f32 %v3917, %v4537
        %v4539 = vpop.f32.mrb[0].mxu0
        %v4540 = vadd.f32 %v3921, %v4539
        %4541 = vmatprep.mubr.bf16.mxu0 %v1221
        %4542 = vmatmul.mubr.bf16.gmra.mrb[0].mxu0 %v1220
        %v4543 = vpop.f32.mrb[0].mxu0
        %v4544 = vadd.f32 %v3917, %v4543
        %v4545 = vpop.f32.mrb[0].mxu0
        %v4546 = vadd.f32 %v3921, %v4545
        %v4547 = vpop.f32.mrb[0].mxu0
        %v4548 = vadd.f32 %v3917, %v4547
        %v4549 = vpop.f32.mrb[0].mxu0
        %v4550 = vadd.f32 %v3921, %v4549
        %4551 = vmatprep.mubr.bf16.mxu0 %v1223
        %4552 = vmatmul.mubr.bf16.gmra.mrb[0].mxu0 %v1222
        %v4553 = vpop.f32.mrb[0].mxu0
        %v4554 = vadd.f32 %v3917, %v4553
        %v4555 = vpop.f32.mrb[0].mxu0
        %v4556 = vadd.f32 %v3921, %v4555
        %v4557 = vpop.f32.mrb[0].mxu0
        %v4558 = vadd.f32 %v3917, %v4557
        %v4559 = vpop.f32.mrb[0].mxu0
        %v4560 = vadd.f32 %v3921, %v4559
        %4561 = vmatprep.mubr.bf16.mxu0 %v1225
        %4562 = vmatmul.mubr.bf16.gmra.mrb[0].mxu0 %v1224
        %v4563 = vpop.f32.mrb[0].mxu0
        %v4564 = vadd.f32 %v3917, %v4563
        %v4565 = vpop.f32.mrb[0].mxu0
        %v4566 = vadd.f32 %v3921, %v4565
        %v4567 = vpop.f32.mrb[0].mxu0
        %v4568 = vadd.f32 %v3917, %v4567
        %v4569 = vpop.f32.mrb[0].mxu0
        %v4570 = vadd.f32 %v3921, %v4569
        %4571 = vmatprep.mubr.bf16.mxu0 %v1227
        %4572 = vmatmul.mubr.bf16.gmra.mrb[0].mxu0 %v1226
        %v4573 = vpop.f32.mrb[0].mxu0
        %v4574 = vadd.f32 %v3917, %v4573
        %v4575 = vpop.f32.mrb[0].mxu0
        %v4576 = vadd.f32 %v3921, %v4575
        %v4577 = vpop.f32.mrb[0].mxu0
        %v4578 = vadd.f32 %v3917, %v4577
        %v4579 = vpop.f32.mrb[0].mxu0
        %v4580 = vadd.f32 %v3921, %v4579
        %4581 = vmatprep.mubr.bf16.mxu0 %v1229
        %4582 = vmatmul.mubr.bf16.gmra.mrb[0].mxu0 %v1228
        %v4583 = vpop.f32.mrb[0].mxu0
        %v4584 = vadd.f32 %v3917, %v4583
        %v4585 = vpop.f32.mrb[0].mxu0
        %v4586 = vadd.f32 %v3921, %v4585
        %v4587 = vpop.f32.mrb[0].mxu0
        %v4588 = vadd.f32 %v3917, %v4587
        %v4589 = vpop.f32.mrb[0].mxu0
        %v4590 = vadd.f32 %v3921, %v4589
        %4591 = vmatprep.mubr.bf16.mxu0 %v1231
        %4592 = vmatmul.mubr.bf16.gmra.mrb[0].mxu0 %v1230
        %v4593 = vpop.f32.mrb[0].mxu0
        %v4594 = vadd.f32 %v3917, %v4593
        %v4595 = vpop.f32.mrb[0].mxu0
        %v4596 = vadd.f32 %v3921, %v4595
        %v4597 = vpop.f32.mrb[0].mxu0
        %v4598 = vadd.f32 %v3917, %v4597
        %v4599 = vpop.f32.mrb[0].mxu0
        %v4600 = vadd.f32 %v3921, %v4599
        %4601 = vmatprep.mubr.bf16.mxu0 %v1233
        %4602 = vmatmul.mubr.bf16.gmra.mrb[0].mxu0 %v1232
        %v4603 = vpop.f32.mrb[0].mxu0
        %v4604 = vadd.f32 %v3917, %v4603
        %v4605 = vpop.f32.mrb[0].mxu0
        %v4606 = vadd.f32 %v3921, %v4605
        %v4607 = vpop.f32.mrb[0].mxu0
        %v4608 = vadd.f32 %v3917, %v4607
        %v4609 = vpop.f32.mrb[0].mxu0
        %v4610 = vadd.f32 %v3921, %v4609
        %4611 = vmatprep.mubr.bf16.mxu0 %v1235
        %4612 = vmatmul.mubr.bf16.gmra.mrb[0].mxu0 %v1234
        %v4613 = vpop.f32.mrb[0].mxu0
        %v4614 = vadd.f32 %v3917, %v4613
        %v4615 = vpop.f32.mrb[0].mxu0
        %v4616 = vadd.f32 %v3921, %v4615
        %v4617 = vpop.f32.mrb[0].mxu0
        %v4618 = vadd.f32 %v3917, %v4617
        %v4619 = vpop.f32.mrb[0].mxu0
        %v4620 = vadd.f32 %v3921, %v4619
        %4621 = vmatprep.mubr.bf16.mxu0 %v1237
        %4622 = vmatmul.mubr.bf16.gmra.mrb[0].mxu0 %v1236
        %v4623 = vpop.f32.mrb[0].mxu0
        %v4624 = vadd.f32 %v3917, %v4623
        %v4625 = vpop.f32.mrb[0].mxu0
        %v4626 = vadd.f32 %v3921, %v4625
        %v4627 = vpop.f32.mrb[0].mxu0
        %v4628 = vadd.f32 %v3917, %v4627
        %v4629 = vpop.f32.mrb[0].mxu0
        %v4630 = vadd.f32 %v3921, %v4629
        %4631 = vdwg.mxu0
        %v4632 = vmul.f32 %v4281, %v4281
        %v4633 = vmul.f32 %v4283, %v4283
        %v4634 = vmul.f32 %v4474, %v4474
        %v4635 = vmul.f32 %v4476, %v4476
        %v4636 = vmul.f32 %v4285, %v4285
        %v4637 = vmul.f32 %v4287, %v4287
        %v4638 = vmul.f32 %v4478, %v4478
        %v4639 = vmul.f32 %v4480, %v4480
        %v4640 = vmul.f32 %v4291, %v4291
        %v4641 = vmul.f32 %v4293, %v4293
        %v4642 = vmul.f32 %v4484, %v4484
        %v4643 = vmul.f32 %v4486, %v4486
        %v4644 = vmul.f32 %v4295, %v4295
        %v4645 = vmul.f32 %v4297, %v4297
        %v4646 = vmul.f32 %v4488, %v4488
        %v4647 = vmul.f32 %v4490, %v4490
        %v4648 = vmul.f32 %v4301, %v4301
        %v4649 = vmul.f32 %v4303, %v4303
        %v4650 = vmul.f32 %v4494, %v4494
        %v4651 = vmul.f32 %v4496, %v4496
        %v4652 = vmul.f32 %v4305, %v4305
        %v4653 = vmul.f32 %v4307, %v4307
        %v4654 = vmul.f32 %v4498, %v4498
        %v4655 = vmul.f32 %v4500, %v4500
        %v4656 = vmul.f32 %v4311, %v4311
        %v4657 = vmul.f32 %v4313, %v4313
        %v4658 = vmul.f32 %v4504, %v4504
        %v4659 = vmul.f32 %v4506, %v4506
        %v4660 = vmul.f32 %v4315, %v4315
        %v4661 = vmul.f32 %v4317, %v4317
        %v4662 = vmul.f32 %v4508, %v4508
        %v4663 = vmul.f32 %v4510, %v4510
        %v4664 = vmul.f32 %v4321, %v4321
        %v4665 = vmul.f32 %v4323, %v4323
        %v4666 = vmul.f32 %v4514, %v4514
        %v4667 = vmul.f32 %v4516, %v4516
        %v4668 = vmul.f32 %v4325, %v4325
        %v4669 = vmul.f32 %v4327, %v4327
        %v4670 = vmul.f32 %v4518, %v4518
        %v4671 = vmul.f32 %v4520, %v4520
        %v4672 = vmul.f32 %v4331, %v4331
        %v4673 = vmul.f32 %v4333, %v4333
        %v4674 = vmul.f32 %v4524, %v4524
        %v4675 = vmul.f32 %v4526, %v4526
        %v4676 = vmul.f32 %v4335, %v4335
        %v4677 = vmul.f32 %v4337, %v4337
        %v4678 = vmul.f32 %v4528, %v4528
        %v4679 = vmul.f32 %v4530, %v4530
        %v4680 = vmul.f32 %v4341, %v4341
        %v4681 = vmul.f32 %v4343, %v4343
        %v4682 = vmul.f32 %v4534, %v4534
        %v4683 = vmul.f32 %v4536, %v4536
        %v4684 = vmul.f32 %v4345, %v4345
        %v4685 = vmul.f32 %v4347, %v4347
        %v4686 = vmul.f32 %v4538, %v4538
        %v4687 = vmul.f32 %v4540, %v4540
        %v4688 = vmul.f32 %v4351, %v4351
        %v4689 = vmul.f32 %v4353, %v4353
        %v4690 = vmul.f32 %v4544, %v4544
        %v4691 = vmul.f32 %v4546, %v4546
        %v4692 = vmul.f32 %v4355, %v4355
        %v4693 = vmul.f32 %v4357, %v4357
        %v4694 = vmul.f32 %v4548, %v4548
        %v4695 = vmul.f32 %v4550, %v4550
        %v4696 = vmul.f32 %v4361, %v4361
        %v4697 = vmul.f32 %v4363, %v4363
        %v4698 = vmul.f32 %v4554, %v4554
        %v4699 = vmul.f32 %v4556, %v4556
        %v4700 = vmul.f32 %v4365, %v4365
        %v4701 = vmul.f32 %v4367, %v4367
        %v4702 = vmul.f32 %v4558, %v4558
        %v4703 = vmul.f32 %v4560, %v4560
        %v4704 = vmul.f32 %v4371, %v4371
        %v4705 = vmul.f32 %v4373, %v4373
        %v4706 = vmul.f32 %v4564, %v4564
        %v4707 = vmul.f32 %v4566, %v4566
        %v4708 = vmul.f32 %v4375, %v4375
        %v4709 = vmul.f32 %v4377, %v4377
        %v4710 = vmul.f32 %v4568, %v4568
        %v4711 = vmul.f32 %v4570, %v4570
        %v4712 = vmul.f32 %v4381, %v4381
        %v4713 = vmul.f32 %v4383, %v4383
        %v4714 = vmul.f32 %v4574, %v4574
        %v4715 = vmul.f32 %v4576, %v4576
        %v4716 = vmul.f32 %v4385, %v4385
        %v4717 = vmul.f32 %v4387, %v4387
        %v4718 = vmul.f32 %v4578, %v4578
        %v4719 = vmul.f32 %v4580, %v4580
        %v4720 = vmul.f32 %v4391, %v4391
        %v4721 = vmul.f32 %v4393, %v4393
        %v4722 = vmul.f32 %v4584, %v4584
        %v4723 = vmul.f32 %v4586, %v4586
        %v4724 = vmul.f32 %v4395, %v4395
        %v4725 = vmul.f32 %v4397, %v4397
        %v4726 = vmul.f32 %v4588, %v4588
        %v4727 = vmul.f32 %v4590, %v4590
        %v4728 = vmul.f32 %v4401, %v4401
        %v4729 = vmul.f32 %v4403, %v4403
        %v4730 = vmul.f32 %v4594, %v4594
        %v4731 = vmul.f32 %v4596, %v4596
        %v4732 = vmul.f32 %v4405, %v4405
        %v4733 = vmul.f32 %v4407, %v4407
        %v4734 = vmul.f32 %v4598, %v4598
        %v4735 = vmul.f32 %v4600, %v4600
        %v4736 = vmul.f32 %v4411, %v4411
        %v4737 = vmul.f32 %v4413, %v4413
        %v4738 = vmul.f32 %v4604, %v4604
        %v4739 = vmul.f32 %v4606, %v4606
        %v4740 = vmul.f32 %v4415, %v4415
        %v4741 = vmul.f32 %v4417, %v4417
        %v4742 = vmul.f32 %v4608, %v4608
        %v4743 = vmul.f32 %v4610, %v4610
        %v4744 = vmul.f32 %v4421, %v4421
        %v4745 = vmul.f32 %v4423, %v4423
        %v4746 = vmul.f32 %v4614, %v4614
        %v4747 = vmul.f32 %v4616, %v4616
        %v4748 = vmul.f32 %v4425, %v4425
        %v4749 = vmul.f32 %v4427, %v4427
        %v4750 = vmul.f32 %v4618, %v4618
        %v4751 = vmul.f32 %v4620, %v4620
        %v4752 = vmul.f32 %v4431, %v4431
        %v4753 = vmul.f32 %v4433, %v4433
        %v4754 = vmul.f32 %v4624, %v4624
        %v4755 = vmul.f32 %v4626, %v4626
        %v4756 = vmul.f32 %v4435, %v4435
        %v4757 = vmul.f32 %v4437, %v4437
        %v4758 = vmul.f32 %v4628, %v4628
        %v4759 = vmul.f32 %v4630, %v4630
        %v4760 = vmul.f32 %v4281, %v4632
        %v4761 = vmul.f32 %v4283, %v4633
        %v4762 = vmul.f32 %v4474, %v4634
        %v4763 = vmul.f32 %v4476, %v4635
        %v4764 = vmul.f32 %v4285, %v4636
        %v4765 = vmul.f32 %v4287, %v4637
        %v4766 = vmul.f32 %v4478, %v4638
        %v4767 = vmul.f32 %v4480, %v4639
        %v4768 = vmul.f32 %v4291, %v4640
        %v4769 = vmul.f32 %v4293, %v4641
        %v4770 = vmul.f32 %v4484, %v4642
        %v4771 = vmul.f32 %v4486, %v4643
        %v4772 = vmul.f32 %v4295, %v4644
        %v4773 = vmul.f32 %v4297, %v4645
        %v4774 = vmul.f32 %v4488, %v4646
        %v4775 = vmul.f32 %v4490, %v4647
        %v4776 = vmul.f32 %v4301, %v4648
        %v4777 = vmul.f32 %v4303, %v4649
        %v4778 = vmul.f32 %v4494, %v4650
        %v4779 = vmul.f32 %v4496, %v4651
        %v4780 = vmul.f32 %v4305, %v4652
        %v4781 = vmul.f32 %v4307, %v4653
        %v4782 = vmul.f32 %v4498, %v4654
        %v4783 = vmul.f32 %v4500, %v4655
        %v4784 = vmul.f32 %v4311, %v4656
        %v4785 = vmul.f32 %v4313, %v4657
        %v4786 = vmul.f32 %v4504, %v4658
        %v4787 = vmul.f32 %v4506, %v4659
        %v4788 = vmul.f32 %v4315, %v4660
        %v4789 = vmul.f32 %v4317, %v4661
        %v4790 = vmul.f32 %v4508, %v4662
        %v4791 = vmul.f32 %v4510, %v4663
        %v4792 = vmul.f32 %v4321, %v4664
        %v4793 = vmul.f32 %v4323, %v4665
        %v4794 = vmul.f32 %v4514, %v4666
        %v4795 = vmul.f32 %v4516, %v4667
        %v4796 = vmul.f32 %v4325, %v4668
        %v4797 = vmul.f32 %v4327, %v4669
        %v4798 = vmul.f32 %v4518, %v4670
        %v4799 = vmul.f32 %v4520, %v4671
        %v4800 = vmul.f32 %v4331, %v4672
        %v4801 = vmul.f32 %v4333, %v4673
        %v4802 = vmul.f32 %v4524, %v4674
        %v4803 = vmul.f32 %v4526, %v4675
        %v4804 = vmul.f32 %v4335, %v4676
        %v4805 = vmul.f32 %v4337, %v4677
        %v4806 = vmul.f32 %v4528, %v4678
        %v4807 = vmul.f32 %v4530, %v4679
        %v4808 = vmul.f32 %v4341, %v4680
        %v4809 = vmul.f32 %v4343, %v4681
        %v4810 = vmul.f32 %v4534, %v4682
        %v4811 = vmul.f32 %v4536, %v4683
        %v4812 = vmul.f32 %v4345, %v4684
        %v4813 = vmul.f32 %v4347, %v4685
        %v4814 = vmul.f32 %v4538, %v4686
        %v4815 = vmul.f32 %v4540, %v4687
        %v4816 = vmul.f32 %v4351, %v4688
        %v4817 = vmul.f32 %v4353, %v4689
        %v4818 = vmul.f32 %v4544, %v4690
        %v4819 = vmul.f32 %v4546, %v4691
        %v4820 = vmul.f32 %v4355, %v4692
        %v4821 = vmul.f32 %v4357, %v4693
        %v4822 = vmul.f32 %v4548, %v4694
        %v4823 = vmul.f32 %v4550, %v4695
        %v4824 = vmul.f32 %v4361, %v4696
        %v4825 = vmul.f32 %v4363, %v4697
        %v4826 = vmul.f32 %v4554, %v4698
        %v4827 = vmul.f32 %v4556, %v4699
        %v4828 = vmul.f32 %v4365, %v4700
        %v4829 = vmul.f32 %v4367, %v4701
        %v4830 = vmul.f32 %v4558, %v4702
        %v4831 = vmul.f32 %v4560, %v4703
        %v4832 = vmul.f32 %v4371, %v4704
        %v4833 = vmul.f32 %v4373, %v4705
        %v4834 = vmul.f32 %v4564, %v4706
        %v4835 = vmul.f32 %v4566, %v4707
        %v4836 = vmul.f32 %v4375, %v4708
        %v4837 = vmul.f32 %v4377, %v4709
        %v4838 = vmul.f32 %v4568, %v4710
        %v4839 = vmul.f32 %v4570, %v4711
        %v4840 = vmul.f32 %v4381, %v4712
        %v4841 = vmul.f32 %v4383, %v4713
        %v4842 = vmul.f32 %v4574, %v4714
        %v4843 = vmul.f32 %v4576, %v4715
        %v4844 = vmul.f32 %v4385, %v4716
        %v4845 = vmul.f32 %v4387, %v4717
        %v4846 = vmul.f32 %v4578, %v4718
        %v4847 = vmul.f32 %v4580, %v4719
        %v4848 = vmul.f32 %v4391, %v4720
        %v4849 = vmul.f32 %v4393, %v4721
        %v4850 = vmul.f32 %v4584, %v4722
        %v4851 = vmul.f32 %v4586, %v4723
        %v4852 = vmul.f32 %v4395, %v4724
        %v4853 = vmul.f32 %v4397, %v4725
        %v4854 = vmul.f32 %v4588, %v4726
        %v4855 = vmul.f32 %v4590, %v4727
        %v4856 = vmul.f32 %v4401, %v4728
        %v4857 = vmul.f32 %v4403, %v4729
        %v4858 = vmul.f32 %v4594, %v4730
        %v4859 = vmul.f32 %v4596, %v4731
        %v4860 = vmul.f32 %v4405, %v4732
        %v4861 = vmul.f32 %v4407, %v4733
        %v4862 = vmul.f32 %v4598, %v4734
        %v4863 = vmul.f32 %v4600, %v4735
        %v4864 = vmul.f32 %v4411, %v4736
        %v4865 = vmul.f32 %v4413, %v4737
        %v4866 = vmul.f32 %v4604, %v4738
        %v4867 = vmul.f32 %v4606, %v4739
        %v4868 = vmul.f32 %v4415, %v4740
        %v4869 = vmul.f32 %v4417, %v4741
        %v4870 = vmul.f32 %v4608, %v4742
        %v4871 = vmul.f32 %v4610, %v4743
        %v4872 = vmul.f32 %v4421, %v4744
        %v4873 = vmul.f32 %v4423, %v4745
        %v4874 = vmul.f32 %v4614, %v4746
        %v4875 = vmul.f32 %v4616, %v4747
        %v4876 = vmul.f32 %v4425, %v4748
        %v4877 = vmul.f32 %v4427, %v4749
        %v4878 = vmul.f32 %v4618, %v4750
        %v4879 = vmul.f32 %v4620, %v4751
        %v4880 = vmul.f32 %v4431, %v4752
        %v4881 = vmul.f32 %v4433, %v4753
        %v4882 = vmul.f32 %v4624, %v4754
        %v4883 = vmul.f32 %v4626, %v4755
        %v4884 = vmul.f32 %v4435, %v4756
        %v4885 = vmul.f32 %v4437, %v4757
        %v4886 = vmul.f32 %v4628, %v4758
        %v4887 = vmul.f32 %v4630, %v4759
        %v4888 = vmul.f32 %v4760, 0.044715
        %v4889 = vmul.f32 %v4761, 0.044715
        %v4890 = vmul.f32 %v4762, 0.044715
        %v4891 = vmul.f32 %v4763, 0.044715
        %v4892 = vmul.f32 %v4764, 0.044715
        %v4893 = vmul.f32 %v4765, 0.044715
        %v4894 = vmul.f32 %v4766, 0.044715
        %v4895 = vmul.f32 %v4767, 0.044715
        %v4896 = vmul.f32 %v4768, 0.044715
        %v4897 = vmul.f32 %v4769, 0.044715
        %v4898 = vmul.f32 %v4770, 0.044715
        %v4899 = vmul.f32 %v4771, 0.044715
        %v4900 = vmul.f32 %v4772, 0.044715
        %v4901 = vmul.f32 %v4773, 0.044715
        %v4902 = vmul.f32 %v4774, 0.044715
        %v4903 = vmul.f32 %v4775, 0.044715
        %v4904 = vmul.f32 %v4776, 0.044715
        %v4905 = vmul.f32 %v4777, 0.044715
        %v4906 = vmul.f32 %v4778, 0.044715
        %v4907 = vmul.f32 %v4779, 0.044715
        %v4908 = vmul.f32 %v4780, 0.044715
        %v4909 = vmul.f32 %v4781, 0.044715
        %v4910 = vmul.f32 %v4782, 0.044715
        %v4911 = vmul.f32 %v4783, 0.044715
        %v4912 = vmul.f32 %v4784, 0.044715
        %v4913 = vmul.f32 %v4785, 0.044715
        %v4914 = vmul.f32 %v4786, 0.044715
        %v4915 = vmul.f32 %v4787, 0.044715
        %v4916 = vmul.f32 %v4788, 0.044715
        %v4917 = vmul.f32 %v4789, 0.044715
        %v4918 = vmul.f32 %v4790, 0.044715
        %v4919 = vmul.f32 %v4791, 0.044715
        %v4920 = vmul.f32 %v4792, 0.044715
        %v4921 = vmul.f32 %v4793, 0.044715
        %v4922 = vmul.f32 %v4794, 0.044715
        %v4923 = vmul.f32 %v4795, 0.044715
        %v4924 = vmul.f32 %v4796, 0.044715
        %v4925 = vmul.f32 %v4797, 0.044715
        %v4926 = vmul.f32 %v4798, 0.044715
        %v4927 = vmul.f32 %v4799, 0.044715
        %v4928 = vmul.f32 %v4800, 0.044715
        %v4929 = vmul.f32 %v4801, 0.044715
        %v4930 = vmul.f32 %v4802, 0.044715
        %v4931 = vmul.f32 %v4803, 0.044715
        %v4932 = vmul.f32 %v4804, 0.044715
        %v4933 = vmul.f32 %v4805, 0.044715
        %v4934 = vmul.f32 %v4806, 0.044715
        %v4935 = vmul.f32 %v4807, 0.044715
        %v4936 = vmul.f32 %v4808, 0.044715
        %v4937 = vmul.f32 %v4809, 0.044715
        %v4938 = vmul.f32 %v4810, 0.044715
        %v4939 = vmul.f32 %v4811, 0.044715
        %v4940 = vmul.f32 %v4812, 0.044715
        %v4941 = vmul.f32 %v4813, 0.044715
        %v4942 = vmul.f32 %v4814, 0.044715
        %v4943 = vmul.f32 %v4815, 0.044715
        %v4944 = vmul.f32 %v4816, 0.044715
        %v4945 = vmul.f32 %v4817, 0.044715
        %v4946 = vmul.f32 %v4818, 0.044715
        %v4947 = vmul.f32 %v4819, 0.044715
        %v4948 = vmul.f32 %v4820, 0.044715
        %v4949 = vmul.f32 %v4821, 0.044715
        %v4950 = vmul.f32 %v4822, 0.044715
        %v4951 = vmul.f32 %v4823, 0.044715
        %v4952 = vmul.f32 %v4824, 0.044715
        %v4953 = vmul.f32 %v4825, 0.044715
        %v4954 = vmul.f32 %v4826, 0.044715
        %v4955 = vmul.f32 %v4827, 0.044715
        %v4956 = vmul.f32 %v4828, 0.044715
        %v4957 = vmul.f32 %v4829, 0.044715
        %v4958 = vmul.f32 %v4830, 0.044715
        %v4959 = vmul.f32 %v4831, 0.044715
        %v4960 = vmul.f32 %v4832, 0.044715
        %v4961 = vmul.f32 %v4833, 0.044715
        %v4962 = vmul.f32 %v4834, 0.044715
        %v4963 = vmul.f32 %v4835, 0.044715
        %v4964 = vmul.f32 %v4836, 0.044715
        %v4965 = vmul.f32 %v4837, 0.044715
        %v4966 = vmul.f32 %v4838, 0.044715
        %v4967 = vmul.f32 %v4839, 0.044715
        %v4968 = vmul.f32 %v4840, 0.044715
        %v4969 = vmul.f32 %v4841, 0.044715
        %v4970 = vmul.f32 %v4842, 0.044715
        %v4971 = vmul.f32 %v4843, 0.044715
        %v4972 = vmul.f32 %v4844, 0.044715
        %v4973 = vmul.f32 %v4845, 0.044715
        %v4974 = vmul.f32 %v4846, 0.044715
        %v4975 = vmul.f32 %v4847, 0.044715
        %v4976 = vmul.f32 %v4848, 0.044715
        %v4977 = vmul.f32 %v4849, 0.044715
        %v4978 = vmul.f32 %v4850, 0.044715
        %v4979 = vmul.f32 %v4851, 0.044715
        %v4980 = vmul.f32 %v4852, 0.044715
        %v4981 = vmul.f32 %v4853, 0.044715
        %v4982 = vmul.f32 %v4854, 0.044715
        %v4983 = vmul.f32 %v4855, 0.044715
        %v4984 = vmul.f32 %v4856, 0.044715
        %v4985 = vmul.f32 %v4857, 0.044715
        %v4986 = vmul.f32 %v4858, 0.044715
        %v4987 = vmul.f32 %v4859, 0.044715
        %v4988 = vmul.f32 %v4860, 0.044715
        %v4989 = vmul.f32 %v4861, 0.044715
        %v4990 = vmul.f32 %v4862, 0.044715
        %v4991 = vmul.f32 %v4863, 0.044715
        %v4992 = vmul.f32 %v4864, 0.044715
        %v4993 = vmul.f32 %v4865, 0.044715
        %v4994 = vmul.f32 %v4866, 0.044715
        %v4995 = vmul.f32 %v4867, 0.044715
        %v4996 = vmul.f32 %v4868, 0.044715
        %v4997 = vmul.f32 %v4869, 0.044715
        %v4998 = vmul.f32 %v4870, 0.044715
        %v4999 = vmul.f32 %v4871, 0.044715
        %v5000 = vmul.f32 %v4872, 0.044715
        %v5001 = vmul.f32 %v4873, 0.044715
        %v5002 = vmul.f32 %v4874, 0.044715
        %v5003 = vmul.f32 %v4875, 0.044715
        %v5004 = vmul.f32 %v4876, 0.044715
        %v5005 = vmul.f32 %v4877, 0.044715
        %v5006 = vmul.f32 %v4878, 0.044715
        %v5007 = vmul.f32 %v4879, 0.044715
        %v5008 = vmul.f32 %v4880, 0.044715
        %v5009 = vmul.f32 %v4881, 0.044715
        %v5010 = vmul.f32 %v4882, 0.044715
        %v5011 = vmul.f32 %v4883, 0.044715
        %v5012 = vmul.f32 %v4884, 0.044715
        %v5013 = vmul.f32 %v4885, 0.044715
        %v5014 = vmul.f32 %v4886, 0.044715
        %v5015 = vmul.f32 %v4887, 0.044715
        %v5016 = vadd.f32 %v4281, %v4888
        %v5017 = vadd.f32 %v4283, %v4889
        %v5018 = vadd.f32 %v4474, %v4890
        %v5019 = vadd.f32 %v4476, %v4891
        %v5020 = vadd.f32 %v4285, %v4892
        %v5021 = vadd.f32 %v4287, %v4893
        %v5022 = vadd.f32 %v4478, %v4894
        %v5023 = vadd.f32 %v4480, %v4895
        %v5024 = vadd.f32 %v4291, %v4896
        %v5025 = vadd.f32 %v4293, %v4897
        %v5026 = vadd.f32 %v4484, %v4898
        %v5027 = vadd.f32 %v4486, %v4899
        %v5028 = vadd.f32 %v4295, %v4900
        %v5029 = vadd.f32 %v4297, %v4901
        %v5030 = vadd.f32 %v4488, %v4902
        %v5031 = vadd.f32 %v4490, %v4903
        %v5032 = vadd.f32 %v4301, %v4904
        %v5033 = vadd.f32 %v4303, %v4905
        %v5034 = vadd.f32 %v4494, %v4906
        %v5035 = vadd.f32 %v4496, %v4907
        %v5036 = vadd.f32 %v4305, %v4908
        %v5037 = vadd.f32 %v4307, %v4909
        %v5038 = vadd.f32 %v4498, %v4910
        %v5039 = vadd.f32 %v4500, %v4911
        %v5040 = vadd.f32 %v4311, %v4912
        %v5041 = vadd.f32 %v4313, %v4913
        %v5042 = vadd.f32 %v4504, %v4914
        %v5043 = vadd.f32 %v4506, %v4915
        %v5044 = vadd.f32 %v4315, %v4916
        %v5045 = vadd.f32 %v4317, %v4917
        %v5046 = vadd.f32 %v4508, %v4918
        %v5047 = vadd.f32 %v4510, %v4919
        %v5048 = vadd.f32 %v4321, %v4920
        %v5049 = vadd.f32 %v4323, %v4921
        %v5050 = vadd.f32 %v4514, %v4922
        %v5051 = vadd.f32 %v4516, %v4923
        %v5052 = vadd.f32 %v4325, %v4924
        %v5053 = vadd.f32 %v4327, %v4925
        %v5054 = vadd.f32 %v4518, %v4926
        %v5055 = vadd.f32 %v4520, %v4927
        %v5056 = vadd.f32 %v4331, %v4928
        %v5057 = vadd.f32 %v4333, %v4929
        %v5058 = vadd.f32 %v4524, %v4930
        %v5059 = vadd.f32 %v4526, %v4931
        %v5060 = vadd.f32 %v4335, %v4932
        %v5061 = vadd.f32 %v4337, %v4933
        %v5062 = vadd.f32 %v4528, %v4934
        %v5063 = vadd.f32 %v4530, %v4935
        %v5064 = vadd.f32 %v4341, %v4936
        %v5065 = vadd.f32 %v4343, %v4937
        %v5066 = vadd.f32 %v4534, %v4938
        %v5067 = vadd.f32 %v4536, %v4939
        %v5068 = vadd.f32 %v4345, %v4940
        %v5069 = vadd.f32 %v4347, %v4941
        %v5070 = vadd.f32 %v4538, %v4942
        %v5071 = vadd.f32 %v4540, %v4943
        %v5072 = vadd.f32 %v4351, %v4944
        %v5073 = vadd.f32 %v4353, %v4945
        %v5074 = vadd.f32 %v4544, %v4946
        %v5075 = vadd.f32 %v4546, %v4947
        %v5076 = vadd.f32 %v4355, %v4948
        %v5077 = vadd.f32 %v4357, %v4949
        %v5078 = vadd.f32 %v4548, %v4950
        %v5079 = vadd.f32 %v4550, %v4951
        %v5080 = vadd.f32 %v4361, %v4952
        %v5081 = vadd.f32 %v4363, %v4953
        %v5082 = vadd.f32 %v4554, %v4954
        %v5083 = vadd.f32 %v4556, %v4955
        %v5084 = vadd.f32 %v4365, %v4956
        %v5085 = vadd.f32 %v4367, %v4957
        %v5086 = vadd.f32 %v4558, %v4958
        %v5087 = vadd.f32 %v4560, %v4959
        %v5088 = vadd.f32 %v4371, %v4960
        %v5089 = vadd.f32 %v4373, %v4961
        %v5090 = vadd.f32 %v4564, %v4962
        %v5091 = vadd.f32 %v4566, %v4963
        %v5092 = vadd.f32 %v4375, %v4964
        %v5093 = vadd.f32 %v4377, %v4965
        %v5094 = vadd.f32 %v4568, %v4966
        %v5095 = vadd.f32 %v4570, %v4967
        %v5096 = vadd.f32 %v4381, %v4968
        %v5097 = vadd.f32 %v4383, %v4969
        %v5098 = vadd.f32 %v4574, %v4970
        %v5099 = vadd.f32 %v4576, %v4971
        %v5100 = vadd.f32 %v4385, %v4972
        %v5101 = vadd.f32 %v4387, %v4973
        %v5102 = vadd.f32 %v4578, %v4974
        %v5103 = vadd.f32 %v4580, %v4975
        %v5104 = vadd.f32 %v4391, %v4976
        %v5105 = vadd.f32 %v4393, %v4977
        %v5106 = vadd.f32 %v4584, %v4978
        %v5107 = vadd.f32 %v4586, %v4979
        %v5108 = vadd.f32 %v4395, %v4980
        %v5109 = vadd.f32 %v4397, %v4981
        %v5110 = vadd.f32 %v4588, %v4982
        %v5111 = vadd.f32 %v4590, %v4983
        %v5112 = vadd.f32 %v4401, %v4984
        %v5113 = vadd.f32 %v4403, %v4985
        %v5114 = vadd.f32 %v4594, %v4986
        %v5115 = vadd.f32 %v4596, %v4987
        %v5116 = vadd.f32 %v4405, %v4988
        %v5117 = vadd.f32 %v4407, %v4989
        %v5118 = vadd.f32 %v4598, %v4990
        %v5119 = vadd.f32 %v4600, %v4991
        %v5120 = vadd.f32 %v4411, %v4992
        %v5121 = vadd.f32 %v4413, %v4993
        %v5122 = vadd.f32 %v4604, %v4994
        %v5123 = vadd.f32 %v4606, %v4995
        %v5124 = vadd.f32 %v4415, %v4996
        %v5125 = vadd.f32 %v4417, %v4997
        %v5126 = vadd.f32 %v4608, %v4998
        %v5127 = vadd.f32 %v4610, %v4999
        %v5128 = vadd.f32 %v4421, %v5000
        %v5129 = vadd.f32 %v4423, %v5001
        %v5130 = vadd.f32 %v4614, %v5002
        %v5131 = vadd.f32 %v4616, %v5003
        %v5132 = vadd.f32 %v4425, %v5004
        %v5133 = vadd.f32 %v4427, %v5005
        %v5134 = vadd.f32 %v4618, %v5006
        %v5135 = vadd.f32 %v4620, %v5007
        %v5136 = vadd.f32 %v4431, %v5008
        %v5137 = vadd.f32 %v4433, %v5009
        %v5138 = vadd.f32 %v4624, %v5010
        %v5139 = vadd.f32 %v4626, %v5011
        %v5140 = vadd.f32 %v4435, %v5012
        %v5141 = vadd.f32 %v4437, %v5013
        %v5142 = vadd.f32 %v4628, %v5014
        %v5143 = vadd.f32 %v4630, %v5015
        %v5144 = vmul.f32 %v5016, 0.7978846
        %v5145 = vmul.f32 %v5017, 0.7978846
        %v5146 = vmul.f32 %v5018, 0.7978846
        %v5147 = vmul.f32 %v5019, 0.7978846
        %v5148 = vmul.f32 %v5020, 0.7978846
        %v5149 = vmul.f32 %v5021, 0.7978846
        %v5150 = vmul.f32 %v5022, 0.7978846
        %v5151 = vmul.f32 %v5023, 0.7978846
        %v5152 = vmul.f32 %v5024, 0.7978846
        %v5153 = vmul.f32 %v5025, 0.7978846
        %v5154 = vmul.f32 %v5026, 0.7978846
        %v5155 = vmul.f32 %v5027, 0.7978846
        %v5156 = vmul.f32 %v5028, 0.7978846
        %v5157 = vmul.f32 %v5029, 0.7978846
        %v5158 = vmul.f32 %v5030, 0.7978846
        %v5159 = vmul.f32 %v5031, 0.7978846
        %v5160 = vmul.f32 %v5032, 0.7978846
        %v5161 = vmul.f32 %v5033, 0.7978846
        %v5162 = vmul.f32 %v5034, 0.7978846
        %v5163 = vmul.f32 %v5035, 0.7978846
        %v5164 = vmul.f32 %v5036, 0.7978846
        %v5165 = vmul.f32 %v5037, 0.7978846
        %v5166 = vmul.f32 %v5038, 0.7978846
        %v5167 = vmul.f32 %v5039, 0.7978846
        %v5168 = vmul.f32 %v5040, 0.7978846
        %v5169 = vmul.f32 %v5041, 0.7978846
        %v5170 = vmul.f32 %v5042, 0.7978846
        %v5171 = vmul.f32 %v5043, 0.7978846
        %v5172 = vmul.f32 %v5044, 0.7978846
        %v5173 = vmul.f32 %v5045, 0.7978846
        %v5174 = vmul.f32 %v5046, 0.7978846
        %v5175 = vmul.f32 %v5047, 0.7978846
        %v5176 = vmul.f32 %v5048, 0.7978846
        %v5177 = vmul.f32 %v5049, 0.7978846
        %v5178 = vmul.f32 %v5050, 0.7978846
        %v5179 = vmul.f32 %v5051, 0.7978846
        %v5180 = vmul.f32 %v5052, 0.7978846
        %v5181 = vmul.f32 %v5053, 0.7978846
        %v5182 = vmul.f32 %v5054, 0.7978846
        %v5183 = vmul.f32 %v5055, 0.7978846
        %v5184 = vmul.f32 %v5056, 0.7978846
        %v5185 = vmul.f32 %v5057, 0.7978846
        %v5186 = vmul.f32 %v5058, 0.7978846
        %v5187 = vmul.f32 %v5059, 0.7978846
        %v5188 = vmul.f32 %v5060, 0.7978846
        %v5189 = vmul.f32 %v5061, 0.7978846
        %v5190 = vmul.f32 %v5062, 0.7978846
        %v5191 = vmul.f32 %v5063, 0.7978846
        %v5192 = vmul.f32 %v5064, 0.7978846
        %v5193 = vmul.f32 %v5065, 0.7978846
        %v5194 = vmul.f32 %v5066, 0.7978846
        %v5195 = vmul.f32 %v5067, 0.7978846
        %v5196 = vmul.f32 %v5068, 0.7978846
        %v5197 = vmul.f32 %v5069, 0.7978846
        %v5198 = vmul.f32 %v5070, 0.7978846
        %v5199 = vmul.f32 %v5071, 0.7978846
        %v5200 = vmul.f32 %v5072, 0.7978846
        %v5201 = vmul.f32 %v5073, 0.7978846
        %v5202 = vmul.f32 %v5074, 0.7978846
        %v5203 = vmul.f32 %v5075, 0.7978846
        %v5204 = vmul.f32 %v5076, 0.7978846
        %v5205 = vmul.f32 %v5077, 0.7978846
        %v5206 = vmul.f32 %v5078, 0.7978846
        %v5207 = vmul.f32 %v5079, 0.7978846
        %v5208 = vmul.f32 %v5080, 0.7978846
        %v5209 = vmul.f32 %v5081, 0.7978846
        %v5210 = vmul.f32 %v5082, 0.7978846
        %v5211 = vmul.f32 %v5083, 0.7978846
        %v5212 = vmul.f32 %v5084, 0.7978846
        %v5213 = vmul.f32 %v5085, 0.7978846
        %v5214 = vmul.f32 %v5086, 0.7978846
        %v5215 = vmul.f32 %v5087, 0.7978846
        %v5216 = vmul.f32 %v5088, 0.7978846
        %v5217 = vmul.f32 %v5089, 0.7978846
        %v5218 = vmul.f32 %v5090, 0.7978846
        %v5219 = vmul.f32 %v5091, 0.7978846
        %v5220 = vmul.f32 %v5092, 0.7978846
        %v5221 = vmul.f32 %v5093, 0.7978846
        %v5222 = vmul.f32 %v5094, 0.7978846
        %v5223 = vmul.f32 %v5095, 0.7978846
        %v5224 = vmul.f32 %v5096, 0.7978846
        %v5225 = vmul.f32 %v5097, 0.7978846
        %v5226 = vmul.f32 %v5098, 0.7978846
        %v5227 = vmul.f32 %v5099, 0.7978846
        %v5228 = vmul.f32 %v5100, 0.7978846
        %v5229 = vmul.f32 %v5101, 0.7978846
        %v5230 = vmul.f32 %v5102, 0.7978846
        %v5231 = vmul.f32 %v5103, 0.7978846
        %v5232 = vmul.f32 %v5104, 0.7978846
        %v5233 = vmul.f32 %v5105, 0.7978846
        %v5234 = vmul.f32 %v5106, 0.7978846
        %v5235 = vmul.f32 %v5107, 0.7978846
        %v5236 = vmul.f32 %v5108, 0.7978846
        %v5237 = vmul.f32 %v5109, 0.7978846
        %v5238 = vmul.f32 %v5110, 0.7978846
        %v5239 = vmul.f32 %v5111, 0.7978846
        %v5240 = vmul.f32 %v5112, 0.7978846
        %v5241 = vmul.f32 %v5113, 0.7978846
        %v5242 = vmul.f32 %v5114, 0.7978846
        %v5243 = vmul.f32 %v5115, 0.7978846
        %v5244 = vmul.f32 %v5116, 0.7978846
        %v5245 = vmul.f32 %v5117, 0.7978846
        %v5246 = vmul.f32 %v5118, 0.7978846
        %v5247 = vmul.f32 %v5119, 0.7978846
        %v5248 = vmul.f32 %v5120, 0.7978846
        %v5249 = vmul.f32 %v5121, 0.7978846
        %v5250 = vmul.f32 %v5122, 0.7978846
        %v5251 = vmul.f32 %v5123, 0.7978846
        %v5252 = vmul.f32 %v5124, 0.7978846
        %v5253 = vmul.f32 %v5125, 0.7978846
        %v5254 = vmul.f32 %v5126, 0.7978846
        %v5255 = vmul.f32 %v5127, 0.7978846
        %v5256 = vmul.f32 %v5128, 0.7978846
        %v5257 = vmul.f32 %v5129, 0.7978846
        %v5258 = vmul.f32 %v5130, 0.7978846
        %v5259 = vmul.f32 %v5131, 0.7978846
        %v5260 = vmul.f32 %v5132, 0.7978846
        %v5261 = vmul.f32 %v5133, 0.7978846
        %v5262 = vmul.f32 %v5134, 0.7978846
        %v5263 = vmul.f32 %v5135, 0.7978846
        %v5264 = vmul.f32 %v5136, 0.7978846
        %v5265 = vmul.f32 %v5137, 0.7978846
        %v5266 = vmul.f32 %v5138, 0.7978846
        %v5267 = vmul.f32 %v5139, 0.7978846
        %v5268 = vmul.f32 %v5140, 0.7978846
        %v5269 = vmul.f32 %v5141, 0.7978846
        %v5270 = vmul.f32 %v5142, 0.7978846
        %v5271 = vmul.f32 %v5143, 0.7978846
        %v5272 = vtanh.pop %v5144
        %v5273 = vtanh.pop %v5145
        %v5274 = vtanh.pop %v5146
        %v5275 = vtanh.pop %v5147
        %v5276 = vtanh.pop %v5148
        %v5277 = vtanh.pop %v5149
        %v5278 = vtanh.pop %v5150
        %v5279 = vtanh.pop %v5151
        %v5280 = vtanh.pop %v5152
        %v5281 = vtanh.pop %v5153
        %v5282 = vtanh.pop %v5154
        %v5283 = vtanh.pop %v5155
        %v5284 = vtanh.pop %v5156
        %v5285 = vtanh.pop %v5157
        %v5286 = vtanh.pop %v5158
        %v5287 = vtanh.pop %v5159
        %v5288 = vtanh.pop %v5160
        %v5289 = vtanh.pop %v5161
        %v5290 = vtanh.pop %v5162
        %v5291 = vtanh.pop %v5163
        %v5292 = vtanh.pop %v5164
        %v5293 = vtanh.pop %v5165
        %v5294 = vtanh.pop %v5166
        %v5295 = vtanh.pop %v5167
        %v5296 = vtanh.pop %v5168
        %v5297 = vtanh.pop %v5169
        %v5298 = vtanh.pop %v5170
        %v5299 = vtanh.pop %v5171
        %v5300 = vtanh.pop %v5172
        %v5301 = vtanh.pop %v5173
        %v5302 = vtanh.pop %v5174
        %v5303 = vtanh.pop %v5175
        %v5304 = vtanh.pop %v5176
        %v5305 = vtanh.pop %v5177
        %v5306 = vtanh.pop %v5178
        %v5307 = vtanh.pop %v5179
        %v5308 = vtanh.pop %v5180
        %v5309 = vtanh.pop %v5181
        %v5310 = vtanh.pop %v5182
        %v5311 = vtanh.pop %v5183
        %v5312 = vtanh.pop %v5184
        %v5313 = vtanh.pop %v5185
        %v5314 = vtanh.pop %v5186
        %v5315 = vtanh.pop %v5187
        %v5316 = vtanh.pop %v5188
        %v5317 = vtanh.pop %v5189
        %v5318 = vtanh.pop %v5190
        %v5319 = vtanh.pop %v5191
        %v5320 = vtanh.pop %v5192
        %v5321 = vtanh.pop %v5193
        %v5322 = vtanh.pop %v5194
        %v5323 = vtanh.pop %v5195
        %v5324 = vtanh.pop %v5196
        %v5325 = vtanh.pop %v5197
        %v5326 = vtanh.pop %v5198
        %v5327 = vtanh.pop %v5199
        %v5328 = vtanh.pop %v5200
        %v5329 = vtanh.pop %v5201
        %v5330 = vtanh.pop %v5202
        %v5331 = vtanh.pop %v5203
        %v5332 = vtanh.pop %v5204
        %v5333 = vtanh.pop %v5205
        %v5334 = vtanh.pop %v5206
        %v5335 = vtanh.pop %v5207
        %v5336 = vtanh.pop %v5208
        %v5337 = vtanh.pop %v5209
        %v5338 = vtanh.pop %v5210
        %v5339 = vtanh.pop %v5211
        %v5340 = vtanh.pop %v5212
        %v5341 = vtanh.pop %v5213
        %v5342 = vtanh.pop %v5214
        %v5343 = vtanh.pop %v5215
        %v5344 = vtanh.pop %v5216
        %v5345 = vtanh.pop %v5217
        %v5346 = vtanh.pop %v5218
        %v5347 = vtanh.pop %v5219
        %v5348 = vtanh.pop %v5220
        %v5349 = vtanh.pop %v5221
        %v5350 = vtanh.pop %v5222
        %v5351 = vtanh.pop %v5223
        %v5352 = vtanh.pop %v5224
        %v5353 = vtanh.pop %v5225
        %v5354 = vtanh.pop %v5226
        %v5355 = vtanh.pop %v5227
        %v5356 = vtanh.pop %v5228
        %v5357 = vtanh.pop %v5229
        %v5358 = vtanh.pop %v5230
        %v5359 = vtanh.pop %v5231
        %v5360 = vtanh.pop %v5232
        %v5361 = vtanh.pop %v5233
        %v5362 = vtanh.pop %v5234
        %v5363 = vtanh.pop %v5235
        %v5364 = vtanh.pop %v5236
        %v5365 = vtanh.pop %v5237
        %v5366 = vtanh.pop %v5238
        %v5367 = vtanh.pop %v5239
        %v5368 = vtanh.pop %v5240
        %v5369 = vtanh.pop %v5241
        %v5370 = vtanh.pop %v5242
        %v5371 = vtanh.pop %v5243
        %v5372 = vtanh.pop %v5244
        %v5373 = vtanh.pop %v5245
        %v5374 = vtanh.pop %v5246
        %v5375 = vtanh.pop %v5247
        %v5376 = vtanh.pop %v5248
        %v5377 = vtanh.pop %v5249
        %v5378 = vtanh.pop %v5250
        %v5379 = vtanh.pop %v5251
        %v5380 = vtanh.pop %v5252
        %v5381 = vtanh.pop %v5253
        %v5382 = vtanh.pop %v5254
        %v5383 = vtanh.pop %v5255
        %v5384 = vtanh.pop %v5256
        %v5385 = vtanh.pop %v5257
        %v5386 = vtanh.pop %v5258
        %v5387 = vtanh.pop %v5259
        %v5388 = vtanh.pop %v5260
        %v5389 = vtanh.pop %v5261
        %v5390 = vtanh.pop %v5262
        %v5391 = vtanh.pop %v5263
        %v5392 = vtanh.pop %v5264
        %v5393 = vtanh.pop %v5265
        %v5394 = vtanh.pop %v5266
        %v5395 = vtanh.pop %v5267
        %v5396 = vtanh.pop %v5268
        %v5397 = vtanh.pop %v5269
        %v5398 = vtanh.pop %v5270
        %v5399 = vtanh.pop %v5271
        %v5400 = vadd.f32 %v5272, 1.0
        %v5401 = vadd.f32 %v5273, 1.0
        %v5402 = vadd.f32 %v5274, 1.0
        %v5403 = vadd.f32 %v5275, 1.0
        %v5404 = vadd.f32 %v5276, 1.0
        %v5405 = vadd.f32 %v5277, 1.0
        %v5406 = vadd.f32 %v5278, 1.0
        %v5407 = vadd.f32 %v5279, 1.0
        %v5408 = vadd.f32 %v5280, 1.0
        %v5409 = vadd.f32 %v5281, 1.0
        %v5410 = vadd.f32 %v5282, 1.0
        %v5411 = vadd.f32 %v5283, 1.0
        %v5412 = vadd.f32 %v5284, 1.0
        %v5413 = vadd.f32 %v5285, 1.0
        %v5414 = vadd.f32 %v5286, 1.0
        %v5415 = vadd.f32 %v5287, 1.0
        %v5416 = vadd.f32 %v5288, 1.0
        %v5417 = vadd.f32 %v5289, 1.0
        %v5418 = vadd.f32 %v5290, 1.0
        %v5419 = vadd.f32 %v5291, 1.0
        %v5420 = vadd.f32 %v5292, 1.0
        %v5421 = vadd.f32 %v5293, 1.0
        %v5422 = vadd.f32 %v5294, 1.0
        %v5423 = vadd.f32 %v5295, 1.0
        %v5424 = vadd.f32 %v5296, 1.0
        %v5425 = vadd.f32 %v5297, 1.0
        %v5426 = vadd.f32 %v5298, 1.0
        %v5427 = vadd.f32 %v5299, 1.0
        %v5428 = vadd.f32 %v5300, 1.0
        %v5429 = vadd.f32 %v5301, 1.0
        %v5430 = vadd.f32 %v5302, 1.0
        %v5431 = vadd.f32 %v5303, 1.0
        %v5432 = vadd.f32 %v5304, 1.0
        %v5433 = vadd.f32 %v5305, 1.0
        %v5434 = vadd.f32 %v5306, 1.0
        %v5435 = vadd.f32 %v5307, 1.0
        %v5436 = vadd.f32 %v5308, 1.0
        %v5437 = vadd.f32 %v5309, 1.0
        %v5438 = vadd.f32 %v5310, 1.0
        %v5439 = vadd.f32 %v5311, 1.0
        %v5440 = vadd.f32 %v5312, 1.0
        %v5441 = vadd.f32 %v5313, 1.0
        %v5442 = vadd.f32 %v5314, 1.0
        %v5443 = vadd.f32 %v5315, 1.0
        %v5444 = vadd.f32 %v5316, 1.0
        %v5445 = vadd.f32 %v5317, 1.0
        %v5446 = vadd.f32 %v5318, 1.0
        %v5447 = vadd.f32 %v5319, 1.0
        %v5448 = vadd.f32 %v5320, 1.0
        %v5449 = vadd.f32 %v5321, 1.0
        %v5450 = vadd.f32 %v5322, 1.0
        %v5451 = vadd.f32 %v5323, 1.0
        %v5452 = vadd.f32 %v5324, 1.0
        %v5453 = vadd.f32 %v5325, 1.0
        %v5454 = vadd.f32 %v5326, 1.0
        %v5455 = vadd.f32 %v5327, 1.0
        %v5456 = vadd.f32 %v5328, 1.0
        %v5457 = vadd.f32 %v5329, 1.0
        %v5458 = vadd.f32 %v5330, 1.0
        %v5459 = vadd.f32 %v5331, 1.0
        %v5460 = vadd.f32 %v5332, 1.0
        %v5461 = vadd.f32 %v5333, 1.0
        %v5462 = vadd.f32 %v5334, 1.0
        %v5463 = vadd.f32 %v5335, 1.0
        %v5464 = vadd.f32 %v5336, 1.0
        %v5465 = vadd.f32 %v5337, 1.0
        %v5466 = vadd.f32 %v5338, 1.0
        %v5467 = vadd.f32 %v5339, 1.0
        %v5468 = vadd.f32 %v5340, 1.0
        %v5469 = vadd.f32 %v5341, 1.0
        %v5470 = vadd.f32 %v5342, 1.0
        %v5471 = vadd.f32 %v5343, 1.0
        %v5472 = vadd.f32 %v5344, 1.0
        %v5473 = vadd.f32 %v5345, 1.0
        %v5474 = vadd.f32 %v5346, 1.0
        %v5475 = vadd.f32 %v5347, 1.0
        %v5476 = vadd.f32 %v5348, 1.0
        %v5477 = vadd.f32 %v5349, 1.0
        %v5478 = vadd.f32 %v5350, 1.0
        %v5479 = vadd.f32 %v5351, 1.0
        %v5480 = vadd.f32 %v5352, 1.0
        %v5481 = vadd.f32 %v5353, 1.0
        %v5482 = vadd.f32 %v5354, 1.0
        %v5483 = vadd.f32 %v5355, 1.0
        %v5484 = vadd.f32 %v5356, 1.0
        %v5485 = vadd.f32 %v5357, 1.0
        %v5486 = vadd.f32 %v5358, 1.0
        %v5487 = vadd.f32 %v5359, 1.0
        %v5488 = vadd.f32 %v5360, 1.0
        %v5489 = vadd.f32 %v5361, 1.0
        %v5490 = vadd.f32 %v5362, 1.0
        %v5491 = vadd.f32 %v5363, 1.0
        %v5492 = vadd.f32 %v5364, 1.0
        %v5493 = vadd.f32 %v5365, 1.0
        %v5494 = vadd.f32 %v5366, 1.0
        %v5495 = vadd.f32 %v5367, 1.0
        %v5496 = vadd.f32 %v5368, 1.0
        %v5497 = vadd.f32 %v5369, 1.0
        %v5498 = vadd.f32 %v5370, 1.0
        %v5499 = vadd.f32 %v5371, 1.0
        %v5500 = vadd.f32 %v5372, 1.0
        %v5501 = vadd.f32 %v5373, 1.0
        %v5502 = vadd.f32 %v5374, 1.0
        %v5503 = vadd.f32 %v5375, 1.0
        %v5504 = vadd.f32 %v5376, 1.0
        %v5505 = vadd.f32 %v5377, 1.0
        %v5506 = vadd.f32 %v5378, 1.0
        %v5507 = vadd.f32 %v5379, 1.0
        %v5508 = vadd.f32 %v5380, 1.0
        %v5509 = vadd.f32 %v5381, 1.0
        %v5510 = vadd.f32 %v5382, 1.0
        %v5511 = vadd.f32 %v5383, 1.0
        %v5512 = vadd.f32 %v5384, 1.0
        %v5513 = vadd.f32 %v5385, 1.0
        %v5514 = vadd.f32 %v5386, 1.0
        %v5515 = vadd.f32 %v5387, 1.0
        %v5516 = vadd.f32 %v5388, 1.0
        %v5517 = vadd.f32 %v5389, 1.0
        %v5518 = vadd.f32 %v5390, 1.0
        %v5519 = vadd.f32 %v5391, 1.0
        %v5520 = vadd.f32 %v5392, 1.0
        %v5521 = vadd.f32 %v5393, 1.0
        %v5522 = vadd.f32 %v5394, 1.0
        %v5523 = vadd.f32 %v5395, 1.0
        %v5524 = vadd.f32 %v5396, 1.0
        %v5525 = vadd.f32 %v5397, 1.0
        %v5526 = vadd.f32 %v5398, 1.0
        %v5527 = vadd.f32 %v5399, 1.0
        %v5528 = vmul.f32 %v5400, 0.5
        %v5529 = vmul.f32 %v5401, 0.5
        %v5530 = vmul.f32 %v5402, 0.5
        %v5531 = vmul.f32 %v5403, 0.5
        %v5532 = vmul.f32 %v5404, 0.5
        %v5533 = vmul.f32 %v5405, 0.5
        %v5534 = vmul.f32 %v5406, 0.5
        %v5535 = vmul.f32 %v5407, 0.5
        %v5536 = vmul.f32 %v5408, 0.5
        %v5537 = vmul.f32 %v5409, 0.5
        %v5538 = vmul.f32 %v5410, 0.5
        %v5539 = vmul.f32 %v5411, 0.5
        %v5540 = vmul.f32 %v5412, 0.5
        %v5541 = vmul.f32 %v5413, 0.5
        %v5542 = vmul.f32 %v5414, 0.5
        %v5543 = vmul.f32 %v5415, 0.5
        %v5544 = vmul.f32 %v5416, 0.5
        %v5545 = vmul.f32 %v5417, 0.5
        %v5546 = vmul.f32 %v5418, 0.5
        %v5547 = vmul.f32 %v5419, 0.5
        %v5548 = vmul.f32 %v5420, 0.5
        %v5549 = vmul.f32 %v5421, 0.5
        %v5550 = vmul.f32 %v5422, 0.5
        %v5551 = vmul.f32 %v5423, 0.5
        %v5552 = vmul.f32 %v5424, 0.5
        %v5553 = vmul.f32 %v5425, 0.5
        %v5554 = vmul.f32 %v5426, 0.5
        %v5555 = vmul.f32 %v5427, 0.5
        %v5556 = vmul.f32 %v5428, 0.5
        %v5557 = vmul.f32 %v5429, 0.5
        %v5558 = vmul.f32 %v5430, 0.5
        %v5559 = vmul.f32 %v5431, 0.5
        %v5560 = vmul.f32 %v5432, 0.5
        %v5561 = vmul.f32 %v5433, 0.5
        %v5562 = vmul.f32 %v5434, 0.5
        %v5563 = vmul.f32 %v5435, 0.5
        %v5564 = vmul.f32 %v5436, 0.5
        %v5565 = vmul.f32 %v5437, 0.5
        %v5566 = vmul.f32 %v5438, 0.5
        %v5567 = vmul.f32 %v5439, 0.5
        %v5568 = vmul.f32 %v5440, 0.5
        %v5569 = vmul.f32 %v5441, 0.5
        %v5570 = vmul.f32 %v5442, 0.5
        %v5571 = vmul.f32 %v5443, 0.5
        %v5572 = vmul.f32 %v5444, 0.5
        %v5573 = vmul.f32 %v5445, 0.5
        %v5574 = vmul.f32 %v5446, 0.5
        %v5575 = vmul.f32 %v5447, 0.5
        %v5576 = vmul.f32 %v5448, 0.5
        %v5577 = vmul.f32 %v5449, 0.5
        %v5578 = vmul.f32 %v5450, 0.5
        %v5579 = vmul.f32 %v5451, 0.5
        %v5580 = vmul.f32 %v5452, 0.5
        %v5581 = vmul.f32 %v5453, 0.5
        %v5582 = vmul.f32 %v5454, 0.5
        %v5583 = vmul.f32 %v5455, 0.5
        %v5584 = vmul.f32 %v5456, 0.5
        %v5585 = vmul.f32 %v5457, 0.5
        %v5586 = vmul.f32 %v5458, 0.5
        %v5587 = vmul.f32 %v5459, 0.5
        %v5588 = vmul.f32 %v5460, 0.5
        %v5589 = vmul.f32 %v5461, 0.5
        %v5590 = vmul.f32 %v5462, 0.5
        %v5591 = vmul.f32 %v5463, 0.5
        %v5592 = vmul.f32 %v5464, 0.5
        %v5593 = vmul.f32 %v5465, 0.5
        %v5594 = vmul.f32 %v5466, 0.5
        %v5595 = vmul.f32 %v5467, 0.5
        %v5596 = vmul.f32 %v5468, 0.5
        %v5597 = vmul.f32 %v5469, 0.5
        %v5598 = vmul.f32 %v5470, 0.5
        %v5599 = vmul.f32 %v5471, 0.5
        %v5600 = vmul.f32 %v5472, 0.5
        %v5601 = vmul.f32 %v5473, 0.5
        %v5602 = vmul.f32 %v5474, 0.5
        %v5603 = vmul.f32 %v5475, 0.5
        %v5604 = vmul.f32 %v5476, 0.5
        %v5605 = vmul.f32 %v5477, 0.5
        %v5606 = vmul.f32 %v5478, 0.5
        %v5607 = vmul.f32 %v5479, 0.5
        %v5608 = vmul.f32 %v5480, 0.5
        %v5609 = vmul.f32 %v5481, 0.5
        %v5610 = vmul.f32 %v5482, 0.5
        %v5611 = vmul.f32 %v5483, 0.5
        %v5612 = vmul.f32 %v5484, 0.5
        %v5613 = vmul.f32 %v5485, 0.5
        %v5614 = vmul.f32 %v5486, 0.5
        %v5615 = vmul.f32 %v5487, 0.5
        %v5616 = vmul.f32 %v5488, 0.5
        %v5617 = vmul.f32 %v5489, 0.5
        %v5618 = vmul.f32 %v5490, 0.5
        %v5619 = vmul.f32 %v5491, 0.5
        %v5620 = vmul.f32 %v5492, 0.5
        %v5621 = vmul.f32 %v5493, 0.5
        %v5622 = vmul.f32 %v5494, 0.5
        %v5623 = vmul.f32 %v5495, 0.5
        %v5624 = vmul.f32 %v5496, 0.5
        %v5625 = vmul.f32 %v5497, 0.5
        %v5626 = vmul.f32 %v5498, 0.5
        %v5627 = vmul.f32 %v5499, 0.5
        %v5628 = vmul.f32 %v5500, 0.5
        %v5629 = vmul.f32 %v5501, 0.5
        %v5630 = vmul.f32 %v5502, 0.5
        %v5631 = vmul.f32 %v5503, 0.5
        %v5632 = vmul.f32 %v5504, 0.5
        %v5633 = vmul.f32 %v5505, 0.5
        %v5634 = vmul.f32 %v5506, 0.5
        %v5635 = vmul.f32 %v5507, 0.5
        %v5636 = vmul.f32 %v5508, 0.5
        %v5637 = vmul.f32 %v5509, 0.5
        %v5638 = vmul.f32 %v5510, 0.5
        %v5639 = vmul.f32 %v5511, 0.5
        %v5640 = vmul.f32 %v5512, 0.5
        %v5641 = vmul.f32 %v5513, 0.5
        %v5642 = vmul.f32 %v5514, 0.5
        %v5643 = vmul.f32 %v5515, 0.5
        %v5644 = vmul.f32 %v5516, 0.5
        %v5645 = vmul.f32 %v5517, 0.5
        %v5646 = vmul.f32 %v5518, 0.5
        %v5647 = vmul.f32 %v5519, 0.5
        %v5648 = vmul.f32 %v5520, 0.5
        %v5649 = vmul.f32 %v5521, 0.5
        %v5650 = vmul.f32 %v5522, 0.5
        %v5651 = vmul.f32 %v5523, 0.5
        %v5652 = vmul.f32 %v5524, 0.5
        %v5653 = vmul.f32 %v5525, 0.5
        %v5654 = vmul.f32 %v5526, 0.5
        %v5655 = vmul.f32 %v5527, 0.5
        %v5656 = vmul.f32 %v4281, %v5528
        %v5657 = vmul.f32 %v4283, %v5529
        %v5658 = vmul.f32 %v4474, %v5530
        %v5659 = vmul.f32 %v4476, %v5531
        %v5660 = vmul.f32 %v4285, %v5532
        %v5661 = vmul.f32 %v4287, %v5533
        %v5662 = vmul.f32 %v4478, %v5534
        %v5663 = vmul.f32 %v4480, %v5535
        %v5664 = vmul.f32 %v4291, %v5536
        %v5665 = vmul.f32 %v4293, %v5537
        %v5666 = vmul.f32 %v4484, %v5538
        %v5667 = vmul.f32 %v4486, %v5539
        %v5668 = vmul.f32 %v4295, %v5540
        %v5669 = vmul.f32 %v4297, %v5541
        %v5670 = vmul.f32 %v4488, %v5542
        %v5671 = vmul.f32 %v4490, %v5543
        %v5672 = vmul.f32 %v4301, %v5544
        %v5673 = vmul.f32 %v4303, %v5545
        %v5674 = vmul.f32 %v4494, %v5546
        %v5675 = vmul.f32 %v4496, %v5547
        %v5676 = vmul.f32 %v4305, %v5548
        %v5677 = vmul.f32 %v4307, %v5549
        %v5678 = vmul.f32 %v4498, %v5550
        %v5679 = vmul.f32 %v4500, %v5551
        %v5680 = vmul.f32 %v4311, %v5552
        %v5681 = vmul.f32 %v4313, %v5553
        %v5682 = vmul.f32 %v4504, %v5554
        %v5683 = vmul.f32 %v4506, %v5555
        %v5684 = vmul.f32 %v4315, %v5556
        %v5685 = vmul.f32 %v4317, %v5557
        %v5686 = vmul.f32 %v4508, %v5558
        %v5687 = vmul.f32 %v4510, %v5559
        %v5688 = vmul.f32 %v4321, %v5560
        %v5689 = vmul.f32 %v4323, %v5561
        %v5690 = vmul.f32 %v4514, %v5562
        %v5691 = vmul.f32 %v4516, %v5563
        %v5692 = vmul.f32 %v4325, %v5564
        %v5693 = vmul.f32 %v4327, %v5565
        %v5694 = vmul.f32 %v4518, %v5566
        %v5695 = vmul.f32 %v4520, %v5567
        %v5696 = vmul.f32 %v4331, %v5568
        %v5697 = vmul.f32 %v4333, %v5569
        %v5698 = vmul.f32 %v4524, %v5570
        %v5699 = vmul.f32 %v4526, %v5571
        %v5700 = vmul.f32 %v4335, %v5572
        %v5701 = vmul.f32 %v4337, %v5573
        %v5702 = vmul.f32 %v4528, %v5574
        %v5703 = vmul.f32 %v4530, %v5575
        %v5704 = vmul.f32 %v4341, %v5576
        %v5705 = vmul.f32 %v4343, %v5577
        %v5706 = vmul.f32 %v4534, %v5578
        %v5707 = vmul.f32 %v4536, %v5579
        %v5708 = vmul.f32 %v4345, %v5580
        %v5709 = vmul.f32 %v4347, %v5581
        %v5710 = vmul.f32 %v4538, %v5582
        %v5711 = vmul.f32 %v4540, %v5583
        %v5712 = vmul.f32 %v4351, %v5584
        %v5713 = vmul.f32 %v4353, %v5585
        %v5714 = vmul.f32 %v4544, %v5586
        %v5715 = vmul.f32 %v4546, %v5587
        %v5716 = vmul.f32 %v4355, %v5588
        %v5717 = vmul.f32 %v4357, %v5589
        %v5718 = vmul.f32 %v4548, %v5590
        %v5719 = vmul.f32 %v4550, %v5591
        %v5720 = vmul.f32 %v4361, %v5592
        %v5721 = vmul.f32 %v4363, %v5593
        %v5722 = vmul.f32 %v4554, %v5594
        %v5723 = vmul.f32 %v4556, %v5595
        %v5724 = vmul.f32 %v4365, %v5596
        %v5725 = vmul.f32 %v4367, %v5597
        %v5726 = vmul.f32 %v4558, %v5598
        %v5727 = vmul.f32 %v4560, %v5599
        %v5728 = vmul.f32 %v4371, %v5600
        %v5729 = vmul.f32 %v4373, %v5601
        %v5730 = vmul.f32 %v4564, %v5602
        %v5731 = vmul.f32 %v4566, %v5603
        %v5732 = vmul.f32 %v4375, %v5604
        %v5733 = vmul.f32 %v4377, %v5605
        %v5734 = vmul.f32 %v4568, %v5606
        %v5735 = vmul.f32 %v4570, %v5607
        %v5736 = vmul.f32 %v4381, %v5608
        %v5737 = vmul.f32 %v4383, %v5609
        %v5738 = vmul.f32 %v4574, %v5610
        %v5739 = vmul.f32 %v4576, %v5611
        %v5740 = vmul.f32 %v4385, %v5612
        %v5741 = vmul.f32 %v4387, %v5613
        %v5742 = vmul.f32 %v4578, %v5614
        %v5743 = vmul.f32 %v4580, %v5615
        %v5744 = vmul.f32 %v4391, %v5616
        %v5745 = vmul.f32 %v4393, %v5617
        %v5746 = vmul.f32 %v4584, %v5618
        %v5747 = vmul.f32 %v4586, %v5619
        %v5748 = vmul.f32 %v4395, %v5620
        %v5749 = vmul.f32 %v4397, %v5621
        %v5750 = vmul.f32 %v4588, %v5622
        %v5751 = vmul.f32 %v4590, %v5623
        %v5752 = vmul.f32 %v4401, %v5624
        %v5753 = vmul.f32 %v4403, %v5625
        %v5754 = vmul.f32 %v4594, %v5626
        %v5755 = vmul.f32 %v4596, %v5627
        %v5756 = vmul.f32 %v4405, %v5628
        %v5757 = vmul.f32 %v4407, %v5629
        %v5758 = vmul.f32 %v4598, %v5630
        %v5759 = vmul.f32 %v4600, %v5631
        %v5760 = vmul.f32 %v4411, %v5632
        %v5761 = vmul.f32 %v4413, %v5633
        %v5762 = vmul.f32 %v4604, %v5634
        %v5763 = vmul.f32 %v4606, %v5635
        %v5764 = vmul.f32 %v4415, %v5636
        %v5765 = vmul.f32 %v4417, %v5637
        %v5766 = vmul.f32 %v4608, %v5638
        %v5767 = vmul.f32 %v4610, %v5639
        %v5768 = vmul.f32 %v4421, %v5640
        %v5769 = vmul.f32 %v4423, %v5641
        %v5770 = vmul.f32 %v4614, %v5642
        %v5771 = vmul.f32 %v4616, %v5643
        %v5772 = vmul.f32 %v4425, %v5644
        %v5773 = vmul.f32 %v4427, %v5645
        %v5774 = vmul.f32 %v4618, %v5646
        %v5775 = vmul.f32 %v4620, %v5647
        %v5776 = vmul.f32 %v4431, %v5648
        %v5777 = vmul.f32 %v4433, %v5649
        %v5778 = vmul.f32 %v4624, %v5650
        %v5779 = vmul.f32 %v4626, %v5651
        %v5780 = vmul.f32 %v4435, %v5652
        %v5781 = vmul.f32 %v4437, %v5653
        %v5782 = vmul.f32 %v4628, %v5654
        %v5783 = vmul.f32 %v4630, %v5655
        %v5784 = vpack.c.bf16 %v5660, %v5656
        %v5785 = vpack.c.bf16 %v5661, %v5657
        %v5786 = vpack.c.bf16 %v5662, %v5658
        %v5787 = vpack.c.bf16 %v5663, %v5659
        %v5788 = vpack.c.bf16 %v5668, %v5664
        %v5789 = vpack.c.bf16 %v5669, %v5665
        %v5790 = vpack.c.bf16 %v5670, %v5666
        %v5791 = vpack.c.bf16 %v5671, %v5667
        %v5792 = vpack.c.bf16 %v5676, %v5672
        %v5793 = vpack.c.bf16 %v5677, %v5673
        %v5794 = vpack.c.bf16 %v5678, %v5674
        %v5795 = vpack.c.bf16 %v5679, %v5675
        %v5796 = vpack.c.bf16 %v5684, %v5680
        %v5797 = vpack.c.bf16 %v5685, %v5681
        %v5798 = vpack.c.bf16 %v5686, %v5682
        %v5799 = vpack.c.bf16 %v5687, %v5683
        %v5800 = vpack.c.bf16 %v5692, %v5688
        %v5801 = vpack.c.bf16 %v5693, %v5689
        %v5802 = vpack.c.bf16 %v5694, %v5690
        %v5803 = vpack.c.bf16 %v5695, %v5691
        %v5804 = vpack.c.bf16 %v5700, %v5696
        %v5805 = vpack.c.bf16 %v5701, %v5697
        %v5806 = vpack.c.bf16 %v5702, %v5698
        %v5807 = vpack.c.bf16 %v5703, %v5699
        %v5808 = vpack.c.bf16 %v5708, %v5704
        %v5809 = vpack.c.bf16 %v5709, %v5705
        %v5810 = vpack.c.bf16 %v5710, %v5706
        %v5811 = vpack.c.bf16 %v5711, %v5707
        %v5812 = vpack.c.bf16 %v5716, %v5712
        %v5813 = vpack.c.bf16 %v5717, %v5713
        %v5814 = vpack.c.bf16 %v5718, %v5714
        %v5815 = vpack.c.bf16 %v5719, %v5715
        %v5816 = vpack.c.bf16 %v5724, %v5720
        %v5817 = vpack.c.bf16 %v5725, %v5721
        %v5818 = vpack.c.bf16 %v5726, %v5722
        %v5819 = vpack.c.bf16 %v5727, %v5723
        %v5820 = vpack.c.bf16 %v5732, %v5728
        %v5821 = vpack.c.bf16 %v5733, %v5729
        %v5822 = vpack.c.bf16 %v5734, %v5730
        %v5823 = vpack.c.bf16 %v5735, %v5731
        %v5824 = vpack.c.bf16 %v5740, %v5736
        %v5825 = vpack.c.bf16 %v5741, %v5737
        %v5826 = vpack.c.bf16 %v5742, %v5738
        %v5827 = vpack.c.bf16 %v5743, %v5739
        %v5828 = vpack.c.bf16 %v5748, %v5744
        %v5829 = vpack.c.bf16 %v5749, %v5745
        %v5830 = vpack.c.bf16 %v5750, %v5746
        %v5831 = vpack.c.bf16 %v5751, %v5747
        %v5832 = vpack.c.bf16 %v5756, %v5752
        %v5833 = vpack.c.bf16 %v5757, %v5753
        %v5834 = vpack.c.bf16 %v5758, %v5754
        %v5835 = vpack.c.bf16 %v5759, %v5755
        %v5836 = vpack.c.bf16 %v5764, %v5760
        %v5837 = vpack.c.bf16 %v5765, %v5761
        %v5838 = vpack.c.bf16 %v5766, %v5762
        %v5839 = vpack.c.bf16 %v5767, %v5763
        %v5840 = vpack.c.bf16 %v5772, %v5768
        %v5841 = vpack.c.bf16 %v5773, %v5769
        %v5842 = vpack.c.bf16 %v5774, %v5770
        %v5843 = vpack.c.bf16 %v5775, %v5771
        %v5844 = vpack.c.bf16 %v5780, %v5776
        %v5845 = vpack.c.bf16 %v5781, %v5777
        %v5846 = vpack.c.bf16 %v5782, %v5778
        %v5847 = vpack.c.bf16 %v5783, %v5779
        %v5848 = vld [vmem:[#allocation4] sm:$0xff]
        %v5849 = vld [vmem:[#allocation4 + $0x8] sm:$0xff]
        %v5850 = vld [vmem:[#allocation4 + $0x10] sm:$0xff]
        %v5851 = vld [vmem:[#allocation4 + $0x18] sm:$0xff]
        %v5852 = vld [vmem:[#allocation4 + $0x20] sm:$0xff]
        %v5853 = vld [vmem:[#allocation4 + $0x28] sm:$0xff]
        %v5854 = vld [vmem:[#allocation4 + $0x30] sm:$0xff]
        %v5855 = vld [vmem:[#allocation4 + $0x38] sm:$0xff]
        %v5856 = vld [vmem:[#allocation4 + $0x40] sm:$0xff]
        %v5857 = vld [vmem:[#allocation4 + $0x48] sm:$0xff]
        %v5858 = vld [vmem:[#allocation4 + $0x50] sm:$0xff]
        %v5859 = vld [vmem:[#allocation4 + $0x58] sm:$0xff]
        %v5860 = vld [vmem:[#allocation4 + $0x60] sm:$0xff]
        %v5861 = vld [vmem:[#allocation4 + $0x68] sm:$0xff]
        %v5862 = vld [vmem:[#allocation4 + $0x70] sm:$0xff]
        %v5863 = vld [vmem:[#allocation4 + $0x78] sm:$0xff]
        %v5864 = vld [vmem:[#allocation4 + $0x80] sm:$0xff]
        %v5865 = vld [vmem:[#allocation4 + $0x88] sm:$0xff]
        %v5866 = vld [vmem:[#allocation4 + $0x90] sm:$0xff]
        %v5867 = vld [vmem:[#allocation4 + $0x98] sm:$0xff]
        %v5868 = vld [vmem:[#allocation4 + $0xa0] sm:$0xff]
        %v5869 = vld [vmem:[#allocation4 + $0xa8] sm:$0xff]
        %v5870 = vld [vmem:[#allocation4 + $0xb0] sm:$0xff]
        %v5871 = vld [vmem:[#allocation4 + $0xb8] sm:$0xff]
        %v5872 = vld [vmem:[#allocation4 + $0xc0] sm:$0xff]
        %v5873 = vld [vmem:[#allocation4 + $0xc8] sm:$0xff]
        %v5874 = vld [vmem:[#allocation4 + $0xd0] sm:$0xff]
        %v5875 = vld [vmem:[#allocation4 + $0xd8] sm:$0xff]
        %v5876 = vld [vmem:[#allocation4 + $0xe0] sm:$0xff]
        %v5877 = vld [vmem:[#allocation4 + $0xe8] sm:$0xff]
        %v5878 = vld [vmem:[#allocation4 + $0xf0] sm:$0xff]
        %v5879 = vld [vmem:[#allocation4 + $0xf8] sm:$0xff]
        %v5880 = vld [vmem:[#allocation4 + $0x100] sm:$0xff]
        %v5881 = vld [vmem:[#allocation4 + $0x108] sm:$0xff]
        %v5882 = vld [vmem:[#allocation4 + $0x110] sm:$0xff]
        %v5883 = vld [vmem:[#allocation4 + $0x118] sm:$0xff]
        %v5884 = vld [vmem:[#allocation4 + $0x120] sm:$0xff]
        %v5885 = vld [vmem:[#allocation4 + $0x128] sm:$0xff]
        %v5886 = vld [vmem:[#allocation4 + $0x130] sm:$0xff]
        %v5887 = vld [vmem:[#allocation4 + $0x138] sm:$0xff]
        %v5888 = vld [vmem:[#allocation4 + $0x140] sm:$0xff]
        %v5889 = vld [vmem:[#allocation4 + $0x148] sm:$0xff]
        %v5890 = vld [vmem:[#allocation4 + $0x150] sm:$0xff]
        %v5891 = vld [vmem:[#allocation4 + $0x158] sm:$0xff]
        %v5892 = vld [vmem:[#allocation4 + $0x160] sm:$0xff]
        %v5893 = vld [vmem:[#allocation4 + $0x168] sm:$0xff]
        %v5894 = vld [vmem:[#allocation4 + $0x170] sm:$0xff]
        %v5895 = vld [vmem:[#allocation4 + $0x178] sm:$0xff]
        %v5896 = vld [vmem:[#allocation4 + $0x180] sm:$0xff]
        %v5897 = vld [vmem:[#allocation4 + $0x188] sm:$0xff]
        %v5898 = vld [vmem:[#allocation4 + $0x190] sm:$0xff]
        %v5899 = vld [vmem:[#allocation4 + $0x198] sm:$0xff]
        %v5900 = vld [vmem:[#allocation4 + $0x1a0] sm:$0xff]
        %v5901 = vld [vmem:[#allocation4 + $0x1a8] sm:$0xff]
        %v5902 = vld [vmem:[#allocation4 + $0x1b0] sm:$0xff]
        %v5903 = vld [vmem:[#allocation4 + $0x1b8] sm:$0xff]
        %v5904 = vld [vmem:[#allocation4 + $0x1c0] sm:$0xff]
        %v5905 = vld [vmem:[#allocation4 + $0x1c8] sm:$0xff]
        %v5906 = vld [vmem:[#allocation4 + $0x1d0] sm:$0xff]
        %v5907 = vld [vmem:[#allocation4 + $0x1d8] sm:$0xff]
        %v5908 = vld [vmem:[#allocation4 + $0x1e0] sm:$0xff]
        %v5909 = vld [vmem:[#allocation4 + $0x1e8] sm:$0xff]
        %v5910 = vld [vmem:[#allocation4 + $0x1f0] sm:$0xff]
        %v5911 = vld [vmem:[#allocation4 + $0x1f8] sm:$0xff]
        %v5912 = vld [vmem:[#allocation3 + $0x200] sm:$0xff]
        %v5913 = vld [vmem:[#allocation3 + $0x208] sm:$0xff]
        %v5914 = vld [vmem:[#allocation3 + $0x210] sm:$0xff]
        %v5915 = vld [vmem:[#allocation3 + $0x218] sm:$0xff]
        %v5916 = vld [vmem:[#allocation3 + $0x220] sm:$0xff]
        %v5917 = vld [vmem:[#allocation3 + $0x228] sm:$0xff]
        %v5918 = vld [vmem:[#allocation3 + $0x230] sm:$0xff]
        %v5919 = vld [vmem:[#allocation3 + $0x238] sm:$0xff]
        %v5920 = vld [vmem:[#allocation3 + $0x240] sm:$0xff]
        %v5921 = vld [vmem:[#allocation3 + $0x248] sm:$0xff]
        %v5922 = vld [vmem:[#allocation3 + $0x250] sm:$0xff]
        %v5923 = vld [vmem:[#allocation3 + $0x258] sm:$0xff]
        %v5924 = vld [vmem:[#allocation3 + $0x260] sm:$0xff]
        %v5925 = vld [vmem:[#allocation3 + $0x268] sm:$0xff]
        %v5926 = vld [vmem:[#allocation3 + $0x270] sm:$0xff]
        %v5927 = vld [vmem:[#allocation3 + $0x278] sm:$0xff]
        %v5928 = vld [vmem:[#allocation3 + $0x280] sm:$0xff]
        %v5929 = vld [vmem:[#allocation3 + $0x288] sm:$0xff]
        %v5930 = vld [vmem:[#allocation3 + $0x290] sm:$0xff]
        %v5931 = vld [vmem:[#allocation3 + $0x298] sm:$0xff]
        %v5932 = vld [vmem:[#allocation3 + $0x2a0] sm:$0xff]
        %v5933 = vld [vmem:[#allocation3 + $0x2a8] sm:$0xff]
        %v5934 = vld [vmem:[#allocation3 + $0x2b0] sm:$0xff]
        %v5935 = vld [vmem:[#allocation3 + $0x2b8] sm:$0xff]
        %v5936 = vld [vmem:[#allocation3 + $0x2c0] sm:$0xff]
        %v5937 = vld [vmem:[#allocation3 + $0x2c8] sm:$0xff]
        %v5938 = vld [vmem:[#allocation3 + $0x2d0] sm:$0xff]
        %v5939 = vld [vmem:[#allocation3 + $0x2d8] sm:$0xff]
        %v5940 = vld [vmem:[#allocation3 + $0x2e0] sm:$0xff]
        %v5941 = vld [vmem:[#allocation3 + $0x2e8] sm:$0xff]
        %v5942 = vld [vmem:[#allocation3 + $0x2f0] sm:$0xff]
        %v5943 = vld [vmem:[#allocation3 + $0x2f8] sm:$0xff]
        %v5944 = vld [vmem:[#allocation3 + $0x300] sm:$0xff]
        %v5945 = vld [vmem:[#allocation3 + $0x308] sm:$0xff]
        %v5946 = vld [vmem:[#allocation3 + $0x310] sm:$0xff]
        %v5947 = vld [vmem:[#allocation3 + $0x318] sm:$0xff]
        %v5948 = vld [vmem:[#allocation3 + $0x320] sm:$0xff]
        %v5949 = vld [vmem:[#allocation3 + $0x328] sm:$0xff]
        %v5950 = vld [vmem:[#allocation3 + $0x330] sm:$0xff]
        %v5951 = vld [vmem:[#allocation3 + $0x338] sm:$0xff]
        %v5952 = vld [vmem:[#allocation3 + $0x340] sm:$0xff]
        %v5953 = vld [vmem:[#allocation3 + $0x348] sm:$0xff]
        %v5954 = vld [vmem:[#allocation3 + $0x350] sm:$0xff]
        %v5955 = vld [vmem:[#allocation3 + $0x358] sm:$0xff]
        %v5956 = vld [vmem:[#allocation3 + $0x360] sm:$0xff]
        %v5957 = vld [vmem:[#allocation3 + $0x368] sm:$0xff]
        %v5958 = vld [vmem:[#allocation3 + $0x370] sm:$0xff]
        %v5959 = vld [vmem:[#allocation3 + $0x378] sm:$0xff]
        %v5960 = vld [vmem:[#allocation3 + $0x380] sm:$0xff]
        %v5961 = vld [vmem:[#allocation3 + $0x388] sm:$0xff]
        %v5962 = vld [vmem:[#allocation3 + $0x390] sm:$0xff]
        %v5963 = vld [vmem:[#allocation3 + $0x398] sm:$0xff]
        %v5964 = vld [vmem:[#allocation3 + $0x3a0] sm:$0xff]
        %v5965 = vld [vmem:[#allocation3 + $0x3a8] sm:$0xff]
        %v5966 = vld [vmem:[#allocation3 + $0x3b0] sm:$0xff]
        %v5967 = vld [vmem:[#allocation3 + $0x3b8] sm:$0xff]
        %v5968 = vld [vmem:[#allocation3 + $0x3c0] sm:$0xff]
        %v5969 = vld [vmem:[#allocation3 + $0x3c8] sm:$0xff]
        %v5970 = vld [vmem:[#allocation3 + $0x3d0] sm:$0xff]
        %v5971 = vld [vmem:[#allocation3 + $0x3d8] sm:$0xff]
        %v5972 = vld [vmem:[#allocation3 + $0x3e0] sm:$0xff]
        %v5973 = vld [vmem:[#allocation3 + $0x3e8] sm:$0xff]
        %v5974 = vld [vmem:[#allocation3 + $0x3f0] sm:$0xff]
        %v5975 = vld [vmem:[#allocation3 + $0x3f8] sm:$0xff]
        %5976 = vmatprep.subr.bf16.mxu0 %v5913
        %5977 = vmatpush1.bf16.msra.mxu0 %v5912
        %5978 = vmatprep.subr.bf16.mxu0 %v5915
        %5979 = vmatpush1.bf16.msra.mxu0 %v5914
        %5980 = vmatprep.subr.bf16.mxu0 %v5917
        %5981 = vmatpush1.bf16.msra.mxu0 %v5916
        %5982 = vmatprep.subr.bf16.mxu0 %v5919
        %5983 = vmatpush1.bf16.msra.mxu0 %v5918
        %5984 = vmatprep.subr.bf16.mxu0 %v5921
        %5985 = vmatpush1.bf16.msra.mxu0 %v5920
        %5986 = vmatprep.subr.bf16.mxu0 %v5923
        %5987 = vmatpush1.bf16.msra.mxu0 %v5922
        %5988 = vmatprep.subr.bf16.mxu0 %v5925
        %5989 = vmatpush1.bf16.msra.mxu0 %v5924
        %5990 = vmatprep.subr.bf16.mxu0 %v5927
        %5991 = vmatpush1.bf16.msra.mxu0 %v5926
        %5992 = vmatprep.subr.bf16.mxu0 %v5929
        %5993 = vmatpush1.bf16.msra.mxu0 %v5928
        %5994 = vmatprep.subr.bf16.mxu0 %v5931
        %5995 = vmatpush1.bf16.msra.mxu0 %v5930
        %5996 = vmatprep.subr.bf16.mxu0 %v5933
        %5997 = vmatpush1.bf16.msra.mxu0 %v5932
        %5998 = vmatprep.subr.bf16.mxu0 %v5935
        %5999 = vmatpush1.bf16.msra.mxu0 %v5934
        %6000 = vmatprep.subr.bf16.mxu0 %v5937
        %6001 = vmatpush1.bf16.msra.mxu0 %v5936
        %6002 = vmatprep.subr.bf16.mxu0 %v5939
        %6003 = vmatpush1.bf16.msra.mxu0 %v5938
        %6004 = vmatprep.subr.bf16.mxu0 %v5941
        %6005 = vmatpush1.bf16.msra.mxu0 %v5940
        %6006 = vmatprep.subr.bf16.mxu0 %v5943
        %6007 = vmatpush1.bf16.msra.mxu0 %v5942
        %6008 = vmatprep.mubr.bf16.mxu0 %v5785
        %6009 = vmatmul.mubr.bf16.gmra.mrb[0].mxu0 %v5784
        %v6010 = vpop.f32.mrb[0].mxu0
        %v6011 = vadd.f32 0.0, %v6010
        %v6012 = vpop.f32.mrb[0].mxu0
        %v6013 = vadd.f32 0.0, %v6012
        %v6014 = vpop.f32.mrb[0].mxu0
        %v6015 = vadd.f32 0.0, %v6014
        %v6016 = vpop.f32.mrb[0].mxu0
        %v6017 = vadd.f32 0.0, %v6016
        %6018 = vmatprep.mubr.bf16.mxu0 %v5789
        %6019 = vmatmul.mubr.bf16.gmra.mrb[0].mxu0 %v5788
        %v6020 = vpop.f32.mrb[0].mxu0
        %v6021 = vadd.f32 0.0, %v6020
        %v6022 = vpop.f32.mrb[0].mxu0
        %v6023 = vadd.f32 0.0, %v6022
        %v6024 = vpop.f32.mrb[0].mxu0
        %v6025 = vadd.f32 0.0, %v6024
        %v6026 = vpop.f32.mrb[0].mxu0
        %v6027 = vadd.f32 0.0, %v6026
        %6028 = vmatprep.mubr.bf16.mxu0 %v5793
        %6029 = vmatmul.mubr.bf16.gmra.mrb[0].mxu0 %v5792
        %v6030 = vpop.f32.mrb[0].mxu0
        %v6031 = vadd.f32 0.0, %v6030
        %v6032 = vpop.f32.mrb[0].mxu0
        %v6033 = vadd.f32 0.0, %v6032
        %v6034 = vpop.f32.mrb[0].mxu0
        %v6035 = vadd.f32 0.0, %v6034
        %v6036 = vpop.f32.mrb[0].mxu0
        %v6037 = vadd.f32 0.0, %v6036
        %6038 = vmatprep.mubr.bf16.mxu0 %v5797
        %6039 = vmatmul.mubr.bf16.gmra.mrb[0].mxu0 %v5796
        %v6040 = vpop.f32.mrb[0].mxu0
        %v6041 = vadd.f32 0.0, %v6040
        %v6042 = vpop.f32.mrb[0].mxu0
        %v6043 = vadd.f32 0.0, %v6042
        %v6044 = vpop.f32.mrb[0].mxu0
        %v6045 = vadd.f32 0.0, %v6044
        %v6046 = vpop.f32.mrb[0].mxu0
        %v6047 = vadd.f32 0.0, %v6046
        %6048 = vmatprep.mubr.bf16.mxu0 %v5801
        %6049 = vmatmul.mubr.bf16.gmra.mrb[0].mxu0 %v5800
        %v6050 = vpop.f32.mrb[0].mxu0
        %v6051 = vadd.f32 0.0, %v6050
        %v6052 = vpop.f32.mrb[0].mxu0
        %v6053 = vadd.f32 0.0, %v6052
        %v6054 = vpop.f32.mrb[0].mxu0
        %v6055 = vadd.f32 0.0, %v6054
        %v6056 = vpop.f32.mrb[0].mxu0
        %v6057 = vadd.f32 0.0, %v6056
        %6058 = vmatprep.mubr.bf16.mxu0 %v5805
        %6059 = vmatmul.mubr.bf16.gmra.mrb[0].mxu0 %v5804
        %v6060 = vpop.f32.mrb[0].mxu0
        %v6061 = vadd.f32 0.0, %v6060
        %v6062 = vpop.f32.mrb[0].mxu0
        %v6063 = vadd.f32 0.0, %v6062
        %v6064 = vpop.f32.mrb[0].mxu0
        %v6065 = vadd.f32 0.0, %v6064
        %v6066 = vpop.f32.mrb[0].mxu0
        %v6067 = vadd.f32 0.0, %v6066
        %6068 = vmatprep.mubr.bf16.mxu0 %v5809
        %6069 = vmatmul.mubr.bf16.gmra.mrb[0].mxu0 %v5808
        %v6070 = vpop.f32.mrb[0].mxu0
        %v6071 = vadd.f32 0.0, %v6070
        %v6072 = vpop.f32.mrb[0].mxu0
        %v6073 = vadd.f32 0.0, %v6072
        %v6074 = vpop.f32.mrb[0].mxu0
        %v6075 = vadd.f32 0.0, %v6074
        %v6076 = vpop.f32.mrb[0].mxu0
        %v6077 = vadd.f32 0.0, %v6076
        %6078 = vmatprep.mubr.bf16.mxu0 %v5813
        %6079 = vmatmul.mubr.bf16.gmra.mrb[0].mxu0 %v5812
        %v6080 = vpop.f32.mrb[0].mxu0
        %v6081 = vadd.f32 0.0, %v6080
        %v6082 = vpop.f32.mrb[0].mxu0
        %v6083 = vadd.f32 0.0, %v6082
        %v6084 = vpop.f32.mrb[0].mxu0
        %v6085 = vadd.f32 0.0, %v6084
        %v6086 = vpop.f32.mrb[0].mxu0
        %v6087 = vadd.f32 0.0, %v6086
        %6088 = vmatprep.mubr.bf16.mxu0 %v5817
        %6089 = vmatmul.mubr.bf16.gmra.mrb[0].mxu0 %v5816
        %v6090 = vpop.f32.mrb[0].mxu0
        %v6091 = vadd.f32 0.0, %v6090
        %v6092 = vpop.f32.mrb[0].mxu0
        %v6093 = vadd.f32 0.0, %v6092
        %v6094 = vpop.f32.mrb[0].mxu0
        %v6095 = vadd.f32 0.0, %v6094
        %v6096 = vpop.f32.mrb[0].mxu0
        %v6097 = vadd.f32 0.0, %v6096
        %6098 = vmatprep.mubr.bf16.mxu0 %v5821
        %6099 = vmatmul.mubr.bf16.gmra.mrb[0].mxu0 %v5820
        %v6100 = vpop.f32.mrb[0].mxu0
        %v6101 = vadd.f32 0.0, %v6100
        %v6102 = vpop.f32.mrb[0].mxu0
        %v6103 = vadd.f32 0.0, %v6102
        %v6104 = vpop.f32.mrb[0].mxu0
        %v6105 = vadd.f32 0.0, %v6104
        %v6106 = vpop.f32.mrb[0].mxu0
        %v6107 = vadd.f32 0.0, %v6106
        %6108 = vmatprep.mubr.bf16.mxu0 %v5825
        %6109 = vmatmul.mubr.bf16.gmra.mrb[0].mxu0 %v5824
        %v6110 = vpop.f32.mrb[0].mxu0
        %v6111 = vadd.f32 0.0, %v6110
        %v6112 = vpop.f32.mrb[0].mxu0
        %v6113 = vadd.f32 0.0, %v6112
        %v6114 = vpop.f32.mrb[0].mxu0
        %v6115 = vadd.f32 0.0, %v6114
        %v6116 = vpop.f32.mrb[0].mxu0
        %v6117 = vadd.f32 0.0, %v6116
        %6118 = vmatprep.mubr.bf16.mxu0 %v5829
        %6119 = vmatmul.mubr.bf16.gmra.mrb[0].mxu0 %v5828
        %v6120 = vpop.f32.mrb[0].mxu0
        %v6121 = vadd.f32 0.0, %v6120
        %v6122 = vpop.f32.mrb[0].mxu0
        %v6123 = vadd.f32 0.0, %v6122
        %v6124 = vpop.f32.mrb[0].mxu0
        %v6125 = vadd.f32 0.0, %v6124
        %v6126 = vpop.f32.mrb[0].mxu0
        %v6127 = vadd.f32 0.0, %v6126
        %6128 = vmatprep.mubr.bf16.mxu0 %v5833
        %6129 = vmatmul.mubr.bf16.gmra.mrb[0].mxu0 %v5832
        %v6130 = vpop.f32.mrb[0].mxu0
        %v6131 = vadd.f32 0.0, %v6130
        %v6132 = vpop.f32.mrb[0].mxu0
        %v6133 = vadd.f32 0.0, %v6132
        %v6134 = vpop.f32.mrb[0].mxu0
        %v6135 = vadd.f32 0.0, %v6134
        %v6136 = vpop.f32.mrb[0].mxu0
        %v6137 = vadd.f32 0.0, %v6136
        %6138 = vmatprep.mubr.bf16.mxu0 %v5837
        %6139 = vmatmul.mubr.bf16.gmra.mrb[0].mxu0 %v5836
        %v6140 = vpop.f32.mrb[0].mxu0
        %v6141 = vadd.f32 0.0, %v6140
        %v6142 = vpop.f32.mrb[0].mxu0
        %v6143 = vadd.f32 0.0, %v6142
        %v6144 = vpop.f32.mrb[0].mxu0
        %v6145 = vadd.f32 0.0, %v6144
        %v6146 = vpop.f32.mrb[0].mxu0
        %v6147 = vadd.f32 0.0, %v6146
        %6148 = vmatprep.mubr.bf16.mxu0 %v5841
        %6149 = vmatmul.mubr.bf16.gmra.mrb[0].mxu0 %v5840
        %v6150 = vpop.f32.mrb[0].mxu0
        %v6151 = vadd.f32 0.0, %v6150
        %v6152 = vpop.f32.mrb[0].mxu0
        %v6153 = vadd.f32 0.0, %v6152
        %v6154 = vpop.f32.mrb[0].mxu0
        %v6155 = vadd.f32 0.0, %v6154
        %v6156 = vpop.f32.mrb[0].mxu0
        %v6157 = vadd.f32 0.0, %v6156
        %6158 = vmatprep.mubr.bf16.mxu0 %v5845
        %6159 = vmatmul.mubr.bf16.gmra.mrb[0].mxu0 %v5844
        %v6160 = vpop.f32.mrb[0].mxu0
        %v6161 = vadd.f32 0.0, %v6160
        %v6162 = vpop.f32.mrb[0].mxu0
        %v6163 = vadd.f32 0.0, %v6162
        %v6164 = vpop.f32.mrb[0].mxu0
        %v6165 = vadd.f32 0.0, %v6164
        %v6166 = vpop.f32.mrb[0].mxu0
        %v6167 = vadd.f32 0.0, %v6166
        %6168 = vdwg.mxu0
        %6169 = vmatprep.subr.bf16.mxu0 %v5945
        %6170 = vmatpush1.bf16.msra.mxu0 %v5944
        %6171 = vmatprep.subr.bf16.mxu0 %v5947
        %6172 = vmatpush1.bf16.msra.mxu0 %v5946
        %6173 = vmatprep.subr.bf16.mxu0 %v5949
        %6174 = vmatpush1.bf16.msra.mxu0 %v5948
        %6175 = vmatprep.subr.bf16.mxu0 %v5951
        %6176 = vmatpush1.bf16.msra.mxu0 %v5950
        %6177 = vmatprep.subr.bf16.mxu0 %v5953
        %6178 = vmatpush1.bf16.msra.mxu0 %v5952
        %6179 = vmatprep.subr.bf16.mxu0 %v5955
        %6180 = vmatpush1.bf16.msra.mxu0 %v5954
        %6181 = vmatprep.subr.bf16.mxu0 %v5957
        %6182 = vmatpush1.bf16.msra.mxu0 %v5956
        %6183 = vmatprep.subr.bf16.mxu0 %v5959
        %6184 = vmatpush1.bf16.msra.mxu0 %v5958
        %6185 = vmatprep.subr.bf16.mxu0 %v5961
        %6186 = vmatpush1.bf16.msra.mxu0 %v5960
        %6187 = vmatprep.subr.bf16.mxu0 %v5963
        %6188 = vmatpush1.bf16.msra.mxu0 %v5962
        %6189 = vmatprep.subr.bf16.mxu0 %v5965
        %6190 = vmatpush1.bf16.msra.mxu0 %v5964
        %6191 = vmatprep.subr.bf16.mxu0 %v5967
        %6192 = vmatpush1.bf16.msra.mxu0 %v5966
        %6193 = vmatprep.subr.bf16.mxu0 %v5969
        %6194 = vmatpush1.bf16.msra.mxu0 %v5968
        %6195 = vmatprep.subr.bf16.mxu0 %v5971
        %6196 = vmatpush1.bf16.msra.mxu0 %v5970
        %6197 = vmatprep.subr.bf16.mxu0 %v5973
        %6198 = vmatpush1.bf16.msra.mxu0 %v5972
        %6199 = vmatprep.subr.bf16.mxu0 %v5975
        %6200 = vmatpush1.bf16.msra.mxu0 %v5974
        %6201 = vmatprep.mubr.bf16.mxu0 %v5787
        %6202 = vmatmul.mubr.bf16.gmra.mrb[0].mxu0 %v5786
        %v6203 = vpop.f32.mrb[0].mxu0
        %v6204 = vadd.f32 %v6011, %v6203
        %v6205 = vpop.f32.mrb[0].mxu0
        %v6206 = vadd.f32 %v6013, %v6205
        %v6207 = vpop.f32.mrb[0].mxu0
        %v6208 = vadd.f32 %v6015, %v6207
        %v6209 = vpop.f32.mrb[0].mxu0
        %v6210 = vadd.f32 %v6017, %v6209
        %6211 = vmatprep.mubr.bf16.mxu0 %v5791
        %6212 = vmatmul.mubr.bf16.gmra.mrb[0].mxu0 %v5790
        %v6213 = vpop.f32.mrb[0].mxu0
        %v6214 = vadd.f32 %v6021, %v6213
        %v6215 = vpop.f32.mrb[0].mxu0
        %v6216 = vadd.f32 %v6023, %v6215
        %v6217 = vpop.f32.mrb[0].mxu0
        %v6218 = vadd.f32 %v6025, %v6217
        %v6219 = vpop.f32.mrb[0].mxu0
        %v6220 = vadd.f32 %v6027, %v6219
        %6221 = vmatprep.mubr.bf16.mxu0 %v5795
        %6222 = vmatmul.mubr.bf16.gmra.mrb[0].mxu0 %v5794
        %v6223 = vpop.f32.mrb[0].mxu0
        %v6224 = vadd.f32 %v6031, %v6223
        %v6225 = vpop.f32.mrb[0].mxu0
        %v6226 = vadd.f32 %v6033, %v6225
        %v6227 = vpop.f32.mrb[0].mxu0
        %v6228 = vadd.f32 %v6035, %v6227
        %v6229 = vpop.f32.mrb[0].mxu0
        %v6230 = vadd.f32 %v6037, %v6229
        %6231 = vmatprep.mubr.bf16.mxu0 %v5799
        %6232 = vmatmul.mubr.bf16.gmra.mrb[0].mxu0 %v5798
        %v6233 = vpop.f32.mrb[0].mxu0
        %v6234 = vadd.f32 %v6041, %v6233
        %v6235 = vpop.f32.mrb[0].mxu0
        %v6236 = vadd.f32 %v6043, %v6235
        %v6237 = vpop.f32.mrb[0].mxu0
        %v6238 = vadd.f32 %v6045, %v6237
        %v6239 = vpop.f32.mrb[0].mxu0
        %v6240 = vadd.f32 %v6047, %v6239
        %6241 = vmatprep.mubr.bf16.mxu0 %v5803
        %6242 = vmatmul.mubr.bf16.gmra.mrb[0].mxu0 %v5802
        %v6243 = vpop.f32.mrb[0].mxu0
        %v6244 = vadd.f32 %v6051, %v6243
        %v6245 = vpop.f32.mrb[0].mxu0
        %v6246 = vadd.f32 %v6053, %v6245
        %v6247 = vpop.f32.mrb[0].mxu0
        %v6248 = vadd.f32 %v6055, %v6247
        %v6249 = vpop.f32.mrb[0].mxu0
        %v6250 = vadd.f32 %v6057, %v6249
        %6251 = vmatprep.mubr.bf16.mxu0 %v5807
        %6252 = vmatmul.mubr.bf16.gmra.mrb[0].mxu0 %v5806
        %v6253 = vpop.f32.mrb[0].mxu0
        %v6254 = vadd.f32 %v6061, %v6253
        %v6255 = vpop.f32.mrb[0].mxu0
        %v6256 = vadd.f32 %v6063, %v6255
        %v6257 = vpop.f32.mrb[0].mxu0
        %v6258 = vadd.f32 %v6065, %v6257
        %v6259 = vpop.f32.mrb[0].mxu0
        %v6260 = vadd.f32 %v6067, %v6259
        %6261 = vmatprep.mubr.bf16.mxu0 %v5811
        %6262 = vmatmul.mubr.bf16.gmra.mrb[0].mxu0 %v5810
        %v6263 = vpop.f32.mrb[0].mxu0
        %v6264 = vadd.f32 %v6071, %v6263
        %v6265 = vpop.f32.mrb[0].mxu0
        %v6266 = vadd.f32 %v6073, %v6265
        %v6267 = vpop.f32.mrb[0].mxu0
        %v6268 = vadd.f32 %v6075, %v6267
        %v6269 = vpop.f32.mrb[0].mxu0
        %v6270 = vadd.f32 %v6077, %v6269
        %6271 = vmatprep.mubr.bf16.mxu0 %v5815
        %6272 = vmatmul.mubr.bf16.gmra.mrb[0].mxu0 %v5814
        %v6273 = vpop.f32.mrb[0].mxu0
        %v6274 = vadd.f32 %v6081, %v6273
        %v6275 = vpop.f32.mrb[0].mxu0
        %v6276 = vadd.f32 %v6083, %v6275
        %v6277 = vpop.f32.mrb[0].mxu0
        %v6278 = vadd.f32 %v6085, %v6277
        %v6279 = vpop.f32.mrb[0].mxu0
        %v6280 = vadd.f32 %v6087, %v6279
        %6281 = vmatprep.mubr.bf16.mxu0 %v5819
        %6282 = vmatmul.mubr.bf16.gmra.mrb[0].mxu0 %v5818
        %v6283 = vpop.f32.mrb[0].mxu0
        %v6284 = vadd.f32 %v6091, %v6283
        %v6285 = vpop.f32.mrb[0].mxu0
        %v6286 = vadd.f32 %v6093, %v6285
        %v6287 = vpop.f32.mrb[0].mxu0
        %v6288 = vadd.f32 %v6095, %v6287
        %v6289 = vpop.f32.mrb[0].mxu0
        %v6290 = vadd.f32 %v6097, %v6289
        %6291 = vmatprep.mubr.bf16.mxu0 %v5823
        %6292 = vmatmul.mubr.bf16.gmra.mrb[0].mxu0 %v5822
        %v6293 = vpop.f32.mrb[0].mxu0
        %v6294 = vadd.f32 %v6101, %v6293
        %v6295 = vpop.f32.mrb[0].mxu0
        %v6296 = vadd.f32 %v6103, %v6295
        %v6297 = vpop.f32.mrb[0].mxu0
        %v6298 = vadd.f32 %v6105, %v6297
        %v6299 = vpop.f32.mrb[0].mxu0
        %v6300 = vadd.f32 %v6107, %v6299
        %6301 = vmatprep.mubr.bf16.mxu0 %v5827
        %6302 = vmatmul.mubr.bf16.gmra.mrb[0].mxu0 %v5826
        %v6303 = vpop.f32.mrb[0].mxu0
        %v6304 = vadd.f32 %v6111, %v6303
        %v6305 = vpop.f32.mrb[0].mxu0
        %v6306 = vadd.f32 %v6113, %v6305
        %v6307 = vpop.f32.mrb[0].mxu0
        %v6308 = vadd.f32 %v6115, %v6307
        %v6309 = vpop.f32.mrb[0].mxu0
        %v6310 = vadd.f32 %v6117, %v6309
        %6311 = vmatprep.mubr.bf16.mxu0 %v5831
        %6312 = vmatmul.mubr.bf16.gmra.mrb[0].mxu0 %v5830
        %v6313 = vpop.f32.mrb[0].mxu0
        %v6314 = vadd.f32 %v6121, %v6313
        %v6315 = vpop.f32.mrb[0].mxu0
        %v6316 = vadd.f32 %v6123, %v6315
        %v6317 = vpop.f32.mrb[0].mxu0
        %v6318 = vadd.f32 %v6125, %v6317
        %v6319 = vpop.f32.mrb[0].mxu0
        %v6320 = vadd.f32 %v6127, %v6319
        %6321 = vmatprep.mubr.bf16.mxu0 %v5835
        %6322 = vmatmul.mubr.bf16.gmra.mrb[0].mxu0 %v5834
        %v6323 = vpop.f32.mrb[0].mxu0
        %v6324 = vadd.f32 %v6131, %v6323
        %v6325 = vpop.f32.mrb[0].mxu0
        %v6326 = vadd.f32 %v6133, %v6325
        %v6327 = vpop.f32.mrb[0].mxu0
        %v6328 = vadd.f32 %v6135, %v6327
        %v6329 = vpop.f32.mrb[0].mxu0
        %v6330 = vadd.f32 %v6137, %v6329
        %6331 = vmatprep.mubr.bf16.mxu0 %v5839
        %6332 = vmatmul.mubr.bf16.gmra.mrb[0].mxu0 %v5838
        %v6333 = vpop.f32.mrb[0].mxu0
        %v6334 = vadd.f32 %v6141, %v6333
        %v6335 = vpop.f32.mrb[0].mxu0
        %v6336 = vadd.f32 %v6143, %v6335
        %v6337 = vpop.f32.mrb[0].mxu0
        %v6338 = vadd.f32 %v6145, %v6337
        %v6339 = vpop.f32.mrb[0].mxu0
        %v6340 = vadd.f32 %v6147, %v6339
        %6341 = vmatprep.mubr.bf16.mxu0 %v5843
        %6342 = vmatmul.mubr.bf16.gmra.mrb[0].mxu0 %v5842
        %v6343 = vpop.f32.mrb[0].mxu0
        %v6344 = vadd.f32 %v6151, %v6343
        %v6345 = vpop.f32.mrb[0].mxu0
        %v6346 = vadd.f32 %v6153, %v6345
        %v6347 = vpop.f32.mrb[0].mxu0
        %v6348 = vadd.f32 %v6155, %v6347
        %v6349 = vpop.f32.mrb[0].mxu0
        %v6350 = vadd.f32 %v6157, %v6349
        %6351 = vmatprep.mubr.bf16.mxu0 %v5847
        %6352 = vmatmul.mubr.bf16.gmra.mrb[0].mxu0 %v5846
        %v6353 = vpop.f32.mrb[0].mxu0
        %v6354 = vadd.f32 %v6161, %v6353
        %v6355 = vpop.f32.mrb[0].mxu0
        %v6356 = vadd.f32 %v6163, %v6355
        %v6357 = vpop.f32.mrb[0].mxu0
        %v6358 = vadd.f32 %v6165, %v6357
        %v6359 = vpop.f32.mrb[0].mxu0
        %v6360 = vadd.f32 %v6167, %v6359
        %6361 = vdwg.mxu0
        %v6362 = vadd.f32 %v5848, %v6204
        %v6363 = vadd.f32 %v5849, %v6206
        %v6364 = vadd.f32 %v5850, %v6208
        %v6365 = vadd.f32 %v5851, %v6210
        %v6366 = vadd.f32 %v5852, %v6214
        %v6367 = vadd.f32 %v5853, %v6216
        %v6368 = vadd.f32 %v5854, %v6218
        %v6369 = vadd.f32 %v5855, %v6220
        %v6370 = vadd.f32 %v5856, %v6224
        %v6371 = vadd.f32 %v5857, %v6226
        %v6372 = vadd.f32 %v5858, %v6228
        %v6373 = vadd.f32 %v5859, %v6230
        %v6374 = vadd.f32 %v5860, %v6234
        %v6375 = vadd.f32 %v5861, %v6236
        %v6376 = vadd.f32 %v5862, %v6238
        %v6377 = vadd.f32 %v5863, %v6240
        %v6378 = vadd.f32 %v5864, %v6244
        %v6379 = vadd.f32 %v5865, %v6246
        %v6380 = vadd.f32 %v5866, %v6248
        %v6381 = vadd.f32 %v5867, %v6250
        %v6382 = vadd.f32 %v5868, %v6254
        %v6383 = vadd.f32 %v5869, %v6256
        %v6384 = vadd.f32 %v5870, %v6258
        %v6385 = vadd.f32 %v5871, %v6260
        %v6386 = vadd.f32 %v5872, %v6264
        %v6387 = vadd.f32 %v5873, %v6266
        %v6388 = vadd.f32 %v5874, %v6268
        %v6389 = vadd.f32 %v5875, %v6270
        %v6390 = vadd.f32 %v5876, %v6274
        %v6391 = vadd.f32 %v5877, %v6276
        %v6392 = vadd.f32 %v5878, %v6278
        %v6393 = vadd.f32 %v5879, %v6280
        %v6394 = vadd.f32 %v5880, %v6284
        %v6395 = vadd.f32 %v5881, %v6286
        %v6396 = vadd.f32 %v5882, %v6288
        %v6397 = vadd.f32 %v5883, %v6290
        %v6398 = vadd.f32 %v5884, %v6294
        %v6399 = vadd.f32 %v5885, %v6296
        %v6400 = vadd.f32 %v5886, %v6298
        %v6401 = vadd.f32 %v5887, %v6300
        %v6402 = vadd.f32 %v5888, %v6304
        %v6403 = vadd.f32 %v5889, %v6306
        %v6404 = vadd.f32 %v5890, %v6308
        %v6405 = vadd.f32 %v5891, %v6310
        %v6406 = vadd.f32 %v5892, %v6314
        %v6407 = vadd.f32 %v5893, %v6316
        %v6408 = vadd.f32 %v5894, %v6318
        %v6409 = vadd.f32 %v5895, %v6320
        %v6410 = vadd.f32 %v5896, %v6324
        %v6411 = vadd.f32 %v5897, %v6326
        %v6412 = vadd.f32 %v5898, %v6328
        %v6413 = vadd.f32 %v5899, %v6330
        %v6414 = vadd.f32 %v5900, %v6334
        %v6415 = vadd.f32 %v5901, %v6336
        %v6416 = vadd.f32 %v5902, %v6338
        %v6417 = vadd.f32 %v5903, %v6340
        %v6418 = vadd.f32 %v5904, %v6344
        %v6419 = vadd.f32 %v5905, %v6346
        %v6420 = vadd.f32 %v5906, %v6348
        %v6421 = vadd.f32 %v5907, %v6350
        %v6422 = vadd.f32 %v5908, %v6354
        %v6423 = vadd.f32 %v5909, %v6356
        %v6424 = vadd.f32 %v5910, %v6358
        %v6425 = vadd.f32 %v5911, %v6360
        %6426 = vst [vmem:[#allocation4] sm:$0xff] %v6362
        %6427 = vst [vmem:[#allocation4 + $0x8] sm:$0xff] %v6363
        %6428 = vst [vmem:[#allocation4 + $0x10] sm:$0xff] %v6364
        %6429 = vst [vmem:[#allocation4 + $0x18] sm:$0xff] %v6365
        %6430 = vst [vmem:[#allocation4 + $0x20] sm:$0xff] %v6366
        %6431 = vst [vmem:[#allocation4 + $0x28] sm:$0xff] %v6367
        %6432 = vst [vmem:[#allocation4 + $0x30] sm:$0xff] %v6368
        %6433 = vst [vmem:[#allocation4 + $0x38] sm:$0xff] %v6369
        %6434 = vst [vmem:[#allocation4 + $0x40] sm:$0xff] %v6370
        %6435 = vst [vmem:[#allocation4 + $0x48] sm:$0xff] %v6371
        %6436 = vst [vmem:[#allocation4 + $0x50] sm:$0xff] %v6372
        %6437 = vst [vmem:[#allocation4 + $0x58] sm:$0xff] %v6373
        %6438 = vst [vmem:[#allocation4 + $0x60] sm:$0xff] %v6374
        %6439 = vst [vmem:[#allocation4 + $0x68] sm:$0xff] %v6375
        %6440 = vst [vmem:[#allocation4 + $0x70] sm:$0xff] %v6376
        %6441 = vst [vmem:[#allocation4 + $0x78] sm:$0xff] %v6377
        %6442 = vst [vmem:[#allocation4 + $0x80] sm:$0xff] %v6378
        %6443 = vst [vmem:[#allocation4 + $0x88] sm:$0xff] %v6379
        %6444 = vst [vmem:[#allocation4 + $0x90] sm:$0xff] %v6380
        %6445 = vst [vmem:[#allocation4 + $0x98] sm:$0xff] %v6381
        %6446 = vst [vmem:[#allocation4 + $0xa0] sm:$0xff] %v6382
        %6447 = vst [vmem:[#allocation4 + $0xa8] sm:$0xff] %v6383
        %6448 = vst [vmem:[#allocation4 + $0xb0] sm:$0xff] %v6384
        %6449 = vst [vmem:[#allocation4 + $0xb8] sm:$0xff] %v6385
        %6450 = vst [vmem:[#allocation4 + $0xc0] sm:$0xff] %v6386
        %6451 = vst [vmem:[#allocation4 + $0xc8] sm:$0xff] %v6387
        %6452 = vst [vmem:[#allocation4 + $0xd0] sm:$0xff] %v6388
        %6453 = vst [vmem:[#allocation4 + $0xd8] sm:$0xff] %v6389
        %6454 = vst [vmem:[#allocation4 + $0xe0] sm:$0xff] %v6390
        %6455 = vst [vmem:[#allocation4 + $0xe8] sm:$0xff] %v6391
        %6456 = vst [vmem:[#allocation4 + $0xf0] sm:$0xff] %v6392
        %6457 = vst [vmem:[#allocation4 + $0xf8] sm:$0xff] %v6393
        %6458 = vst [vmem:[#allocation4 + $0x100] sm:$0xff] %v6394
        %6459 = vst [vmem:[#allocation4 + $0x108] sm:$0xff] %v6395
        %6460 = vst [vmem:[#allocation4 + $0x110] sm:$0xff] %v6396
        %6461 = vst [vmem:[#allocation4 + $0x118] sm:$0xff] %v6397
        %6462 = vst [vmem:[#allocation4 + $0x120] sm:$0xff] %v6398
        %6463 = vst [vmem:[#allocation4 + $0x128] sm:$0xff] %v6399
        %6464 = vst [vmem:[#allocation4 + $0x130] sm:$0xff] %v6400
        %6465 = vst [vmem:[#allocation4 + $0x138] sm:$0xff] %v6401
        %6466 = vst [vmem:[#allocation4 + $0x140] sm:$0xff] %v6402
        %6467 = vst [vmem:[#allocation4 + $0x148] sm:$0xff] %v6403
        %6468 = vst [vmem:[#allocation4 + $0x150] sm:$0xff] %v6404
        %6469 = vst [vmem:[#allocation4 + $0x158] sm:$0xff] %v6405
        %6470 = vst [vmem:[#allocation4 + $0x160] sm:$0xff] %v6406
        %6471 = vst [vmem:[#allocation4 + $0x168] sm:$0xff] %v6407
        %6472 = vst [vmem:[#allocation4 + $0x170] sm:$0xff] %v6408
        %6473 = vst [vmem:[#allocation4 + $0x178] sm:$0xff] %v6409
        %6474 = vst [vmem:[#allocation4 + $0x180] sm:$0xff] %v6410
        %6475 = vst [vmem:[#allocation4 + $0x188] sm:$0xff] %v6411
        %6476 = vst [vmem:[#allocation4 + $0x190] sm:$0xff] %v6412
        %6477 = vst [vmem:[#allocation4 + $0x198] sm:$0xff] %v6413
        %6478 = vst [vmem:[#allocation4 + $0x1a0] sm:$0xff] %v6414
        %6479 = vst [vmem:[#allocation4 + $0x1a8] sm:$0xff] %v6415
        %6480 = vst [vmem:[#allocation4 + $0x1b0] sm:$0xff] %v6416
        %6481 = vst [vmem:[#allocation4 + $0x1b8] sm:$0xff] %v6417
        %6482 = vst [vmem:[#allocation4 + $0x1c0] sm:$0xff] %v6418
        %6483 = vst [vmem:[#allocation4 + $0x1c8] sm:$0xff] %v6419
        %6484 = vst [vmem:[#allocation4 + $0x1d0] sm:$0xff] %v6420
        %6485 = vst [vmem:[#allocation4 + $0x1d8] sm:$0xff] %v6421
        %6486 = vst [vmem:[#allocation4 + $0x1e0] sm:$0xff] %v6422
        %6487 = vst [vmem:[#allocation4 + $0x1e8] sm:$0xff] %v6423
        %6488 = vst [vmem:[#allocation4 + $0x1f0] sm:$0xff] %v6424
        %6489 = vst [vmem:[#allocation4 + $0x1f8] sm:$0xff] %v6425
        %v6490 = vld [vmem:[#allocation4] sm:$0xff]
        %v6491 = vld [vmem:[#allocation4 + $0x8] sm:$0xff]
        %v6492 = vld [vmem:[#allocation4 + $0x10] sm:$0xff]
        %v6493 = vld [vmem:[#allocation4 + $0x18] sm:$0xff]
        %v6494 = vld [vmem:[#allocation4 + $0x20] sm:$0xff]
        %v6495 = vld [vmem:[#allocation4 + $0x28] sm:$0xff]
        %v6496 = vld [vmem:[#allocation4 + $0x30] sm:$0xff]
        %v6497 = vld [vmem:[#allocation4 + $0x38] sm:$0xff]
        %v6498 = vld [vmem:[#allocation4 + $0x40] sm:$0xff]
        %v6499 = vld [vmem:[#allocation4 + $0x48] sm:$0xff]
        %v6500 = vld [vmem:[#allocation4 + $0x50] sm:$0xff]
        %v6501 = vld [vmem:[#allocation4 + $0x58] sm:$0xff]
        %v6502 = vld [vmem:[#allocation4 + $0x60] sm:$0xff]
        %v6503 = vld [vmem:[#allocation4 + $0x68] sm:$0xff]
        %v6504 = vld [vmem:[#allocation4 + $0x70] sm:$0xff]
        %v6505 = vld [vmem:[#allocation4 + $0x78] sm:$0xff]
        %v6506 = vld [vmem:[#allocation4 + $0x80] sm:$0xff]
        %v6507 = vld [vmem:[#allocation4 + $0x88] sm:$0xff]
        %v6508 = vld [vmem:[#allocation4 + $0x90] sm:$0xff]
        %v6509 = vld [vmem:[#allocation4 + $0x98] sm:$0xff]
        %v6510 = vld [vmem:[#allocation4 + $0xa0] sm:$0xff]
        %v6511 = vld [vmem:[#allocation4 + $0xa8] sm:$0xff]
        %v6512 = vld [vmem:[#allocation4 + $0xb0] sm:$0xff]
        %v6513 = vld [vmem:[#allocation4 + $0xb8] sm:$0xff]
        %v6514 = vld [vmem:[#allocation4 + $0xc0] sm:$0xff]
        %v6515 = vld [vmem:[#allocation4 + $0xc8] sm:$0xff]
        %v6516 = vld [vmem:[#allocation4 + $0xd0] sm:$0xff]
        %v6517 = vld [vmem:[#allocation4 + $0xd8] sm:$0xff]
        %v6518 = vld [vmem:[#allocation4 + $0xe0] sm:$0xff]
        %v6519 = vld [vmem:[#allocation4 + $0xe8] sm:$0xff]
        %v6520 = vld [vmem:[#allocation4 + $0xf0] sm:$0xff]
        %v6521 = vld [vmem:[#allocation4 + $0xf8] sm:$0xff]
        %v6522 = vld [vmem:[#allocation4 + $0x100] sm:$0xff]
        %v6523 = vld [vmem:[#allocation4 + $0x108] sm:$0xff]
        %v6524 = vld [vmem:[#allocation4 + $0x110] sm:$0xff]
        %v6525 = vld [vmem:[#allocation4 + $0x118] sm:$0xff]
        %v6526 = vld [vmem:[#allocation4 + $0x120] sm:$0xff]
        %v6527 = vld [vmem:[#allocation4 + $0x128] sm:$0xff]
        %v6528 = vld [vmem:[#allocation4 + $0x130] sm:$0xff]
        %v6529 = vld [vmem:[#allocation4 + $0x138] sm:$0xff]
        %v6530 = vld [vmem:[#allocation4 + $0x140] sm:$0xff]
        %v6531 = vld [vmem:[#allocation4 + $0x148] sm:$0xff]
        %v6532 = vld [vmem:[#allocation4 + $0x150] sm:$0xff]
        %v6533 = vld [vmem:[#allocation4 + $0x158] sm:$0xff]
        %v6534 = vld [vmem:[#allocation4 + $0x160] sm:$0xff]
        %v6535 = vld [vmem:[#allocation4 + $0x168] sm:$0xff]
        %v6536 = vld [vmem:[#allocation4 + $0x170] sm:$0xff]
        %v6537 = vld [vmem:[#allocation4 + $0x178] sm:$0xff]
        %v6538 = vld [vmem:[#allocation4 + $0x180] sm:$0xff]
        %v6539 = vld [vmem:[#allocation4 + $0x188] sm:$0xff]
        %v6540 = vld [vmem:[#allocation4 + $0x190] sm:$0xff]
        %v6541 = vld [vmem:[#allocation4 + $0x198] sm:$0xff]
        %v6542 = vld [vmem:[#allocation4 + $0x1a0] sm:$0xff]
        %v6543 = vld [vmem:[#allocation4 + $0x1a8] sm:$0xff]
        %v6544 = vld [vmem:[#allocation4 + $0x1b0] sm:$0xff]
        %v6545 = vld [vmem:[#allocation4 + $0x1b8] sm:$0xff]
        %v6546 = vld [vmem:[#allocation4 + $0x1c0] sm:$0xff]
        %v6547 = vld [vmem:[#allocation4 + $0x1c8] sm:$0xff]
        %v6548 = vld [vmem:[#allocation4 + $0x1d0] sm:$0xff]
        %v6549 = vld [vmem:[#allocation4 + $0x1d8] sm:$0xff]
        %v6550 = vld [vmem:[#allocation4 + $0x1e0] sm:$0xff]
        %v6551 = vld [vmem:[#allocation4 + $0x1e8] sm:$0xff]
        %v6552 = vld [vmem:[#allocation4 + $0x1f0] sm:$0xff]
        %v6553 = vld [vmem:[#allocation4 + $0x1f8] sm:$0xff]
        %v6554 = vpack.c.bf16 %v6492, %v6490
        %v6555 = vpack.c.bf16 %v6493, %v6491
        %v6556 = vpack.c.bf16 %v6496, %v6494
        %v6557 = vpack.c.bf16 %v6497, %v6495
        %v6558 = vpack.c.bf16 %v6500, %v6498
        %v6559 = vpack.c.bf16 %v6501, %v6499
        %v6560 = vpack.c.bf16 %v6504, %v6502
        %v6561 = vpack.c.bf16 %v6505, %v6503
        %v6562 = vpack.c.bf16 %v6508, %v6506
        %v6563 = vpack.c.bf16 %v6509, %v6507
        %v6564 = vpack.c.bf16 %v6512, %v6510
        %v6565 = vpack.c.bf16 %v6513, %v6511
        %v6566 = vpack.c.bf16 %v6516, %v6514
        %v6567 = vpack.c.bf16 %v6517, %v6515
        %v6568 = vpack.c.bf16 %v6520, %v6518
        %v6569 = vpack.c.bf16 %v6521, %v6519
        %v6570 = vpack.c.bf16 %v6524, %v6522
        %v6571 = vpack.c.bf16 %v6525, %v6523
        %v6572 = vpack.c.bf16 %v6528, %v6526
        %v6573 = vpack.c.bf16 %v6529, %v6527
        %v6574 = vpack.c.bf16 %v6532, %v6530
        %v6575 = vpack.c.bf16 %v6533, %v6531
        %v6576 = vpack.c.bf16 %v6536, %v6534
        %v6577 = vpack.c.bf16 %v6537, %v6535
        %v6578 = vpack.c.bf16 %v6540, %v6538
        %v6579 = vpack.c.bf16 %v6541, %v6539
        %v6580 = vpack.c.bf16 %v6544, %v6542
        %v6581 = vpack.c.bf16 %v6545, %v6543
        %v6582 = vpack.c.bf16 %v6548, %v6546
        %v6583 = vpack.c.bf16 %v6549, %v6547
        %v6584 = vpack.c.bf16 %v6552, %v6550
        %v6585 = vpack.c.bf16 %v6553, %v6551
        %v6586 = vld [vmem:[%s446] sm:$0xf]
        %v6587 = vld [vmem:[%s446 + $0x4] sm:$0xf]
        %v6588 = vld [vmem:[%s446 + $0x8] sm:$0xf]
        %v6589 = vld [vmem:[%s446 + $0xc] sm:$0xf]
        %v6590 = vld [vmem:[%s446 + $0x10] sm:$0xf]
        %v6591 = vld [vmem:[%s446 + $0x14] sm:$0xf]
        %v6592 = vld [vmem:[%s446 + $0x18] sm:$0xf]
        %v6593 = vld [vmem:[%s446 + $0x1c] sm:$0xf]
        %v6594 = vld [vmem:[%s446 + $0x20] sm:$0xf]
        %v6595 = vld [vmem:[%s446 + $0x24] sm:$0xf]
        %v6596 = vld [vmem:[%s446 + $0x28] sm:$0xf]
        %v6597 = vld [vmem:[%s446 + $0x2c] sm:$0xf]
        %v6598 = vld [vmem:[%s446 + $0x30] sm:$0xf]
        %v6599 = vld [vmem:[%s446 + $0x34] sm:$0xf]
        %v6600 = vld [vmem:[%s446 + $0x38] sm:$0xf]
        %v6601 = vld [vmem:[%s446 + $0x3c] sm:$0xf]
        %v6602 = vld [vmem:[%s446 + $0x40] sm:$0xf]
        %v6603 = vld [vmem:[%s446 + $0x44] sm:$0xf]
        %v6604 = vld [vmem:[%s446 + $0x48] sm:$0xf]
        %v6605 = vld [vmem:[%s446 + $0x4c] sm:$0xf]
        %v6606 = vld [vmem:[%s446 + $0x50] sm:$0xf]
        %v6607 = vld [vmem:[%s446 + $0x54] sm:$0xf]
        %v6608 = vld [vmem:[%s446 + $0x58] sm:$0xf]
        %v6609 = vld [vmem:[%s446 + $0x5c] sm:$0xf]
        %v6610 = vld [vmem:[%s446 + $0x60] sm:$0xf]
        %v6611 = vld [vmem:[%s446 + $0x64] sm:$0xf]
        %v6612 = vld [vmem:[%s446 + $0x68] sm:$0xf]
        %v6613 = vld [vmem:[%s446 + $0x6c] sm:$0xf]
        %v6614 = vld [vmem:[%s446 + $0x70] sm:$0xf]
        %v6615 = vld [vmem:[%s446 + $0x74] sm:$0xf]
        %v6616 = vld [vmem:[%s446 + $0x78] sm:$0xf]
        %v6617 = vld [vmem:[%s446 + $0x7c] sm:$0xf]
        %v6618 = vld [vmem:[%s449] sm:$0x1]
        %v6620 = vlaneseq
        %v6621 = vshrl.u32 %v6620, 7
        %v6622 = vsub.s32 0, %v6621
        %v6623 = vrot.slane %v6618, %v6622
        %v6657 = vunpack.c.l.b16 %v6586
        %v6658 = vunpack.c.l.b16 %v6587
        %v6659 = vunpack.c.l.b16 %v6588
        %v6660 = vunpack.c.l.b16 %v6589
        %v6661 = vunpack.c.l.b16 %v6590
        %v6662 = vunpack.c.l.b16 %v6591
        %v6663 = vunpack.c.l.b16 %v6592
        %v6664 = vunpack.c.l.b16 %v6593
        %v6665 = vunpack.c.l.b16 %v6594
        %v6666 = vunpack.c.l.b16 %v6595
        %v6667 = vunpack.c.l.b16 %v6596
        %v6668 = vunpack.c.l.b16 %v6597
        %v6669 = vunpack.c.l.b16 %v6598
        %v6670 = vunpack.c.l.b16 %v6599
        %v6671 = vunpack.c.l.b16 %v6600
        %v6672 = vunpack.c.l.b16 %v6601
        %v6673 = vunpack.c.l.b16 %v6602
        %v6674 = vunpack.c.l.b16 %v6603
        %v6675 = vunpack.c.l.b16 %v6604
        %v6676 = vunpack.c.l.b16 %v6605
        %v6677 = vunpack.c.l.b16 %v6606
        %v6678 = vunpack.c.l.b16 %v6607
        %v6679 = vunpack.c.l.b16 %v6608
        %v6680 = vunpack.c.l.b16 %v6609
        %v6681 = vunpack.c.l.b16 %v6610
        %v6682 = vunpack.c.l.b16 %v6611
        %v6683 = vunpack.c.l.b16 %v6612
        %v6684 = vunpack.c.l.b16 %v6613
        %v6685 = vunpack.c.l.b16 %v6614
        %v6686 = vunpack.c.l.b16 %v6615
        %v6687 = vunpack.c.l.b16 %v6616
        %v6688 = vunpack.c.l.b16 %v6617
        %v6689 = vpack.c.b16 %v6658, %v6657
        %v6690 = vpack.c.b16 %v6660, %v6659
        %v6691 = vpack.c.b16 %v6662, %v6661
        %v6692 = vpack.c.b16 %v6664, %v6663
        %v6693 = vpack.c.b16 %v6666, %v6665
        %v6694 = vpack.c.b16 %v6668, %v6667
        %v6695 = vpack.c.b16 %v6670, %v6669
        %v6696 = vpack.c.b16 %v6672, %v6671
        %v6697 = vpack.c.b16 %v6674, %v6673
        %v6698 = vpack.c.b16 %v6676, %v6675
        %v6699 = vpack.c.b16 %v6678, %v6677
        %v6700 = vpack.c.b16 %v6680, %v6679
        %v6701 = vpack.c.b16 %v6682, %v6681
        %v6702 = vpack.c.b16 %v6684, %v6683
        %v6703 = vpack.c.b16 %v6686, %v6685
        %v6704 = vpack.c.b16 %v6688, %v6687
        %6721 = vmatprep.subr.bf16.mxu0 0
        %6722 = vmatpush1.bf16.msra.mxu0 %v6689
        %6723 = vmatprep.subr.bf16.mxu0 0
        %6724 = vmatpush1.bf16.msra.mxu0 %v6690
        %6725 = vmatprep.subr.bf16.mxu0 0
        %6726 = vmatpush1.bf16.msra.mxu0 %v6691
        %6727 = vmatprep.subr.bf16.mxu0 0
        %6728 = vmatpush1.bf16.msra.mxu0 %v6692
        %6729 = vmatprep.subr.bf16.mxu0 0
        %6730 = vmatpush1.bf16.msra.mxu0 %v6693
        %6731 = vmatprep.subr.bf16.mxu0 0
        %6732 = vmatpush1.bf16.msra.mxu0 %v6694
        %6733 = vmatprep.subr.bf16.mxu0 0
        %6734 = vmatpush1.bf16.msra.mxu0 %v6695
        %6735 = vmatprep.subr.bf16.mxu0 0
        %6736 = vmatpush1.bf16.msra.mxu0 %v6696
        %6737 = vmatprep.subr.bf16.mxu0 0
        %6738 = vmatpush1.bf16.msra.mxu0 %v6697
        %6739 = vmatprep.subr.bf16.mxu0 0
        %6740 = vmatpush1.bf16.msra.mxu0 %v6698
        %6741 = vmatprep.subr.bf16.mxu0 0
        %6742 = vmatpush1.bf16.msra.mxu0 %v6699
        %6743 = vmatprep.subr.bf16.mxu0 0
        %6744 = vmatpush1.bf16.msra.mxu0 %v6700
        %6745 = vmatprep.subr.bf16.mxu0 0
        %6746 = vmatpush1.bf16.msra.mxu0 %v6701
        %6747 = vmatprep.subr.bf16.mxu0 0
        %6748 = vmatpush1.bf16.msra.mxu0 %v6702
        %6749 = vmatprep.subr.bf16.mxu0 0
        %6750 = vmatpush1.bf16.msra.mxu0 %v6703
        %6751 = vmatprep.subr.bf16.mxu0 0
        %6752 = vmatpush1.bf16.msra.mxu0 %v6704
        %6753 = vmatprep.mubr.bf16.mxu0 %v6555
        %6754 = vmatmul.mubr.bf16.gmra.mrb[0].mxu0 %v6554
        %v6755 = vpop.f32.mrb[0].mxu0
        %v6756 = vadd.f32 %v6623, %v6755
        %v6757 = vpop.f32.mrb[0].mxu0
        %v6758 = vpop.f32.mrb[0].mxu0
        %v6759 = vadd.f32 %v6623, %v6758
        %v6760 = vpop.f32.mrb[0].mxu0
        %6761 = vmatprep.mubr.bf16.mxu0 %v6557
        %6762 = vmatmul.mubr.bf16.gmra.mrb[0].mxu0 %v6556
        %v6763 = vpop.f32.mrb[0].mxu0
        %v6764 = vadd.f32 %v6623, %v6763
        %v6765 = vpop.f32.mrb[0].mxu0
        %v6766 = vpop.f32.mrb[0].mxu0
        %v6767 = vadd.f32 %v6623, %v6766
        %v6768 = vpop.f32.mrb[0].mxu0
        %6769 = vmatprep.mubr.bf16.mxu0 %v6559
        %6770 = vmatmul.mubr.bf16.gmra.mrb[0].mxu0 %v6558
        %v6771 = vpop.f32.mrb[0].mxu0
        %v6772 = vadd.f32 %v6623, %v6771
        %v6773 = vpop.f32.mrb[0].mxu0
        %v6774 = vpop.f32.mrb[0].mxu0
        %v6775 = vadd.f32 %v6623, %v6774
        %v6776 = vpop.f32.mrb[0].mxu0
        %6777 = vmatprep.mubr.bf16.mxu0 %v6561
        %6778 = vmatmul.mubr.bf16.gmra.mrb[0].mxu0 %v6560
        %v6779 = vpop.f32.mrb[0].mxu0
        %v6780 = vadd.f32 %v6623, %v6779
        %v6781 = vpop.f32.mrb[0].mxu0
        %v6782 = vpop.f32.mrb[0].mxu0
        %v6783 = vadd.f32 %v6623, %v6782
        %v6784 = vpop.f32.mrb[0].mxu0
        %6785 = vmatprep.mubr.bf16.mxu0 %v6563
        %6786 = vmatmul.mubr.bf16.gmra.mrb[0].mxu0 %v6562
        %v6787 = vpop.f32.mrb[0].mxu0
        %v6788 = vadd.f32 %v6623, %v6787
        %v6789 = vpop.f32.mrb[0].mxu0
        %v6790 = vpop.f32.mrb[0].mxu0
        %v6791 = vadd.f32 %v6623, %v6790
        %v6792 = vpop.f32.mrb[0].mxu0
        %6793 = vmatprep.mubr.bf16.mxu0 %v6565
        %6794 = vmatmul.mubr.bf16.gmra.mrb[0].mxu0 %v6564
        %v6795 = vpop.f32.mrb[0].mxu0
        %v6796 = vadd.f32 %v6623, %v6795
        %v6797 = vpop.f32.mrb[0].mxu0
        %v6798 = vpop.f32.mrb[0].mxu0
        %v6799 = vadd.f32 %v6623, %v6798
        %v6800 = vpop.f32.mrb[0].mxu0
        %6801 = vmatprep.mubr.bf16.mxu0 %v6567
        %6802 = vmatmul.mubr.bf16.gmra.mrb[0].mxu0 %v6566
        %v6803 = vpop.f32.mrb[0].mxu0
        %v6804 = vadd.f32 %v6623, %v6803
        %v6805 = vpop.f32.mrb[0].mxu0
        %v6806 = vpop.f32.mrb[0].mxu0
        %v6807 = vadd.f32 %v6623, %v6806
        %v6808 = vpop.f32.mrb[0].mxu0
        %6809 = vmatprep.mubr.bf16.mxu0 %v6569
        %6810 = vmatmul.mubr.bf16.gmra.mrb[0].mxu0 %v6568
        %v6811 = vpop.f32.mrb[0].mxu0
        %v6812 = vadd.f32 %v6623, %v6811
        %v6813 = vpop.f32.mrb[0].mxu0
        %v6814 = vpop.f32.mrb[0].mxu0
        %v6815 = vadd.f32 %v6623, %v6814
        %v6816 = vpop.f32.mrb[0].mxu0
        %6817 = vmatprep.mubr.bf16.mxu0 %v6571
        %6818 = vmatmul.mubr.bf16.gmra.mrb[0].mxu0 %v6570
        %v6819 = vpop.f32.mrb[0].mxu0
        %v6820 = vadd.f32 %v6623, %v6819
        %v6821 = vpop.f32.mrb[0].mxu0
        %v6822 = vpop.f32.mrb[0].mxu0
        %v6823 = vadd.f32 %v6623, %v6822
        %v6824 = vpop.f32.mrb[0].mxu0
        %6825 = vmatprep.mubr.bf16.mxu0 %v6573
        %6826 = vmatmul.mubr.bf16.gmra.mrb[0].mxu0 %v6572
        %v6827 = vpop.f32.mrb[0].mxu0
        %v6828 = vadd.f32 %v6623, %v6827
        %v6829 = vpop.f32.mrb[0].mxu0
        %v6830 = vpop.f32.mrb[0].mxu0
        %v6831 = vadd.f32 %v6623, %v6830
        %v6832 = vpop.f32.mrb[0].mxu0
        %6833 = vmatprep.mubr.bf16.mxu0 %v6575
        %6834 = vmatmul.mubr.bf16.gmra.mrb[0].mxu0 %v6574
        %v6835 = vpop.f32.mrb[0].mxu0
        %v6836 = vadd.f32 %v6623, %v6835
        %v6837 = vpop.f32.mrb[0].mxu0
        %v6838 = vpop.f32.mrb[0].mxu0
        %v6839 = vadd.f32 %v6623, %v6838
        %v6840 = vpop.f32.mrb[0].mxu0
        %6841 = vmatprep.mubr.bf16.mxu0 %v6577
        %6842 = vmatmul.mubr.bf16.gmra.mrb[0].mxu0 %v6576
        %v6843 = vpop.f32.mrb[0].mxu0
        %v6844 = vadd.f32 %v6623, %v6843
        %v6845 = vpop.f32.mrb[0].mxu0
        %v6846 = vpop.f32.mrb[0].mxu0
        %v6847 = vadd.f32 %v6623, %v6846
        %v6848 = vpop.f32.mrb[0].mxu0
        %6849 = vmatprep.mubr.bf16.mxu0 %v6579
        %6850 = vmatmul.mubr.bf16.gmra.mrb[0].mxu0 %v6578
        %v6851 = vpop.f32.mrb[0].mxu0
        %v6852 = vadd.f32 %v6623, %v6851
        %v6853 = vpop.f32.mrb[0].mxu0
        %v6854 = vpop.f32.mrb[0].mxu0
        %v6855 = vadd.f32 %v6623, %v6854
        %v6856 = vpop.f32.mrb[0].mxu0
        %6857 = vmatprep.mubr.bf16.mxu0 %v6581
        %6858 = vmatmul.mubr.bf16.gmra.mrb[0].mxu0 %v6580
        %v6859 = vpop.f32.mrb[0].mxu0
        %v6860 = vadd.f32 %v6623, %v6859
        %v6861 = vpop.f32.mrb[0].mxu0
        %v6862 = vpop.f32.mrb[0].mxu0
        %v6863 = vadd.f32 %v6623, %v6862
        %v6864 = vpop.f32.mrb[0].mxu0
        %6865 = vmatprep.mubr.bf16.mxu0 %v6583
        %6866 = vmatmul.mubr.bf16.gmra.mrb[0].mxu0 %v6582
        %v6867 = vpop.f32.mrb[0].mxu0
        %v6868 = vadd.f32 %v6623, %v6867
        %v6869 = vpop.f32.mrb[0].mxu0
        %v6870 = vpop.f32.mrb[0].mxu0
        %v6871 = vadd.f32 %v6623, %v6870
        %v6872 = vpop.f32.mrb[0].mxu0
        %6873 = vmatprep.mubr.bf16.mxu0 %v6585
        %6874 = vmatmul.mubr.bf16.gmra.mrb[0].mxu0 %v6584
        %v6875 = vpop.f32.mrb[0].mxu0
        %v6876 = vadd.f32 %v6623, %v6875
        %v6877 = vpop.f32.mrb[0].mxu0
        %v6878 = vpop.f32.mrb[0].mxu0
        %v6879 = vadd.f32 %v6623, %v6878
        %v6880 = vpop.f32.mrb[0].mxu0
        %6881 = vdwg.mxu0
        %6882 = vxpose.xlu0.b32.start [1/16] %v6756, 128
        %6883 = vxpose.xlu0.b32.cont [2/16] %v6759, 128
        %6884 = vxpose.xlu0.b32.cont [3/16] %v6764, 128
        %6885 = vxpose.xlu0.b32.cont [4/16] %v6767, 128
        %6886 = vxpose.xlu0.b32.cont [5/16] %v6772, 128
        %6887 = vxpose.xlu0.b32.cont [6/16] %v6775, 128
        %6888 = vxpose.xlu0.b32.cont [7/16] %v6780, 128
        %6889 = vxpose.xlu0.b32.cont [8/16] %v6783, 128
        %6890 = vxpose.xlu0.b32.cont [9/16] %v6788, 128
        %6891 = vxpose.xlu0.b32.cont [10/16] %v6791, 128
        %6892 = vxpose.xlu0.b32.cont [11/16] %v6796, 128
        %6893 = vxpose.xlu0.b32.cont [12/16] %v6799, 128
        %6894 = vxpose.xlu0.b32.cont [13/16] %v6804, 128
        %6895 = vxpose.xlu0.b32.cont [14/16] %v6807, 128
        %6896 = vxpose.xlu0.b32.cont [15/16] %v6812, 128
        %6897 = vxpose.xlu0.b32.end [16/16] %v6815, 128
        %v6898 = vpop.trf.xlu0
        %v6899 = vpop.trf.xlu0
        %v6900 = vpop.trf.xlu0
        %v6901 = vpop.trf.xlu0
        %v6902 = vpop.trf.xlu0
        %v6903 = vpop.trf.xlu0
        %v6904 = vpop.trf.xlu0
        %v6905 = vpop.trf.xlu0
        %v6906 = vpop.trf.xlu0
        %v6907 = vpop.trf.xlu0
        %v6908 = vpop.trf.xlu0
        %v6909 = vpop.trf.xlu0
        %v6910 = vpop.trf.xlu0
        %v6911 = vpop.trf.xlu0
        %v6912 = vpop.trf.xlu0
        %v6913 = vpop.trf.xlu0
        %v6914 = vmul.f32 %v6898, %v6898
        %6915 = vadd.xlane.f32.xlu0 %v6914
        %v6916 = vpop.xlane.xlu0 %6915
        %v6917 = vrot.slane %v6916, 4
        %v6918 = vadd.f32 %v6916, %v6917
        %v6919 = vrot.slane %v6918, 2
        %v6920 = vadd.f32 %v6918, %v6919
        %v6921 = vrot.slane %v6920, 1
        %v6922 = vadd.f32 %v6920, %v6921
        %s6923 = vtos %v6922
        %s6924 = smax.f32 %s6923, 1e-24
        %v6925 = vstv %s6924
        %v6926 = vrsqrt.pop %v6925
        %s6927 = vtos %v6926
        %v6928 = vstv %s6927
        %v6929 = vmul.f32 %v6898, %v6928
        %6930 = vst [vmem:[%s454] sm:$0xff] %v6929
        %6931 = vxpose.xlu0.b32.start [1/16] %v6820, 128
        %6932 = vxpose.xlu0.b32.cont [2/16] %v6823, 128
        %6933 = vxpose.xlu0.b32.cont [3/16] %v6828, 128
        %6934 = vxpose.xlu0.b32.cont [4/16] %v6831, 128
        %6935 = vxpose.xlu0.b32.cont [5/16] %v6836, 128
        %6936 = vxpose.xlu0.b32.cont [6/16] %v6839, 128
        %6937 = vxpose.xlu0.b32.cont [7/16] %v6844, 128
        %6938 = vxpose.xlu0.b32.cont [8/16] %v6847, 128
        %6939 = vxpose.xlu0.b32.cont [9/16] %v6852, 128
        %6940 = vxpose.xlu0.b32.cont [10/16] %v6855, 128
        %6941 = vxpose.xlu0.b32.cont [11/16] %v6860, 128
        %6942 = vxpose.xlu0.b32.cont [12/16] %v6863, 128
        %6943 = vxpose.xlu0.b32.cont [13/16] %v6868, 128
        %6944 = vxpose.xlu0.b32.cont [14/16] %v6871, 128
        %6945 = vxpose.xlu0.b32.cont [15/16] %v6876, 128
        %6946 = vxpose.xlu0.b32.end [16/16] %v6879, 128
        %v6947 = vpop.trf.xlu0
        %v6948 = vpop.trf.xlu0
        %v6949 = vpop.trf.xlu0
        %v6950 = vpop.trf.xlu0
        %v6951 = vpop.trf.xlu0
        %v6952 = vpop.trf.xlu0
        %v6953 = vpop.trf.xlu0
        %v6954 = vpop.trf.xlu0
        %v6955 = vpop.trf.xlu0
        %v6956 = vpop.trf.xlu0
        %v6957 = vpop.trf.xlu0
        %v6958 = vpop.trf.xlu0
        %v6959 = vpop.trf.xlu0
        %v6960 = vpop.trf.xlu0
        %v6961 = vpop.trf.xlu0
        %v6962 = vpop.trf.xlu0
        %v6963 = vmul.f32 %v6947, %v6947
        %6964 = vadd.xlane.f32.xlu0 %v6963
        %v6965 = vpop.xlane.xlu0 %6964
        %v6966 = vrot.slane %v6965, 4
        %v6967 = vadd.f32 %v6965, %v6966
        %v6968 = vrot.slane %v6967, 2
        %v6969 = vadd.f32 %v6967, %v6968
        %v6970 = vrot.slane %v6969, 1
        %v6971 = vadd.f32 %v6969, %v6970
        %s6972 = vtos %v6971
        %s6973 = smax.f32 %s6972, 1e-24
        %v6974 = vstv %s6973
        %v6975 = vrsqrt.pop %v6974
        %s6976 = vtos %v6975
        %v6977 = vstv %s6976
        %v6978 = vmul.f32 %v6947, %v6977
        %s6979 = scalar_lea.vmem %s454, 8
        %6980 = vst [vmem:[%s6979] sm:$0xff] %v6978
        %p6981 = scmp.lt.s32.totalorder %s23, 1
        %s6982 = scalar_select %p6981, %s23, 1
        %s6983 = smul.addr %s6982, 2
        %s6984 = smul.addr %s6983, 8
        %s6985 = scalar_lea.vmem %s9, %s6984
        // Predicated region
        $region57: #{two_view_forward.1} parent=51 // pred_check
          %p6986 = pneg %p249
        $region58: #{two_view_forward.1} parent=51 // pred_check_branch
          %6988 = sbr.rel (%p6986) target = $region60
        $region59: #{two_view_forward.1} parent=51 // pred_region
          _
        $region60: #{two_view_forward.1} parent=51 // pred_fallthru
          _
      $region52: #{two_view_forward.1} parent=5 // pred_fallthru
        _
      %p6989 = scmp.le.s32.totalorder 2, %s18
      // Predicated region
      $region61: #{two_view_forward.1} parent=5 // pred_check
        %p6990 = pneg %p6989
      $region62: #{two_view_forward.1} parent=5 // pred_check_branch
        %6992 = sbr.rel (%p6990) target = $region64
      $region63: #{two_view_forward.1} parent=5 // pred_region
        %s6993 = ssub.s32 %s18, 2
        // Predicated region
        $region65: #{two_view_forward.1} parent=63 // pred_check
          %p6994 = pneg %p255
        $region66: #{two_view_forward.1} parent=63 // pred_check_branch
          %6996 = sbr.rel (%p6994) target = $region68
        $region67: #{two_view_forward.1} parent=63 // pred_region
          %p6997 = scmp.lt.s32.totalorder %s24, 1
          %s6998 = scalar_select %p6997, %s24, 1
          %s6999 = smul.addr %s6998, 2
          %s7000 = smul.addr %s6999, 8
          %s7001 = scalar_lea.vmem %s9, %s7000
        $region68: #{two_view_forward.1} parent=63 // pred_fallthru
          _
      $region64: #{two_view_forward.1} parent=5 // pred_fallthru
        _
    $region6: #{two_view_forward.1} parent=1 // loop_footer
      %s22 = sadd.s32 1, %s18
    $region7: #{two_view_forward.1} parent=1 // loop_footer_branch
      %17 = sbr.rel target = $region3
    $region8: #{two_view_forward.1} parent=1 // loop_exit
      _
    %7002 = vsyncpa [#allocation7], 1
    %s7003 = scalar_lea.sflag [#allocation7], 1
    %7004 = vsyncpa %s7003, 1
  %7005 = vsyncmov [#allocation5]
  %s7006 = vpop.sfrf %7005
  %p7007 = scmp.eq.s32.totalorder %s7006, 0
  %p7008 = pneg %p7007
  %7010 = shalt.err (%p7008)

</llo_original>
